<compile_context>
chip_gen: v6e
topology: v6e:2x2x1
jax: 0.10.0
libtpu: 0.0.40
codegen_flags: <defaults>
</compile_context>

<pallas_src>
import functools
import math

import jax
import jax.numpy as jnp
from jax.experimental import pallas as pl
from jax.experimental.pallas import tpu as pltpu


# ---------------------------------------------------------------------------
# Kernel 1: conv (im2col matmul) + GroupNorm + ReLU + 2x2 max-pool, fused.
# One sample per grid step.  Patches arrive as (4, Npool, K): 4 pooling-window
# corners x Npool pooled pixels x patch features.
# ---------------------------------------------------------------------------
def _conv_gn_relu_pool_kernel(p_ref, w_ref, b_ref, gamma_ref, beta_ref, g_ref,
                              o_ref, acc_ref, *, eps, inv_count):
    w = w_ref[...]                                    # (K, C)   bf16
    b = b_ref[...]                                    # (1, C)   f32

    s = jnp.zeros_like(b)                             # per-channel sum
    ss = jnp.zeros_like(b)                            # per-channel sum of squares
    for c in range(4):                                # 4 pooling-window corners
        a = jnp.dot(p_ref[0, c], w,
                    preferred_element_type=jnp.float32) + b   # (Npool, C) MXU
        acc_ref[c] = a
        s = s + jnp.sum(a, axis=0, keepdims=True)
        ss = ss + jnp.sum(a * a, axis=0, keepdims=True)

    # Single-pass GroupNorm statistics: group-reduce the per-channel sums with
    # an indicator matmul (broadcasts each group's stat back to its channels),
    # then var = E[x^2] - E[x]^2 (biased, as in torch.nn.GroupNorm).
    gm = g_ref[...]                                   # (C, C) group indicator
    mean = jnp.dot(s, gm, preferred_element_type=jnp.float32) * inv_count
    ex2 = jnp.dot(ss, gm, preferred_element_type=jnp.float32) * inv_count
    var = ex2 - mean * mean
    scale = gamma_ref[...] * jax.lax.rsqrt(var + eps)
    shift = beta_ref[...] - mean * scale

    # Normalize each corner, max-pool over the 4 corners, then ReLU.
    y = jnp.maximum(acc_ref[0] * scale + shift, acc_ref[1] * scale + shift)
    y = jnp.maximum(y, acc_ref[2] * scale + shift)
    y = jnp.maximum(y, acc_ref[3] * scale + shift)
    o_ref[0] = jnp.maximum(y, 0.0).astype(o_ref.dtype)


def conv_gn_relu_pool(patches, w_col, bias, gamma, beta, gmat,
                      *, num_groups=2, eps=1e-5):
    B, _four, npool, k = patches.shape
    cout = w_col.shape[1]
    cpg = cout // num_groups
    inv_count = 1.0 / float(4 * npool * cpg)          # elems per (sample, group)
    kern = functools.partial(_conv_gn_relu_pool_kernel,
                             eps=eps, inv_count=inv_count)
    return pl.pallas_call(
        kern,
        out_shape=jax.ShapeDtypeStruct((B, npool, cout), jnp.bfloat16),
        grid=(B,),
        in_specs=[
            pl.BlockSpec((1, 4, npool, k), lambda b: (b, 0, 0, 0)),
            pl.BlockSpec((k, cout), lambda b: (0, 0)),
            pl.BlockSpec((1, cout), lambda b: (0, 0)),
            pl.BlockSpec((1, cout), lambda b: (0, 0)),
            pl.BlockSpec((1, cout), lambda b: (0, 0)),
            pl.BlockSpec((cout, cout), lambda b: (0, 0)),
        ],
        out_specs=pl.BlockSpec((1, npool, cout), lambda b: (b, 0, 0)),
        scratch_shapes=[pltpu.VMEM((4, npool, cout), jnp.float32)],
        compiler_params=pltpu.CompilerParams(
            dimension_semantics=("parallel",)),
    )(patches, w_col, bias, gamma, beta, gmat)


# ---------------------------------------------------------------------------
# Kernel 2: fused fc1+ReLU -> fc2+ReLU -> fc3 (fc3 padded to 128 lanes).
# ---------------------------------------------------------------------------
def _mlp_kernel(x_ref, w1_ref, b1_ref, w2_ref, b2_ref, w3_ref, b3_ref, o_ref):
    h = jnp.dot(x_ref[...], w1_ref[...],
                preferred_element_type=jnp.float32) + b1_ref[...]
    h = jnp.maximum(h, 0.0).astype(jnp.bfloat16)
    h = jnp.dot(h, w2_ref[...],
                preferred_element_type=jnp.float32) + b2_ref[...]
    h = jnp.maximum(h, 0.0).astype(jnp.bfloat16)
    o_ref[...] = jnp.dot(h, w3_ref[...],
                         preferred_element_type=jnp.float32) + b3_ref[...]


def mlp(x, w1, b1, w2, b2, w3, b3, num_classes):
    B, k0 = x.shape
    h1 = w1.shape[1]
    h2 = w2.shape[1]
    npad = w3.shape[1]                                # padded (multiple of 128)
    bt = B if B <= 512 else 512                       # batch tile (v7x: >=2 steps at big B)
    out = pl.pallas_call(
        _mlp_kernel,
        out_shape=jax.ShapeDtypeStruct((B, npad), jnp.float32),
        grid=(pl.cdiv(B, bt),),
        in_specs=[
            pl.BlockSpec((bt, k0), lambda i: (i, 0)),
            pl.BlockSpec((k0, h1), lambda i: (0, 0)),
            pl.BlockSpec((1, h1), lambda i: (0, 0)),
            pl.BlockSpec((h1, h2), lambda i: (0, 0)),
            pl.BlockSpec((1, h2), lambda i: (0, 0)),
            pl.BlockSpec((h2, npad), lambda i: (0, 0)),
            pl.BlockSpec((1, npad), lambda i: (0, 0)),
        ],
        out_specs=pl.BlockSpec((bt, npad), lambda i: (i, 0)),
        compiler_params=pltpu.CompilerParams(
            dimension_semantics=("parallel",)),
    )(x, w1, b1, w2, b2, w3, b3)
    return out[:, :num_classes]


# ---------------------------------------------------------------------------
# Glue (layout plumbing) + parameters
# ---------------------------------------------------------------------------
def im2col_pool_corners(x, k):
    # x: (B, H, W, C) -> patches (B, 4, Npool, k*k*C) where axis 1 indexes the
    # four 2x2-pool-window corners and Npool = (Ho//2)*(Wo//2).  Patch feature
    # order is (kh, kw, cin), matching conv_w_to_col.
    B, H, W, C = x.shape
    Ho, Wo = H - k + 1, W - k + 1
    Hp, Wp = Ho // 2, Wo // 2
    cols = []
    for kh in range(k):
        for kw in range(k):
            cols.append(x[:, kh:kh + Ho, kw:kw + Wo, :])
    p = jnp.stack(cols, axis=3)                       # (B, Ho, Wo, k*k, C)
    p = p.reshape(B, Ho, Wo, k * k * C)
    p = p.reshape(B, Hp, 2, Wp, 2, k * k * C)         # split pool windows
    p = jnp.transpose(p, (0, 2, 4, 1, 3, 5))          # (B, di, dj, Hp, Wp, K)
    return p.reshape(B, 4, Hp * Wp, k * k * C), Hp, Wp


def conv_w_to_col(w_oihw):
    # torch layout (Cout, Cin, kh, kw) -> (kh*kw*Cin, Cout), matching im2col.
    cout, cin, kh, kw = w_oihw.shape
    return jnp.transpose(w_oihw, (2, 3, 1, 0)).reshape(kh * kw * cin, cout)


def init_params(num_classes, key):
    # torch default init: U(-1/sqrt(fan_in), 1/sqrt(fan_in)); GroupNorm affine
    # weight=1, bias=0.  Weights kept in torch layout; prepare_params converts.
    def u(k, shape, fan_in):
        bound = 1.0 / math.sqrt(fan_in)
        return jax.random.uniform(k, shape, jnp.float32, -bound, bound)

    ks = jax.random.split(key, 10)
    p = {}
    p["conv1_w"] = u(ks[0], (64, 3, 5, 5), 3 * 5 * 5)
    p["conv1_b"] = u(ks[1], (1, 64), 3 * 5 * 5)
    p["gn1_g"] = jnp.ones((1, 64), jnp.float32)
    p["gn1_b"] = jnp.zeros((1, 64), jnp.float32)
    p["conv2_w"] = u(ks[2], (64, 64, 5, 5), 64 * 5 * 5)
    p["conv2_b"] = u(ks[3], (1, 64), 64 * 5 * 5)
    p["gn2_g"] = jnp.ones((1, 64), jnp.float32)
    p["gn2_b"] = jnp.zeros((1, 64), jnp.float32)
    p["fc1_w"] = u(ks[4], (384, 64 * 5 * 5), 64 * 5 * 5)   # torch (out, in)
    p["fc1_b"] = u(ks[5], (1, 384), 64 * 5 * 5)
    p["fc2_w"] = u(ks[6], (192, 384), 384)
    p["fc2_b"] = u(ks[7], (1, 192), 384)
    p["fc3_w"] = u(ks[8], (num_classes, 192), 192)
    p["fc3_b"] = u(ks[9], (1, num_classes), 192)
    return p


def prepare_params(p, num_classes, num_groups=2):
    # One-time kernel-ready layout: bf16 weights, (in, out) FC layout, im2col
    # conv weights, fc3 padded to a multiple of 128 lanes, GN group matrix.
    kp = {}
    kp["conv1_w"] = conv_w_to_col(p["conv1_w"]).astype(jnp.bfloat16)
    kp["conv1_b"] = p["conv1_b"]
    kp["gn1_g"], kp["gn1_b"] = p["gn1_g"], p["gn1_b"]
    kp["conv2_w"] = conv_w_to_col(p["conv2_w"]).astype(jnp.bfloat16)
    kp["conv2_b"] = p["conv2_b"]
    kp["gn2_g"], kp["gn2_b"] = p["gn2_g"], p["gn2_b"]

    kp["fc1_w"] = jnp.transpose(p["fc1_w"]).astype(jnp.bfloat16)   # (1600, 384)
    kp["fc1_b"] = p["fc1_b"]
    kp["fc2_w"] = jnp.transpose(p["fc2_w"]).astype(jnp.bfloat16)   # (384, 192)
    kp["fc2_b"] = p["fc2_b"]

    npad = ((num_classes + 127) // 128) * 128
    w3 = jnp.transpose(p["fc3_w"])                                  # (192, nc)
    kp["fc3_w"] = jnp.pad(w3, ((0, 0), (0, npad - num_classes))
                          ).astype(jnp.bfloat16)
    kp["fc3_b"] = jnp.pad(p["fc3_b"], ((0, 0), (0, npad - num_classes)))

    cout = 64
    grp = jnp.arange(cout) // (cout // num_groups)
    kp["gmat"] = (grp[:, None] == grp[None, :]).astype(jnp.float32)  # (64, 64)
    return kp


def forward(x_nchw, kp, num_classes):
    B = x_nchw.shape[0]
    x = jnp.transpose(x_nchw, (0, 2, 3, 1)).astype(jnp.bfloat16)   # NCHW->NHWC

    # block 1: conv1(3->64,5x5) + GroupNorm(2,64) + ReLU + MaxPool(2,2) fused
    p1, hp1, wp1 = im2col_pool_corners(x, 5)           # (B, 4, 196, 75)
    a1 = conv_gn_relu_pool(p1, kp["conv1_w"], kp["conv1_b"],
                           kp["gn1_g"], kp["gn1_b"], kp["gmat"])
    x1 = a1.reshape(B, hp1, wp1, 64)                   # (B, 14, 14, 64)

    # block 2: conv2(64->64,5x5) + GroupNorm(2,64) + ReLU + MaxPool(2,2) fused
    p2, hp2, wp2 = im2col_pool_corners(x1, 5)          # (B, 4, 25, 1600)
    a2 = conv_gn_relu_pool(p2, kp["conv2_w"], kp["conv2_b"],
                           kp["gn2_g"], kp["gn2_b"], kp["gmat"])
    x2 = a2.reshape(B, hp2, wp2, 64)                   # (B, 5, 5, 64)

    # flatten exactly like torch's x.view(-1, 64*5*5) on an NCHW tensor
    flat = jnp.transpose(x2, (0, 3, 1, 2)).reshape(B, 64 * 5 * 5)

    return mlp(flat, kp["fc1_w"], kp["fc1_b"],
               kp["fc2_w"], kp["fc2_b"],
               kp["fc3_w"], kp["fc3_b"], num_classes)


if __name__ == "__main__":
    num_classes = 10
    key = jax.random.PRNGKey(0)
    pkey, xkey = jax.random.split(key)
    params = init_params(num_classes, pkey)
    kparams = prepare_params(params, num_classes)

    # fc1's 64*5*5 input fixes the spatial size: CIFAR 32x32, 3 channels.
    x = jax.random.normal(xkey, (2, 3, 32, 32), jnp.float32)

    fwd = jax.jit(functools.partial(forward, num_classes=num_classes))
    out = fwd(x, kparams)
    out = jax.block_until_ready(out)
    assert out.shape == (2, num_classes)
    assert bool(jnp.all(jnp.isfinite(out)))
    print("KERNEL_OK")
</pallas_src>

<mosaic_0001>
module attributes {stable_mosaic.version = 11 : i64} {
  func.func @_conv_gn_relu_pool_kernel(%arg0: i32, %arg1: memref<1x4x196x75xbf16, #tpu.memory_space<vmem>>, %arg2: memref<75x64xbf16, #tpu.memory_space<vmem>>, %arg3: memref<1x64xf32, #tpu.memory_space<vmem>>, %arg4: memref<1x64xf32, #tpu.memory_space<vmem>>, %arg5: memref<1x64xf32, #tpu.memory_space<vmem>>, %arg6: memref<64x64xf32, #tpu.memory_space<vmem>>, %arg7: memref<1x196x64xbf16, #tpu.memory_space<vmem>>, %arg8: memref<4x196x64xf32, #tpu.memory_space<vmem>>) attributes {dimension_semantics = [#tpu.dimension_semantics<parallel>], iteration_bounds = array<i64: 2>, scalar_prefetch = 0 : i64, scratch_operands = 1 : i64, tpu.core_type = #tpu.core_type<tc>, window_params = [{transform_indices = @transform_0, window_bounds = array<i64: 1, 4, 196, 75>}, {pipeline_mode = #tpu.pipeline_mode<synchronous>, transform_indices = @transform_1, window_bounds = array<i64: 75, 64>}, {pipeline_mode = #tpu.pipeline_mode<synchronous>, transform_indices = @transform_2, window_bounds = array<i64: 1, 64>}, {pipeline_mode = #tpu.pipeline_mode<synchronous>, transform_indices = @transform_3, window_bounds = array<i64: 1, 64>}, {pipeline_mode = #tpu.pipeline_mode<synchronous>, transform_indices = @transform_4, window_bounds = array<i64: 1, 64>}, {pipeline_mode = #tpu.pipeline_mode<synchronous>, transform_indices = @transform_5, window_bounds = array<i64: 64, 64>}, {transform_indices = @transform_6, window_bounds = array<i64: 1, 196, 64>}]} {
    %c0 = arith.constant 0 : index
    %c0_0 = arith.constant 0 : index
    %0 = vector.load %arg2[%c0, %c0_0] : memref<75x64xbf16, #tpu.memory_space<vmem>>, vector<75x64xbf16>
    %c0_1 = arith.constant 0 : index
    %c0_2 = arith.constant 0 : index
    %1 = vector.load %arg3[%c0_1, %c0_2] : memref<1x64xf32, #tpu.memory_space<vmem>>, vector<1x64xf32>
    %cst = arith.constant 0.000000e+00 : f32
    %2 = vector.broadcast %cst : f32 to vector<1x64xf32>
    %cst_3 = arith.constant 0.000000e+00 : f32
    %3 = vector.broadcast %cst_3 : f32 to vector<1x64xf32>
    %c0_4 = arith.constant 0 : index
    %c0_5 = arith.constant 0 : index
    %c0_6 = arith.constant 0 : index
    %c0_7 = arith.constant 0 : index
    %4 = vector.load %arg1[%c0_4, %c0_5, %c0_6, %c0_7] : memref<1x4x196x75xbf16, #tpu.memory_space<vmem>>, vector<1x1x196x75xbf16>
    %5 = vector.shape_cast %4 : vector<1x1x196x75xbf16> to vector<196x75xbf16>
    %cst_8 = arith.constant dense<0.000000e+00> : vector<196x64xf32>
    %6 = tpu.matmul %5, %0, %cst_8 {dimension_numbers = #tpu.dot_dimension_numbers<[1], [0], [0], [1], [0, 0, 1, 1], [], []>} : vector<196x75xbf16>, vector<75x64xbf16>, vector<196x64xf32> -> vector<196x64xf32>
    %7 = vector.broadcast %1 : vector<1x64xf32> to vector<196x64xf32>
    %8 = arith.addf %6, %7 : vector<196x64xf32>
    %c0_9 = arith.constant 0 : index
    %c0_10 = arith.constant 0 : index
    %c0_11 = arith.constant 0 : index
    %9 = vector.load %arg8[%c0_9, %c0_10, %c0_11] : memref<4x196x64xf32, #tpu.memory_space<vmem>>, vector<1x196x64xf32>
    %10 = vector.shape_cast %9 : vector<1x196x64xf32> to vector<196x64xf32>
    %11 = vector.shape_cast %8 : vector<196x64xf32> to vector<1x196x64xf32>
    tpu.vector_store %arg8[%c0_9, %c0_10, %c0_11], %11 {strides = array<i32>} : memref<4x196x64xf32, #tpu.memory_space<vmem>>, vector<1x196x64xf32>,
    %cst_12 = arith.constant dense<0.000000e+00> : vector<64xf32>
    %12 = vector.multi_reduction <add>, %8, %cst_12 [0] : vector<196x64xf32> to vector<64xf32>
    %13 = vector.shape_cast %12 : vector<64xf32> to vector<1x64xf32>
    %14 = arith.addf %2, %13 : vector<1x64xf32>
    %15 = arith.mulf %8, %8 : vector<196x64xf32>
    %cst_13 = arith.constant dense<0.000000e+00> : vector<64xf32>
    %16 = vector.multi_reduction <add>, %15, %cst_13 [0] : vector<196x64xf32> to vector<64xf32>
    %17 = vector.shape_cast %16 : vector<64xf32> to vector<1x64xf32>
    %18 = arith.addf %3, %17 : vector<1x64xf32>
    %c0_14 = arith.constant 0 : index
    %c1 = arith.constant 1 : index
    %c0_15 = arith.constant 0 : index
    %c0_16 = arith.constant 0 : index
    %19 = vector.load %arg1[%c0_14, %c1, %c0_15, %c0_16] : memref<1x4x196x75xbf16, #tpu.memory_space<vmem>>, vector<1x1x196x75xbf16>
    %20 = vector.shape_cast %19 : vector<1x1x196x75xbf16> to vector<196x75xbf16>
    %cst_17 = arith.constant dense<0.000000e+00> : vector<196x64xf32>
    %21 = tpu.matmul %20, %0, %cst_17 {dimension_numbers = #tpu.dot_dimension_numbers<[1], [0], [0], [1], [0, 0, 1, 1], [], []>} : vector<196x75xbf16>, vector<75x64xbf16>, vector<196x64xf32> -> vector<196x64xf32>
    %22 = vector.broadcast %1 : vector<1x64xf32> to vector<196x64xf32>
    %23 = arith.addf %21, %22 : vector<196x64xf32>
    %c1_18 = arith.constant 1 : index
    %c0_19 = arith.constant 0 : index
    %c0_20 = arith.constant 0 : index
    %24 = vector.load %arg8[%c1_18, %c0_19, %c0_20] : memref<4x196x64xf32, #tpu.memory_space<vmem>>, vector<1x196x64xf32>
    %25 = vector.shape_cast %24 : vector<1x196x64xf32> to vector<196x64xf32>
    %26 = vector.shape_cast %23 : vector<196x64xf32> to vector<1x196x64xf32>
    tpu.vector_store %arg8[%c1_18, %c0_19, %c0_20], %26 {strides = array<i32>} : memref<4x196x64xf32, #tpu.memory_space<vmem>>, vector<1x196x64xf32>,
    %cst_21 = arith.constant dense<0.000000e+00> : vector<64xf32>
    %27 = vector.multi_reduction <add>, %23, %cst_21 [0] : vector<196x64xf32> to vector<64xf32>
    %28 = vector.shape_cast %27 : vector<64xf32> to vector<1x64xf32>
    %29 = arith.addf %14, %28 : vector<1x64xf32>
    %30 = arith.mulf %23, %23 : vector<196x64xf32>
    %cst_22 = arith.constant dense<0.000000e+00> : vector<64xf32>
    %31 = vector.multi_reduction <add>, %30, %cst_22 [0] : vector<196x64xf32> to vector<64xf32>
    %32 = vector.shape_cast %31 : vector<64xf32> to vector<1x64xf32>
    %33 = arith.addf %18, %32 : vector<1x64xf32>
    %c0_23 = arith.constant 0 : index
    %c2 = arith.constant 2 : index
    %c0_24 = arith.constant 0 : index
    %c0_25 = arith.constant 0 : index
    %34 = vector.load %arg1[%c0_23, %c2, %c0_24, %c0_25] : memref<1x4x196x75xbf16, #tpu.memory_space<vmem>>, vector<1x1x196x75xbf16>
    %35 = vector.shape_cast %34 : vector<1x1x196x75xbf16> to vector<196x75xbf16>
    %cst_26 = arith.constant dense<0.000000e+00> : vector<196x64xf32>
    %36 = tpu.matmul %35, %0, %cst_26 {dimension_numbers = #tpu.dot_dimension_numbers<[1], [0], [0], [1], [0, 0, 1, 1], [], []>} : vector<196x75xbf16>, vector<75x64xbf16>, vector<196x64xf32> -> vector<196x64xf32>
    %37 = vector.broadcast %1 : vector<1x64xf32> to vector<196x64xf32>
    %38 = arith.addf %36, %37 : vector<196x64xf32>
    %c2_27 = arith.constant 2 : index
    %c0_28 = arith.constant 0 : index
    %c0_29 = arith.constant 0 : index
    %39 = vector.load %arg8[%c2_27, %c0_28, %c0_29] : memref<4x196x64xf32, #tpu.memory_space<vmem>>, vector<1x196x64xf32>
    %40 = vector.shape_cast %39 : vector<1x196x64xf32> to vector<196x64xf32>
    %41 = vector.shape_cast %38 : vector<196x64xf32> to vector<1x196x64xf32>
    tpu.vector_store %arg8[%c2_27, %c0_28, %c0_29], %41 {strides = array<i32>} : memref<4x196x64xf32, #tpu.memory_space<vmem>>, vector<1x196x64xf32>,
    %cst_30 = arith.constant dense<0.000000e+00> : vector<64xf32>
    %42 = vector.multi_reduction <add>, %38, %cst_30 [0] : vector<196x64xf32> to vector<64xf32>
    %43 = vector.shape_cast %42 : vector<64xf32> to vector<1x64xf32>
    %44 = arith.addf %29, %43 : vector<1x64xf32>
    %45 = arith.mulf %38, %38 : vector<196x64xf32>
    %cst_31 = arith.constant dense<0.000000e+00> : vector<64xf32>
    %46 = vector.multi_reduction <add>, %45, %cst_31 [0] : vector<196x64xf32> to vector<64xf32>
    %47 = vector.shape_cast %46 : vector<64xf32> to vector<1x64xf32>
    %48 = arith.addf %33, %47 : vector<1x64xf32>
    %c0_32 = arith.constant 0 : index
    %c3 = arith.constant 3 : index
    %c0_33 = arith.constant 0 : index
    %c0_34 = arith.constant 0 : index
    %49 = vector.load %arg1[%c0_32, %c3, %c0_33, %c0_34] : memref<1x4x196x75xbf16, #tpu.memory_space<vmem>>, vector<1x1x196x75xbf16>
    %50 = vector.shape_cast %49 : vector<1x1x196x75xbf16> to vector<196x75xbf16>
    %cst_35 = arith.constant dense<0.000000e+00> : vector<196x64xf32>
    %51 = tpu.matmul %50, %0, %cst_35 {dimension_numbers = #tpu.dot_dimension_numbers<[1], [0], [0], [1], [0, 0, 1, 1], [], []>} : vector<196x75xbf16>, vector<75x64xbf16>, vector<196x64xf32> -> vector<196x64xf32>
    %52 = vector.broadcast %1 : vector<1x64xf32> to vector<196x64xf32>
    %53 = arith.addf %51, %52 : vector<196x64xf32>
    %c3_36 = arith.constant 3 : index
    %c0_37 = arith.constant 0 : index
    %c0_38 = arith.constant 0 : index
    %54 = vector.load %arg8[%c3_36, %c0_37, %c0_38] : memref<4x196x64xf32, #tpu.memory_space<vmem>>, vector<1x196x64xf32>
    %55 = vector.shape_cast %54 : vector<1x196x64xf32> to vector<196x64xf32>
    %56 = vector.shape_cast %53 : vector<196x64xf32> to vector<1x196x64xf32>
    tpu.vector_store %arg8[%c3_36, %c0_37, %c0_38], %56 {strides = array<i32>} : memref<4x196x64xf32, #tpu.memory_space<vmem>>, vector<1x196x64xf32>,
    %cst_39 = arith.constant dense<0.000000e+00> : vector<64xf32>
    %57 = vector.multi_reduction <add>, %53, %cst_39 [0] : vector<196x64xf32> to vector<64xf32>
    %58 = vector.shape_cast %57 : vector<64xf32> to vector<1x64xf32>
    %59 = arith.addf %44, %58 : vector<1x64xf32>
    %60 = arith.mulf %53, %53 : vector<196x64xf32>
    %cst_40 = arith.constant dense<0.000000e+00> : vector<64xf32>
    %61 = vector.multi_reduction <add>, %60, %cst_40 [0] : vector<196x64xf32> to vector<64xf32>
    %62 = vector.shape_cast %61 : vector<64xf32> to vector<1x64xf32>
    %63 = arith.addf %48, %62 : vector<1x64xf32>
    %c0_41 = arith.constant 0 : index
    %c0_42 = arith.constant 0 : index
    %64 = vector.load %arg6[%c0_41, %c0_42] : memref<64x64xf32, #tpu.memory_space<vmem>>, vector<64x64xf32>
    %cst_43 = arith.constant dense<0.000000e+00> : vector<1x64xf32>
    %65 = tpu.matmul %59, %64, %cst_43 {dimension_numbers = #tpu.dot_dimension_numbers<[1], [0], [0], [1], [0, 0, 1, 1], [], []>} : vector<1x64xf32>, vector<64x64xf32>, vector<1x64xf32> -> vector<1x64xf32>
    %cst_44 = arith.constant 3.98596931E-5 : f32
    %66 = vector.broadcast %cst_44 : f32 to vector<1x64xf32>
    %67 = arith.mulf %65, %66 : vector<1x64xf32>
    %cst_45 = arith.constant dense<0.000000e+00> : vector<1x64xf32>
    %68 = tpu.matmul %63, %64, %cst_45 {dimension_numbers = #tpu.dot_dimension_numbers<[1], [0], [0], [1], [0, 0, 1, 1], [], []>} : vector<1x64xf32>, vector<64x64xf32>, vector<1x64xf32> -> vector<1x64xf32>
    %cst_46 = arith.constant 3.98596931E-5 : f32
    %69 = vector.broadcast %cst_46 : f32 to vector<1x64xf32>
    %70 = arith.mulf %68, %69 : vector<1x64xf32>
    %71 = arith.mulf %67, %67 : vector<1x64xf32>
    %72 = arith.subf %70, %71 : vector<1x64xf32>
    %c0_47 = arith.constant 0 : index
    %c0_48 = arith.constant 0 : index
    %73 = vector.load %arg4[%c0_47, %c0_48] : memref<1x64xf32, #tpu.memory_space<vmem>>, vector<1x64xf32>
    %cst_49 = arith.constant 9.99999974E-6 : f32
    %74 = vector.broadcast %cst_49 : f32 to vector<1x64xf32>
    %75 = arith.addf %72, %74 : vector<1x64xf32>
    %76 = math.rsqrt %75 : vector<1x64xf32>
    %77 = arith.mulf %73, %76 : vector<1x64xf32>
    %c0_50 = arith.constant 0 : index
    %c0_51 = arith.constant 0 : index
    %78 = vector.load %arg5[%c0_50, %c0_51] : memref<1x64xf32, #tpu.memory_space<vmem>>, vector<1x64xf32>
    %79 = arith.mulf %67, %77 : vector<1x64xf32>
    %80 = arith.subf %78, %79 : vector<1x64xf32>
    %c0_52 = arith.constant 0 : index
    %c0_53 = arith.constant 0 : index
    %c0_54 = arith.constant 0 : index
    %81 = vector.load %arg8[%c0_52, %c0_53, %c0_54] : memref<4x196x64xf32, #tpu.memory_space<vmem>>, vector<1x196x64xf32>
    %82 = vector.shape_cast %81 : vector<1x196x64xf32> to vector<196x64xf32>
    %83 = vector.broadcast %77 : vector<1x64xf32> to vector<196x64xf32>
    %84 = arith.mulf %82, %83 : vector<196x64xf32>
    %85 = vector.broadcast %80 : vector<1x64xf32> to vector<196x64xf32>
    %86 = arith.addf %84, %85 : vector<196x64xf32>
    %c1_55 = arith.constant 1 : index
    %c0_56 = arith.constant 0 : index
    %c0_57 = arith.constant 0 : index
    %87 = vector.load %arg8[%c1_55, %c0_56, %c0_57] : memref<4x196x64xf32, #tpu.memory_space<vmem>>, vector<1x196x64xf32>
    %88 = vector.shape_cast %87 : vector<1x196x64xf32> to vector<196x64xf32>
    %89 = vector.broadcast %77 : vector<1x64xf32> to vector<196x64xf32>
    %90 = arith.mulf %88, %89 : vector<196x64xf32>
    %91 = vector.broadcast %80 : vector<1x64xf32> to vector<196x64xf32>
    %92 = arith.addf %90, %91 : vector<196x64xf32>
    %93 = arith.maximumf %86, %92 : vector<196x64xf32>
    %c2_58 = arith.constant 2 : index
    %c0_59 = arith.constant 0 : index
    %c0_60 = arith.constant 0 : index
    %94 = vector.load %arg8[%c2_58, %c0_59, %c0_60] : memref<4x196x64xf32, #tpu.memory_space<vmem>>, vector<1x196x64xf32>
    %95 = vector.shape_cast %94 : vector<1x196x64xf32> to vector<196x64xf32>
    %96 = vector.broadcast %77 : vector<1x64xf32> to vector<196x64xf32>
    %97 = arith.mulf %95, %96 : vector<196x64xf32>
    %98 = vector.broadcast %80 : vector<1x64xf32> to vector<196x64xf32>
    %99 = arith.addf %97, %98 : vector<196x64xf32>
    %100 = arith.maximumf %93, %99 : vector<196x64xf32>
    %c3_61 = arith.constant 3 : index
    %c0_62 = arith.constant 0 : index
    %c0_63 = arith.constant 0 : index
    %101 = vector.load %arg8[%c3_61, %c0_62, %c0_63] : memref<4x196x64xf32, #tpu.memory_space<vmem>>, vector<1x196x64xf32>
    %102 = vector.shape_cast %101 : vector<1x196x64xf32> to vector<196x64xf32>
    %103 = vector.broadcast %77 : vector<1x64xf32> to vector<196x64xf32>
    %104 = arith.mulf %102, %103 : vector<196x64xf32>
    %105 = vector.broadcast %80 : vector<1x64xf32> to vector<196x64xf32>
    %106 = arith.addf %104, %105 : vector<196x64xf32>
    %107 = arith.maximumf %100, %106 : vector<196x64xf32>
    %cst_64 = arith.constant 0.000000e+00 : f32
    %108 = vector.broadcast %cst_64 : f32 to vector<196x64xf32>
    %109 = arith.maximumf %107, %108 : vector<196x64xf32>
    %110 = arith.truncf %109 : vector<196x64xf32> to vector<196x64xbf16>
    %c0_65 = arith.constant 0 : index
    %c0_66 = arith.constant 0 : index
    %c0_67 = arith.constant 0 : index
    %111 = vector.load %arg7[%c0_65, %c0_66, %c0_67] : memref<1x196x64xbf16, #tpu.memory_space<vmem>>, vector<1x196x64xbf16>
    %112 = vector.shape_cast %111 : vector<1x196x64xbf16> to vector<196x64xbf16>
    %113 = vector.shape_cast %110 : vector<196x64xbf16> to vector<1x196x64xbf16>
    tpu.vector_store %arg7[%c0_65, %c0_66, %c0_67], %113 {strides = array<i32>} : memref<1x196x64xbf16, #tpu.memory_space<vmem>>, vector<1x196x64xbf16>,
    return
  }
  func.func @transform_0(%arg0: i32) -> (i32, i32, i32, i32) {
    %c0_i32 = arith.constant 0 : i32
    %c0_i32_0 = arith.constant 0 : i32
    %c0_i32_1 = arith.constant 0 : i32
    %c0_i32_2 = arith.constant 0 : i32
    return %arg0, %c0_i32, %c0_i32_0, %c0_i32_1 : i32, i32, i32, i32
  }
  func.func @transform_1(%arg0: i32) -> (i32, i32) {
    %c0_i32 = arith.constant 0 : i32
    %c0_i32_0 = arith.constant 0 : i32
    %c0_i32_1 = arith.constant 0 : i32
    return %c0_i32, %c0_i32_0 : i32, i32
  }
  func.func @transform_2(%arg0: i32) -> (i32, i32) {
    %c0_i32 = arith.constant 0 : i32
    %c0_i32_0 = arith.constant 0 : i32
    %c0_i32_1 = arith.constant 0 : i32
    return %c0_i32, %c0_i32_0 : i32, i32
  }
  func.func @transform_3(%arg0: i32) -> (i32, i32) {
    %c0_i32 = arith.constant 0 : i32
    %c0_i32_0 = arith.constant 0 : i32
    %c0_i32_1 = arith.constant 0 : i32
    return %c0_i32, %c0_i32_0 : i32, i32
  }
  func.func @transform_4(%arg0: i32) -> (i32, i32) {
    %c0_i32 = arith.constant 0 : i32
    %c0_i32_0 = arith.constant 0 : i32
    %c0_i32_1 = arith.constant 0 : i32
    return %c0_i32, %c0_i32_0 : i32, i32
  }
  func.func @transform_5(%arg0: i32) -> (i32, i32) {
    %c0_i32 = arith.constant 0 : i32
    %c0_i32_0 = arith.constant 0 : i32
    %c0_i32_1 = arith.constant 0 : i32
    return %c0_i32, %c0_i32_0 : i32, i32
  }
  func.func @transform_6(%arg0: i32) -> (i32, i32, i32) {
    %c0_i32 = arith.constant 0 : i32
    %c0_i32_0 = arith.constant 0 : i32
    %c0_i32_1 = arith.constant 0 : i32
    return %arg0, %c0_i32, %c0_i32_0 : i32, i32, i32
  }
}

module attributes {stable_mosaic.version = 11 : i64} {
  func.func @_conv_gn_relu_pool_kernel(%arg0: i32, %arg1: memref<1x4x25x1600xbf16, #tpu.memory_space<vmem>>, %arg2: memref<1600x64xbf16, #tpu.memory_space<vmem>>, %arg3: memref<1x64xf32, #tpu.memory_space<vmem>>, %arg4: memref<1x64xf32, #tpu.memory_space<vmem>>, %arg5: memref<1x64xf32, #tpu.memory_space<vmem>>, %arg6: memref<64x64xf32, #tpu.memory_space<vmem>>, %arg7: memref<1x25x64xbf16, #tpu.memory_space<vmem>>, %arg8: memref<4x25x64xf32, #tpu.memory_space<vmem>>) attributes {dimension_semantics = [#tpu.dimension_semantics<parallel>], iteration_bounds = array<i64: 2>, scalar_prefetch = 0 : i64, scratch_operands = 1 : i64, tpu.core_type = #tpu.core_type<tc>, window_params = [{transform_indices = @transform_0, window_bounds = array<i64: 1, 4, 25, 1600>}, {pipeline_mode = #tpu.pipeline_mode<synchronous>, transform_indices = @transform_1, window_bounds = array<i64: 1600, 64>}, {pipeline_mode = #tpu.pipeline_mode<synchronous>, transform_indices = @transform_2, window_bounds = array<i64: 1, 64>}, {pipeline_mode = #tpu.pipeline_mode<synchronous>, transform_indices = @transform_3, window_bounds = array<i64: 1, 64>}, {pipeline_mode = #tpu.pipeline_mode<synchronous>, transform_indices = @transform_4, window_bounds = array<i64: 1, 64>}, {pipeline_mode = #tpu.pipeline_mode<synchronous>, transform_indices = @transform_5, window_bounds = array<i64: 64, 64>}, {transform_indices = @transform_6, window_bounds = array<i64: 1, 25, 64>}]} {
    %c0 = arith.constant 0 : index
    %c0_0 = arith.constant 0 : index
    %0 = vector.load %arg2[%c0, %c0_0] : memref<1600x64xbf16, #tpu.memory_space<vmem>>, vector<1600x64xbf16>
    %c0_1 = arith.constant 0 : index
    %c0_2 = arith.constant 0 : index
    %1 = vector.load %arg3[%c0_1, %c0_2] : memref<1x64xf32, #tpu.memory_space<vmem>>, vector<1x64xf32>
    %cst = arith.constant 0.000000e+00 : f32
    %2 = vector.broadcast %cst : f32 to vector<1x64xf32>
    %cst_3 = arith.constant 0.000000e+00 : f32
    %3 = vector.broadcast %cst_3 : f32 to vector<1x64xf32>
    %c0_4 = arith.constant 0 : index
    %c0_5 = arith.constant 0 : index
    %c0_6 = arith.constant 0 : index
    %c0_7 = arith.constant 0 : index
    %4 = vector.load %arg1[%c0_4, %c0_5, %c0_6, %c0_7] : memref<1x4x25x1600xbf16, #tpu.memory_space<vmem>>, vector<1x1x25x1600xbf16>
    %5 = vector.shape_cast %4 : vector<1x1x25x1600xbf16> to vector<25x1600xbf16>
    %cst_8 = arith.constant dense<0.000000e+00> : vector<25x64xf32>
    %6 = tpu.matmul %5, %0, %cst_8 {dimension_numbers = #tpu.dot_dimension_numbers<[1], [0], [0], [1], [0, 0, 1, 1], [], []>} : vector<25x1600xbf16>, vector<1600x64xbf16>, vector<25x64xf32> -> vector<25x64xf32>
    %7 = vector.broadcast %1 : vector<1x64xf32> to vector<25x64xf32>
    %8 = arith.addf %6, %7 : vector<25x64xf32>
    %c0_9 = arith.constant 0 : index
    %c0_10 = arith.constant 0 : index
    %c0_11 = arith.constant 0 : index
    %9 = vector.load %arg8[%c0_9, %c0_10, %c0_11] : memref<4x25x64xf32, #tpu.memory_space<vmem>>, vector<1x25x64xf32>
    %10 = vector.shape_cast %9 : vector<1x25x64xf32> to vector<25x64xf32>
    %11 = vector.shape_cast %8 : vector<25x64xf32> to vector<1x25x64xf32>
    tpu.vector_store %arg8[%c0_9, %c0_10, %c0_11], %11 {strides = array<i32>} : memref<4x25x64xf32, #tpu.memory_space<vmem>>, vector<1x25x64xf32>,
    %cst_12 = arith.constant dense<0.000000e+00> : vector<64xf32>
    %12 = vector.multi_reduction <add>, %8, %cst_12 [0] : vector<25x64xf32> to vector<64xf32>
    %13 = vector.shape_cast %12 : vector<64xf32> to vector<1x64xf32>
    %14 = arith.addf %2, %13 : vector<1x64xf32>
    %15 = arith.mulf %8, %8 : vector<25x64xf32>
    %cst_13 = arith.constant dense<0.000000e+00> : vector<64xf32>
    %16 = vector.multi_reduction <add>, %15, %cst_13 [0] : vector<25x64xf32> to vector<64xf32>
    %17 = vector.shape_cast %16 : vector<64xf32> to vector<1x64xf32>
    %18 = arith.addf %3, %17 : vector<1x64xf32>
    %c0_14 = arith.constant 0 : index
    %c1 = arith.constant 1 : index
    %c0_15 = arith.constant 0 : index
    %c0_16 = arith.constant 0 : index
    %19 = vector.load %arg1[%c0_14, %c1, %c0_15, %c0_16] : memref<1x4x25x1600xbf16, #tpu.memory_space<vmem>>, vector<1x1x25x1600xbf16>
    %20 = vector.shape_cast %19 : vector<1x1x25x1600xbf16> to vector<25x1600xbf16>
    %cst_17 = arith.constant dense<0.000000e+00> : vector<25x64xf32>
    %21 = tpu.matmul %20, %0, %cst_17 {dimension_numbers = #tpu.dot_dimension_numbers<[1], [0], [0], [1], [0, 0, 1, 1], [], []>} : vector<25x1600xbf16>, vector<1600x64xbf16>, vector<25x64xf32> -> vector<25x64xf32>
    %22 = vector.broadcast %1 : vector<1x64xf32> to vector<25x64xf32>
    %23 = arith.addf %21, %22 : vector<25x64xf32>
    %c1_18 = arith.constant 1 : index
    %c0_19 = arith.constant 0 : index
    %c0_20 = arith.constant 0 : index
    %24 = vector.load %arg8[%c1_18, %c0_19, %c0_20] : memref<4x25x64xf32, #tpu.memory_space<vmem>>, vector<1x25x64xf32>
    %25 = vector.shape_cast %24 : vector<1x25x64xf32> to vector<25x64xf32>
    %26 = vector.shape_cast %23 : vector<25x64xf32> to vector<1x25x64xf32>
    tpu.vector_store %arg8[%c1_18, %c0_19, %c0_20], %26 {strides = array<i32>} : memref<4x25x64xf32, #tpu.memory_space<vmem>>, vector<1x25x64xf32>,
    %cst_21 = arith.constant dense<0.000000e+00> : vector<64xf32>
    %27 = vector.multi_reduction <add>, %23, %cst_21 [0] : vector<25x64xf32> to vector<64xf32>
    %28 = vector.shape_cast %27 : vector<64xf32> to vector<1x64xf32>
    %29 = arith.addf %14, %28 : vector<1x64xf32>
    %30 = arith.mulf %23, %23 : vector<25x64xf32>
    %cst_22 = arith.constant dense<0.000000e+00> : vector<64xf32>
    %31 = vector.multi_reduction <add>, %30, %cst_22 [0] : vector<25x64xf32> to vector<64xf32>
    %32 = vector.shape_cast %31 : vector<64xf32> to vector<1x64xf32>
    %33 = arith.addf %18, %32 : vector<1x64xf32>
    %c0_23 = arith.constant 0 : index
    %c2 = arith.constant 2 : index
    %c0_24 = arith.constant 0 : index
    %c0_25 = arith.constant 0 : index
    %34 = vector.load %arg1[%c0_23, %c2, %c0_24, %c0_25] : memref<1x4x25x1600xbf16, #tpu.memory_space<vmem>>, vector<1x1x25x1600xbf16>
    %35 = vector.shape_cast %34 : vector<1x1x25x1600xbf16> to vector<25x1600xbf16>
    %cst_26 = arith.constant dense<0.000000e+00> : vector<25x64xf32>
    %36 = tpu.matmul %35, %0, %cst_26 {dimension_numbers = #tpu.dot_dimension_numbers<[1], [0], [0], [1], [0, 0, 1, 1], [], []>} : vector<25x1600xbf16>, vector<1600x64xbf16>, vector<25x64xf32> -> vector<25x64xf32>
    %37 = vector.broadcast %1 : vector<1x64xf32> to vector<25x64xf32>
    %38 = arith.addf %36, %37 : vector<25x64xf32>
    %c2_27 = arith.constant 2 : index
    %c0_28 = arith.constant 0 : index
    %c0_29 = arith.constant 0 : index
    %39 = vector.load %arg8[%c2_27, %c0_28, %c0_29] : memref<4x25x64xf32, #tpu.memory_space<vmem>>, vector<1x25x64xf32>
    %40 = vector.shape_cast %39 : vector<1x25x64xf32> to vector<25x64xf32>
    %41 = vector.shape_cast %38 : vector<25x64xf32> to vector<1x25x64xf32>
    tpu.vector_store %arg8[%c2_27, %c0_28, %c0_29], %41 {strides = array<i32>} : memref<4x25x64xf32, #tpu.memory_space<vmem>>, vector<1x25x64xf32>,
    %cst_30 = arith.constant dense<0.000000e+00> : vector<64xf32>
    %42 = vector.multi_reduction <add>, %38, %cst_30 [0] : vector<25x64xf32> to vector<64xf32>
    %43 = vector.shape_cast %42 : vector<64xf32> to vector<1x64xf32>
    %44 = arith.addf %29, %43 : vector<1x64xf32>
    %45 = arith.mulf %38, %38 : vector<25x64xf32>
    %cst_31 = arith.constant dense<0.000000e+00> : vector<64xf32>
    %46 = vector.multi_reduction <add>, %45, %cst_31 [0] : vector<25x64xf32> to vector<64xf32>
    %47 = vector.shape_cast %46 : vector<64xf32> to vector<1x64xf32>
    %48 = arith.addf %33, %47 : vector<1x64xf32>
    %c0_32 = arith.constant 0 : index
    %c3 = arith.constant 3 : index
    %c0_33 = arith.constant 0 : index
    %c0_34 = arith.constant 0 : index
    %49 = vector.load %arg1[%c0_32, %c3, %c0_33, %c0_34] : memref<1x4x25x1600xbf16, #tpu.memory_space<vmem>>, vector<1x1x25x1600xbf16>
    %50 = vector.shape_cast %49 : vector<1x1x25x1600xbf16> to vector<25x1600xbf16>
    %cst_35 = arith.constant dense<0.000000e+00> : vector<25x64xf32>
    %51 = tpu.matmul %50, %0, %cst_35 {dimension_numbers = #tpu.dot_dimension_numbers<[1], [0], [0], [1], [0, 0, 1, 1], [], []>} : vector<25x1600xbf16>, vector<1600x64xbf16>, vector<25x64xf32> -> vector<25x64xf32>
    %52 = vector.broadcast %1 : vector<1x64xf32> to vector<25x64xf32>
    %53 = arith.addf %51, %52 : vector<25x64xf32>
    %c3_36 = arith.constant 3 : index
    %c0_37 = arith.constant 0 : index
    %c0_38 = arith.constant 0 : index
    %54 = vector.load %arg8[%c3_36, %c0_37, %c0_38] : memref<4x25x64xf32, #tpu.memory_space<vmem>>, vector<1x25x64xf32>
    %55 = vector.shape_cast %54 : vector<1x25x64xf32> to vector<25x64xf32>
    %56 = vector.shape_cast %53 : vector<25x64xf32> to vector<1x25x64xf32>
    tpu.vector_store %arg8[%c3_36, %c0_37, %c0_38], %56 {strides = array<i32>} : memref<4x25x64xf32, #tpu.memory_space<vmem>>, vector<1x25x64xf32>,
    %cst_39 = arith.constant dense<0.000000e+00> : vector<64xf32>
    %57 = vector.multi_reduction <add>, %53, %cst_39 [0] : vector<25x64xf32> to vector<64xf32>
    %58 = vector.shape_cast %57 : vector<64xf32> to vector<1x64xf32>
    %59 = arith.addf %44, %58 : vector<1x64xf32>
    %60 = arith.mulf %53, %53 : vector<25x64xf32>
    %cst_40 = arith.constant dense<0.000000e+00> : vector<64xf32>
    %61 = vector.multi_reduction <add>, %60, %cst_40 [0] : vector<25x64xf32> to vector<64xf32>
    %62 = vector.shape_cast %61 : vector<64xf32> to vector<1x64xf32>
    %63 = arith.addf %48, %62 : vector<1x64xf32>
    %c0_41 = arith.constant 0 : index
    %c0_42 = arith.constant 0 : index
    %64 = vector.load %arg6[%c0_41, %c0_42] : memref<64x64xf32, #tpu.memory_space<vmem>>, vector<64x64xf32>
    %cst_43 = arith.constant dense<0.000000e+00> : vector<1x64xf32>
    %65 = tpu.matmul %59, %64, %cst_43 {dimension_numbers = #tpu.dot_dimension_numbers<[1], [0], [0], [1], [0, 0, 1, 1], [], []>} : vector<1x64xf32>, vector<64x64xf32>, vector<1x64xf32> -> vector<1x64xf32>
    %cst_44 = arith.constant 3.125000e-04 : f32
    %66 = vector.broadcast %cst_44 : f32 to vector<1x64xf32>
    %67 = arith.mulf %65, %66 : vector<1x64xf32>
    %cst_45 = arith.constant dense<0.000000e+00> : vector<1x64xf32>
    %68 = tpu.matmul %63, %64, %cst_45 {dimension_numbers = #tpu.dot_dimension_numbers<[1], [0], [0], [1], [0, 0, 1, 1], [], []>} : vector<1x64xf32>, vector<64x64xf32>, vector<1x64xf32> -> vector<1x64xf32>
    %cst_46 = arith.constant 3.125000e-04 : f32
    %69 = vector.broadcast %cst_46 : f32 to vector<1x64xf32>
    %70 = arith.mulf %68, %69 : vector<1x64xf32>
    %71 = arith.mulf %67, %67 : vector<1x64xf32>
    %72 = arith.subf %70, %71 : vector<1x64xf32>
    %c0_47 = arith.constant 0 : index
    %c0_48 = arith.constant 0 : index
    %73 = vector.load %arg4[%c0_47, %c0_48] : memref<1x64xf32, #tpu.memory_space<vmem>>, vector<1x64xf32>
    %cst_49 = arith.constant 9.99999974E-6 : f32
    %74 = vector.broadcast %cst_49 : f32 to vector<1x64xf32>
    %75 = arith.addf %72, %74 : vector<1x64xf32>
    %76 = math.rsqrt %75 : vector<1x64xf32>
    %77 = arith.mulf %73, %76 : vector<1x64xf32>
    %c0_50 = arith.constant 0 : index
    %c0_51 = arith.constant 0 : index
    %78 = vector.load %arg5[%c0_50, %c0_51] : memref<1x64xf32, #tpu.memory_space<vmem>>, vector<1x64xf32>
    %79 = arith.mulf %67, %77 : vector<1x64xf32>
    %80 = arith.subf %78, %79 : vector<1x64xf32>
    %c0_52 = arith.constant 0 : index
    %c0_53 = arith.constant 0 : index
    %c0_54 = arith.constant 0 : index
    %81 = vector.load %arg8[%c0_52, %c0_53, %c0_54] : memref<4x25x64xf32, #tpu.memory_space<vmem>>, vector<1x25x64xf32>
    %82 = vector.shape_cast %81 : vector<1x25x64xf32> to vector<25x64xf32>
    %83 = vector.broadcast %77 : vector<1x64xf32> to vector<25x64xf32>
    %84 = arith.mulf %82, %83 : vector<25x64xf32>
    %85 = vector.broadcast %80 : vector<1x64xf32> to vector<25x64xf32>
    %86 = arith.addf %84, %85 : vector<25x64xf32>
    %c1_55 = arith.constant 1 : index
    %c0_56 = arith.constant 0 : index
    %c0_57 = arith.constant 0 : index
    %87 = vector.load %arg8[%c1_55, %c0_56, %c0_57] : memref<4x25x64xf32, #tpu.memory_space<vmem>>, vector<1x25x64xf32>
    %88 = vector.shape_cast %87 : vector<1x25x64xf32> to vector<25x64xf32>
    %89 = vector.broadcast %77 : vector<1x64xf32> to vector<25x64xf32>
    %90 = arith.mulf %88, %89 : vector<25x64xf32>
    %91 = vector.broadcast %80 : vector<1x64xf32> to vector<25x64xf32>
    %92 = arith.addf %90, %91 : vector<25x64xf32>
    %93 = arith.maximumf %86, %92 : vector<25x64xf32>
    %c2_58 = arith.constant 2 : index
    %c0_59 = arith.constant 0 : index
    %c0_60 = arith.constant 0 : index
    %94 = vector.load %arg8[%c2_58, %c0_59, %c0_60] : memref<4x25x64xf32, #tpu.memory_space<vmem>>, vector<1x25x64xf32>
    %95 = vector.shape_cast %94 : vector<1x25x64xf32> to vector<25x64xf32>
    %96 = vector.broadcast %77 : vector<1x64xf32> to vector<25x64xf32>
    %97 = arith.mulf %95, %96 : vector<25x64xf32>
    %98 = vector.broadcast %80 : vector<1x64xf32> to vector<25x64xf32>
    %99 = arith.addf %97, %98 : vector<25x64xf32>
    %100 = arith.maximumf %93, %99 : vector<25x64xf32>
    %c3_61 = arith.constant 3 : index
    %c0_62 = arith.constant 0 : index
    %c0_63 = arith.constant 0 : index
    %101 = vector.load %arg8[%c3_61, %c0_62, %c0_63] : memref<4x25x64xf32, #tpu.memory_space<vmem>>, vector<1x25x64xf32>
    %102 = vector.shape_cast %101 : vector<1x25x64xf32> to vector<25x64xf32>
    %103 = vector.broadcast %77 : vector<1x64xf32> to vector<25x64xf32>
    %104 = arith.mulf %102, %103 : vector<25x64xf32>
    %105 = vector.broadcast %80 : vector<1x64xf32> to vector<25x64xf32>
    %106 = arith.addf %104, %105 : vector<25x64xf32>
    %107 = arith.maximumf %100, %106 : vector<25x64xf32>
    %cst_64 = arith.constant 0.000000e+00 : f32
    %108 = vector.broadcast %cst_64 : f32 to vector<25x64xf32>
    %109 = arith.maximumf %107, %108 : vector<25x64xf32>
    %110 = arith.truncf %109 : vector<25x64xf32> to vector<25x64xbf16>
    %c0_65 = arith.constant 0 : index
    %c0_66 = arith.constant 0 : index
    %c0_67 = arith.constant 0 : index
    %111 = vector.load %arg7[%c0_65, %c0_66, %c0_67] : memref<1x25x64xbf16, #tpu.memory_space<vmem>>, vector<1x25x64xbf16>
    %112 = vector.shape_cast %111 : vector<1x25x64xbf16> to vector<25x64xbf16>
    %113 = vector.shape_cast %110 : vector<25x64xbf16> to vector<1x25x64xbf16>
    tpu.vector_store %arg7[%c0_65, %c0_66, %c0_67], %113 {strides = array<i32>} : memref<1x25x64xbf16, #tpu.memory_space<vmem>>, vector<1x25x64xbf16>,
    return
  }
  func.func @transform_0(%arg0: i32) -> (i32, i32, i32, i32) {
    %c0_i32 = arith.constant 0 : i32
    %c0_i32_0 = arith.constant 0 : i32
    %c0_i32_1 = arith.constant 0 : i32
    %c0_i32_2 = arith.constant 0 : i32
    return %arg0, %c0_i32, %c0_i32_0, %c0_i32_1 : i32, i32, i32, i32
  }
  func.func @transform_1(%arg0: i32) -> (i32, i32) {
    %c0_i32 = arith.constant 0 : i32
    %c0_i32_0 = arith.constant 0 : i32
    %c0_i32_1 = arith.constant 0 : i32
    return %c0_i32, %c0_i32_0 : i32, i32
  }
  func.func @transform_2(%arg0: i32) -> (i32, i32) {
    %c0_i32 = arith.constant 0 : i32
    %c0_i32_0 = arith.constant 0 : i32
    %c0_i32_1 = arith.constant 0 : i32
    return %c0_i32, %c0_i32_0 : i32, i32
  }
  func.func @transform_3(%arg0: i32) -> (i32, i32) {
    %c0_i32 = arith.constant 0 : i32
    %c0_i32_0 = arith.constant 0 : i32
    %c0_i32_1 = arith.constant 0 : i32
    return %c0_i32, %c0_i32_0 : i32, i32
  }
  func.func @transform_4(%arg0: i32) -> (i32, i32) {
    %c0_i32 = arith.constant 0 : i32
    %c0_i32_0 = arith.constant 0 : i32
    %c0_i32_1 = arith.constant 0 : i32
    return %c0_i32, %c0_i32_0 : i32, i32
  }
  func.func @transform_5(%arg0: i32) -> (i32, i32) {
    %c0_i32 = arith.constant 0 : i32
    %c0_i32_0 = arith.constant 0 : i32
    %c0_i32_1 = arith.constant 0 : i32
    return %c0_i32, %c0_i32_0 : i32, i32
  }
  func.func @transform_6(%arg0: i32) -> (i32, i32, i32) {
    %c0_i32 = arith.constant 0 : i32
    %c0_i32_0 = arith.constant 0 : i32
    %c0_i32_1 = arith.constant 0 : i32
    return %arg0, %c0_i32, %c0_i32_0 : i32, i32, i32
  }
}

module attributes {stable_mosaic.version = 11 : i64} {
  func.func @_mlp_kernel(%arg0: i32, %arg1: memref<2x1600xbf16, #tpu.memory_space<vmem>>, %arg2: memref<1600x384xbf16, #tpu.memory_space<vmem>>, %arg3: memref<1x384xf32, #tpu.memory_space<vmem>>, %arg4: memref<384x192xbf16, #tpu.memory_space<vmem>>, %arg5: memref<1x192xf32, #tpu.memory_space<vmem>>, %arg6: memref<192x128xbf16, #tpu.memory_space<vmem>>, %arg7: memref<1x128xf32, #tpu.memory_space<vmem>>, %arg8: memref<2x128xf32, #tpu.memory_space<vmem>>) attributes {dimension_semantics = [#tpu.dimension_semantics<parallel>], iteration_bounds = array<i64: 1>, scalar_prefetch = 0 : i64, scratch_operands = 0 : i64, tpu.core_type = #tpu.core_type<tc>, window_params = [{transform_indices = @transform_0, window_bounds = array<i64: 2, 1600>}, {pipeline_mode = #tpu.pipeline_mode<synchronous>, transform_indices = @transform_1, window_bounds = array<i64: 1600, 384>}, {pipeline_mode = #tpu.pipeline_mode<synchronous>, transform_indices = @transform_2, window_bounds = array<i64: 1, 384>}, {pipeline_mode = #tpu.pipeline_mode<synchronous>, transform_indices = @transform_3, window_bounds = array<i64: 384, 192>}, {pipeline_mode = #tpu.pipeline_mode<synchronous>, transform_indices = @transform_4, window_bounds = array<i64: 1, 192>}, {pipeline_mode = #tpu.pipeline_mode<synchronous>, transform_indices = @transform_5, window_bounds = array<i64: 192, 128>}, {pipeline_mode = #tpu.pipeline_mode<synchronous>, transform_indices = @transform_6, window_bounds = array<i64: 1, 128>}, {transform_indices = @transform_7, window_bounds = array<i64: 2, 128>}]} {
    %c0 = arith.constant 0 : index
    %c0_0 = arith.constant 0 : index
    %0 = vector.load %arg1[%c0, %c0_0] : memref<2x1600xbf16, #tpu.memory_space<vmem>>, vector<2x1600xbf16>
    %c0_1 = arith.constant 0 : index
    %c0_2 = arith.constant 0 : index
    %1 = vector.load %arg2[%c0_1, %c0_2] : memref<1600x384xbf16, #tpu.memory_space<vmem>>, vector<1600x384xbf16>
    %cst = arith.constant dense<0.000000e+00> : vector<2x384xf32>
    %2 = tpu.matmul %0, %1, %cst {dimension_numbers = #tpu.dot_dimension_numbers<[1], [0], [0], [1], [0, 0, 1, 1], [], []>} : vector<2x1600xbf16>, vector<1600x384xbf16>, vector<2x384xf32> -> vector<2x384xf32>
    %c0_3 = arith.constant 0 : index
    %c0_4 = arith.constant 0 : index
    %3 = vector.load %arg3[%c0_3, %c0_4] : memref<1x384xf32, #tpu.memory_space<vmem>>, vector<1x384xf32>
    %4 = vector.broadcast %3 : vector<1x384xf32> to vector<2x384xf32>
    %5 = arith.addf %2, %4 : vector<2x384xf32>
    %cst_5 = arith.constant 0.000000e+00 : f32
    %6 = vector.broadcast %cst_5 : f32 to vector<2x384xf32>
    %7 = arith.maximumf %5, %6 : vector<2x384xf32>
    %8 = arith.truncf %7 : vector<2x384xf32> to vector<2x384xbf16>
    %c0_6 = arith.constant 0 : index
    %c0_7 = arith.constant 0 : index
    %9 = vector.load %arg4[%c0_6, %c0_7] : memref<384x192xbf16, #tpu.memory_space<vmem>>, vector<384x192xbf16>
    %cst_8 = arith.constant dense<0.000000e+00> : vector<2x192xf32>
    %10 = tpu.matmul %8, %9, %cst_8 {dimension_numbers = #tpu.dot_dimension_numbers<[1], [0], [0], [1], [0, 0, 1, 1], [], []>} : vector<2x384xbf16>, vector<384x192xbf16>, vector<2x192xf32> -> vector<2x192xf32>
    %c0_9 = arith.constant 0 : index
    %c0_10 = arith.constant 0 : index
    %11 = vector.load %arg5[%c0_9, %c0_10] : memref<1x192xf32, #tpu.memory_space<vmem>>, vector<1x192xf32>
    %12 = vector.broadcast %11 : vector<1x192xf32> to vector<2x192xf32>
    %13 = arith.addf %10, %12 : vector<2x192xf32>
    %cst_11 = arith.constant 0.000000e+00 : f32
    %14 = vector.broadcast %cst_11 : f32 to vector<2x192xf32>
    %15 = arith.maximumf %13, %14 : vector<2x192xf32>
    %16 = arith.truncf %15 : vector<2x192xf32> to vector<2x192xbf16>
    %c0_12 = arith.constant 0 : index
    %c0_13 = arith.constant 0 : index
    %17 = vector.load %arg6[%c0_12, %c0_13] : memref<192x128xbf16, #tpu.memory_space<vmem>>, vector<192x128xbf16>
    %cst_14 = arith.constant dense<0.000000e+00> : vector<2x128xf32>
    %18 = tpu.matmul %16, %17, %cst_14 {dimension_numbers = #tpu.dot_dimension_numbers<[1], [0], [0], [1], [0, 0, 1, 1], [], []>} : vector<2x192xbf16>, vector<192x128xbf16>, vector<2x128xf32> -> vector<2x128xf32>
    %c0_15 = arith.constant 0 : index
    %c0_16 = arith.constant 0 : index
    %19 = vector.load %arg7[%c0_15, %c0_16] : memref<1x128xf32, #tpu.memory_space<vmem>>, vector<1x128xf32>
    %20 = vector.broadcast %19 : vector<1x128xf32> to vector<2x128xf32>
    %21 = arith.addf %18, %20 : vector<2x128xf32>
    %c0_17 = arith.constant 0 : index
    %c0_18 = arith.constant 0 : index
    %22 = vector.load %arg8[%c0_17, %c0_18] : memref<2x128xf32, #tpu.memory_space<vmem>>, vector<2x128xf32>
    tpu.vector_store %arg8[%c0_17, %c0_18], %21 {strides = array<i32>} : memref<2x128xf32, #tpu.memory_space<vmem>>, vector<2x128xf32>,
    return
  }
  func.func @transform_0(%arg0: i32) -> (i32, i32) {
    %c0_i32 = arith.constant 0 : i32
    %c0_i32_0 = arith.constant 0 : i32
    return %arg0, %c0_i32 : i32, i32
  }
  func.func @transform_1(%arg0: i32) -> (i32, i32) {
    %c0_i32 = arith.constant 0 : i32
    %c0_i32_0 = arith.constant 0 : i32
    %c0_i32_1 = arith.constant 0 : i32
    return %c0_i32, %c0_i32_0 : i32, i32
  }
  func.func @transform_2(%arg0: i32) -> (i32, i32) {
    %c0_i32 = arith.constant 0 : i32
    %c0_i32_0 = arith.constant 0 : i32
    %c0_i32_1 = arith.constant 0 : i32
    return %c0_i32, %c0_i32_0 : i32, i32
  }
  func.func @transform_3(%arg0: i32) -> (i32, i32) {
    %c0_i32 = arith.constant 0 : i32
    %c0_i32_0 = arith.constant 0 : i32
    %c0_i32_1 = arith.constant 0 : i32
    return %c0_i32, %c0_i32_0 : i32, i32
  }
  func.func @transform_4(%arg0: i32) -> (i32, i32) {
    %c0_i32 = arith.constant 0 : i32
    %c0_i32_0 = arith.constant 0 : i32
    %c0_i32_1 = arith.constant 0 : i32
    return %c0_i32, %c0_i32_0 : i32, i32
  }
  func.func @transform_5(%arg0: i32) -> (i32, i32) {
    %c0_i32 = arith.constant 0 : i32
    %c0_i32_0 = arith.constant 0 : i32
    %c0_i32_1 = arith.constant 0 : i32
    return %c0_i32, %c0_i32_0 : i32, i32
  }
  func.func @transform_6(%arg0: i32) -> (i32, i32) {
    %c0_i32 = arith.constant 0 : i32
    %c0_i32_0 = arith.constant 0 : i32
    %c0_i32_1 = arith.constant 0 : i32
    return %c0_i32, %c0_i32_0 : i32, i32
  }
  func.func @transform_7(%arg0: i32) -> (i32, i32) {
    %c0_i32 = arith.constant 0 : i32
    %c0_i32_0 = arith.constant 0 : i32
    return %arg0, %c0_i32 : i32, i32
  }
}

</mosaic_0001>

<llo_original>
// kernel: forward.3
$region0: #{forward.3}
  #allocation0 [shape = 'u32[]', space=smem, size = 0x4, offset = 0x4, fixed_abs, tag = 'smem constant byte address 0x4 - core index']
  #allocation1 [shape = 'u32[144,128]{1,0:T(1,128)}', space=vmem, size = 0x12000, scoped, tag = 'internal scratch']
  #allocation2 [shape = 'f32[4,196,64]{2,1,0:T(8,128)}', space=vmem, size = 0x64000, scoped, tag = 'scratch operand']
  %s0 = inlined_call_operand.vmem [shape: bf16[2,4,196,75], index: 0, kind: input, shape index: {}]
  %s1 = inlined_call_operand.vmem [shape: bf16[75,64], index: 1, kind: input, shape index: {}]
  %s2 = inlined_call_operand.vmem [shape: f32[1,64], index: 2, kind: input, shape index: {}]
  %s3 = inlined_call_operand.vmem [shape: f32[1,64], index: 3, kind: input, shape index: {}]
  %s4 = inlined_call_operand.vmem [shape: f32[1,64], index: 4, kind: input, shape index: {}]
  %s5 = inlined_call_operand.vmem [shape: f32[64,64], index: 5, kind: input, shape index: {}]
  %s6 = inlined_call_operand.vmem [shape: bf16[2,196,64], index: 6, kind: output, shape index: {}]
  %s7 = sld [smem:[#allocation0]]
  $region57: #{forward.3} parent=0
    _
  %s9 = ssub.s32 1, %s7
  %s10 = scalar_select 0, %s9, %s7
  loop: start=0, step=1, limit=4
  $region2: #{forward.3} parent=0 // loop_pre_header
    _
  $region3: #{forward.3} parent=0 // loop_header
    %s12 = sphi 0, %s16
    %p13 = scmp.ge.s32.totalorder %s12, 4
    %s22 = sphi 0, %s24
    %s25 = sphi 0, %s22
    %s26 = sphi 0, %s25
    %s42 = sphi 0, %s26
    %s46 = sphi 0, %s46
    %s48 = sphi 0, %s46
    %s49 = sphi 0, %s48
    %s63 = sphi 0, %s49
    %s67 = sphi 0, %s67
    %s69 = sphi 0, %s67
    %s70 = sphi 0, %s69
    %s84 = sphi 0, %s70
    %s88 = sphi 0, %s88
    %s90 = sphi 0, %s88
    %s91 = sphi 0, %s90
    %s105 = sphi 0, %s91
    %s109 = sphi 0, %s109
    %s111 = sphi 0, %s109
    %s112 = sphi 0, %s111
    %s126 = sphi 0, %s112
    %s130 = sphi 0, %s130
    %s132 = sphi 0, %s130
    %s133 = sphi 0, %s132
    %s147 = sphi 0, %s133
    %s153 = sphi 0, %s155
    %s156 = sphi 0, %s153
    %s157 = sphi 0, %s156
    %s173 = sphi 0, %s157
  $region4: #{forward.3} parent=0 // loop_header_branch
    %15 = sbr.rel (%p13) target = $region8
  $region5: #{forward.3} parent=0 // loop_body
    %s17 = ssub.s32 %s12, 1
    %s18 = ssub.s32 %s12, 2
    %s19 = sadd.s32 %s12, 1
    %s20 = ssub.s32 %s12, %s19
    %p21 = scmp.eq.s32.totalorder %s20, 0
    %s23 = sadd.s32 %s22, 1
    %s24 = scalar_select %p21, %s22, %s23
    %p27 = pneg %p21
    %p28 = scmp.eq.s32.totalorder %s12, 1
    %p29 = por %p27, %p28
    %p30 = scmp.ne.s32.totalorder %s22, %s25
    %p31 = scmp.eq.s32.totalorder %s12, 0
    %p32 = por %p30, %p31
    %p33 = scmp.ne.s32.totalorder %s22, %s25
    %p34 = scmp.eq.s32.totalorder %s17, 1
    %p35 = por %p33, %p34
    %p36 = scmp.ne.s32.totalorder %s25, %s26
    %p37 = scmp.eq.s32.totalorder %s17, 0
    %p38 = por %p36, %p37
    %p39 = scmp.ne.s32.totalorder %s25, %s26
    %p40 = scmp.eq.s32.totalorder %s18, 1
    %p41 = por %p39, %p40
    %p43 = scmp.ne.s32.totalorder %s26, %s42
    %p44 = scmp.eq.s32.totalorder %s18, 0
    %p45 = por %p43, %p44
    %s47 = sadd.s32 %s46, 1
    %p50 = scmp.eq.s32.totalorder %s12, 1
    %p51 = scmp.ne.s32.totalorder %s46, %s48
    %p52 = scmp.eq.s32.totalorder %s12, 0
    %p53 = por %p51, %p52
    %p54 = scmp.ne.s32.totalorder %s46, %s48
    %p55 = scmp.eq.s32.totalorder %s17, 1
    %p56 = por %p54, %p55
    %p57 = scmp.ne.s32.totalorder %s48, %s49
    %p58 = scmp.eq.s32.totalorder %s17, 0
    %p59 = por %p57, %p58
    %p60 = scmp.ne.s32.totalorder %s48, %s49
    %p61 = scmp.eq.s32.totalorder %s18, 1
    %p62 = por %p60, %p61
    %p64 = scmp.ne.s32.totalorder %s49, %s63
    %p65 = scmp.eq.s32.totalorder %s18, 0
    %p66 = por %p64, %p65
    %s68 = sadd.s32 %s67, 1
    %p71 = scmp.eq.s32.totalorder %s12, 1
    %p72 = scmp.ne.s32.totalorder %s67, %s69
    %p73 = scmp.eq.s32.totalorder %s12, 0
    %p74 = por %p72, %p73
    %p75 = scmp.ne.s32.totalorder %s67, %s69
    %p76 = scmp.eq.s32.totalorder %s17, 1
    %p77 = por %p75, %p76
    %p78 = scmp.ne.s32.totalorder %s69, %s70
    %p79 = scmp.eq.s32.totalorder %s17, 0
    %p80 = por %p78, %p79
    %p81 = scmp.ne.s32.totalorder %s69, %s70
    %p82 = scmp.eq.s32.totalorder %s18, 1
    %p83 = por %p81, %p82
    %p85 = scmp.ne.s32.totalorder %s70, %s84
    %p86 = scmp.eq.s32.totalorder %s18, 0
    %p87 = por %p85, %p86
    %s89 = sadd.s32 %s88, 1
    %p92 = scmp.eq.s32.totalorder %s12, 1
    %p93 = scmp.ne.s32.totalorder %s88, %s90
    %p94 = scmp.eq.s32.totalorder %s12, 0
    %p95 = por %p93, %p94
    %p96 = scmp.ne.s32.totalorder %s88, %s90
    %p97 = scmp.eq.s32.totalorder %s17, 1
    %p98 = por %p96, %p97
    %p99 = scmp.ne.s32.totalorder %s90, %s91
    %p100 = scmp.eq.s32.totalorder %s17, 0
    %p101 = por %p99, %p100
    %p102 = scmp.ne.s32.totalorder %s90, %s91
    %p103 = scmp.eq.s32.totalorder %s18, 1
    %p104 = por %p102, %p103
    %p106 = scmp.ne.s32.totalorder %s91, %s105
    %p107 = scmp.eq.s32.totalorder %s18, 0
    %p108 = por %p106, %p107
    %s110 = sadd.s32 %s109, 1
    %p113 = scmp.eq.s32.totalorder %s12, 1
    %p114 = scmp.ne.s32.totalorder %s109, %s111
    %p115 = scmp.eq.s32.totalorder %s12, 0
    %p116 = por %p114, %p115
    %p117 = scmp.ne.s32.totalorder %s109, %s111
    %p118 = scmp.eq.s32.totalorder %s17, 1
    %p119 = por %p117, %p118
    %p120 = scmp.ne.s32.totalorder %s111, %s112
    %p121 = scmp.eq.s32.totalorder %s17, 0
    %p122 = por %p120, %p121
    %p123 = scmp.ne.s32.totalorder %s111, %s112
    %p124 = scmp.eq.s32.totalorder %s18, 1
    %p125 = por %p123, %p124
    %p127 = scmp.ne.s32.totalorder %s112, %s126
    %p128 = scmp.eq.s32.totalorder %s18, 0
    %p129 = por %p127, %p128
    %s131 = sadd.s32 %s130, 1
    %p134 = scmp.eq.s32.totalorder %s12, 1
    %p135 = scmp.ne.s32.totalorder %s130, %s132
    %p136 = scmp.eq.s32.totalorder %s12, 0
    %p137 = por %p135, %p136
    %p138 = scmp.ne.s32.totalorder %s130, %s132
    %p139 = scmp.eq.s32.totalorder %s17, 1
    %p140 = por %p138, %p139
    %p141 = scmp.ne.s32.totalorder %s132, %s133
    %p142 = scmp.eq.s32.totalorder %s17, 0
    %p143 = por %p141, %p142
    %p144 = scmp.ne.s32.totalorder %s132, %s133
    %p145 = scmp.eq.s32.totalorder %s18, 1
    %p146 = por %p144, %p145
    %p148 = scmp.ne.s32.totalorder %s133, %s147
    %p149 = scmp.eq.s32.totalorder %s18, 0
    %p150 = por %p148, %p149
    %s151 = ssub.s32 %s12, %s19
    %p152 = scmp.eq.s32.totalorder %s151, 0
    %s154 = sadd.s32 %s153, 1
    %s155 = scalar_select %p152, %s153, %s154
    %p158 = pneg %p152
    %p159 = scmp.eq.s32.totalorder %s12, 1
    %p160 = por %p158, %p159
    %p161 = scmp.ne.s32.totalorder %s153, %s156
    %p162 = scmp.eq.s32.totalorder %s12, 0
    %p163 = por %p161, %p162
    %p164 = scmp.ne.s32.totalorder %s153, %s156
    %p165 = scmp.eq.s32.totalorder %s17, 1
    %p166 = por %p164, %p165
    %p167 = scmp.ne.s32.totalorder %s156, %s157
    %p168 = scmp.eq.s32.totalorder %s17, 0
    %p169 = por %p167, %p168
    %p170 = scmp.ne.s32.totalorder %s156, %s157
    %p171 = scmp.eq.s32.totalorder %s18, 1
    %p172 = por %p170, %p171
    %p174 = scmp.ne.s32.totalorder %s157, %s173
    %p175 = scmp.eq.s32.totalorder %s18, 0
    %p176 = por %p174, %p175
    %p177 = scmp.le.s32.totalorder 1, %s12
    %p178 = scmp.lt.s32.totalorder %s12, 3
    %p179 = pnand %p177, %p178
    %p180 = pneg %p179
    // Predicated region
    $region9: #{forward.3} parent=5 // pred_check
      _
    $region10: #{forward.3} parent=5 // pred_check_branch
      %182 = sbr.rel (%p179) target = $region12
    $region11: #{forward.3} parent=5 // pred_region
      %s183 = ssub.s32 %s12, 1
      // Predicated region
      $region13: #{forward.3} parent=11 // pred_check
        %p184 = pneg %p59
      $region14: #{forward.3} parent=11 // pred_check_branch
        %186 = sbr.rel (%p184) target = $region16
      $region15: #{forward.3} parent=11 // pred_region
        _
      $region16: #{forward.3} parent=11 // pred_fallthru
        _
      // Predicated region
      $region17: #{forward.3} parent=11 // pred_check
        %p187 = pneg %p80
      $region18: #{forward.3} parent=11 // pred_check_branch
        %189 = sbr.rel (%p187) target = $region20
      $region19: #{forward.3} parent=11 // pred_region
        _
      $region20: #{forward.3} parent=11 // pred_fallthru
        _
      // Predicated region
      $region21: #{forward.3} parent=11 // pred_check
        %p190 = pneg %p101
      $region22: #{forward.3} parent=11 // pred_check_branch
        %192 = sbr.rel (%p190) target = $region24
      $region23: #{forward.3} parent=11 // pred_region
        _
      $region24: #{forward.3} parent=11 // pred_fallthru
        _
      // Predicated region
      $region25: #{forward.3} parent=11 // pred_check
        %p193 = pneg %p122
      $region26: #{forward.3} parent=11 // pred_check_branch
        %195 = sbr.rel (%p193) target = $region28
      $region27: #{forward.3} parent=11 // pred_region
        _
      $region28: #{forward.3} parent=11 // pred_fallthru
        _
      // Predicated region
      $region29: #{forward.3} parent=11 // pred_check
        %p196 = pneg %p143
      $region30: #{forward.3} parent=11 // pred_check_branch
        %198 = sbr.rel (%p196) target = $region32
      $region31: #{forward.3} parent=11 // pred_region
        _
      $region32: #{forward.3} parent=11 // pred_fallthru
        _
    $region12: #{forward.3} parent=5 // pred_fallthru
      _
    %p199 = scmp.lt.s32.totalorder %s12, 2
    // Predicated region
    $region33: #{forward.3} parent=5 // pred_check
      %p200 = pneg %p199
    $region34: #{forward.3} parent=5 // pred_check_branch
      %202 = sbr.rel (%p200) target = $region36
    $region35: #{forward.3} parent=5 // pred_region
      // Predicated region
      $region37: #{forward.3} parent=35 // pred_check
        %p203 = pneg %p32
      $region38: #{forward.3} parent=35 // pred_check_branch
        %205 = sbr.rel (%p203) target = $region40
      $region39: #{forward.3} parent=35 // pred_region
        %p206 = scmp.lt.s32.totalorder %s12, 1
        %s207 = scalar_select %p206, %s12, 1
        %s208 = smul.addr %s207, 100
        %s209 = smul.addr %s208, 4
        %s210 = scalar_lea.vmem %s0, %s209
      $region40: #{forward.3} parent=35 // pred_fallthru
        _
    $region36: #{forward.3} parent=5 // pred_fallthru
      _
    %p211 = scmp.le.s32.totalorder 1, %s12
    %p212 = scmp.lt.s32.totalorder %s12, 3
    %p213 = pnand %p211, %p212
    %p214 = pneg %p213
    // Predicated region
    $region41: #{forward.3} parent=5 // pred_check
      _
    $region42: #{forward.3} parent=5 // pred_check_branch
      %216 = sbr.rel (%p213) target = $region44
    $region43: #{forward.3} parent=5 // pred_region
      %s217 = ssub.s32 %s12, 1
      %p218 = scmp.lt.s32.totalorder %s17, 1
      %s219 = scalar_select %p218, %s17, 1
      %s220 = smul.addr %s219, 100
      %s221 = smul.addr %s220, 4
      %s222 = scalar_lea.vmem %s0, %s221
      %p223 = pneg %p38
      %p224 = pneg %p35
      %p225 = pneg %p59
      %p226 = pneg %p56
      %p227 = pneg %p80
      %p228 = pneg %p77
      %p229 = pneg %p101
      %p230 = pneg %p98
      %p231 = pneg %p122
      %p232 = pneg %p119
      %p233 = pneg %p143
      %p234 = pneg %p140
      %p235 = pneg %p169
      %p236 = pneg %p166
      %p237 = scmp.lt.s32.totalorder %s17, 1
      %s238 = scalar_select %p237, %s17, 1
      %s239 = smul.addr %s238, 25
      %s240 = smul.addr %s239, 4
      %s241 = scalar_lea.vmem %s6, %s240
      %p242 = scmp.lt.s32.totalorder %s17, 1
      %s243 = scalar_select %p242, %s17, 1
      %s244 = smul.addr %s243, 100
      %s245 = smul.addr %s244, 4
      %s246 = scalar_lea.vmem %s0, %s245
      %p247 = scmp.lt.s32.totalorder %s17, 1
      %s248 = scalar_select %p247, %s17, 1
      %s249 = smul.addr %s248, 25
      %s250 = smul.addr %s249, 4
      %s251 = scalar_lea.vmem %s6, %s250
      %v253 = vld [vmem:[%s1] sm:$0xf]
      %v254 = vld [vmem:[%s1 + $0x4] sm:$0xf]
      %v255 = vld [vmem:[%s1 + $0x8] sm:$0xf]
      %v256 = vld [vmem:[%s1 + $0xc] sm:$0xf]
      %v257 = vld [vmem:[%s1 + $0x10] sm:$0xf]
      %v258 = vld [vmem:[%s1 + $0x14] sm:$0xf]
      %v259 = vld [vmem:[%s1 + $0x18] sm:$0xf]
      %v260 = vld [vmem:[%s1 + $0x1c] sm:$0xf]
      %v261 = vld [vmem:[%s1 + $0x20] sm:$0xf]
      %v262 = vld [vmem:[%s1 + $0x24] sm:$0x3]
      %v263 = vld [vmem:[%s2] sm:$0x1]
      %v264 = vld [vmem:[%s246] sm:$0xf]
      %v265 = vld [vmem:[%s246 + $0x4] sm:$0xf]
      %v266 = vld [vmem:[%s246 + $0x8] sm:$0xf]
      %v267 = vld [vmem:[%s246 + $0xc] sm:$0xf]
      %v268 = vld [vmem:[%s246 + $0x10] sm:$0xf]
      %v269 = vld [vmem:[%s246 + $0x14] sm:$0xf]
      %v270 = vld [vmem:[%s246 + $0x18] sm:$0xf]
      %v271 = vld [vmem:[%s246 + $0x1c] sm:$0xf]
      %v272 = vld [vmem:[%s246 + $0x20] sm:$0xf]
      %v273 = vld [vmem:[%s246 + $0x24] sm:$0xf]
      %v274 = vld [vmem:[%s246 + $0x28] sm:$0xf]
      %v275 = vld [vmem:[%s246 + $0x2c] sm:$0xf]
      %v276 = vld [vmem:[%s246 + $0x30] sm:$0xf]
      %v277 = vld [vmem:[%s246 + $0x34] sm:$0xf]
      %v278 = vld [vmem:[%s246 + $0x38] sm:$0xf]
      %v279 = vld [vmem:[%s246 + $0x3c] sm:$0xf]
      %v280 = vld [vmem:[%s246 + $0x40] sm:$0xf]
      %v281 = vld [vmem:[%s246 + $0x44] sm:$0xf]
      %v282 = vld [vmem:[%s246 + $0x48] sm:$0xf]
      %v283 = vld [vmem:[%s246 + $0x4c] sm:$0xf]
      %v284 = vld [vmem:[%s246 + $0x50] sm:$0xf]
      %v285 = vld [vmem:[%s246 + $0x54] sm:$0xf]
      %v286 = vld [vmem:[%s246 + $0x58] sm:$0xf]
      %v287 = vld [vmem:[%s246 + $0x5c] sm:$0xf]
      %v288 = vld [vmem:[%s246 + $0x60] sm:$0x3]
      %v290 = vlaneseq
      %v291 = vshrl.u32 %v290, 7
      %v292 = vsub.s32 0, %v291
      %v293 = vrot.slane %v263, %v292
      %v320 = vunpack.c.l.b16 %v264
      %v321 = vunpack.c.l.b16 %v265
      %v322 = vunpack.c.l.b16 %v266
      %v323 = vunpack.c.l.b16 %v267
      %v324 = vunpack.c.l.b16 %v268
      %v325 = vunpack.c.l.b16 %v269
      %v326 = vunpack.c.l.b16 %v270
      %v327 = vunpack.c.l.b16 %v271
      %v328 = vunpack.c.l.b16 %v272
      %v329 = vunpack.c.l.b16 %v273
      %v330 = vunpack.c.l.b16 %v274
      %v331 = vunpack.c.l.b16 %v275
      %v332 = vunpack.c.l.b16 %v276
      %v333 = vunpack.c.l.b16 %v277
      %v334 = vunpack.c.l.b16 %v278
      %v335 = vunpack.c.l.b16 %v279
      %v336 = vunpack.c.l.b16 %v280
      %v337 = vunpack.c.l.b16 %v281
      %v338 = vunpack.c.l.b16 %v282
      %v339 = vunpack.c.l.b16 %v283
      %v340 = vunpack.c.l.b16 %v284
      %v341 = vunpack.c.l.b16 %v285
      %v342 = vunpack.c.l.b16 %v286
      %v343 = vunpack.c.l.b16 %v287
      %v344 = vunpack.c.l.b16 %v288
      %v345 = vpack.c.b16 %v321, %v320
      %v346 = vpack.c.b16 %v323, %v322
      %v347 = vpack.c.b16 %v325, %v324
      %v348 = vpack.c.b16 %v327, %v326
      %v349 = vpack.c.b16 %v329, %v328
      %v350 = vpack.c.b16 %v331, %v330
      %v351 = vpack.c.b16 %v333, %v332
      %v352 = vpack.c.b16 %v335, %v334
      %v353 = vpack.c.b16 %v337, %v336
      %v354 = vpack.c.b16 %v339, %v338
      %v355 = vpack.c.b16 %v341, %v340
      %v356 = vpack.c.b16 %v343, %v342
      %v357 = vpack.c.b16 %v344, %v344
      %v368 = vunpack.c.l.b16 %v253
      %v369 = vunpack.c.l.b16 %v254
      %v370 = vunpack.c.l.b16 %v255
      %v371 = vunpack.c.l.b16 %v256
      %v372 = vunpack.c.l.b16 %v257
      %v373 = vunpack.c.l.b16 %v258
      %v374 = vunpack.c.l.b16 %v259
      %v375 = vunpack.c.l.b16 %v260
      %v376 = vunpack.c.l.b16 %v261
      %v377 = vunpack.c.l.b16 %v262
      %v378 = vpack.c.b16 %v369, %v368
      %v379 = vpack.c.b16 %v371, %v370
      %v380 = vpack.c.b16 %v373, %v372
      %v381 = vpack.c.b16 %v375, %v374
      %v382 = vpack.c.b16 %v377, %v376
      %vm387 = vcmask 613376
      %v389 = vsel %vm387, %v345, 0
      %v392 = vsel %vm387, %v346, 0
      %v395 = vsel %vm387, %v347, 0
      %v398 = vsel %vm387, %v348, 0
      %v401 = vsel %vm387, %v349, 0
      %v404 = vsel %vm387, %v350, 0
      %v407 = vsel %vm387, %v351, 0
      %v410 = vsel %vm387, %v352, 0
      %v413 = vsel %vm387, %v353, 0
      %v416 = vsel %vm387, %v354, 0
      %v419 = vsel %vm387, %v355, 0
      %v422 = vsel %vm387, %v356, 0
      %v425 = vsel %vm387, %v357, 0
      %vm427 = vcmask 1044480
      %vm428 = vcmask 1045504
      %v429 = vsel %vm427, 4294967295, 65535
      %v430 = vsel %vm428, %v429, 0
      %v432 = vand.u32 %v382, %v430
      %434 = vmatprep.subr.bf16.mxu0 0
      %435 = vmatpush1.bf16.msra.mxu0 0
      %436 = vmatprep.subr.bf16.mxu0 0
      %437 = vmatpush1.bf16.msra.mxu0 0
      %438 = vmatprep.subr.bf16.mxu0 0
      %439 = vmatpush1.bf16.msra.mxu0 0
      %440 = vmatprep.subr.bf16.mxu0 0
      %441 = vmatpush1.bf16.msra.mxu0 %v432
      %442 = vmatprep.subr.bf16.mxu0 0
      %443 = vmatpush1.bf16.msra.mxu0 %v381
      %444 = vmatprep.subr.bf16.mxu0 0
      %445 = vmatpush1.bf16.msra.mxu0 %v380
      %446 = vmatprep.subr.bf16.mxu0 0
      %447 = vmatpush1.bf16.msra.mxu0 %v379
      %448 = vmatprep.subr.bf16.mxu0 0
      %449 = vmatpush1.bf16.msra.mxu0 %v378
      %450 = vmatprep.subr.bf16.mxu0 0
      %451 = vmatpush2.bf16.msra.mxu0 0
      %452 = vmatprep.subr.bf16.mxu0 0
      %453 = vmatpush2.bf16.msra.mxu0 0
      %454 = vmatprep.subr.bf16.mxu0 0
      %455 = vmatpush2.bf16.msra.mxu0 0
      %456 = vmatprep.subr.bf16.mxu0 0
      %457 = vmatpush2.bf16.msra.mxu0 0
      %458 = vmatprep.subr.bf16.mxu0 0
      %459 = vmatpush2.bf16.msra.mxu0 0
      %460 = vmatprep.subr.bf16.mxu0 0
      %461 = vmatpush2.bf16.msra.mxu0 0
      %462 = vmatprep.subr.bf16.mxu0 0
      %463 = vmatpush2.bf16.msra.mxu0 0
      %464 = vmatprep.subr.bf16.mxu0 0
      %465 = vmatpush2.bf16.msra.mxu0 0
      %466 = vmatprep.mubr.bf16.mxu0 0
      %467 = vmatmul.mubr.bf16.gmra.mxu0 %v389
      %v468 = vpop.f32.mrf.mxu0
      %v469 = vadd.f32 %v293, %v468
      %v470 = vpop.f32.mrf.mxu0
      %v471 = vpop.f32.mrf.mxu0
      %v472 = vadd.f32 %v293, %v471
      %v473 = vpop.f32.mrf.mxu0
      %474 = vmatprep.mubr.bf16.mxu0 0
      %475 = vmatmul.mubr.bf16.gmra.mxu0 %v392
      %v476 = vpop.f32.mrf.mxu0
      %v477 = vadd.f32 %v293, %v476
      %v478 = vpop.f32.mrf.mxu0
      %v479 = vpop.f32.mrf.mxu0
      %v480 = vadd.f32 %v293, %v479
      %v481 = vpop.f32.mrf.mxu0
      %482 = vmatprep.mubr.bf16.mxu0 0
      %483 = vmatmul.mubr.bf16.gmra.mxu0 %v395
      %v484 = vpop.f32.mrf.mxu0
      %v485 = vadd.f32 %v293, %v484
      %v486 = vpop.f32.mrf.mxu0
      %v487 = vpop.f32.mrf.mxu0
      %v488 = vadd.f32 %v293, %v487
      %v489 = vpop.f32.mrf.mxu0
      %490 = vmatprep.mubr.bf16.mxu0 0
      %491 = vmatmul.mubr.bf16.gmra.mxu0 %v398
      %v492 = vpop.f32.mrf.mxu0
      %v493 = vadd.f32 %v293, %v492
      %v494 = vpop.f32.mrf.mxu0
      %v495 = vpop.f32.mrf.mxu0
      %v496 = vadd.f32 %v293, %v495
      %v497 = vpop.f32.mrf.mxu0
      %498 = vmatprep.mubr.bf16.mxu0 0
      %499 = vmatmul.mubr.bf16.gmra.mxu0 %v401
      %v500 = vpop.f32.mrf.mxu0
      %v501 = vadd.f32 %v293, %v500
      %v502 = vpop.f32.mrf.mxu0
      %v503 = vpop.f32.mrf.mxu0
      %v504 = vadd.f32 %v293, %v503
      %v505 = vpop.f32.mrf.mxu0
      %506 = vmatprep.mubr.bf16.mxu0 0
      %507 = vmatmul.mubr.bf16.gmra.mxu0 %v404
      %v508 = vpop.f32.mrf.mxu0
      %v509 = vadd.f32 %v293, %v508
      %v510 = vpop.f32.mrf.mxu0
      %v511 = vpop.f32.mrf.mxu0
      %v512 = vadd.f32 %v293, %v511
      %v513 = vpop.f32.mrf.mxu0
      %514 = vmatprep.mubr.bf16.mxu0 0
      %515 = vmatmul.mubr.bf16.gmra.mxu0 %v407
      %v516 = vpop.f32.mrf.mxu0
      %v517 = vadd.f32 %v293, %v516
      %v518 = vpop.f32.mrf.mxu0
      %v519 = vpop.f32.mrf.mxu0
      %v520 = vadd.f32 %v293, %v519
      %v521 = vpop.f32.mrf.mxu0
      %522 = vmatprep.mubr.bf16.mxu0 0
      %523 = vmatmul.mubr.bf16.gmra.mxu0 %v410
      %v524 = vpop.f32.mrf.mxu0
      %v525 = vadd.f32 %v293, %v524
      %v526 = vpop.f32.mrf.mxu0
      %v527 = vpop.f32.mrf.mxu0
      %v528 = vadd.f32 %v293, %v527
      %v529 = vpop.f32.mrf.mxu0
      %530 = vmatprep.mubr.bf16.mxu0 0
      %531 = vmatmul.mubr.bf16.gmra.mxu0 %v413
      %v532 = vpop.f32.mrf.mxu0
      %v533 = vadd.f32 %v293, %v532
      %v534 = vpop.f32.mrf.mxu0
      %v535 = vpop.f32.mrf.mxu0
      %v536 = vadd.f32 %v293, %v535
      %v537 = vpop.f32.mrf.mxu0
      %538 = vmatprep.mubr.bf16.mxu0 0
      %539 = vmatmul.mubr.bf16.gmra.mxu0 %v416
      %v540 = vpop.f32.mrf.mxu0
      %v541 = vadd.f32 %v293, %v540
      %v542 = vpop.f32.mrf.mxu0
      %v543 = vpop.f32.mrf.mxu0
      %v544 = vadd.f32 %v293, %v543
      %v545 = vpop.f32.mrf.mxu0
      %546 = vmatprep.mubr.bf16.mxu0 0
      %547 = vmatmul.mubr.bf16.gmra.mxu0 %v419
      %v548 = vpop.f32.mrf.mxu0
      %v549 = vadd.f32 %v293, %v548
      %v550 = vpop.f32.mrf.mxu0
      %v551 = vpop.f32.mrf.mxu0
      %v552 = vadd.f32 %v293, %v551
      %v553 = vpop.f32.mrf.mxu0
      %554 = vmatprep.mubr.bf16.mxu0 0
      %555 = vmatmul.mubr.bf16.gmra.mxu0 %v422
      %v556 = vpop.f32.mrf.mxu0
      %v557 = vadd.f32 %v293, %v556
      %v558 = vpop.f32.mrf.mxu0
      %v559 = vpop.f32.mrf.mxu0
      %v560 = vadd.f32 %v293, %v559
      %v561 = vpop.f32.mrf.mxu0
      %562 = vmatprep.mubr.bf16.mxu0 0
      %563 = vmatmul.mubr.bf16.gmra.mxu0 %v425
      %v564 = vpop.f32.mrf.mxu0
      %v565 = vadd.f32 %v293, %v564
      %v566 = vpop.f32.mrf.mxu0
      %v567 = vpop.f32.mrf.mxu0
      %v568 = vpop.f32.mrf.mxu0
      %569 = vdwg.mxu0
      %vm570 = vcmask 523264
      %571 = vst.msk [vmem:[#allocation2] sm:$0xff] %vm570, %v469
      %572 = vst.msk [vmem:[#allocation2 + $0x8] sm:$0xff] %vm570, %v472
      %573 = vst.msk [vmem:[#allocation2 + $0x10] sm:$0xff] %vm570, %v477
      %574 = vst.msk [vmem:[#allocation2 + $0x18] sm:$0xff] %vm570, %v480
      %575 = vst.msk [vmem:[#allocation2 + $0x20] sm:$0xff] %vm570, %v485
      %576 = vst.msk [vmem:[#allocation2 + $0x28] sm:$0xff] %vm570, %v488
      %577 = vst.msk [vmem:[#allocation2 + $0x30] sm:$0xff] %vm570, %v493
      %578 = vst.msk [vmem:[#allocation2 + $0x38] sm:$0xff] %vm570, %v496
      %579 = vst.msk [vmem:[#allocation2 + $0x40] sm:$0xff] %vm570, %v501
      %580 = vst.msk [vmem:[#allocation2 + $0x48] sm:$0xff] %vm570, %v504
      %581 = vst.msk [vmem:[#allocation2 + $0x50] sm:$0xff] %vm570, %v509
      %582 = vst.msk [vmem:[#allocation2 + $0x58] sm:$0xff] %vm570, %v512
      %583 = vst.msk [vmem:[#allocation2 + $0x60] sm:$0xff] %vm570, %v517
      %584 = vst.msk [vmem:[#allocation2 + $0x68] sm:$0xff] %vm570, %v520
      %585 = vst.msk [vmem:[#allocation2 + $0x70] sm:$0xff] %vm570, %v525
      %586 = vst.msk [vmem:[#allocation2 + $0x78] sm:$0xff] %vm570, %v528
      %587 = vst.msk [vmem:[#allocation2 + $0x80] sm:$0xff] %vm570, %v533
      %588 = vst.msk [vmem:[#allocation2 + $0x88] sm:$0xff] %vm570, %v536
      %589 = vst.msk [vmem:[#allocation2 + $0x90] sm:$0xff] %vm570, %v541
      %590 = vst.msk [vmem:[#allocation2 + $0x98] sm:$0xff] %vm570, %v544
      %591 = vst.msk [vmem:[#allocation2 + $0xa0] sm:$0xff] %vm570, %v549
      %592 = vst.msk [vmem:[#allocation2 + $0xa8] sm:$0xff] %vm570, %v552
      %593 = vst.msk [vmem:[#allocation2 + $0xb0] sm:$0xff] %vm570, %v557
      %594 = vst.msk [vmem:[#allocation2 + $0xb8] sm:$0xff] %vm570, %v560
      %vm595 = vcmask 519168
      %596 = vst.msk [vmem:[#allocation2 + $0xc0] sm:$0xf] %vm595, %v565
      %v597 = vsel %vm570, %v469, 0.0
      %v598 = vsel %vm570, %v472, 0.0
      %v599 = vadd.f32 %v597, %v598
      %v600 = vsel %vm570, %v477, 0.0
      %v601 = vadd.f32 %v599, %v600
      %v602 = vsel %vm570, %v480, 0.0
      %v603 = vadd.f32 %v601, %v602
      %v604 = vsel %vm570, %v485, 0.0
      %v605 = vadd.f32 %v603, %v604
      %v606 = vsel %vm570, %v488, 0.0
      %v607 = vadd.f32 %v605, %v606
      %v608 = vsel %vm570, %v493, 0.0
      %v609 = vadd.f32 %v607, %v608
      %v610 = vsel %vm570, %v496, 0.0
      %v611 = vadd.f32 %v609, %v610
      %v612 = vsel %vm570, %v501, 0.0
      %v613 = vadd.f32 %v611, %v612
      %v614 = vsel %vm570, %v504, 0.0
      %v615 = vadd.f32 %v613, %v614
      %v616 = vsel %vm570, %v509, 0.0
      %v617 = vadd.f32 %v615, %v616
      %v618 = vsel %vm570, %v512, 0.0
      %v619 = vadd.f32 %v617, %v618
      %v620 = vsel %vm570, %v517, 0.0
      %v621 = vadd.f32 %v619, %v620
      %v622 = vsel %vm570, %v520, 0.0
      %v623 = vadd.f32 %v621, %v622
      %v624 = vsel %vm570, %v525, 0.0
      %v625 = vadd.f32 %v623, %v624
      %v626 = vsel %vm570, %v528, 0.0
      %v627 = vadd.f32 %v625, %v626
      %v628 = vsel %vm570, %v533, 0.0
      %v629 = vadd.f32 %v627, %v628
      %v630 = vsel %vm570, %v536, 0.0
      %v631 = vadd.f32 %v629, %v630
      %v632 = vsel %vm570, %v541, 0.0
      %v633 = vadd.f32 %v631, %v632
      %v634 = vsel %vm570, %v544, 0.0
      %v635 = vadd.f32 %v633, %v634
      %v636 = vsel %vm570, %v549, 0.0
      %v637 = vadd.f32 %v635, %v636
      %v638 = vsel %vm570, %v552, 0.0
      %v639 = vadd.f32 %v637, %v638
      %v640 = vsel %vm570, %v557, 0.0
      %v641 = vadd.f32 %v639, %v640
      %v642 = vsel %vm570, %v560, 0.0
      %v643 = vadd.f32 %v641, %v642
      %v644 = vsel %vm595, %v565, 0.0
      %v645 = vadd.f32 %v643, %v644
      %v646 = vrot.slane %v645, 4
      %v647 = vadd.f32 %v645, %v646
      %v648 = vrot.slane %v647, 2
      %v649 = vadd.f32 %v647, %v648
      %v650 = vrot.slane %v649, 1
      %v651 = vadd.f32 %v649, %v650
      %v652 = vadd.f32 %v651, 0.0
      %v653 = vmul.f32 %v469, %v469
      %v654 = vmul.f32 %v472, %v472
      %v655 = vmul.f32 %v477, %v477
      %v656 = vmul.f32 %v480, %v480
      %v657 = vmul.f32 %v485, %v485
      %v658 = vmul.f32 %v488, %v488
      %v659 = vmul.f32 %v493, %v493
      %v660 = vmul.f32 %v496, %v496
      %v661 = vmul.f32 %v501, %v501
      %v662 = vmul.f32 %v504, %v504
      %v663 = vmul.f32 %v509, %v509
      %v664 = vmul.f32 %v512, %v512
      %v665 = vmul.f32 %v517, %v517
      %v666 = vmul.f32 %v520, %v520
      %v667 = vmul.f32 %v525, %v525
      %v668 = vmul.f32 %v528, %v528
      %v669 = vmul.f32 %v533, %v533
      %v670 = vmul.f32 %v536, %v536
      %v671 = vmul.f32 %v541, %v541
      %v672 = vmul.f32 %v544, %v544
      %v673 = vmul.f32 %v549, %v549
      %v674 = vmul.f32 %v552, %v552
      %v675 = vmul.f32 %v557, %v557
      %v676 = vmul.f32 %v560, %v560
      %v677 = vmul.f32 %v565, %v565
      %v678 = vsel %vm570, %v653, 0.0
      %v679 = vsel %vm570, %v654, 0.0
      %v680 = vadd.f32 %v678, %v679
      %v681 = vsel %vm570, %v655, 0.0
      %v682 = vadd.f32 %v680, %v681
      %v683 = vsel %vm570, %v656, 0.0
      %v684 = vadd.f32 %v682, %v683
      %v685 = vsel %vm570, %v657, 0.0
      %v686 = vadd.f32 %v684, %v685
      %v687 = vsel %vm570, %v658, 0.0
      %v688 = vadd.f32 %v686, %v687
      %v689 = vsel %vm570, %v659, 0.0
      %v690 = vadd.f32 %v688, %v689
      %v691 = vsel %vm570, %v660, 0.0
      %v692 = vadd.f32 %v690, %v691
      %v693 = vsel %vm570, %v661, 0.0
      %v694 = vadd.f32 %v692, %v693
      %v695 = vsel %vm570, %v662, 0.0
      %v696 = vadd.f32 %v694, %v695
      %v697 = vsel %vm570, %v663, 0.0
      %v698 = vadd.f32 %v696, %v697
      %v699 = vsel %vm570, %v664, 0.0
      %v700 = vadd.f32 %v698, %v699
      %v701 = vsel %vm570, %v665, 0.0
      %v702 = vadd.f32 %v700, %v701
      %v703 = vsel %vm570, %v666, 0.0
      %v704 = vadd.f32 %v702, %v703
      %v705 = vsel %vm570, %v667, 0.0
      %v706 = vadd.f32 %v704, %v705
      %v707 = vsel %vm570, %v668, 0.0
      %v708 = vadd.f32 %v706, %v707
      %v709 = vsel %vm570, %v669, 0.0
      %v710 = vadd.f32 %v708, %v709
      %v711 = vsel %vm570, %v670, 0.0
      %v712 = vadd.f32 %v710, %v711
      %v713 = vsel %vm570, %v671, 0.0
      %v714 = vadd.f32 %v712, %v713
      %v715 = vsel %vm570, %v672, 0.0
      %v716 = vadd.f32 %v714, %v715
      %v717 = vsel %vm570, %v673, 0.0
      %v718 = vadd.f32 %v716, %v717
      %v719 = vsel %vm570, %v674, 0.0
      %v720 = vadd.f32 %v718, %v719
      %v721 = vsel %vm570, %v675, 0.0
      %v722 = vadd.f32 %v720, %v721
      %v723 = vsel %vm570, %v676, 0.0
      %v724 = vadd.f32 %v722, %v723
      %v725 = vsel %vm595, %v677, 0.0
      %v726 = vadd.f32 %v724, %v725
      %v727 = vrot.slane %v726, 4
      %v728 = vadd.f32 %v726, %v727
      %v729 = vrot.slane %v728, 2
      %v730 = vadd.f32 %v728, %v729
      %v731 = vrot.slane %v730, 1
      %v732 = vadd.f32 %v730, %v731
      %v733 = vadd.f32 %v732, 0.0
      %s734 = scalar_lea.vmem %s246, 100
      %v735 = vld [vmem:[%s734] sm:$0xf]
      %v736 = vld [vmem:[%s734 + $0x4] sm:$0xf]
      %v737 = vld [vmem:[%s734 + $0x8] sm:$0xf]
      %v738 = vld [vmem:[%s734 + $0xc] sm:$0xf]
      %v739 = vld [vmem:[%s734 + $0x10] sm:$0xf]
      %v740 = vld [vmem:[%s734 + $0x14] sm:$0xf]
      %v741 = vld [vmem:[%s734 + $0x18] sm:$0xf]
      %v742 = vld [vmem:[%s734 + $0x1c] sm:$0xf]
      %v743 = vld [vmem:[%s734 + $0x20] sm:$0xf]
      %v744 = vld [vmem:[%s734 + $0x24] sm:$0xf]
      %v745 = vld [vmem:[%s734 + $0x28] sm:$0xf]
      %v746 = vld [vmem:[%s734 + $0x2c] sm:$0xf]
      %v747 = vld [vmem:[%s734 + $0x30] sm:$0xf]
      %v748 = vld [vmem:[%s734 + $0x34] sm:$0xf]
      %v749 = vld [vmem:[%s734 + $0x38] sm:$0xf]
      %v750 = vld [vmem:[%s734 + $0x3c] sm:$0xf]
      %v751 = vld [vmem:[%s734 + $0x40] sm:$0xf]
      %v752 = vld [vmem:[%s734 + $0x44] sm:$0xf]
      %v753 = vld [vmem:[%s734 + $0x48] sm:$0xf]
      %v754 = vld [vmem:[%s734 + $0x4c] sm:$0xf]
      %v755 = vld [vmem:[%s734 + $0x50] sm:$0xf]
      %v756 = vld [vmem:[%s734 + $0x54] sm:$0xf]
      %v757 = vld [vmem:[%s734 + $0x58] sm:$0xf]
      %v758 = vld [vmem:[%s734 + $0x5c] sm:$0xf]
      %v759 = vld [vmem:[%s734 + $0x60] sm:$0x3]
      %v785 = vunpack.c.l.b16 %v735
      %v786 = vunpack.c.l.b16 %v736
      %v787 = vunpack.c.l.b16 %v737
      %v788 = vunpack.c.l.b16 %v738
      %v789 = vunpack.c.l.b16 %v739
      %v790 = vunpack.c.l.b16 %v740
      %v791 = vunpack.c.l.b16 %v741
      %v792 = vunpack.c.l.b16 %v742
      %v793 = vunpack.c.l.b16 %v743
      %v794 = vunpack.c.l.b16 %v744
      %v795 = vunpack.c.l.b16 %v745
      %v796 = vunpack.c.l.b16 %v746
      %v797 = vunpack.c.l.b16 %v747
      %v798 = vunpack.c.l.b16 %v748
      %v799 = vunpack.c.l.b16 %v749
      %v800 = vunpack.c.l.b16 %v750
      %v801 = vunpack.c.l.b16 %v751
      %v802 = vunpack.c.l.b16 %v752
      %v803 = vunpack.c.l.b16 %v753
      %v804 = vunpack.c.l.b16 %v754
      %v805 = vunpack.c.l.b16 %v755
      %v806 = vunpack.c.l.b16 %v756
      %v807 = vunpack.c.l.b16 %v757
      %v808 = vunpack.c.l.b16 %v758
      %v809 = vunpack.c.l.b16 %v759
      %v810 = vpack.c.b16 %v786, %v785
      %v811 = vpack.c.b16 %v788, %v787
      %v812 = vpack.c.b16 %v790, %v789
      %v813 = vpack.c.b16 %v792, %v791
      %v814 = vpack.c.b16 %v794, %v793
      %v815 = vpack.c.b16 %v796, %v795
      %v816 = vpack.c.b16 %v798, %v797
      %v817 = vpack.c.b16 %v800, %v799
      %v818 = vpack.c.b16 %v802, %v801
      %v819 = vpack.c.b16 %v804, %v803
      %v820 = vpack.c.b16 %v806, %v805
      %v821 = vpack.c.b16 %v808, %v807
      %v822 = vpack.c.b16 %v809, %v809
      %v824 = vsel %vm387, %v810, 0
      %v827 = vsel %vm387, %v811, 0
      %v830 = vsel %vm387, %v812, 0
      %v833 = vsel %vm387, %v813, 0
      %v836 = vsel %vm387, %v814, 0
      %v839 = vsel %vm387, %v815, 0
      %v842 = vsel %vm387, %v816, 0
      %v845 = vsel %vm387, %v817, 0
      %v848 = vsel %vm387, %v818, 0
      %v851 = vsel %vm387, %v819, 0
      %v854 = vsel %vm387, %v820, 0
      %v857 = vsel %vm387, %v821, 0
      %v860 = vsel %vm387, %v822, 0
      %862 = vmatprep.subr.bf16.mxu0 0
      %863 = vmatpush1.bf16.msra.mxu0 0
      %864 = vmatprep.subr.bf16.mxu0 0
      %865 = vmatpush1.bf16.msra.mxu0 0
      %866 = vmatprep.subr.bf16.mxu0 0
      %867 = vmatpush1.bf16.msra.mxu0 0
      %868 = vmatprep.subr.bf16.mxu0 0
      %869 = vmatpush1.bf16.msra.mxu0 %v432
      %870 = vmatprep.subr.bf16.mxu0 0
      %871 = vmatpush1.bf16.msra.mxu0 %v381
      %872 = vmatprep.subr.bf16.mxu0 0
      %873 = vmatpush1.bf16.msra.mxu0 %v380
      %874 = vmatprep.subr.bf16.mxu0 0
      %875 = vmatpush1.bf16.msra.mxu0 %v379
      %876 = vmatprep.subr.bf16.mxu0 0
      %877 = vmatpush1.bf16.msra.mxu0 %v378
      %878 = vmatprep.subr.bf16.mxu0 0
      %879 = vmatpush2.bf16.msra.mxu0 0
      %880 = vmatprep.subr.bf16.mxu0 0
      %881 = vmatpush2.bf16.msra.mxu0 0
      %882 = vmatprep.subr.bf16.mxu0 0
      %883 = vmatpush2.bf16.msra.mxu0 0
      %884 = vmatprep.subr.bf16.mxu0 0
      %885 = vmatpush2.bf16.msra.mxu0 0
      %886 = vmatprep.subr.bf16.mxu0 0
      %887 = vmatpush2.bf16.msra.mxu0 0
      %888 = vmatprep.subr.bf16.mxu0 0
      %889 = vmatpush2.bf16.msra.mxu0 0
      %890 = vmatprep.subr.bf16.mxu0 0
      %891 = vmatpush2.bf16.msra.mxu0 0
      %892 = vmatprep.subr.bf16.mxu0 0
      %893 = vmatpush2.bf16.msra.mxu0 0
      %894 = vmatprep.mubr.bf16.mxu0 0
      %895 = vmatmul.mubr.bf16.gmra.mxu0 %v824
      %v896 = vpop.f32.mrf.mxu0
      %v897 = vadd.f32 %v293, %v896
      %v898 = vpop.f32.mrf.mxu0
      %v899 = vpop.f32.mrf.mxu0
      %v900 = vadd.f32 %v293, %v899
      %v901 = vpop.f32.mrf.mxu0
      %902 = vmatprep.mubr.bf16.mxu0 0
      %903 = vmatmul.mubr.bf16.gmra.mxu0 %v827
      %v904 = vpop.f32.mrf.mxu0
      %v905 = vadd.f32 %v293, %v904
      %v906 = vpop.f32.mrf.mxu0
      %v907 = vpop.f32.mrf.mxu0
      %v908 = vadd.f32 %v293, %v907
      %v909 = vpop.f32.mrf.mxu0
      %910 = vmatprep.mubr.bf16.mxu0 0
      %911 = vmatmul.mubr.bf16.gmra.mxu0 %v830
      %v912 = vpop.f32.mrf.mxu0
      %v913 = vadd.f32 %v293, %v912
      %v914 = vpop.f32.mrf.mxu0
      %v915 = vpop.f32.mrf.mxu0
      %v916 = vadd.f32 %v293, %v915
      %v917 = vpop.f32.mrf.mxu0
      %918 = vmatprep.mubr.bf16.mxu0 0
      %919 = vmatmul.mubr.bf16.gmra.mxu0 %v833
      %v920 = vpop.f32.mrf.mxu0
      %v921 = vadd.f32 %v293, %v920
      %v922 = vpop.f32.mrf.mxu0
      %v923 = vpop.f32.mrf.mxu0
      %v924 = vadd.f32 %v293, %v923
      %v925 = vpop.f32.mrf.mxu0
      %926 = vmatprep.mubr.bf16.mxu0 0
      %927 = vmatmul.mubr.bf16.gmra.mxu0 %v836
      %v928 = vpop.f32.mrf.mxu0
      %v929 = vadd.f32 %v293, %v928
      %v930 = vpop.f32.mrf.mxu0
      %v931 = vpop.f32.mrf.mxu0
      %v932 = vadd.f32 %v293, %v931
      %v933 = vpop.f32.mrf.mxu0
      %934 = vmatprep.mubr.bf16.mxu0 0
      %935 = vmatmul.mubr.bf16.gmra.mxu0 %v839
      %v936 = vpop.f32.mrf.mxu0
      %v937 = vadd.f32 %v293, %v936
      %v938 = vpop.f32.mrf.mxu0
      %v939 = vpop.f32.mrf.mxu0
      %v940 = vadd.f32 %v293, %v939
      %v941 = vpop.f32.mrf.mxu0
      %942 = vmatprep.mubr.bf16.mxu0 0
      %943 = vmatmul.mubr.bf16.gmra.mxu0 %v842
      %v944 = vpop.f32.mrf.mxu0
      %v945 = vadd.f32 %v293, %v944
      %v946 = vpop.f32.mrf.mxu0
      %v947 = vpop.f32.mrf.mxu0
      %v948 = vadd.f32 %v293, %v947
      %v949 = vpop.f32.mrf.mxu0
      %950 = vmatprep.mubr.bf16.mxu0 0
      %951 = vmatmul.mubr.bf16.gmra.mxu0 %v845
      %v952 = vpop.f32.mrf.mxu0
      %v953 = vadd.f32 %v293, %v952
      %v954 = vpop.f32.mrf.mxu0
      %v955 = vpop.f32.mrf.mxu0
      %v956 = vadd.f32 %v293, %v955
      %v957 = vpop.f32.mrf.mxu0
      %958 = vmatprep.mubr.bf16.mxu0 0
      %959 = vmatmul.mubr.bf16.gmra.mxu0 %v848
      %v960 = vpop.f32.mrf.mxu0
      %v961 = vadd.f32 %v293, %v960
      %v962 = vpop.f32.mrf.mxu0
      %v963 = vpop.f32.mrf.mxu0
      %v964 = vadd.f32 %v293, %v963
      %v965 = vpop.f32.mrf.mxu0
      %966 = vmatprep.mubr.bf16.mxu0 0
      %967 = vmatmul.mubr.bf16.gmra.mxu0 %v851
      %v968 = vpop.f32.mrf.mxu0
      %v969 = vadd.f32 %v293, %v968
      %v970 = vpop.f32.mrf.mxu0
      %v971 = vpop.f32.mrf.mxu0
      %v972 = vadd.f32 %v293, %v971
      %v973 = vpop.f32.mrf.mxu0
      %974 = vmatprep.mubr.bf16.mxu0 0
      %975 = vmatmul.mubr.bf16.gmra.mxu0 %v854
      %v976 = vpop.f32.mrf.mxu0
      %v977 = vadd.f32 %v293, %v976
      %v978 = vpop.f32.mrf.mxu0
      %v979 = vpop.f32.mrf.mxu0
      %v980 = vadd.f32 %v293, %v979
      %v981 = vpop.f32.mrf.mxu0
      %982 = vmatprep.mubr.bf16.mxu0 0
      %983 = vmatmul.mubr.bf16.gmra.mxu0 %v857
      %v984 = vpop.f32.mrf.mxu0
      %v985 = vadd.f32 %v293, %v984
      %v986 = vpop.f32.mrf.mxu0
      %v987 = vpop.f32.mrf.mxu0
      %v988 = vadd.f32 %v293, %v987
      %v989 = vpop.f32.mrf.mxu0
      %990 = vmatprep.mubr.bf16.mxu0 0
      %991 = vmatmul.mubr.bf16.gmra.mxu0 %v860
      %v992 = vpop.f32.mrf.mxu0
      %v993 = vadd.f32 %v293, %v992
      %v994 = vpop.f32.mrf.mxu0
      %v995 = vpop.f32.mrf.mxu0
      %v996 = vpop.f32.mrf.mxu0
      %997 = vdwg.mxu0
      %s998 = scalar_lea.vmem [#allocation2], 200
      %999 = vst.msk [vmem:[%s998] sm:$0xff] %vm570, %v897
      %1000 = vst.msk [vmem:[%s998 + $0x8] sm:$0xff] %vm570, %v900
      %1001 = vst.msk [vmem:[%s998 + $0x10] sm:$0xff] %vm570, %v905
      %1002 = vst.msk [vmem:[%s998 + $0x18] sm:$0xff] %vm570, %v908
      %1003 = vst.msk [vmem:[%s998 + $0x20] sm:$0xff] %vm570, %v913
      %1004 = vst.msk [vmem:[%s998 + $0x28] sm:$0xff] %vm570, %v916
      %1005 = vst.msk [vmem:[%s998 + $0x30] sm:$0xff] %vm570, %v921
      %1006 = vst.msk [vmem:[%s998 + $0x38] sm:$0xff] %vm570, %v924
      %1007 = vst.msk [vmem:[%s998 + $0x40] sm:$0xff] %vm570, %v929
      %1008 = vst.msk [vmem:[%s998 + $0x48] sm:$0xff] %vm570, %v932
      %1009 = vst.msk [vmem:[%s998 + $0x50] sm:$0xff] %vm570, %v937
      %1010 = vst.msk [vmem:[%s998 + $0x58] sm:$0xff] %vm570, %v940
      %1011 = vst.msk [vmem:[%s998 + $0x60] sm:$0xff] %vm570, %v945
      %1012 = vst.msk [vmem:[%s998 + $0x68] sm:$0xff] %vm570, %v948
      %1013 = vst.msk [vmem:[%s998 + $0x70] sm:$0xff] %vm570, %v953
      %1014 = vst.msk [vmem:[%s998 + $0x78] sm:$0xff] %vm570, %v956
      %1015 = vst.msk [vmem:[%s998 + $0x80] sm:$0xff] %vm570, %v961
      %1016 = vst.msk [vmem:[%s998 + $0x88] sm:$0xff] %vm570, %v964
      %1017 = vst.msk [vmem:[%s998 + $0x90] sm:$0xff] %vm570, %v969
      %1018 = vst.msk [vmem:[%s998 + $0x98] sm:$0xff] %vm570, %v972
      %1019 = vst.msk [vmem:[%s998 + $0xa0] sm:$0xff] %vm570, %v977
      %1020 = vst.msk [vmem:[%s998 + $0xa8] sm:$0xff] %vm570, %v980
      %1021 = vst.msk [vmem:[%s998 + $0xb0] sm:$0xff] %vm570, %v985
      %1022 = vst.msk [vmem:[%s998 + $0xb8] sm:$0xff] %vm570, %v988
      %1023 = vst.msk [vmem:[%s998 + $0xc0] sm:$0xf] %vm595, %v993
      %v1024 = vsel %vm570, %v897, 0.0
      %v1025 = vsel %vm570, %v900, 0.0
      %v1026 = vadd.f32 %v1024, %v1025
      %v1027 = vsel %vm570, %v905, 0.0
      %v1028 = vadd.f32 %v1026, %v1027
      %v1029 = vsel %vm570, %v908, 0.0
      %v1030 = vadd.f32 %v1028, %v1029
      %v1031 = vsel %vm570, %v913, 0.0
      %v1032 = vadd.f32 %v1030, %v1031
      %v1033 = vsel %vm570, %v916, 0.0
      %v1034 = vadd.f32 %v1032, %v1033
      %v1035 = vsel %vm570, %v921, 0.0
      %v1036 = vadd.f32 %v1034, %v1035
      %v1037 = vsel %vm570, %v924, 0.0
      %v1038 = vadd.f32 %v1036, %v1037
      %v1039 = vsel %vm570, %v929, 0.0
      %v1040 = vadd.f32 %v1038, %v1039
      %v1041 = vsel %vm570, %v932, 0.0
      %v1042 = vadd.f32 %v1040, %v1041
      %v1043 = vsel %vm570, %v937, 0.0
      %v1044 = vadd.f32 %v1042, %v1043
      %v1045 = vsel %vm570, %v940, 0.0
      %v1046 = vadd.f32 %v1044, %v1045
      %v1047 = vsel %vm570, %v945, 0.0
      %v1048 = vadd.f32 %v1046, %v1047
      %v1049 = vsel %vm570, %v948, 0.0
      %v1050 = vadd.f32 %v1048, %v1049
      %v1051 = vsel %vm570, %v953, 0.0
      %v1052 = vadd.f32 %v1050, %v1051
      %v1053 = vsel %vm570, %v956, 0.0
      %v1054 = vadd.f32 %v1052, %v1053
      %v1055 = vsel %vm570, %v961, 0.0
      %v1056 = vadd.f32 %v1054, %v1055
      %v1057 = vsel %vm570, %v964, 0.0
      %v1058 = vadd.f32 %v1056, %v1057
      %v1059 = vsel %vm570, %v969, 0.0
      %v1060 = vadd.f32 %v1058, %v1059
      %v1061 = vsel %vm570, %v972, 0.0
      %v1062 = vadd.f32 %v1060, %v1061
      %v1063 = vsel %vm570, %v977, 0.0
      %v1064 = vadd.f32 %v1062, %v1063
      %v1065 = vsel %vm570, %v980, 0.0
      %v1066 = vadd.f32 %v1064, %v1065
      %v1067 = vsel %vm570, %v985, 0.0
      %v1068 = vadd.f32 %v1066, %v1067
      %v1069 = vsel %vm570, %v988, 0.0
      %v1070 = vadd.f32 %v1068, %v1069
      %v1071 = vsel %vm595, %v993, 0.0
      %v1072 = vadd.f32 %v1070, %v1071
      %v1073 = vrot.slane %v1072, 4
      %v1074 = vadd.f32 %v1072, %v1073
      %v1075 = vrot.slane %v1074, 2
      %v1076 = vadd.f32 %v1074, %v1075
      %v1077 = vrot.slane %v1076, 1
      %v1078 = vadd.f32 %v1076, %v1077
      %v1079 = vadd.f32 %v652, %v1078
      %v1080 = vmul.f32 %v897, %v897
      %v1081 = vmul.f32 %v900, %v900
      %v1082 = vmul.f32 %v905, %v905
      %v1083 = vmul.f32 %v908, %v908
      %v1084 = vmul.f32 %v913, %v913
      %v1085 = vmul.f32 %v916, %v916
      %v1086 = vmul.f32 %v921, %v921
      %v1087 = vmul.f32 %v924, %v924
      %v1088 = vmul.f32 %v929, %v929
      %v1089 = vmul.f32 %v932, %v932
      %v1090 = vmul.f32 %v937, %v937
      %v1091 = vmul.f32 %v940, %v940
      %v1092 = vmul.f32 %v945, %v945
      %v1093 = vmul.f32 %v948, %v948
      %v1094 = vmul.f32 %v953, %v953
      %v1095 = vmul.f32 %v956, %v956
      %v1096 = vmul.f32 %v961, %v961
      %v1097 = vmul.f32 %v964, %v964
      %v1098 = vmul.f32 %v969, %v969
      %v1099 = vmul.f32 %v972, %v972
      %v1100 = vmul.f32 %v977, %v977
      %v1101 = vmul.f32 %v980, %v980
      %v1102 = vmul.f32 %v985, %v985
      %v1103 = vmul.f32 %v988, %v988
      %v1104 = vmul.f32 %v993, %v993
      %v1105 = vsel %vm570, %v1080, 0.0
      %v1106 = vsel %vm570, %v1081, 0.0
      %v1107 = vadd.f32 %v1105, %v1106
      %v1108 = vsel %vm570, %v1082, 0.0
      %v1109 = vadd.f32 %v1107, %v1108
      %v1110 = vsel %vm570, %v1083, 0.0
      %v1111 = vadd.f32 %v1109, %v1110
      %v1112 = vsel %vm570, %v1084, 0.0
      %v1113 = vadd.f32 %v1111, %v1112
      %v1114 = vsel %vm570, %v1085, 0.0
      %v1115 = vadd.f32 %v1113, %v1114
      %v1116 = vsel %vm570, %v1086, 0.0
      %v1117 = vadd.f32 %v1115, %v1116
      %v1118 = vsel %vm570, %v1087, 0.0
      %v1119 = vadd.f32 %v1117, %v1118
      %v1120 = vsel %vm570, %v1088, 0.0
      %v1121 = vadd.f32 %v1119, %v1120
      %v1122 = vsel %vm570, %v1089, 0.0
      %v1123 = vadd.f32 %v1121, %v1122
      %v1124 = vsel %vm570, %v1090, 0.0
      %v1125 = vadd.f32 %v1123, %v1124
      %v1126 = vsel %vm570, %v1091, 0.0
      %v1127 = vadd.f32 %v1125, %v1126
      %v1128 = vsel %vm570, %v1092, 0.0
      %v1129 = vadd.f32 %v1127, %v1128
      %v1130 = vsel %vm570, %v1093, 0.0
      %v1131 = vadd.f32 %v1129, %v1130
      %v1132 = vsel %vm570, %v1094, 0.0
      %v1133 = vadd.f32 %v1131, %v1132
      %v1134 = vsel %vm570, %v1095, 0.0
      %v1135 = vadd.f32 %v1133, %v1134
      %v1136 = vsel %vm570, %v1096, 0.0
      %v1137 = vadd.f32 %v1135, %v1136
      %v1138 = vsel %vm570, %v1097, 0.0
      %v1139 = vadd.f32 %v1137, %v1138
      %v1140 = vsel %vm570, %v1098, 0.0
      %v1141 = vadd.f32 %v1139, %v1140
      %v1142 = vsel %vm570, %v1099, 0.0
      %v1143 = vadd.f32 %v1141, %v1142
      %v1144 = vsel %vm570, %v1100, 0.0
      %v1145 = vadd.f32 %v1143, %v1144
      %v1146 = vsel %vm570, %v1101, 0.0
      %v1147 = vadd.f32 %v1145, %v1146
      %v1148 = vsel %vm570, %v1102, 0.0
      %v1149 = vadd.f32 %v1147, %v1148
      %v1150 = vsel %vm570, %v1103, 0.0
      %v1151 = vadd.f32 %v1149, %v1150
      %v1152 = vsel %vm595, %v1104, 0.0
      %v1153 = vadd.f32 %v1151, %v1152
      %v1154 = vrot.slane %v1153, 4
      %v1155 = vadd.f32 %v1153, %v1154
      %v1156 = vrot.slane %v1155, 2
      %v1157 = vadd.f32 %v1155, %v1156
      %v1158 = vrot.slane %v1157, 1
      %v1159 = vadd.f32 %v1157, %v1158
      %v1160 = vadd.f32 %v733, %v1159
      %s1161 = scalar_lea.vmem %s246, 200
      %v1162 = vld [vmem:[%s1161] sm:$0xf]
      %v1163 = vld [vmem:[%s1161 + $0x4] sm:$0xf]
      %v1164 = vld [vmem:[%s1161 + $0x8] sm:$0xf]
      %v1165 = vld [vmem:[%s1161 + $0xc] sm:$0xf]
      %v1166 = vld [vmem:[%s1161 + $0x10] sm:$0xf]
      %v1167 = vld [vmem:[%s1161 + $0x14] sm:$0xf]
      %v1168 = vld [vmem:[%s1161 + $0x18] sm:$0xf]
      %v1169 = vld [vmem:[%s1161 + $0x1c] sm:$0xf]
      %v1170 = vld [vmem:[%s1161 + $0x20] sm:$0xf]
      %v1171 = vld [vmem:[%s1161 + $0x24] sm:$0xf]
      %v1172 = vld [vmem:[%s1161 + $0x28] sm:$0xf]
      %v1173 = vld [vmem:[%s1161 + $0x2c] sm:$0xf]
      %v1174 = vld [vmem:[%s1161 + $0x30] sm:$0xf]
      %v1175 = vld [vmem:[%s1161 + $0x34] sm:$0xf]
      %v1176 = vld [vmem:[%s1161 + $0x38] sm:$0xf]
      %v1177 = vld [vmem:[%s1161 + $0x3c] sm:$0xf]
      %v1178 = vld [vmem:[%s1161 + $0x40] sm:$0xf]
      %v1179 = vld [vmem:[%s1161 + $0x44] sm:$0xf]
      %v1180 = vld [vmem:[%s1161 + $0x48] sm:$0xf]
      %v1181 = vld [vmem:[%s1161 + $0x4c] sm:$0xf]
      %v1182 = vld [vmem:[%s1161 + $0x50] sm:$0xf]
      %v1183 = vld [vmem:[%s1161 + $0x54] sm:$0xf]
      %v1184 = vld [vmem:[%s1161 + $0x58] sm:$0xf]
      %v1185 = vld [vmem:[%s1161 + $0x5c] sm:$0xf]
      %v1186 = vld [vmem:[%s1161 + $0x60] sm:$0x3]
      %v1212 = vunpack.c.l.b16 %v1162
      %v1213 = vunpack.c.l.b16 %v1163
      %v1214 = vunpack.c.l.b16 %v1164
      %v1215 = vunpack.c.l.b16 %v1165
      %v1216 = vunpack.c.l.b16 %v1166
      %v1217 = vunpack.c.l.b16 %v1167
      %v1218 = vunpack.c.l.b16 %v1168
      %v1219 = vunpack.c.l.b16 %v1169
      %v1220 = vunpack.c.l.b16 %v1170
      %v1221 = vunpack.c.l.b16 %v1171
      %v1222 = vunpack.c.l.b16 %v1172
      %v1223 = vunpack.c.l.b16 %v1173
      %v1224 = vunpack.c.l.b16 %v1174
      %v1225 = vunpack.c.l.b16 %v1175
      %v1226 = vunpack.c.l.b16 %v1176
      %v1227 = vunpack.c.l.b16 %v1177
      %v1228 = vunpack.c.l.b16 %v1178
      %v1229 = vunpack.c.l.b16 %v1179
      %v1230 = vunpack.c.l.b16 %v1180
      %v1231 = vunpack.c.l.b16 %v1181
      %v1232 = vunpack.c.l.b16 %v1182
      %v1233 = vunpack.c.l.b16 %v1183
      %v1234 = vunpack.c.l.b16 %v1184
      %v1235 = vunpack.c.l.b16 %v1185
      %v1236 = vunpack.c.l.b16 %v1186
      %v1237 = vpack.c.b16 %v1213, %v1212
      %v1238 = vpack.c.b16 %v1215, %v1214
      %v1239 = vpack.c.b16 %v1217, %v1216
      %v1240 = vpack.c.b16 %v1219, %v1218
      %v1241 = vpack.c.b16 %v1221, %v1220
      %v1242 = vpack.c.b16 %v1223, %v1222
      %v1243 = vpack.c.b16 %v1225, %v1224
      %v1244 = vpack.c.b16 %v1227, %v1226
      %v1245 = vpack.c.b16 %v1229, %v1228
      %v1246 = vpack.c.b16 %v1231, %v1230
      %v1247 = vpack.c.b16 %v1233, %v1232
      %v1248 = vpack.c.b16 %v1235, %v1234
      %v1249 = vpack.c.b16 %v1236, %v1236
      %v1251 = vsel %vm387, %v1237, 0
      %v1254 = vsel %vm387, %v1238, 0
      %v1257 = vsel %vm387, %v1239, 0
      %v1260 = vsel %vm387, %v1240, 0
      %v1263 = vsel %vm387, %v1241, 0
      %v1266 = vsel %vm387, %v1242, 0
      %v1269 = vsel %vm387, %v1243, 0
      %v1272 = vsel %vm387, %v1244, 0
      %v1275 = vsel %vm387, %v1245, 0
      %v1278 = vsel %vm387, %v1246, 0
      %v1281 = vsel %vm387, %v1247, 0
      %v1284 = vsel %vm387, %v1248, 0
      %v1287 = vsel %vm387, %v1249, 0
      %1289 = vmatprep.subr.bf16.mxu0 0
      %1290 = vmatpush1.bf16.msra.mxu0 0
      %1291 = vmatprep.subr.bf16.mxu0 0
      %1292 = vmatpush1.bf16.msra.mxu0 0
      %1293 = vmatprep.subr.bf16.mxu0 0
      %1294 = vmatpush1.bf16.msra.mxu0 0
      %1295 = vmatprep.subr.bf16.mxu0 0
      %1296 = vmatpush1.bf16.msra.mxu0 %v432
      %1297 = vmatprep.subr.bf16.mxu0 0
      %1298 = vmatpush1.bf16.msra.mxu0 %v381
      %1299 = vmatprep.subr.bf16.mxu0 0
      %1300 = vmatpush1.bf16.msra.mxu0 %v380
      %1301 = vmatprep.subr.bf16.mxu0 0
      %1302 = vmatpush1.bf16.msra.mxu0 %v379
      %1303 = vmatprep.subr.bf16.mxu0 0
      %1304 = vmatpush1.bf16.msra.mxu0 %v378
      %1305 = vmatprep.subr.bf16.mxu0 0
      %1306 = vmatpush2.bf16.msra.mxu0 0
      %1307 = vmatprep.subr.bf16.mxu0 0
      %1308 = vmatpush2.bf16.msra.mxu0 0
      %1309 = vmatprep.subr.bf16.mxu0 0
      %1310 = vmatpush2.bf16.msra.mxu0 0
      %1311 = vmatprep.subr.bf16.mxu0 0
      %1312 = vmatpush2.bf16.msra.mxu0 0
      %1313 = vmatprep.subr.bf16.mxu0 0
      %1314 = vmatpush2.bf16.msra.mxu0 0
      %1315 = vmatprep.subr.bf16.mxu0 0
      %1316 = vmatpush2.bf16.msra.mxu0 0
      %1317 = vmatprep.subr.bf16.mxu0 0
      %1318 = vmatpush2.bf16.msra.mxu0 0
      %1319 = vmatprep.subr.bf16.mxu0 0
      %1320 = vmatpush2.bf16.msra.mxu0 0
      %1321 = vmatprep.mubr.bf16.mxu0 0
      %1322 = vmatmul.mubr.bf16.gmra.mxu0 %v1251
      %v1323 = vpop.f32.mrf.mxu0
      %v1324 = vadd.f32 %v293, %v1323
      %v1325 = vpop.f32.mrf.mxu0
      %v1326 = vpop.f32.mrf.mxu0
      %v1327 = vadd.f32 %v293, %v1326
      %v1328 = vpop.f32.mrf.mxu0
      %1329 = vmatprep.mubr.bf16.mxu0 0
      %1330 = vmatmul.mubr.bf16.gmra.mxu0 %v1254
      %v1331 = vpop.f32.mrf.mxu0
      %v1332 = vadd.f32 %v293, %v1331
      %v1333 = vpop.f32.mrf.mxu0
      %v1334 = vpop.f32.mrf.mxu0
      %v1335 = vadd.f32 %v293, %v1334
      %v1336 = vpop.f32.mrf.mxu0
      %1337 = vmatprep.mubr.bf16.mxu0 0
      %1338 = vmatmul.mubr.bf16.gmra.mxu0 %v1257
      %v1339 = vpop.f32.mrf.mxu0
      %v1340 = vadd.f32 %v293, %v1339
      %v1341 = vpop.f32.mrf.mxu0
      %v1342 = vpop.f32.mrf.mxu0
      %v1343 = vadd.f32 %v293, %v1342
      %v1344 = vpop.f32.mrf.mxu0
      %1345 = vmatprep.mubr.bf16.mxu0 0
      %1346 = vmatmul.mubr.bf16.gmra.mxu0 %v1260
      %v1347 = vpop.f32.mrf.mxu0
      %v1348 = vadd.f32 %v293, %v1347
      %v1349 = vpop.f32.mrf.mxu0
      %v1350 = vpop.f32.mrf.mxu0
      %v1351 = vadd.f32 %v293, %v1350
      %v1352 = vpop.f32.mrf.mxu0
      %1353 = vmatprep.mubr.bf16.mxu0 0
      %1354 = vmatmul.mubr.bf16.gmra.mxu0 %v1263
      %v1355 = vpop.f32.mrf.mxu0
      %v1356 = vadd.f32 %v293, %v1355
      %v1357 = vpop.f32.mrf.mxu0
      %v1358 = vpop.f32.mrf.mxu0
      %v1359 = vadd.f32 %v293, %v1358
      %v1360 = vpop.f32.mrf.mxu0
      %1361 = vmatprep.mubr.bf16.mxu0 0
      %1362 = vmatmul.mubr.bf16.gmra.mxu0 %v1266
      %v1363 = vpop.f32.mrf.mxu0
      %v1364 = vadd.f32 %v293, %v1363
      %v1365 = vpop.f32.mrf.mxu0
      %v1366 = vpop.f32.mrf.mxu0
      %v1367 = vadd.f32 %v293, %v1366
      %v1368 = vpop.f32.mrf.mxu0
      %1369 = vmatprep.mubr.bf16.mxu0 0
      %1370 = vmatmul.mubr.bf16.gmra.mxu0 %v1269
      %v1371 = vpop.f32.mrf.mxu0
      %v1372 = vadd.f32 %v293, %v1371
      %v1373 = vpop.f32.mrf.mxu0
      %v1374 = vpop.f32.mrf.mxu0
      %v1375 = vadd.f32 %v293, %v1374
      %v1376 = vpop.f32.mrf.mxu0
      %1377 = vmatprep.mubr.bf16.mxu0 0
      %1378 = vmatmul.mubr.bf16.gmra.mxu0 %v1272
      %v1379 = vpop.f32.mrf.mxu0
      %v1380 = vadd.f32 %v293, %v1379
      %v1381 = vpop.f32.mrf.mxu0
      %v1382 = vpop.f32.mrf.mxu0
      %v1383 = vadd.f32 %v293, %v1382
      %v1384 = vpop.f32.mrf.mxu0
      %1385 = vmatprep.mubr.bf16.mxu0 0
      %1386 = vmatmul.mubr.bf16.gmra.mxu0 %v1275
      %v1387 = vpop.f32.mrf.mxu0
      %v1388 = vadd.f32 %v293, %v1387
      %v1389 = vpop.f32.mrf.mxu0
      %v1390 = vpop.f32.mrf.mxu0
      %v1391 = vadd.f32 %v293, %v1390
      %v1392 = vpop.f32.mrf.mxu0
      %1393 = vmatprep.mubr.bf16.mxu0 0
      %1394 = vmatmul.mubr.bf16.gmra.mxu0 %v1278
      %v1395 = vpop.f32.mrf.mxu0
      %v1396 = vadd.f32 %v293, %v1395
      %v1397 = vpop.f32.mrf.mxu0
      %v1398 = vpop.f32.mrf.mxu0
      %v1399 = vadd.f32 %v293, %v1398
      %v1400 = vpop.f32.mrf.mxu0
      %1401 = vmatprep.mubr.bf16.mxu0 0
      %1402 = vmatmul.mubr.bf16.gmra.mxu0 %v1281
      %v1403 = vpop.f32.mrf.mxu0
      %v1404 = vadd.f32 %v293, %v1403
      %v1405 = vpop.f32.mrf.mxu0
      %v1406 = vpop.f32.mrf.mxu0
      %v1407 = vadd.f32 %v293, %v1406
      %v1408 = vpop.f32.mrf.mxu0
      %1409 = vmatprep.mubr.bf16.mxu0 0
      %1410 = vmatmul.mubr.bf16.gmra.mxu0 %v1284
      %v1411 = vpop.f32.mrf.mxu0
      %v1412 = vadd.f32 %v293, %v1411
      %v1413 = vpop.f32.mrf.mxu0
      %v1414 = vpop.f32.mrf.mxu0
      %v1415 = vadd.f32 %v293, %v1414
      %v1416 = vpop.f32.mrf.mxu0
      %1417 = vmatprep.mubr.bf16.mxu0 0
      %1418 = vmatmul.mubr.bf16.gmra.mxu0 %v1287
      %v1419 = vpop.f32.mrf.mxu0
      %v1420 = vadd.f32 %v293, %v1419
      %v1421 = vpop.f32.mrf.mxu0
      %v1422 = vpop.f32.mrf.mxu0
      %v1423 = vpop.f32.mrf.mxu0
      %1424 = vdwg.mxu0
      %s1425 = scalar_lea.vmem [#allocation2], 400
      %1426 = vst.msk [vmem:[%s1425] sm:$0xff] %vm570, %v1324
      %1427 = vst.msk [vmem:[%s1425 + $0x8] sm:$0xff] %vm570, %v1327
      %1428 = vst.msk [vmem:[%s1425 + $0x10] sm:$0xff] %vm570, %v1332
      %1429 = vst.msk [vmem:[%s1425 + $0x18] sm:$0xff] %vm570, %v1335
      %1430 = vst.msk [vmem:[%s1425 + $0x20] sm:$0xff] %vm570, %v1340
      %1431 = vst.msk [vmem:[%s1425 + $0x28] sm:$0xff] %vm570, %v1343
      %1432 = vst.msk [vmem:[%s1425 + $0x30] sm:$0xff] %vm570, %v1348
      %1433 = vst.msk [vmem:[%s1425 + $0x38] sm:$0xff] %vm570, %v1351
      %1434 = vst.msk [vmem:[%s1425 + $0x40] sm:$0xff] %vm570, %v1356
      %1435 = vst.msk [vmem:[%s1425 + $0x48] sm:$0xff] %vm570, %v1359
      %1436 = vst.msk [vmem:[%s1425 + $0x50] sm:$0xff] %vm570, %v1364
      %1437 = vst.msk [vmem:[%s1425 + $0x58] sm:$0xff] %vm570, %v1367
      %1438 = vst.msk [vmem:[%s1425 + $0x60] sm:$0xff] %vm570, %v1372
      %1439 = vst.msk [vmem:[%s1425 + $0x68] sm:$0xff] %vm570, %v1375
      %1440 = vst.msk [vmem:[%s1425 + $0x70] sm:$0xff] %vm570, %v1380
      %1441 = vst.msk [vmem:[%s1425 + $0x78] sm:$0xff] %vm570, %v1383
      %1442 = vst.msk [vmem:[%s1425 + $0x80] sm:$0xff] %vm570, %v1388
      %1443 = vst.msk [vmem:[%s1425 + $0x88] sm:$0xff] %vm570, %v1391
      %1444 = vst.msk [vmem:[%s1425 + $0x90] sm:$0xff] %vm570, %v1396
      %1445 = vst.msk [vmem:[%s1425 + $0x98] sm:$0xff] %vm570, %v1399
      %1446 = vst.msk [vmem:[%s1425 + $0xa0] sm:$0xff] %vm570, %v1404
      %1447 = vst.msk [vmem:[%s1425 + $0xa8] sm:$0xff] %vm570, %v1407
      %1448 = vst.msk [vmem:[%s1425 + $0xb0] sm:$0xff] %vm570, %v1412
      %1449 = vst.msk [vmem:[%s1425 + $0xb8] sm:$0xff] %vm570, %v1415
      %1450 = vst.msk [vmem:[%s1425 + $0xc0] sm:$0xf] %vm595, %v1420
      %v1451 = vsel %vm570, %v1324, 0.0
      %v1452 = vsel %vm570, %v1327, 0.0
      %v1453 = vadd.f32 %v1451, %v1452
      %v1454 = vsel %vm570, %v1332, 0.0
      %v1455 = vadd.f32 %v1453, %v1454
      %v1456 = vsel %vm570, %v1335, 0.0
      %v1457 = vadd.f32 %v1455, %v1456
      %v1458 = vsel %vm570, %v1340, 0.0
      %v1459 = vadd.f32 %v1457, %v1458
      %v1460 = vsel %vm570, %v1343, 0.0
      %v1461 = vadd.f32 %v1459, %v1460
      %v1462 = vsel %vm570, %v1348, 0.0
      %v1463 = vadd.f32 %v1461, %v1462
      %v1464 = vsel %vm570, %v1351, 0.0
      %v1465 = vadd.f32 %v1463, %v1464
      %v1466 = vsel %vm570, %v1356, 0.0
      %v1467 = vadd.f32 %v1465, %v1466
      %v1468 = vsel %vm570, %v1359, 0.0
      %v1469 = vadd.f32 %v1467, %v1468
      %v1470 = vsel %vm570, %v1364, 0.0
      %v1471 = vadd.f32 %v1469, %v1470
      %v1472 = vsel %vm570, %v1367, 0.0
      %v1473 = vadd.f32 %v1471, %v1472
      %v1474 = vsel %vm570, %v1372, 0.0
      %v1475 = vadd.f32 %v1473, %v1474
      %v1476 = vsel %vm570, %v1375, 0.0
      %v1477 = vadd.f32 %v1475, %v1476
      %v1478 = vsel %vm570, %v1380, 0.0
      %v1479 = vadd.f32 %v1477, %v1478
      %v1480 = vsel %vm570, %v1383, 0.0
      %v1481 = vadd.f32 %v1479, %v1480
      %v1482 = vsel %vm570, %v1388, 0.0
      %v1483 = vadd.f32 %v1481, %v1482
      %v1484 = vsel %vm570, %v1391, 0.0
      %v1485 = vadd.f32 %v1483, %v1484
      %v1486 = vsel %vm570, %v1396, 0.0
      %v1487 = vadd.f32 %v1485, %v1486
      %v1488 = vsel %vm570, %v1399, 0.0
      %v1489 = vadd.f32 %v1487, %v1488
      %v1490 = vsel %vm570, %v1404, 0.0
      %v1491 = vadd.f32 %v1489, %v1490
      %v1492 = vsel %vm570, %v1407, 0.0
      %v1493 = vadd.f32 %v1491, %v1492
      %v1494 = vsel %vm570, %v1412, 0.0
      %v1495 = vadd.f32 %v1493, %v1494
      %v1496 = vsel %vm570, %v1415, 0.0
      %v1497 = vadd.f32 %v1495, %v1496
      %v1498 = vsel %vm595, %v1420, 0.0
      %v1499 = vadd.f32 %v1497, %v1498
      %v1500 = vrot.slane %v1499, 4
      %v1501 = vadd.f32 %v1499, %v1500
      %v1502 = vrot.slane %v1501, 2
      %v1503 = vadd.f32 %v1501, %v1502
      %v1504 = vrot.slane %v1503, 1
      %v1505 = vadd.f32 %v1503, %v1504
      %v1506 = vadd.f32 %v1079, %v1505
      %v1507 = vmul.f32 %v1324, %v1324
      %v1508 = vmul.f32 %v1327, %v1327
      %v1509 = vmul.f32 %v1332, %v1332
      %v1510 = vmul.f32 %v1335, %v1335
      %v1511 = vmul.f32 %v1340, %v1340
      %v1512 = vmul.f32 %v1343, %v1343
      %v1513 = vmul.f32 %v1348, %v1348
      %v1514 = vmul.f32 %v1351, %v1351
      %v1515 = vmul.f32 %v1356, %v1356
      %v1516 = vmul.f32 %v1359, %v1359
      %v1517 = vmul.f32 %v1364, %v1364
      %v1518 = vmul.f32 %v1367, %v1367
      %v1519 = vmul.f32 %v1372, %v1372
      %v1520 = vmul.f32 %v1375, %v1375
      %v1521 = vmul.f32 %v1380, %v1380
      %v1522 = vmul.f32 %v1383, %v1383
      %v1523 = vmul.f32 %v1388, %v1388
      %v1524 = vmul.f32 %v1391, %v1391
      %v1525 = vmul.f32 %v1396, %v1396
      %v1526 = vmul.f32 %v1399, %v1399
      %v1527 = vmul.f32 %v1404, %v1404
      %v1528 = vmul.f32 %v1407, %v1407
      %v1529 = vmul.f32 %v1412, %v1412
      %v1530 = vmul.f32 %v1415, %v1415
      %v1531 = vmul.f32 %v1420, %v1420
      %v1532 = vsel %vm570, %v1507, 0.0
      %v1533 = vsel %vm570, %v1508, 0.0
      %v1534 = vadd.f32 %v1532, %v1533
      %v1535 = vsel %vm570, %v1509, 0.0
      %v1536 = vadd.f32 %v1534, %v1535
      %v1537 = vsel %vm570, %v1510, 0.0
      %v1538 = vadd.f32 %v1536, %v1537
      %v1539 = vsel %vm570, %v1511, 0.0
      %v1540 = vadd.f32 %v1538, %v1539
      %v1541 = vsel %vm570, %v1512, 0.0
      %v1542 = vadd.f32 %v1540, %v1541
      %v1543 = vsel %vm570, %v1513, 0.0
      %v1544 = vadd.f32 %v1542, %v1543
      %v1545 = vsel %vm570, %v1514, 0.0
      %v1546 = vadd.f32 %v1544, %v1545
      %v1547 = vsel %vm570, %v1515, 0.0
      %v1548 = vadd.f32 %v1546, %v1547
      %v1549 = vsel %vm570, %v1516, 0.0
      %v1550 = vadd.f32 %v1548, %v1549
      %v1551 = vsel %vm570, %v1517, 0.0
      %v1552 = vadd.f32 %v1550, %v1551
      %v1553 = vsel %vm570, %v1518, 0.0
      %v1554 = vadd.f32 %v1552, %v1553
      %v1555 = vsel %vm570, %v1519, 0.0
      %v1556 = vadd.f32 %v1554, %v1555
      %v1557 = vsel %vm570, %v1520, 0.0
      %v1558 = vadd.f32 %v1556, %v1557
      %v1559 = vsel %vm570, %v1521, 0.0
      %v1560 = vadd.f32 %v1558, %v1559
      %v1561 = vsel %vm570, %v1522, 0.0
      %v1562 = vadd.f32 %v1560, %v1561
      %v1563 = vsel %vm570, %v1523, 0.0
      %v1564 = vadd.f32 %v1562, %v1563
      %v1565 = vsel %vm570, %v1524, 0.0
      %v1566 = vadd.f32 %v1564, %v1565
      %v1567 = vsel %vm570, %v1525, 0.0
      %v1568 = vadd.f32 %v1566, %v1567
      %v1569 = vsel %vm570, %v1526, 0.0
      %v1570 = vadd.f32 %v1568, %v1569
      %v1571 = vsel %vm570, %v1527, 0.0
      %v1572 = vadd.f32 %v1570, %v1571
      %v1573 = vsel %vm570, %v1528, 0.0
      %v1574 = vadd.f32 %v1572, %v1573
      %v1575 = vsel %vm570, %v1529, 0.0
      %v1576 = vadd.f32 %v1574, %v1575
      %v1577 = vsel %vm570, %v1530, 0.0
      %v1578 = vadd.f32 %v1576, %v1577
      %v1579 = vsel %vm595, %v1531, 0.0
      %v1580 = vadd.f32 %v1578, %v1579
      %v1581 = vrot.slane %v1580, 4
      %v1582 = vadd.f32 %v1580, %v1581
      %v1583 = vrot.slane %v1582, 2
      %v1584 = vadd.f32 %v1582, %v1583
      %v1585 = vrot.slane %v1584, 1
      %v1586 = vadd.f32 %v1584, %v1585
      %v1587 = vadd.f32 %v1160, %v1586
      %s1588 = scalar_lea.vmem %s246, 300
      %v1589 = vld [vmem:[%s1588] sm:$0xf]
      %v1590 = vld [vmem:[%s1588 + $0x4] sm:$0xf]
      %v1591 = vld [vmem:[%s1588 + $0x8] sm:$0xf]
      %v1592 = vld [vmem:[%s1588 + $0xc] sm:$0xf]
      %v1593 = vld [vmem:[%s1588 + $0x10] sm:$0xf]
      %v1594 = vld [vmem:[%s1588 + $0x14] sm:$0xf]
      %v1595 = vld [vmem:[%s1588 + $0x18] sm:$0xf]
      %v1596 = vld [vmem:[%s1588 + $0x1c] sm:$0xf]
      %v1597 = vld [vmem:[%s1588 + $0x20] sm:$0xf]
      %v1598 = vld [vmem:[%s1588 + $0x24] sm:$0xf]
      %v1599 = vld [vmem:[%s1588 + $0x28] sm:$0xf]
      %v1600 = vld [vmem:[%s1588 + $0x2c] sm:$0xf]
      %v1601 = vld [vmem:[%s1588 + $0x30] sm:$0xf]
      %v1602 = vld [vmem:[%s1588 + $0x34] sm:$0xf]
      %v1603 = vld [vmem:[%s1588 + $0x38] sm:$0xf]
      %v1604 = vld [vmem:[%s1588 + $0x3c] sm:$0xf]
      %v1605 = vld [vmem:[%s1588 + $0x40] sm:$0xf]
      %v1606 = vld [vmem:[%s1588 + $0x44] sm:$0xf]
      %v1607 = vld [vmem:[%s1588 + $0x48] sm:$0xf]
      %v1608 = vld [vmem:[%s1588 + $0x4c] sm:$0xf]
      %v1609 = vld [vmem:[%s1588 + $0x50] sm:$0xf]
      %v1610 = vld [vmem:[%s1588 + $0x54] sm:$0xf]
      %v1611 = vld [vmem:[%s1588 + $0x58] sm:$0xf]
      %v1612 = vld [vmem:[%s1588 + $0x5c] sm:$0xf]
      %v1613 = vld [vmem:[%s1588 + $0x60] sm:$0x3]
      %v1639 = vunpack.c.l.b16 %v1589
      %v1640 = vunpack.c.l.b16 %v1590
      %v1641 = vunpack.c.l.b16 %v1591
      %v1642 = vunpack.c.l.b16 %v1592
      %v1643 = vunpack.c.l.b16 %v1593
      %v1644 = vunpack.c.l.b16 %v1594
      %v1645 = vunpack.c.l.b16 %v1595
      %v1646 = vunpack.c.l.b16 %v1596
      %v1647 = vunpack.c.l.b16 %v1597
      %v1648 = vunpack.c.l.b16 %v1598
      %v1649 = vunpack.c.l.b16 %v1599
      %v1650 = vunpack.c.l.b16 %v1600
      %v1651 = vunpack.c.l.b16 %v1601
      %v1652 = vunpack.c.l.b16 %v1602
      %v1653 = vunpack.c.l.b16 %v1603
      %v1654 = vunpack.c.l.b16 %v1604
      %v1655 = vunpack.c.l.b16 %v1605
      %v1656 = vunpack.c.l.b16 %v1606
      %v1657 = vunpack.c.l.b16 %v1607
      %v1658 = vunpack.c.l.b16 %v1608
      %v1659 = vunpack.c.l.b16 %v1609
      %v1660 = vunpack.c.l.b16 %v1610
      %v1661 = vunpack.c.l.b16 %v1611
      %v1662 = vunpack.c.l.b16 %v1612
      %v1663 = vunpack.c.l.b16 %v1613
      %v1664 = vpack.c.b16 %v1640, %v1639
      %v1665 = vpack.c.b16 %v1642, %v1641
      %v1666 = vpack.c.b16 %v1644, %v1643
      %v1667 = vpack.c.b16 %v1646, %v1645
      %v1668 = vpack.c.b16 %v1648, %v1647
      %v1669 = vpack.c.b16 %v1650, %v1649
      %v1670 = vpack.c.b16 %v1652, %v1651
      %v1671 = vpack.c.b16 %v1654, %v1653
      %v1672 = vpack.c.b16 %v1656, %v1655
      %v1673 = vpack.c.b16 %v1658, %v1657
      %v1674 = vpack.c.b16 %v1660, %v1659
      %v1675 = vpack.c.b16 %v1662, %v1661
      %v1676 = vpack.c.b16 %v1663, %v1663
      %v1678 = vsel %vm387, %v1664, 0
      %v1681 = vsel %vm387, %v1665, 0
      %v1684 = vsel %vm387, %v1666, 0
      %v1687 = vsel %vm387, %v1667, 0
      %v1690 = vsel %vm387, %v1668, 0
      %v1693 = vsel %vm387, %v1669, 0
      %v1696 = vsel %vm387, %v1670, 0
      %v1699 = vsel %vm387, %v1671, 0
      %v1702 = vsel %vm387, %v1672, 0
      %v1705 = vsel %vm387, %v1673, 0
      %v1708 = vsel %vm387, %v1674, 0
      %v1711 = vsel %vm387, %v1675, 0
      %v1714 = vsel %vm387, %v1676, 0
      %1716 = vmatprep.subr.bf16.mxu0 0
      %1717 = vmatpush1.bf16.msra.mxu0 0
      %1718 = vmatprep.subr.bf16.mxu0 0
      %1719 = vmatpush1.bf16.msra.mxu0 0
      %1720 = vmatprep.subr.bf16.mxu0 0
      %1721 = vmatpush1.bf16.msra.mxu0 0
      %1722 = vmatprep.subr.bf16.mxu0 0
      %1723 = vmatpush1.bf16.msra.mxu0 %v432
      %1724 = vmatprep.subr.bf16.mxu0 0
      %1725 = vmatpush1.bf16.msra.mxu0 %v381
      %1726 = vmatprep.subr.bf16.mxu0 0
      %1727 = vmatpush1.bf16.msra.mxu0 %v380
      %1728 = vmatprep.subr.bf16.mxu0 0
      %1729 = vmatpush1.bf16.msra.mxu0 %v379
      %1730 = vmatprep.subr.bf16.mxu0 0
      %1731 = vmatpush1.bf16.msra.mxu0 %v378
      %1732 = vmatprep.subr.bf16.mxu0 0
      %1733 = vmatpush2.bf16.msra.mxu0 0
      %1734 = vmatprep.subr.bf16.mxu0 0
      %1735 = vmatpush2.bf16.msra.mxu0 0
      %1736 = vmatprep.subr.bf16.mxu0 0
      %1737 = vmatpush2.bf16.msra.mxu0 0
      %1738 = vmatprep.subr.bf16.mxu0 0
      %1739 = vmatpush2.bf16.msra.mxu0 0
      %1740 = vmatprep.subr.bf16.mxu0 0
      %1741 = vmatpush2.bf16.msra.mxu0 0
      %1742 = vmatprep.subr.bf16.mxu0 0
      %1743 = vmatpush2.bf16.msra.mxu0 0
      %1744 = vmatprep.subr.bf16.mxu0 0
      %1745 = vmatpush2.bf16.msra.mxu0 0
      %1746 = vmatprep.subr.bf16.mxu0 0
      %1747 = vmatpush2.bf16.msra.mxu0 0
      %1748 = vmatprep.mubr.bf16.mxu0 0
      %1749 = vmatmul.mubr.bf16.gmra.mxu0 %v1678
      %v1750 = vpop.f32.mrf.mxu0
      %v1751 = vadd.f32 %v293, %v1750
      %v1752 = vpop.f32.mrf.mxu0
      %v1753 = vpop.f32.mrf.mxu0
      %v1754 = vadd.f32 %v293, %v1753
      %v1755 = vpop.f32.mrf.mxu0
      %1756 = vmatprep.mubr.bf16.mxu0 0
      %1757 = vmatmul.mubr.bf16.gmra.mxu0 %v1681
      %v1758 = vpop.f32.mrf.mxu0
      %v1759 = vadd.f32 %v293, %v1758
      %v1760 = vpop.f32.mrf.mxu0
      %v1761 = vpop.f32.mrf.mxu0
      %v1762 = vadd.f32 %v293, %v1761
      %v1763 = vpop.f32.mrf.mxu0
      %1764 = vmatprep.mubr.bf16.mxu0 0
      %1765 = vmatmul.mubr.bf16.gmra.mxu0 %v1684
      %v1766 = vpop.f32.mrf.mxu0
      %v1767 = vadd.f32 %v293, %v1766
      %v1768 = vpop.f32.mrf.mxu0
      %v1769 = vpop.f32.mrf.mxu0
      %v1770 = vadd.f32 %v293, %v1769
      %v1771 = vpop.f32.mrf.mxu0
      %1772 = vmatprep.mubr.bf16.mxu0 0
      %1773 = vmatmul.mubr.bf16.gmra.mxu0 %v1687
      %v1774 = vpop.f32.mrf.mxu0
      %v1775 = vadd.f32 %v293, %v1774
      %v1776 = vpop.f32.mrf.mxu0
      %v1777 = vpop.f32.mrf.mxu0
      %v1778 = vadd.f32 %v293, %v1777
      %v1779 = vpop.f32.mrf.mxu0
      %1780 = vmatprep.mubr.bf16.mxu0 0
      %1781 = vmatmul.mubr.bf16.gmra.mxu0 %v1690
      %v1782 = vpop.f32.mrf.mxu0
      %v1783 = vadd.f32 %v293, %v1782
      %v1784 = vpop.f32.mrf.mxu0
      %v1785 = vpop.f32.mrf.mxu0
      %v1786 = vadd.f32 %v293, %v1785
      %v1787 = vpop.f32.mrf.mxu0
      %1788 = vmatprep.mubr.bf16.mxu0 0
      %1789 = vmatmul.mubr.bf16.gmra.mxu0 %v1693
      %v1790 = vpop.f32.mrf.mxu0
      %v1791 = vadd.f32 %v293, %v1790
      %v1792 = vpop.f32.mrf.mxu0
      %v1793 = vpop.f32.mrf.mxu0
      %v1794 = vadd.f32 %v293, %v1793
      %v1795 = vpop.f32.mrf.mxu0
      %1796 = vmatprep.mubr.bf16.mxu0 0
      %1797 = vmatmul.mubr.bf16.gmra.mxu0 %v1696
      %v1798 = vpop.f32.mrf.mxu0
      %v1799 = vadd.f32 %v293, %v1798
      %v1800 = vpop.f32.mrf.mxu0
      %v1801 = vpop.f32.mrf.mxu0
      %v1802 = vadd.f32 %v293, %v1801
      %v1803 = vpop.f32.mrf.mxu0
      %1804 = vmatprep.mubr.bf16.mxu0 0
      %1805 = vmatmul.mubr.bf16.gmra.mxu0 %v1699
      %v1806 = vpop.f32.mrf.mxu0
      %v1807 = vadd.f32 %v293, %v1806
      %v1808 = vpop.f32.mrf.mxu0
      %v1809 = vpop.f32.mrf.mxu0
      %v1810 = vadd.f32 %v293, %v1809
      %v1811 = vpop.f32.mrf.mxu0
      %1812 = vmatprep.mubr.bf16.mxu0 0
      %1813 = vmatmul.mubr.bf16.gmra.mxu0 %v1702
      %v1814 = vpop.f32.mrf.mxu0
      %v1815 = vadd.f32 %v293, %v1814
      %v1816 = vpop.f32.mrf.mxu0
      %v1817 = vpop.f32.mrf.mxu0
      %v1818 = vadd.f32 %v293, %v1817
      %v1819 = vpop.f32.mrf.mxu0
      %1820 = vmatprep.mubr.bf16.mxu0 0
      %1821 = vmatmul.mubr.bf16.gmra.mxu0 %v1705
      %v1822 = vpop.f32.mrf.mxu0
      %v1823 = vadd.f32 %v293, %v1822
      %v1824 = vpop.f32.mrf.mxu0
      %v1825 = vpop.f32.mrf.mxu0
      %v1826 = vadd.f32 %v293, %v1825
      %v1827 = vpop.f32.mrf.mxu0
      %1828 = vmatprep.mubr.bf16.mxu0 0
      %1829 = vmatmul.mubr.bf16.gmra.mxu0 %v1708
      %v1830 = vpop.f32.mrf.mxu0
      %v1831 = vadd.f32 %v293, %v1830
      %v1832 = vpop.f32.mrf.mxu0
      %v1833 = vpop.f32.mrf.mxu0
      %v1834 = vadd.f32 %v293, %v1833
      %v1835 = vpop.f32.mrf.mxu0
      %1836 = vmatprep.mubr.bf16.mxu0 0
      %1837 = vmatmul.mubr.bf16.gmra.mxu0 %v1711
      %v1838 = vpop.f32.mrf.mxu0
      %v1839 = vadd.f32 %v293, %v1838
      %v1840 = vpop.f32.mrf.mxu0
      %v1841 = vpop.f32.mrf.mxu0
      %v1842 = vadd.f32 %v293, %v1841
      %v1843 = vpop.f32.mrf.mxu0
      %1844 = vmatprep.mubr.bf16.mxu0 0
      %1845 = vmatmul.mubr.bf16.gmra.mxu0 %v1714
      %v1846 = vpop.f32.mrf.mxu0
      %v1847 = vadd.f32 %v293, %v1846
      %v1848 = vpop.f32.mrf.mxu0
      %v1849 = vpop.f32.mrf.mxu0
      %v1850 = vpop.f32.mrf.mxu0
      %1851 = vdwg.mxu0
      %s1852 = scalar_lea.vmem [#allocation2], 600
      %1853 = vst.msk [vmem:[%s1852] sm:$0xff] %vm570, %v1751
      %1854 = vst.msk [vmem:[%s1852 + $0x8] sm:$0xff] %vm570, %v1754
      %1855 = vst.msk [vmem:[%s1852 + $0x10] sm:$0xff] %vm570, %v1759
      %1856 = vst.msk [vmem:[%s1852 + $0x18] sm:$0xff] %vm570, %v1762
      %1857 = vst.msk [vmem:[%s1852 + $0x20] sm:$0xff] %vm570, %v1767
      %1858 = vst.msk [vmem:[%s1852 + $0x28] sm:$0xff] %vm570, %v1770
      %1859 = vst.msk [vmem:[%s1852 + $0x30] sm:$0xff] %vm570, %v1775
      %1860 = vst.msk [vmem:[%s1852 + $0x38] sm:$0xff] %vm570, %v1778
      %1861 = vst.msk [vmem:[%s1852 + $0x40] sm:$0xff] %vm570, %v1783
      %1862 = vst.msk [vmem:[%s1852 + $0x48] sm:$0xff] %vm570, %v1786
      %1863 = vst.msk [vmem:[%s1852 + $0x50] sm:$0xff] %vm570, %v1791
      %1864 = vst.msk [vmem:[%s1852 + $0x58] sm:$0xff] %vm570, %v1794
      %1865 = vst.msk [vmem:[%s1852 + $0x60] sm:$0xff] %vm570, %v1799
      %1866 = vst.msk [vmem:[%s1852 + $0x68] sm:$0xff] %vm570, %v1802
      %1867 = vst.msk [vmem:[%s1852 + $0x70] sm:$0xff] %vm570, %v1807
      %1868 = vst.msk [vmem:[%s1852 + $0x78] sm:$0xff] %vm570, %v1810
      %1869 = vst.msk [vmem:[%s1852 + $0x80] sm:$0xff] %vm570, %v1815
      %1870 = vst.msk [vmem:[%s1852 + $0x88] sm:$0xff] %vm570, %v1818
      %1871 = vst.msk [vmem:[%s1852 + $0x90] sm:$0xff] %vm570, %v1823
      %1872 = vst.msk [vmem:[%s1852 + $0x98] sm:$0xff] %vm570, %v1826
      %1873 = vst.msk [vmem:[%s1852 + $0xa0] sm:$0xff] %vm570, %v1831
      %1874 = vst.msk [vmem:[%s1852 + $0xa8] sm:$0xff] %vm570, %v1834
      %1875 = vst.msk [vmem:[%s1852 + $0xb0] sm:$0xff] %vm570, %v1839
      %1876 = vst.msk [vmem:[%s1852 + $0xb8] sm:$0xff] %vm570, %v1842
      %1877 = vst.msk [vmem:[%s1852 + $0xc0] sm:$0xf] %vm595, %v1847
      %v1878 = vsel %vm570, %v1751, 0.0
      %v1879 = vsel %vm570, %v1754, 0.0
      %v1880 = vadd.f32 %v1878, %v1879
      %v1881 = vsel %vm570, %v1759, 0.0
      %v1882 = vadd.f32 %v1880, %v1881
      %v1883 = vsel %vm570, %v1762, 0.0
      %v1884 = vadd.f32 %v1882, %v1883
      %v1885 = vsel %vm570, %v1767, 0.0
      %v1886 = vadd.f32 %v1884, %v1885
      %v1887 = vsel %vm570, %v1770, 0.0
      %v1888 = vadd.f32 %v1886, %v1887
      %v1889 = vsel %vm570, %v1775, 0.0
      %v1890 = vadd.f32 %v1888, %v1889
      %v1891 = vsel %vm570, %v1778, 0.0
      %v1892 = vadd.f32 %v1890, %v1891
      %v1893 = vsel %vm570, %v1783, 0.0
      %v1894 = vadd.f32 %v1892, %v1893
      %v1895 = vsel %vm570, %v1786, 0.0
      %v1896 = vadd.f32 %v1894, %v1895
      %v1897 = vsel %vm570, %v1791, 0.0
      %v1898 = vadd.f32 %v1896, %v1897
      %v1899 = vsel %vm570, %v1794, 0.0
      %v1900 = vadd.f32 %v1898, %v1899
      %v1901 = vsel %vm570, %v1799, 0.0
      %v1902 = vadd.f32 %v1900, %v1901
      %v1903 = vsel %vm570, %v1802, 0.0
      %v1904 = vadd.f32 %v1902, %v1903
      %v1905 = vsel %vm570, %v1807, 0.0
      %v1906 = vadd.f32 %v1904, %v1905
      %v1907 = vsel %vm570, %v1810, 0.0
      %v1908 = vadd.f32 %v1906, %v1907
      %v1909 = vsel %vm570, %v1815, 0.0
      %v1910 = vadd.f32 %v1908, %v1909
      %v1911 = vsel %vm570, %v1818, 0.0
      %v1912 = vadd.f32 %v1910, %v1911
      %v1913 = vsel %vm570, %v1823, 0.0
      %v1914 = vadd.f32 %v1912, %v1913
      %v1915 = vsel %vm570, %v1826, 0.0
      %v1916 = vadd.f32 %v1914, %v1915
      %v1917 = vsel %vm570, %v1831, 0.0
      %v1918 = vadd.f32 %v1916, %v1917
      %v1919 = vsel %vm570, %v1834, 0.0
      %v1920 = vadd.f32 %v1918, %v1919
      %v1921 = vsel %vm570, %v1839, 0.0
      %v1922 = vadd.f32 %v1920, %v1921
      %v1923 = vsel %vm570, %v1842, 0.0
      %v1924 = vadd.f32 %v1922, %v1923
      %v1925 = vsel %vm595, %v1847, 0.0
      %v1926 = vadd.f32 %v1924, %v1925
      %v1927 = vrot.slane %v1926, 4
      %v1928 = vadd.f32 %v1926, %v1927
      %v1929 = vrot.slane %v1928, 2
      %v1930 = vadd.f32 %v1928, %v1929
      %v1931 = vrot.slane %v1930, 1
      %v1932 = vadd.f32 %v1930, %v1931
      %v1933 = vadd.f32 %v1506, %v1932
      %v1934 = vmul.f32 %v1751, %v1751
      %v1935 = vmul.f32 %v1754, %v1754
      %v1936 = vmul.f32 %v1759, %v1759
      %v1937 = vmul.f32 %v1762, %v1762
      %v1938 = vmul.f32 %v1767, %v1767
      %v1939 = vmul.f32 %v1770, %v1770
      %v1940 = vmul.f32 %v1775, %v1775
      %v1941 = vmul.f32 %v1778, %v1778
      %v1942 = vmul.f32 %v1783, %v1783
      %v1943 = vmul.f32 %v1786, %v1786
      %v1944 = vmul.f32 %v1791, %v1791
      %v1945 = vmul.f32 %v1794, %v1794
      %v1946 = vmul.f32 %v1799, %v1799
      %v1947 = vmul.f32 %v1802, %v1802
      %v1948 = vmul.f32 %v1807, %v1807
      %v1949 = vmul.f32 %v1810, %v1810
      %v1950 = vmul.f32 %v1815, %v1815
      %v1951 = vmul.f32 %v1818, %v1818
      %v1952 = vmul.f32 %v1823, %v1823
      %v1953 = vmul.f32 %v1826, %v1826
      %v1954 = vmul.f32 %v1831, %v1831
      %v1955 = vmul.f32 %v1834, %v1834
      %v1956 = vmul.f32 %v1839, %v1839
      %v1957 = vmul.f32 %v1842, %v1842
      %v1958 = vmul.f32 %v1847, %v1847
      %v1959 = vsel %vm570, %v1934, 0.0
      %v1960 = vsel %vm570, %v1935, 0.0
      %v1961 = vadd.f32 %v1959, %v1960
      %v1962 = vsel %vm570, %v1936, 0.0
      %v1963 = vadd.f32 %v1961, %v1962
      %v1964 = vsel %vm570, %v1937, 0.0
      %v1965 = vadd.f32 %v1963, %v1964
      %v1966 = vsel %vm570, %v1938, 0.0
      %v1967 = vadd.f32 %v1965, %v1966
      %v1968 = vsel %vm570, %v1939, 0.0
      %v1969 = vadd.f32 %v1967, %v1968
      %v1970 = vsel %vm570, %v1940, 0.0
      %v1971 = vadd.f32 %v1969, %v1970
      %v1972 = vsel %vm570, %v1941, 0.0
      %v1973 = vadd.f32 %v1971, %v1972
      %v1974 = vsel %vm570, %v1942, 0.0
      %v1975 = vadd.f32 %v1973, %v1974
      %v1976 = vsel %vm570, %v1943, 0.0
      %v1977 = vadd.f32 %v1975, %v1976
      %v1978 = vsel %vm570, %v1944, 0.0
      %v1979 = vadd.f32 %v1977, %v1978
      %v1980 = vsel %vm570, %v1945, 0.0
      %v1981 = vadd.f32 %v1979, %v1980
      %v1982 = vsel %vm570, %v1946, 0.0
      %v1983 = vadd.f32 %v1981, %v1982
      %v1984 = vsel %vm570, %v1947, 0.0
      %v1985 = vadd.f32 %v1983, %v1984
      %v1986 = vsel %vm570, %v1948, 0.0
      %v1987 = vadd.f32 %v1985, %v1986
      %v1988 = vsel %vm570, %v1949, 0.0
      %v1989 = vadd.f32 %v1987, %v1988
      %v1990 = vsel %vm570, %v1950, 0.0
      %v1991 = vadd.f32 %v1989, %v1990
      %v1992 = vsel %vm570, %v1951, 0.0
      %v1993 = vadd.f32 %v1991, %v1992
      %v1994 = vsel %vm570, %v1952, 0.0
      %v1995 = vadd.f32 %v1993, %v1994
      %v1996 = vsel %vm570, %v1953, 0.0
      %v1997 = vadd.f32 %v1995, %v1996
      %v1998 = vsel %vm570, %v1954, 0.0
      %v1999 = vadd.f32 %v1997, %v1998
      %v2000 = vsel %vm570, %v1955, 0.0
      %v2001 = vadd.f32 %v1999, %v2000
      %v2002 = vsel %vm570, %v1956, 0.0
      %v2003 = vadd.f32 %v2001, %v2002
      %v2004 = vsel %vm570, %v1957, 0.0
      %v2005 = vadd.f32 %v2003, %v2004
      %v2006 = vsel %vm595, %v1958, 0.0
      %v2007 = vadd.f32 %v2005, %v2006
      %v2008 = vrot.slane %v2007, 4
      %v2009 = vadd.f32 %v2007, %v2008
      %v2010 = vrot.slane %v2009, 2
      %v2011 = vadd.f32 %v2009, %v2010
      %v2012 = vrot.slane %v2011, 1
      %v2013 = vadd.f32 %v2011, %v2012
      %v2014 = vadd.f32 %v1587, %v2013
      %v2015 = vld [vmem:[%s5] sm:$0xff]
      %v2016 = vld [vmem:[%s5 + $0x8] sm:$0xff]
      %v2017 = vld [vmem:[%s5 + $0x10] sm:$0xff]
      %v2018 = vld [vmem:[%s5 + $0x18] sm:$0xff]
      %v2019 = vld [vmem:[%s5 + $0x20] sm:$0xff]
      %v2020 = vld [vmem:[%s5 + $0x28] sm:$0xff]
      %v2021 = vld [vmem:[%s5 + $0x30] sm:$0xff]
      %v2022 = vld [vmem:[%s5 + $0x38] sm:$0xff]
      %v2024 = vsel %vm570, %v1933, 0
      %2026 = vmatprep.subr.mxu0 0.0
      %2027 = vmatpush1.msra.mxu0 0.0
      %2028 = vmatprep.subr.mxu0 0.0
      %2029 = vmatpush1.msra.mxu0 0.0
      %2030 = vmatprep.subr.mxu0 0.0
      %2031 = vmatpush1.msra.mxu0 0.0
      %2032 = vmatprep.subr.mxu0 0.0
      %2033 = vmatpush1.msra.mxu0 0.0
      %2034 = vmatprep.subr.mxu0 0.0
      %2035 = vmatpush1.msra.mxu0 0.0
      %2036 = vmatprep.subr.mxu0 0.0
      %2037 = vmatpush1.msra.mxu0 0.0
      %2038 = vmatprep.subr.mxu0 0.0
      %2039 = vmatpush1.msra.mxu0 0.0
      %2040 = vmatprep.subr.mxu0 0.0
      %2041 = vmatpush1.msra.mxu0 0.0
      %2042 = vmatprep.subr.mxu0 0.0
      %2043 = vmatpush1.msra.mxu0 %v2022
      %2044 = vmatprep.subr.mxu0 0.0
      %2045 = vmatpush1.msra.mxu0 %v2021
      %2046 = vmatprep.subr.mxu0 0.0
      %2047 = vmatpush1.msra.mxu0 %v2020
      %2048 = vmatprep.subr.mxu0 0.0
      %2049 = vmatpush1.msra.mxu0 %v2019
      %2050 = vmatprep.subr.mxu0 0.0
      %2051 = vmatpush1.msra.mxu0 %v2018
      %2052 = vmatprep.subr.mxu0 0.0
      %2053 = vmatpush1.msra.mxu0 %v2017
      %2054 = vmatprep.subr.mxu0 0.0
      %2055 = vmatpush1.msra.mxu0 %v2016
      %2056 = vmatprep.subr.mxu0 0.0
      %2057 = vmatpush1.msra.mxu0 %v2015
      %2058 = vmatprep.subr.mxu0 0.0
      %2059 = vmatpush2.msra.mxu0 0.0
      %2060 = vmatprep.subr.mxu0 0.0
      %2061 = vmatpush2.msra.mxu0 0.0
      %2062 = vmatprep.subr.mxu0 0.0
      %2063 = vmatpush2.msra.mxu0 0.0
      %2064 = vmatprep.subr.mxu0 0.0
      %2065 = vmatpush2.msra.mxu0 0.0
      %2066 = vmatprep.subr.mxu0 0.0
      %2067 = vmatpush2.msra.mxu0 0.0
      %2068 = vmatprep.subr.mxu0 0.0
      %2069 = vmatpush2.msra.mxu0 0.0
      %2070 = vmatprep.subr.mxu0 0.0
      %2071 = vmatpush2.msra.mxu0 0.0
      %2072 = vmatprep.subr.mxu0 0.0
      %2073 = vmatpush2.msra.mxu0 0.0
      %2074 = vmatprep.subr.mxu0 0.0
      %2075 = vmatpush2.msra.mxu0 0.0
      %2076 = vmatprep.subr.mxu0 0.0
      %2077 = vmatpush2.msra.mxu0 0.0
      %2078 = vmatprep.subr.mxu0 0.0
      %2079 = vmatpush2.msra.mxu0 0.0
      %2080 = vmatprep.subr.mxu0 0.0
      %2081 = vmatpush2.msra.mxu0 0.0
      %2082 = vmatprep.subr.mxu0 0.0
      %2083 = vmatpush2.msra.mxu0 0.0
      %2084 = vmatprep.subr.mxu0 0.0
      %2085 = vmatpush2.msra.mxu0 0.0
      %2086 = vmatprep.subr.mxu0 0.0
      %2087 = vmatpush2.msra.mxu0 0.0
      %2088 = vmatprep.subr.mxu0 0.0
      %2089 = vmatpush2.msra.mxu0 0.0
      %2090 = vmatprep.mubr.f32.mxu0 0.0
      %2091 = vmatmul.mubr.f32.gmra.mxu0 %v2024
      %v2092 = vpop.f32.mrf.mxu0
      %v2093 = vadd.f32 0.0, %v2092
      %v2094 = vpop.f32.mrf.mxu0
      %2095 = vdwg.mxu0
      %v2096 = vmul.f32 %v2093, 3.9859693e-05
      %v2098 = vsel %vm570, %v2014, 0
      %2100 = vmatprep.subr.mxu0 0.0
      %2101 = vmatpush1.msra.mxu0 0.0
      %2102 = vmatprep.subr.mxu0 0.0
      %2103 = vmatpush1.msra.mxu0 0.0
      %2104 = vmatprep.subr.mxu0 0.0
      %2105 = vmatpush1.msra.mxu0 0.0
      %2106 = vmatprep.subr.mxu0 0.0
      %2107 = vmatpush1.msra.mxu0 0.0
      %2108 = vmatprep.subr.mxu0 0.0
      %2109 = vmatpush1.msra.mxu0 0.0
      %2110 = vmatprep.subr.mxu0 0.0
      %2111 = vmatpush1.msra.mxu0 0.0
      %2112 = vmatprep.subr.mxu0 0.0
      %2113 = vmatpush1.msra.mxu0 0.0
      %2114 = vmatprep.subr.mxu0 0.0
      %2115 = vmatpush1.msra.mxu0 0.0
      %2116 = vmatprep.subr.mxu0 0.0
      %2117 = vmatpush1.msra.mxu0 %v2022
      %2118 = vmatprep.subr.mxu0 0.0
      %2119 = vmatpush1.msra.mxu0 %v2021
      %2120 = vmatprep.subr.mxu0 0.0
      %2121 = vmatpush1.msra.mxu0 %v2020
      %2122 = vmatprep.subr.mxu0 0.0
      %2123 = vmatpush1.msra.mxu0 %v2019
      %2124 = vmatprep.subr.mxu0 0.0
      %2125 = vmatpush1.msra.mxu0 %v2018
      %2126 = vmatprep.subr.mxu0 0.0
      %2127 = vmatpush1.msra.mxu0 %v2017
      %2128 = vmatprep.subr.mxu0 0.0
      %2129 = vmatpush1.msra.mxu0 %v2016
      %2130 = vmatprep.subr.mxu0 0.0
      %2131 = vmatpush1.msra.mxu0 %v2015
      %2132 = vmatprep.subr.mxu0 0.0
      %2133 = vmatpush2.msra.mxu0 0.0
      %2134 = vmatprep.subr.mxu0 0.0
      %2135 = vmatpush2.msra.mxu0 0.0
      %2136 = vmatprep.subr.mxu0 0.0
      %2137 = vmatpush2.msra.mxu0 0.0
      %2138 = vmatprep.subr.mxu0 0.0
      %2139 = vmatpush2.msra.mxu0 0.0
      %2140 = vmatprep.subr.mxu0 0.0
      %2141 = vmatpush2.msra.mxu0 0.0
      %2142 = vmatprep.subr.mxu0 0.0
      %2143 = vmatpush2.msra.mxu0 0.0
      %2144 = vmatprep.subr.mxu0 0.0
      %2145 = vmatpush2.msra.mxu0 0.0
      %2146 = vmatprep.subr.mxu0 0.0
      %2147 = vmatpush2.msra.mxu0 0.0
      %2148 = vmatprep.subr.mxu0 0.0
      %2149 = vmatpush2.msra.mxu0 0.0
      %2150 = vmatprep.subr.mxu0 0.0
      %2151 = vmatpush2.msra.mxu0 0.0
      %2152 = vmatprep.subr.mxu0 0.0
      %2153 = vmatpush2.msra.mxu0 0.0
      %2154 = vmatprep.subr.mxu0 0.0
      %2155 = vmatpush2.msra.mxu0 0.0
      %2156 = vmatprep.subr.mxu0 0.0
      %2157 = vmatpush2.msra.mxu0 0.0
      %2158 = vmatprep.subr.mxu0 0.0
      %2159 = vmatpush2.msra.mxu0 0.0
      %2160 = vmatprep.subr.mxu0 0.0
      %2161 = vmatpush2.msra.mxu0 0.0
      %2162 = vmatprep.subr.mxu0 0.0
      %2163 = vmatpush2.msra.mxu0 0.0
      %2164 = vmatprep.mubr.f32.mxu0 0.0
      %2165 = vmatmul.mubr.f32.gmra.mxu0 %v2098
      %v2166 = vpop.f32.mrf.mxu0
      %v2167 = vadd.f32 0.0, %v2166
      %v2168 = vpop.f32.mrf.mxu0
      %2169 = vdwg.mxu0
      %v2170 = vmul.f32 %v2167, 3.9859693e-05
      %v2171 = vmul.f32 %v2096, %v2096
      %v2172 = vsub.f32 %v2170, %v2171
      %v2173 = vld [vmem:[%s3] sm:$0x1]
      %v2174 = vadd.f32 %v2172, 1e-05
      %v2175 = vrsqrt.pop %v2174
      %v2176 = vmul.f32 %v2173, %v2175
      %v2177 = vld [vmem:[%s4] sm:$0x1]
      %v2178 = vmul.f32 %v2096, %v2176
      %v2179 = vsub.f32 %v2177, %v2178
      %v2180 = vld [vmem:[#allocation2] sm:$0xff]
      %v2181 = vld [vmem:[#allocation2 + $0x8] sm:$0xff]
      %v2182 = vld [vmem:[#allocation2 + $0x10] sm:$0xff]
      %v2183 = vld [vmem:[#allocation2 + $0x18] sm:$0xff]
      %v2184 = vld [vmem:[#allocation2 + $0x20] sm:$0xff]
      %v2185 = vld [vmem:[#allocation2 + $0x28] sm:$0xff]
      %v2186 = vld [vmem:[#allocation2 + $0x30] sm:$0xff]
      %v2187 = vld [vmem:[#allocation2 + $0x38] sm:$0xff]
      %v2188 = vld [vmem:[#allocation2 + $0x40] sm:$0xff]
      %v2189 = vld [vmem:[#allocation2 + $0x48] sm:$0xff]
      %v2190 = vld [vmem:[#allocation2 + $0x50] sm:$0xff]
      %v2191 = vld [vmem:[#allocation2 + $0x58] sm:$0xff]
      %v2192 = vld [vmem:[#allocation2 + $0x60] sm:$0xff]
      %v2193 = vld [vmem:[#allocation2 + $0x68] sm:$0xff]
      %v2194 = vld [vmem:[#allocation2 + $0x70] sm:$0xff]
      %v2195 = vld [vmem:[#allocation2 + $0x78] sm:$0xff]
      %v2196 = vld [vmem:[#allocation2 + $0x80] sm:$0xff]
      %v2197 = vld [vmem:[#allocation2 + $0x88] sm:$0xff]
      %v2198 = vld [vmem:[#allocation2 + $0x90] sm:$0xff]
      %v2199 = vld [vmem:[#allocation2 + $0x98] sm:$0xff]
      %v2200 = vld [vmem:[#allocation2 + $0xa0] sm:$0xff]
      %v2201 = vld [vmem:[#allocation2 + $0xa8] sm:$0xff]
      %v2202 = vld [vmem:[#allocation2 + $0xb0] sm:$0xff]
      %v2203 = vld [vmem:[#allocation2 + $0xb8] sm:$0xff]
      %v2204 = vld [vmem:[#allocation2 + $0xc0] sm:$0xf]
      %v2206 = vlaneseq
      %v2207 = vshrl.u32 %v2206, 7
      %v2208 = vsub.s32 0, %v2207
      %v2209 = vrot.slane %v2176, %v2208
      %v2211 = vmul.f32 %v2180, %v2209
      %v2212 = vmul.f32 %v2181, %v2209
      %v2213 = vmul.f32 %v2182, %v2209
      %v2214 = vmul.f32 %v2183, %v2209
      %v2215 = vmul.f32 %v2184, %v2209
      %v2216 = vmul.f32 %v2185, %v2209
      %v2217 = vmul.f32 %v2186, %v2209
      %v2218 = vmul.f32 %v2187, %v2209
      %v2219 = vmul.f32 %v2188, %v2209
      %v2220 = vmul.f32 %v2189, %v2209
      %v2221 = vmul.f32 %v2190, %v2209
      %v2222 = vmul.f32 %v2191, %v2209
      %v2223 = vmul.f32 %v2192, %v2209
      %v2224 = vmul.f32 %v2193, %v2209
      %v2225 = vmul.f32 %v2194, %v2209
      %v2226 = vmul.f32 %v2195, %v2209
      %v2227 = vmul.f32 %v2196, %v2209
      %v2228 = vmul.f32 %v2197, %v2209
      %v2229 = vmul.f32 %v2198, %v2209
      %v2230 = vmul.f32 %v2199, %v2209
      %v2231 = vmul.f32 %v2200, %v2209
      %v2232 = vmul.f32 %v2201, %v2209
      %v2233 = vmul.f32 %v2202, %v2209
      %v2234 = vmul.f32 %v2203, %v2209
      %v2235 = vmul.f32 %v2204, %v2209
      %v2237 = vlaneseq
      %v2238 = vshrl.u32 %v2237, 7
      %v2239 = vsub.s32 0, %v2238
      %v2240 = vrot.slane %v2179, %v2239
      %v2242 = vadd.f32 %v2211, %v2240
      %v2243 = vadd.f32 %v2212, %v2240
      %v2244 = vadd.f32 %v2213, %v2240
      %v2245 = vadd.f32 %v2214, %v2240
      %v2246 = vadd.f32 %v2215, %v2240
      %v2247 = vadd.f32 %v2216, %v2240
      %v2248 = vadd.f32 %v2217, %v2240
      %v2249 = vadd.f32 %v2218, %v2240
      %v2250 = vadd.f32 %v2219, %v2240
      %v2251 = vadd.f32 %v2220, %v2240
      %v2252 = vadd.f32 %v2221, %v2240
      %v2253 = vadd.f32 %v2222, %v2240
      %v2254 = vadd.f32 %v2223, %v2240
      %v2255 = vadd.f32 %v2224, %v2240
      %v2256 = vadd.f32 %v2225, %v2240
      %v2257 = vadd.f32 %v2226, %v2240
      %v2258 = vadd.f32 %v2227, %v2240
      %v2259 = vadd.f32 %v2228, %v2240
      %v2260 = vadd.f32 %v2229, %v2240
      %v2261 = vadd.f32 %v2230, %v2240
      %v2262 = vadd.f32 %v2231, %v2240
      %v2263 = vadd.f32 %v2232, %v2240
      %v2264 = vadd.f32 %v2233, %v2240
      %v2265 = vadd.f32 %v2234, %v2240
      %v2266 = vadd.f32 %v2235, %v2240
      %v2267 = vld [vmem:[%s998] sm:$0xff]
      %v2268 = vld [vmem:[%s998 + $0x8] sm:$0xff]
      %v2269 = vld [vmem:[%s998 + $0x10] sm:$0xff]
      %v2270 = vld [vmem:[%s998 + $0x18] sm:$0xff]
      %v2271 = vld [vmem:[%s998 + $0x20] sm:$0xff]
      %v2272 = vld [vmem:[%s998 + $0x28] sm:$0xff]
      %v2273 = vld [vmem:[%s998 + $0x30] sm:$0xff]
      %v2274 = vld [vmem:[%s998 + $0x38] sm:$0xff]
      %v2275 = vld [vmem:[%s998 + $0x40] sm:$0xff]
      %v2276 = vld [vmem:[%s998 + $0x48] sm:$0xff]
      %v2277 = vld [vmem:[%s998 + $0x50] sm:$0xff]
      %v2278 = vld [vmem:[%s998 + $0x58] sm:$0xff]
      %v2279 = vld [vmem:[%s998 + $0x60] sm:$0xff]
      %v2280 = vld [vmem:[%s998 + $0x68] sm:$0xff]
      %v2281 = vld [vmem:[%s998 + $0x70] sm:$0xff]
      %v2282 = vld [vmem:[%s998 + $0x78] sm:$0xff]
      %v2283 = vld [vmem:[%s998 + $0x80] sm:$0xff]
      %v2284 = vld [vmem:[%s998 + $0x88] sm:$0xff]
      %v2285 = vld [vmem:[%s998 + $0x90] sm:$0xff]
      %v2286 = vld [vmem:[%s998 + $0x98] sm:$0xff]
      %v2287 = vld [vmem:[%s998 + $0xa0] sm:$0xff]
      %v2288 = vld [vmem:[%s998 + $0xa8] sm:$0xff]
      %v2289 = vld [vmem:[%s998 + $0xb0] sm:$0xff]
      %v2290 = vld [vmem:[%s998 + $0xb8] sm:$0xff]
      %v2291 = vld [vmem:[%s998 + $0xc0] sm:$0xf]
      %v2292 = vmul.f32 %v2267, %v2209
      %v2293 = vmul.f32 %v2268, %v2209
      %v2294 = vmul.f32 %v2269, %v2209
      %v2295 = vmul.f32 %v2270, %v2209
      %v2296 = vmul.f32 %v2271, %v2209
      %v2297 = vmul.f32 %v2272, %v2209
      %v2298 = vmul.f32 %v2273, %v2209
      %v2299 = vmul.f32 %v2274, %v2209
      %v2300 = vmul.f32 %v2275, %v2209
      %v2301 = vmul.f32 %v2276, %v2209
      %v2302 = vmul.f32 %v2277, %v2209
      %v2303 = vmul.f32 %v2278, %v2209
      %v2304 = vmul.f32 %v2279, %v2209
      %v2305 = vmul.f32 %v2280, %v2209
      %v2306 = vmul.f32 %v2281, %v2209
      %v2307 = vmul.f32 %v2282, %v2209
      %v2308 = vmul.f32 %v2283, %v2209
      %v2309 = vmul.f32 %v2284, %v2209
      %v2310 = vmul.f32 %v2285, %v2209
      %v2311 = vmul.f32 %v2286, %v2209
      %v2312 = vmul.f32 %v2287, %v2209
      %v2313 = vmul.f32 %v2288, %v2209
      %v2314 = vmul.f32 %v2289, %v2209
      %v2315 = vmul.f32 %v2290, %v2209
      %v2316 = vmul.f32 %v2291, %v2209
      %v2317 = vadd.f32 %v2292, %v2240
      %v2318 = vadd.f32 %v2293, %v2240
      %v2319 = vadd.f32 %v2294, %v2240
      %v2320 = vadd.f32 %v2295, %v2240
      %v2321 = vadd.f32 %v2296, %v2240
      %v2322 = vadd.f32 %v2297, %v2240
      %v2323 = vadd.f32 %v2298, %v2240
      %v2324 = vadd.f32 %v2299, %v2240
      %v2325 = vadd.f32 %v2300, %v2240
      %v2326 = vadd.f32 %v2301, %v2240
      %v2327 = vadd.f32 %v2302, %v2240
      %v2328 = vadd.f32 %v2303, %v2240
      %v2329 = vadd.f32 %v2304, %v2240
      %v2330 = vadd.f32 %v2305, %v2240
      %v2331 = vadd.f32 %v2306, %v2240
      %v2332 = vadd.f32 %v2307, %v2240
      %v2333 = vadd.f32 %v2308, %v2240
      %v2334 = vadd.f32 %v2309, %v2240
      %v2335 = vadd.f32 %v2310, %v2240
      %v2336 = vadd.f32 %v2311, %v2240
      %v2337 = vadd.f32 %v2312, %v2240
      %v2338 = vadd.f32 %v2313, %v2240
      %v2339 = vadd.f32 %v2314, %v2240
      %v2340 = vadd.f32 %v2315, %v2240
      %v2341 = vadd.f32 %v2316, %v2240
      %v2342 = vmax.f32 %v2242, %v2317
      %v2343 = vmax.f32 %v2243, %v2318
      %v2344 = vmax.f32 %v2244, %v2319
      %v2345 = vmax.f32 %v2245, %v2320
      %v2346 = vmax.f32 %v2246, %v2321
      %v2347 = vmax.f32 %v2247, %v2322
      %v2348 = vmax.f32 %v2248, %v2323
      %v2349 = vmax.f32 %v2249, %v2324
      %v2350 = vmax.f32 %v2250, %v2325
      %v2351 = vmax.f32 %v2251, %v2326
      %v2352 = vmax.f32 %v2252, %v2327
      %v2353 = vmax.f32 %v2253, %v2328
      %v2354 = vmax.f32 %v2254, %v2329
      %v2355 = vmax.f32 %v2255, %v2330
      %v2356 = vmax.f32 %v2256, %v2331
      %v2357 = vmax.f32 %v2257, %v2332
      %v2358 = vmax.f32 %v2258, %v2333
      %v2359 = vmax.f32 %v2259, %v2334
      %v2360 = vmax.f32 %v2260, %v2335
      %v2361 = vmax.f32 %v2261, %v2336
      %v2362 = vmax.f32 %v2262, %v2337
      %v2363 = vmax.f32 %v2263, %v2338
      %v2364 = vmax.f32 %v2264, %v2339
      %v2365 = vmax.f32 %v2265, %v2340
      %v2366 = vmax.f32 %v2266, %v2341
      %v2367 = vld [vmem:[%s1425] sm:$0xff]
      %v2368 = vld [vmem:[%s1425 + $0x8] sm:$0xff]
      %v2369 = vld [vmem:[%s1425 + $0x10] sm:$0xff]
      %v2370 = vld [vmem:[%s1425 + $0x18] sm:$0xff]
      %v2371 = vld [vmem:[%s1425 + $0x20] sm:$0xff]
      %v2372 = vld [vmem:[%s1425 + $0x28] sm:$0xff]
      %v2373 = vld [vmem:[%s1425 + $0x30] sm:$0xff]
      %v2374 = vld [vmem:[%s1425 + $0x38] sm:$0xff]
      %v2375 = vld [vmem:[%s1425 + $0x40] sm:$0xff]
      %v2376 = vld [vmem:[%s1425 + $0x48] sm:$0xff]
      %v2377 = vld [vmem:[%s1425 + $0x50] sm:$0xff]
      %v2378 = vld [vmem:[%s1425 + $0x58] sm:$0xff]
      %v2379 = vld [vmem:[%s1425 + $0x60] sm:$0xff]
      %v2380 = vld [vmem:[%s1425 + $0x68] sm:$0xff]
      %v2381 = vld [vmem:[%s1425 + $0x70] sm:$0xff]
      %v2382 = vld [vmem:[%s1425 + $0x78] sm:$0xff]
      %v2383 = vld [vmem:[%s1425 + $0x80] sm:$0xff]
      %v2384 = vld [vmem:[%s1425 + $0x88] sm:$0xff]
      %v2385 = vld [vmem:[%s1425 + $0x90] sm:$0xff]
      %v2386 = vld [vmem:[%s1425 + $0x98] sm:$0xff]
      %v2387 = vld [vmem:[%s1425 + $0xa0] sm:$0xff]
      %v2388 = vld [vmem:[%s1425 + $0xa8] sm:$0xff]
      %v2389 = vld [vmem:[%s1425 + $0xb0] sm:$0xff]
      %v2390 = vld [vmem:[%s1425 + $0xb8] sm:$0xff]
      %v2391 = vld [vmem:[%s1425 + $0xc0] sm:$0xf]
      %v2392 = vmul.f32 %v2367, %v2209
      %v2393 = vmul.f32 %v2368, %v2209
      %v2394 = vmul.f32 %v2369, %v2209
      %v2395 = vmul.f32 %v2370, %v2209
      %v2396 = vmul.f32 %v2371, %v2209
      %v2397 = vmul.f32 %v2372, %v2209
      %v2398 = vmul.f32 %v2373, %v2209
      %v2399 = vmul.f32 %v2374, %v2209
      %v2400 = vmul.f32 %v2375, %v2209
      %v2401 = vmul.f32 %v2376, %v2209
      %v2402 = vmul.f32 %v2377, %v2209
      %v2403 = vmul.f32 %v2378, %v2209
      %v2404 = vmul.f32 %v2379, %v2209
      %v2405 = vmul.f32 %v2380, %v2209
      %v2406 = vmul.f32 %v2381, %v2209
      %v2407 = vmul.f32 %v2382, %v2209
      %v2408 = vmul.f32 %v2383, %v2209
      %v2409 = vmul.f32 %v2384, %v2209
      %v2410 = vmul.f32 %v2385, %v2209
      %v2411 = vmul.f32 %v2386, %v2209
      %v2412 = vmul.f32 %v2387, %v2209
      %v2413 = vmul.f32 %v2388, %v2209
      %v2414 = vmul.f32 %v2389, %v2209
      %v2415 = vmul.f32 %v2390, %v2209
      %v2416 = vmul.f32 %v2391, %v2209
      %v2417 = vadd.f32 %v2392, %v2240
      %v2418 = vadd.f32 %v2393, %v2240
      %v2419 = vadd.f32 %v2394, %v2240
      %v2420 = vadd.f32 %v2395, %v2240
      %v2421 = vadd.f32 %v2396, %v2240
      %v2422 = vadd.f32 %v2397, %v2240
      %v2423 = vadd.f32 %v2398, %v2240
      %v2424 = vadd.f32 %v2399, %v2240
      %v2425 = vadd.f32 %v2400, %v2240
      %v2426 = vadd.f32 %v2401, %v2240
      %v2427 = vadd.f32 %v2402, %v2240
      %v2428 = vadd.f32 %v2403, %v2240
      %v2429 = vadd.f32 %v2404, %v2240
      %v2430 = vadd.f32 %v2405, %v2240
      %v2431 = vadd.f32 %v2406, %v2240
      %v2432 = vadd.f32 %v2407, %v2240
      %v2433 = vadd.f32 %v2408, %v2240
      %v2434 = vadd.f32 %v2409, %v2240
      %v2435 = vadd.f32 %v2410, %v2240
      %v2436 = vadd.f32 %v2411, %v2240
      %v2437 = vadd.f32 %v2412, %v2240
      %v2438 = vadd.f32 %v2413, %v2240
      %v2439 = vadd.f32 %v2414, %v2240
      %v2440 = vadd.f32 %v2415, %v2240
      %v2441 = vadd.f32 %v2416, %v2240
      %v2442 = vmax.f32 %v2342, %v2417
      %v2443 = vmax.f32 %v2343, %v2418
      %v2444 = vmax.f32 %v2344, %v2419
      %v2445 = vmax.f32 %v2345, %v2420
      %v2446 = vmax.f32 %v2346, %v2421
      %v2447 = vmax.f32 %v2347, %v2422
      %v2448 = vmax.f32 %v2348, %v2423
      %v2449 = vmax.f32 %v2349, %v2424
      %v2450 = vmax.f32 %v2350, %v2425
      %v2451 = vmax.f32 %v2351, %v2426
      %v2452 = vmax.f32 %v2352, %v2427
      %v2453 = vmax.f32 %v2353, %v2428
      %v2454 = vmax.f32 %v2354, %v2429
      %v2455 = vmax.f32 %v2355, %v2430
      %v2456 = vmax.f32 %v2356, %v2431
      %v2457 = vmax.f32 %v2357, %v2432
      %v2458 = vmax.f32 %v2358, %v2433
      %v2459 = vmax.f32 %v2359, %v2434
      %v2460 = vmax.f32 %v2360, %v2435
      %v2461 = vmax.f32 %v2361, %v2436
      %v2462 = vmax.f32 %v2362, %v2437
      %v2463 = vmax.f32 %v2363, %v2438
      %v2464 = vmax.f32 %v2364, %v2439
      %v2465 = vmax.f32 %v2365, %v2440
      %v2466 = vmax.f32 %v2366, %v2441
      %v2467 = vld [vmem:[%s1852] sm:$0xff]
      %v2468 = vld [vmem:[%s1852 + $0x8] sm:$0xff]
      %v2469 = vld [vmem:[%s1852 + $0x10] sm:$0xff]
      %v2470 = vld [vmem:[%s1852 + $0x18] sm:$0xff]
      %v2471 = vld [vmem:[%s1852 + $0x20] sm:$0xff]
      %v2472 = vld [vmem:[%s1852 + $0x28] sm:$0xff]
      %v2473 = vld [vmem:[%s1852 + $0x30] sm:$0xff]
      %v2474 = vld [vmem:[%s1852 + $0x38] sm:$0xff]
      %v2475 = vld [vmem:[%s1852 + $0x40] sm:$0xff]
      %v2476 = vld [vmem:[%s1852 + $0x48] sm:$0xff]
      %v2477 = vld [vmem:[%s1852 + $0x50] sm:$0xff]
      %v2478 = vld [vmem:[%s1852 + $0x58] sm:$0xff]
      %v2479 = vld [vmem:[%s1852 + $0x60] sm:$0xff]
      %v2480 = vld [vmem:[%s1852 + $0x68] sm:$0xff]
      %v2481 = vld [vmem:[%s1852 + $0x70] sm:$0xff]
      %v2482 = vld [vmem:[%s1852 + $0x78] sm:$0xff]
      %v2483 = vld [vmem:[%s1852 + $0x80] sm:$0xff]
      %v2484 = vld [vmem:[%s1852 + $0x88] sm:$0xff]
      %v2485 = vld [vmem:[%s1852 + $0x90] sm:$0xff]
      %v2486 = vld [vmem:[%s1852 + $0x98] sm:$0xff]
      %v2487 = vld [vmem:[%s1852 + $0xa0] sm:$0xff]
      %v2488 = vld [vmem:[%s1852 + $0xa8] sm:$0xff]
      %v2489 = vld [vmem:[%s1852 + $0xb0] sm:$0xff]
      %v2490 = vld [vmem:[%s1852 + $0xb8] sm:$0xff]
      %v2491 = vld [vmem:[%s1852 + $0xc0] sm:$0xf]
      %v2492 = vmul.f32 %v2467, %v2209
      %v2493 = vmul.f32 %v2468, %v2209
      %v2494 = vmul.f32 %v2469, %v2209
      %v2495 = vmul.f32 %v2470, %v2209
      %v2496 = vmul.f32 %v2471, %v2209
      %v2497 = vmul.f32 %v2472, %v2209
      %v2498 = vmul.f32 %v2473, %v2209
      %v2499 = vmul.f32 %v2474, %v2209
      %v2500 = vmul.f32 %v2475, %v2209
      %v2501 = vmul.f32 %v2476, %v2209
      %v2502 = vmul.f32 %v2477, %v2209
      %v2503 = vmul.f32 %v2478, %v2209
      %v2504 = vmul.f32 %v2479, %v2209
      %v2505 = vmul.f32 %v2480, %v2209
      %v2506 = vmul.f32 %v2481, %v2209
      %v2507 = vmul.f32 %v2482, %v2209
      %v2508 = vmul.f32 %v2483, %v2209
      %v2509 = vmul.f32 %v2484, %v2209
      %v2510 = vmul.f32 %v2485, %v2209
      %v2511 = vmul.f32 %v2486, %v2209
      %v2512 = vmul.f32 %v2487, %v2209
      %v2513 = vmul.f32 %v2488, %v2209
      %v2514 = vmul.f32 %v2489, %v2209
      %v2515 = vmul.f32 %v2490, %v2209
      %v2516 = vmul.f32 %v2491, %v2209
      %v2517 = vadd.f32 %v2492, %v2240
      %v2518 = vadd.f32 %v2493, %v2240
      %v2519 = vadd.f32 %v2494, %v2240
      %v2520 = vadd.f32 %v2495, %v2240
      %v2521 = vadd.f32 %v2496, %v2240
      %v2522 = vadd.f32 %v2497, %v2240
      %v2523 = vadd.f32 %v2498, %v2240
      %v2524 = vadd.f32 %v2499, %v2240
      %v2525 = vadd.f32 %v2500, %v2240
      %v2526 = vadd.f32 %v2501, %v2240
      %v2527 = vadd.f32 %v2502, %v2240
      %v2528 = vadd.f32 %v2503, %v2240
      %v2529 = vadd.f32 %v2504, %v2240
      %v2530 = vadd.f32 %v2505, %v2240
      %v2531 = vadd.f32 %v2506, %v2240
      %v2532 = vadd.f32 %v2507, %v2240
      %v2533 = vadd.f32 %v2508, %v2240
      %v2534 = vadd.f32 %v2509, %v2240
      %v2535 = vadd.f32 %v2510, %v2240
      %v2536 = vadd.f32 %v2511, %v2240
      %v2537 = vadd.f32 %v2512, %v2240
      %v2538 = vadd.f32 %v2513, %v2240
      %v2539 = vadd.f32 %v2514, %v2240
      %v2540 = vadd.f32 %v2515, %v2240
      %v2541 = vadd.f32 %v2516, %v2240
      %v2542 = vmax.f32 %v2442, %v2517
      %v2543 = vmax.f32 %v2443, %v2518
      %v2544 = vmax.f32 %v2444, %v2519
      %v2545 = vmax.f32 %v2445, %v2520
      %v2546 = vmax.f32 %v2446, %v2521
      %v2547 = vmax.f32 %v2447, %v2522
      %v2548 = vmax.f32 %v2448, %v2523
      %v2549 = vmax.f32 %v2449, %v2524
      %v2550 = vmax.f32 %v2450, %v2525
      %v2551 = vmax.f32 %v2451, %v2526
      %v2552 = vmax.f32 %v2452, %v2527
      %v2553 = vmax.f32 %v2453, %v2528
      %v2554 = vmax.f32 %v2454, %v2529
      %v2555 = vmax.f32 %v2455, %v2530
      %v2556 = vmax.f32 %v2456, %v2531
      %v2557 = vmax.f32 %v2457, %v2532
      %v2558 = vmax.f32 %v2458, %v2533
      %v2559 = vmax.f32 %v2459, %v2534
      %v2560 = vmax.f32 %v2460, %v2535
      %v2561 = vmax.f32 %v2461, %v2536
      %v2562 = vmax.f32 %v2462, %v2537
      %v2563 = vmax.f32 %v2463, %v2538
      %v2564 = vmax.f32 %v2464, %v2539
      %v2565 = vmax.f32 %v2465, %v2540
      %v2566 = vmax.f32 %v2466, %v2541
      %v2567 = vmax.f32 %v2542, 0.0
      %v2568 = vmax.f32 %v2543, 0.0
      %v2569 = vmax.f32 %v2544, 0.0
      %v2570 = vmax.f32 %v2545, 0.0
      %v2571 = vmax.f32 %v2546, 0.0
      %v2572 = vmax.f32 %v2547, 0.0
      %v2573 = vmax.f32 %v2548, 0.0
      %v2574 = vmax.f32 %v2549, 0.0
      %v2575 = vmax.f32 %v2550, 0.0
      %v2576 = vmax.f32 %v2551, 0.0
      %v2577 = vmax.f32 %v2552, 0.0
      %v2578 = vmax.f32 %v2553, 0.0
      %v2579 = vmax.f32 %v2554, 0.0
      %v2580 = vmax.f32 %v2555, 0.0
      %v2581 = vmax.f32 %v2556, 0.0
      %v2582 = vmax.f32 %v2557, 0.0
      %v2583 = vmax.f32 %v2558, 0.0
      %v2584 = vmax.f32 %v2559, 0.0
      %v2585 = vmax.f32 %v2560, 0.0
      %v2586 = vmax.f32 %v2561, 0.0
      %v2587 = vmax.f32 %v2562, 0.0
      %v2588 = vmax.f32 %v2563, 0.0
      %v2589 = vmax.f32 %v2564, 0.0
      %v2590 = vmax.f32 %v2565, 0.0
      %v2591 = vmax.f32 %v2566, 0.0
      %v2592 = vpack.c.bf16 %v2568, %v2567
      %v2593 = vpack.c.bf16 %v2570, %v2569
      %v2594 = vpack.c.bf16 %v2572, %v2571
      %v2595 = vpack.c.bf16 %v2574, %v2573
      %v2596 = vpack.c.bf16 %v2576, %v2575
      %v2597 = vpack.c.bf16 %v2578, %v2577
      %v2598 = vpack.c.bf16 %v2580, %v2579
      %v2599 = vpack.c.bf16 %v2582, %v2581
      %v2600 = vpack.c.bf16 %v2584, %v2583
      %v2601 = vpack.c.bf16 %v2586, %v2585
      %v2602 = vpack.c.bf16 %v2588, %v2587
      %v2603 = vpack.c.bf16 %v2590, %v2589
      %v2604 = vpack.c.bf16 %v2591, %v2591
      %v2618 = vunpack.c.l.b16 %v2592
      %v2619 = vunpack.c.h.b16 %v2592
      %v2620 = vunpack.c.l.b16 %v2593
      %v2621 = vunpack.c.h.b16 %v2593
      %v2622 = vunpack.c.l.b16 %v2594
      %v2623 = vunpack.c.h.b16 %v2594
      %v2624 = vunpack.c.l.b16 %v2595
      %v2625 = vunpack.c.h.b16 %v2595
      %v2626 = vunpack.c.l.b16 %v2596
      %v2627 = vunpack.c.h.b16 %v2596
      %v2628 = vunpack.c.l.b16 %v2597
      %v2629 = vunpack.c.h.b16 %v2597
      %v2630 = vunpack.c.l.b16 %v2598
      %v2631 = vunpack.c.h.b16 %v2598
      %v2632 = vunpack.c.l.b16 %v2599
      %v2633 = vunpack.c.h.b16 %v2599
      %v2634 = vunpack.c.l.b16 %v2600
      %v2635 = vunpack.c.h.b16 %v2600
      %v2636 = vunpack.c.l.b16 %v2601
      %v2637 = vunpack.c.h.b16 %v2601
      %v2638 = vunpack.c.l.b16 %v2602
      %v2639 = vunpack.c.h.b16 %v2602
      %v2640 = vunpack.c.l.b16 %v2603
      %v2641 = vunpack.c.h.b16 %v2603
      %v2642 = vunpack.c.l.b16 %v2604
      %v2643 = vpack.c.b16 %v2618, %v2618
      %v2644 = vpack.c.b16 %v2619, %v2619
      %v2645 = vpack.c.b16 %v2620, %v2620
      %v2646 = vpack.c.b16 %v2621, %v2621
      %v2647 = vpack.c.b16 %v2622, %v2622
      %v2648 = vpack.c.b16 %v2623, %v2623
      %v2649 = vpack.c.b16 %v2624, %v2624
      %v2650 = vpack.c.b16 %v2625, %v2625
      %v2651 = vpack.c.b16 %v2626, %v2626
      %v2652 = vpack.c.b16 %v2627, %v2627
      %v2653 = vpack.c.b16 %v2628, %v2628
      %v2654 = vpack.c.b16 %v2629, %v2629
      %v2655 = vpack.c.b16 %v2630, %v2630
      %v2656 = vpack.c.b16 %v2631, %v2631
      %v2657 = vpack.c.b16 %v2632, %v2632
      %v2658 = vpack.c.b16 %v2633, %v2633
      %v2659 = vpack.c.b16 %v2634, %v2634
      %v2660 = vpack.c.b16 %v2635, %v2635
      %v2661 = vpack.c.b16 %v2636, %v2636
      %v2662 = vpack.c.b16 %v2637, %v2637
      %v2663 = vpack.c.b16 %v2638, %v2638
      %v2664 = vpack.c.b16 %v2639, %v2639
      %v2665 = vpack.c.b16 %v2640, %v2640
      %v2666 = vpack.c.b16 %v2641, %v2641
      %v2667 = vpack.c.b16 %v2642, %v2642
      %2693 = vst.msk [vmem:[%s251] sm:$0xf] %vm595, %v2643
      %2694 = vst.msk [vmem:[%s251 + $0x4] sm:$0xf] %vm595, %v2644
      %2695 = vst.msk [vmem:[%s251 + $0x8] sm:$0xf] %vm595, %v2645
      %2696 = vst.msk [vmem:[%s251 + $0xc] sm:$0xf] %vm595, %v2646
      %2697 = vst.msk [vmem:[%s251 + $0x10] sm:$0xf] %vm595, %v2647
      %2698 = vst.msk [vmem:[%s251 + $0x14] sm:$0xf] %vm595, %v2648
      %2699 = vst.msk [vmem:[%s251 + $0x18] sm:$0xf] %vm595, %v2649
      %2700 = vst.msk [vmem:[%s251 + $0x1c] sm:$0xf] %vm595, %v2650
      %2701 = vst.msk [vmem:[%s251 + $0x20] sm:$0xf] %vm595, %v2651
      %2702 = vst.msk [vmem:[%s251 + $0x24] sm:$0xf] %vm595, %v2652
      %2703 = vst.msk [vmem:[%s251 + $0x28] sm:$0xf] %vm595, %v2653
      %2704 = vst.msk [vmem:[%s251 + $0x2c] sm:$0xf] %vm595, %v2654
      %2705 = vst.msk [vmem:[%s251 + $0x30] sm:$0xf] %vm595, %v2655
      %2706 = vst.msk [vmem:[%s251 + $0x34] sm:$0xf] %vm595, %v2656
      %2707 = vst.msk [vmem:[%s251 + $0x38] sm:$0xf] %vm595, %v2657
      %2708 = vst.msk [vmem:[%s251 + $0x3c] sm:$0xf] %vm595, %v2658
      %2709 = vst.msk [vmem:[%s251 + $0x40] sm:$0xf] %vm595, %v2659
      %2710 = vst.msk [vmem:[%s251 + $0x44] sm:$0xf] %vm595, %v2660
      %2711 = vst.msk [vmem:[%s251 + $0x48] sm:$0xf] %vm595, %v2661
      %2712 = vst.msk [vmem:[%s251 + $0x4c] sm:$0xf] %vm595, %v2662
      %2713 = vst.msk [vmem:[%s251 + $0x50] sm:$0xf] %vm595, %v2663
      %2714 = vst.msk [vmem:[%s251 + $0x54] sm:$0xf] %vm595, %v2664
      %2715 = vst.msk [vmem:[%s251 + $0x58] sm:$0xf] %vm595, %v2665
      %2716 = vst.msk [vmem:[%s251 + $0x5c] sm:$0xf] %vm595, %v2666
      %vm2717 = vcmask 517120
      %2718 = vst.msk [vmem:[%s251 + $0x60] sm:$0x3] %vm2717, %v2667
      %p2719 = scmp.lt.s32.totalorder %s17, 1
      %s2720 = scalar_select %p2719, %s17, 1
      %s2721 = smul.addr %s2720, 25
      %s2722 = smul.addr %s2721, 4
      %s2723 = scalar_lea.vmem %s6, %s2722
      // Predicated region
      $region45: #{forward.3} parent=43 // pred_check
        %p2724 = pneg %p166
      $region46: #{forward.3} parent=43 // pred_check_branch
        %2726 = sbr.rel (%p2724) target = $region48
      $region47: #{forward.3} parent=43 // pred_region
        _
      $region48: #{forward.3} parent=43 // pred_fallthru
        _
    $region44: #{forward.3} parent=5 // pred_fallthru
      _
    %p2727 = scmp.le.s32.totalorder 2, %s12
    // Predicated region
    $region49: #{forward.3} parent=5 // pred_check
      %p2728 = pneg %p2727
    $region50: #{forward.3} parent=5 // pred_check_branch
      %2730 = sbr.rel (%p2728) target = $region52
    $region51: #{forward.3} parent=5 // pred_region
      %s2731 = ssub.s32 %s12, 2
      // Predicated region
      $region53: #{forward.3} parent=51 // pred_check
        %p2732 = pneg %p172
      $region54: #{forward.3} parent=51 // pred_check_branch
        %2734 = sbr.rel (%p2732) target = $region56
      $region55: #{forward.3} parent=51 // pred_region
        %p2735 = scmp.lt.s32.totalorder %s18, 1
        %s2736 = scalar_select %p2735, %s18, 1
        %s2737 = smul.addr %s2736, 25
        %s2738 = smul.addr %s2737, 4
        %s2739 = scalar_lea.vmem %s6, %s2738
      $region56: #{forward.3} parent=51 // pred_fallthru
        _
    $region52: #{forward.3} parent=5 // pred_fallthru
      _
  $region6: #{forward.3} parent=0 // loop_footer
    %s16 = sadd.s32 1, %s12
  $region7: #{forward.3} parent=0 // loop_footer_branch
    %11 = sbr.rel target = $region3
  $region8: #{forward.3} parent=0 // loop_exit
    _

// kernel: forward.4
$region0: #{forward.4}
  #allocation0 [shape = 'u32[]', space=smem, size = 0x4, offset = 0x4, fixed_abs, tag = 'smem constant byte address 0x4 - core index']
  #allocation1 [shape = 'u32[144,128]{1,0:T(1,128)}', space=vmem, size = 0x12000, scoped, tag = 'internal scratch']
  #allocation2 [shape = 'f32[4,25,64]{2,1,0:T(8,128)}', space=vmem, size = 0x10000, scoped, tag = 'scratch operand']
  %s0 = inlined_call_operand.vmem [shape: bf16[2,4,25,1600], index: 0, kind: input, shape index: {}]
  %s1 = inlined_call_operand.vmem [shape: bf16[1600,64], index: 1, kind: input, shape index: {}]
  %s2 = inlined_call_operand.vmem [shape: f32[1,64], index: 2, kind: input, shape index: {}]
  %s3 = inlined_call_operand.vmem [shape: f32[1,64], index: 3, kind: input, shape index: {}]
  %s4 = inlined_call_operand.vmem [shape: f32[1,64], index: 4, kind: input, shape index: {}]
  %s5 = inlined_call_operand.vmem [shape: f32[64,64], index: 5, kind: input, shape index: {}]
  %s6 = inlined_call_operand.vmem [shape: bf16[2,25,64], index: 6, kind: output, shape index: {}]
  %s7 = sld [smem:[#allocation0]]
  $region57: #{forward.4} parent=0
    _
  %s9 = ssub.s32 1, %s7
  %s10 = scalar_select 0, %s9, %s7
  loop: start=0, step=1, limit=4
  $region2: #{forward.4} parent=0 // loop_pre_header
    _
  $region3: #{forward.4} parent=0 // loop_header
    %s12 = sphi 0, %s16
    %p13 = scmp.ge.s32.totalorder %s12, 4
    %s22 = sphi 0, %s24
    %s25 = sphi 0, %s22
    %s26 = sphi 0, %s25
    %s42 = sphi 0, %s26
    %s46 = sphi 0, %s46
    %s48 = sphi 0, %s46
    %s49 = sphi 0, %s48
    %s63 = sphi 0, %s49
    %s67 = sphi 0, %s67
    %s69 = sphi 0, %s67
    %s70 = sphi 0, %s69
    %s84 = sphi 0, %s70
    %s88 = sphi 0, %s88
    %s90 = sphi 0, %s88
    %s91 = sphi 0, %s90
    %s105 = sphi 0, %s91
    %s109 = sphi 0, %s109
    %s111 = sphi 0, %s109
    %s112 = sphi 0, %s111
    %s126 = sphi 0, %s112
    %s130 = sphi 0, %s130
    %s132 = sphi 0, %s130
    %s133 = sphi 0, %s132
    %s147 = sphi 0, %s133
    %s153 = sphi 0, %s155
    %s156 = sphi 0, %s153
    %s157 = sphi 0, %s156
    %s173 = sphi 0, %s157
  $region4: #{forward.4} parent=0 // loop_header_branch
    %15 = sbr.rel (%p13) target = $region8
  $region5: #{forward.4} parent=0 // loop_body
    %s17 = ssub.s32 %s12, 1
    %s18 = ssub.s32 %s12, 2
    %s19 = sadd.s32 %s12, 1
    %s20 = ssub.s32 %s12, %s19
    %p21 = scmp.eq.s32.totalorder %s20, 0
    %s23 = sadd.s32 %s22, 1
    %s24 = scalar_select %p21, %s22, %s23
    %p27 = pneg %p21
    %p28 = scmp.eq.s32.totalorder %s12, 1
    %p29 = por %p27, %p28
    %p30 = scmp.ne.s32.totalorder %s22, %s25
    %p31 = scmp.eq.s32.totalorder %s12, 0
    %p32 = por %p30, %p31
    %p33 = scmp.ne.s32.totalorder %s22, %s25
    %p34 = scmp.eq.s32.totalorder %s17, 1
    %p35 = por %p33, %p34
    %p36 = scmp.ne.s32.totalorder %s25, %s26
    %p37 = scmp.eq.s32.totalorder %s17, 0
    %p38 = por %p36, %p37
    %p39 = scmp.ne.s32.totalorder %s25, %s26
    %p40 = scmp.eq.s32.totalorder %s18, 1
    %p41 = por %p39, %p40
    %p43 = scmp.ne.s32.totalorder %s26, %s42
    %p44 = scmp.eq.s32.totalorder %s18, 0
    %p45 = por %p43, %p44
    %s47 = sadd.s32 %s46, 1
    %p50 = scmp.eq.s32.totalorder %s12, 1
    %p51 = scmp.ne.s32.totalorder %s46, %s48
    %p52 = scmp.eq.s32.totalorder %s12, 0
    %p53 = por %p51, %p52
    %p54 = scmp.ne.s32.totalorder %s46, %s48
    %p55 = scmp.eq.s32.totalorder %s17, 1
    %p56 = por %p54, %p55
    %p57 = scmp.ne.s32.totalorder %s48, %s49
    %p58 = scmp.eq.s32.totalorder %s17, 0
    %p59 = por %p57, %p58
    %p60 = scmp.ne.s32.totalorder %s48, %s49
    %p61 = scmp.eq.s32.totalorder %s18, 1
    %p62 = por %p60, %p61
    %p64 = scmp.ne.s32.totalorder %s49, %s63
    %p65 = scmp.eq.s32.totalorder %s18, 0
    %p66 = por %p64, %p65
    %s68 = sadd.s32 %s67, 1
    %p71 = scmp.eq.s32.totalorder %s12, 1
    %p72 = scmp.ne.s32.totalorder %s67, %s69
    %p73 = scmp.eq.s32.totalorder %s12, 0
    %p74 = por %p72, %p73
    %p75 = scmp.ne.s32.totalorder %s67, %s69
    %p76 = scmp.eq.s32.totalorder %s17, 1
    %p77 = por %p75, %p76
    %p78 = scmp.ne.s32.totalorder %s69, %s70
    %p79 = scmp.eq.s32.totalorder %s17, 0
    %p80 = por %p78, %p79
    %p81 = scmp.ne.s32.totalorder %s69, %s70
    %p82 = scmp.eq.s32.totalorder %s18, 1
    %p83 = por %p81, %p82
    %p85 = scmp.ne.s32.totalorder %s70, %s84
    %p86 = scmp.eq.s32.totalorder %s18, 0
    %p87 = por %p85, %p86
    %s89 = sadd.s32 %s88, 1
    %p92 = scmp.eq.s32.totalorder %s12, 1
    %p93 = scmp.ne.s32.totalorder %s88, %s90
    %p94 = scmp.eq.s32.totalorder %s12, 0
    %p95 = por %p93, %p94
    %p96 = scmp.ne.s32.totalorder %s88, %s90
    %p97 = scmp.eq.s32.totalorder %s17, 1
    %p98 = por %p96, %p97
    %p99 = scmp.ne.s32.totalorder %s90, %s91
    %p100 = scmp.eq.s32.totalorder %s17, 0
    %p101 = por %p99, %p100
    %p102 = scmp.ne.s32.totalorder %s90, %s91
    %p103 = scmp.eq.s32.totalorder %s18, 1
    %p104 = por %p102, %p103
    %p106 = scmp.ne.s32.totalorder %s91, %s105
    %p107 = scmp.eq.s32.totalorder %s18, 0
    %p108 = por %p106, %p107
    %s110 = sadd.s32 %s109, 1
    %p113 = scmp.eq.s32.totalorder %s12, 1
    %p114 = scmp.ne.s32.totalorder %s109, %s111
    %p115 = scmp.eq.s32.totalorder %s12, 0
    %p116 = por %p114, %p115
    %p117 = scmp.ne.s32.totalorder %s109, %s111
    %p118 = scmp.eq.s32.totalorder %s17, 1
    %p119 = por %p117, %p118
    %p120 = scmp.ne.s32.totalorder %s111, %s112
    %p121 = scmp.eq.s32.totalorder %s17, 0
    %p122 = por %p120, %p121
    %p123 = scmp.ne.s32.totalorder %s111, %s112
    %p124 = scmp.eq.s32.totalorder %s18, 1
    %p125 = por %p123, %p124
    %p127 = scmp.ne.s32.totalorder %s112, %s126
    %p128 = scmp.eq.s32.totalorder %s18, 0
    %p129 = por %p127, %p128
    %s131 = sadd.s32 %s130, 1
    %p134 = scmp.eq.s32.totalorder %s12, 1
    %p135 = scmp.ne.s32.totalorder %s130, %s132
    %p136 = scmp.eq.s32.totalorder %s12, 0
    %p137 = por %p135, %p136
    %p138 = scmp.ne.s32.totalorder %s130, %s132
    %p139 = scmp.eq.s32.totalorder %s17, 1
    %p140 = por %p138, %p139
    %p141 = scmp.ne.s32.totalorder %s132, %s133
    %p142 = scmp.eq.s32.totalorder %s17, 0
    %p143 = por %p141, %p142
    %p144 = scmp.ne.s32.totalorder %s132, %s133
    %p145 = scmp.eq.s32.totalorder %s18, 1
    %p146 = por %p144, %p145
    %p148 = scmp.ne.s32.totalorder %s133, %s147
    %p149 = scmp.eq.s32.totalorder %s18, 0
    %p150 = por %p148, %p149
    %s151 = ssub.s32 %s12, %s19
    %p152 = scmp.eq.s32.totalorder %s151, 0
    %s154 = sadd.s32 %s153, 1
    %s155 = scalar_select %p152, %s153, %s154
    %p158 = pneg %p152
    %p159 = scmp.eq.s32.totalorder %s12, 1
    %p160 = por %p158, %p159
    %p161 = scmp.ne.s32.totalorder %s153, %s156
    %p162 = scmp.eq.s32.totalorder %s12, 0
    %p163 = por %p161, %p162
    %p164 = scmp.ne.s32.totalorder %s153, %s156
    %p165 = scmp.eq.s32.totalorder %s17, 1
    %p166 = por %p164, %p165
    %p167 = scmp.ne.s32.totalorder %s156, %s157
    %p168 = scmp.eq.s32.totalorder %s17, 0
    %p169 = por %p167, %p168
    %p170 = scmp.ne.s32.totalorder %s156, %s157
    %p171 = scmp.eq.s32.totalorder %s18, 1
    %p172 = por %p170, %p171
    %p174 = scmp.ne.s32.totalorder %s157, %s173
    %p175 = scmp.eq.s32.totalorder %s18, 0
    %p176 = por %p174, %p175
    %p177 = scmp.le.s32.totalorder 1, %s12
    %p178 = scmp.lt.s32.totalorder %s12, 3
    %p179 = pnand %p177, %p178
    %p180 = pneg %p179
    // Predicated region
    $region9: #{forward.4} parent=5 // pred_check
      _
    $region10: #{forward.4} parent=5 // pred_check_branch
      %182 = sbr.rel (%p179) target = $region12
    $region11: #{forward.4} parent=5 // pred_region
      %s183 = ssub.s32 %s12, 1
      // Predicated region
      $region13: #{forward.4} parent=11 // pred_check
        %p184 = pneg %p59
      $region14: #{forward.4} parent=11 // pred_check_branch
        %186 = sbr.rel (%p184) target = $region16
      $region15: #{forward.4} parent=11 // pred_region
        _
      $region16: #{forward.4} parent=11 // pred_fallthru
        _
      // Predicated region
      $region17: #{forward.4} parent=11 // pred_check
        %p187 = pneg %p80
      $region18: #{forward.4} parent=11 // pred_check_branch
        %189 = sbr.rel (%p187) target = $region20
      $region19: #{forward.4} parent=11 // pred_region
        _
      $region20: #{forward.4} parent=11 // pred_fallthru
        _
      // Predicated region
      $region21: #{forward.4} parent=11 // pred_check
        %p190 = pneg %p101
      $region22: #{forward.4} parent=11 // pred_check_branch
        %192 = sbr.rel (%p190) target = $region24
      $region23: #{forward.4} parent=11 // pred_region
        _
      $region24: #{forward.4} parent=11 // pred_fallthru
        _
      // Predicated region
      $region25: #{forward.4} parent=11 // pred_check
        %p193 = pneg %p122
      $region26: #{forward.4} parent=11 // pred_check_branch
        %195 = sbr.rel (%p193) target = $region28
      $region27: #{forward.4} parent=11 // pred_region
        _
      $region28: #{forward.4} parent=11 // pred_fallthru
        _
      // Predicated region
      $region29: #{forward.4} parent=11 // pred_check
        %p196 = pneg %p143
      $region30: #{forward.4} parent=11 // pred_check_branch
        %198 = sbr.rel (%p196) target = $region32
      $region31: #{forward.4} parent=11 // pred_region
        _
      $region32: #{forward.4} parent=11 // pred_fallthru
        _
    $region12: #{forward.4} parent=5 // pred_fallthru
      _
    %p199 = scmp.lt.s32.totalorder %s12, 2
    // Predicated region
    $region33: #{forward.4} parent=5 // pred_check
      %p200 = pneg %p199
    $region34: #{forward.4} parent=5 // pred_check_branch
      %202 = sbr.rel (%p200) target = $region36
    $region35: #{forward.4} parent=5 // pred_region
      // Predicated region
      $region37: #{forward.4} parent=35 // pred_check
        %p203 = pneg %p32
      $region38: #{forward.4} parent=35 // pred_check_branch
        %205 = sbr.rel (%p203) target = $region40
      $region39: #{forward.4} parent=35 // pred_region
        %p206 = scmp.lt.s32.totalorder %s12, 1
        %s207 = scalar_select %p206, %s12, 1
        %s208 = smul.addr %s207, 208
        %s209 = smul.addr %s208, 4
        %s210 = scalar_lea.vmem %s0, %s209
      $region40: #{forward.4} parent=35 // pred_fallthru
        _
    $region36: #{forward.4} parent=5 // pred_fallthru
      _
    %p211 = scmp.le.s32.totalorder 1, %s12
    %p212 = scmp.lt.s32.totalorder %s12, 3
    %p213 = pnand %p211, %p212
    %p214 = pneg %p213
    // Predicated region
    $region41: #{forward.4} parent=5 // pred_check
      _
    $region42: #{forward.4} parent=5 // pred_check_branch
      %216 = sbr.rel (%p213) target = $region44
    $region43: #{forward.4} parent=5 // pred_region
      %s217 = ssub.s32 %s12, 1
      %p218 = scmp.lt.s32.totalorder %s17, 1
      %s219 = scalar_select %p218, %s17, 1
      %s220 = smul.addr %s219, 208
      %s221 = smul.addr %s220, 4
      %s222 = scalar_lea.vmem %s0, %s221
      %p223 = pneg %p38
      %p224 = pneg %p35
      %p225 = pneg %p59
      %p226 = pneg %p56
      %p227 = pneg %p80
      %p228 = pneg %p77
      %p229 = pneg %p101
      %p230 = pneg %p98
      %p231 = pneg %p122
      %p232 = pneg %p119
      %p233 = pneg %p143
      %p234 = pneg %p140
      %p235 = pneg %p169
      %p236 = pneg %p166
      %p237 = scmp.lt.s32.totalorder %s17, 1
      %s238 = scalar_select %p237, %s17, 1
      %s239 = smul.addr %s238, 4
      %s240 = smul.addr %s239, 4
      %s241 = scalar_lea.vmem %s6, %s240
      %p242 = scmp.lt.s32.totalorder %s17, 1
      %s243 = scalar_select %p242, %s17, 1
      %s244 = smul.addr %s243, 208
      %s245 = smul.addr %s244, 4
      %s246 = scalar_lea.vmem %s0, %s245
      %p247 = scmp.lt.s32.totalorder %s17, 1
      %s248 = scalar_select %p247, %s17, 1
      %s249 = smul.addr %s248, 4
      %s250 = smul.addr %s249, 4
      %s251 = scalar_lea.vmem %s6, %s250
      %v253 = vld [vmem:[%s1] sm:$0xf]
      %v254 = vld [vmem:[%s1 + $0x4] sm:$0xf]
      %v255 = vld [vmem:[%s1 + $0x8] sm:$0xf]
      %v256 = vld [vmem:[%s1 + $0xc] sm:$0xf]
      %v257 = vld [vmem:[%s1 + $0x10] sm:$0xf]
      %v258 = vld [vmem:[%s1 + $0x14] sm:$0xf]
      %v259 = vld [vmem:[%s1 + $0x18] sm:$0xf]
      %v260 = vld [vmem:[%s1 + $0x1c] sm:$0xf]
      %v261 = vld [vmem:[%s1 + $0x20] sm:$0xf]
      %v262 = vld [vmem:[%s1 + $0x24] sm:$0xf]
      %v263 = vld [vmem:[%s1 + $0x28] sm:$0xf]
      %v264 = vld [vmem:[%s1 + $0x2c] sm:$0xf]
      %v265 = vld [vmem:[%s1 + $0x30] sm:$0xf]
      %v266 = vld [vmem:[%s1 + $0x34] sm:$0xf]
      %v267 = vld [vmem:[%s1 + $0x38] sm:$0xf]
      %v268 = vld [vmem:[%s1 + $0x3c] sm:$0xf]
      %v269 = vld [vmem:[%s1 + $0x40] sm:$0xf]
      %v270 = vld [vmem:[%s1 + $0x44] sm:$0xf]
      %v271 = vld [vmem:[%s1 + $0x48] sm:$0xf]
      %v272 = vld [vmem:[%s1 + $0x4c] sm:$0xf]
      %v273 = vld [vmem:[%s1 + $0x50] sm:$0xf]
      %v274 = vld [vmem:[%s1 + $0x54] sm:$0xf]
      %v275 = vld [vmem:[%s1 + $0x58] sm:$0xf]
      %v276 = vld [vmem:[%s1 + $0x5c] sm:$0xf]
      %v277 = vld [vmem:[%s1 + $0x60] sm:$0xf]
      %v278 = vld [vmem:[%s1 + $0x64] sm:$0xf]
      %v279 = vld [vmem:[%s1 + $0x68] sm:$0xf]
      %v280 = vld [vmem:[%s1 + $0x6c] sm:$0xf]
      %v281 = vld [vmem:[%s1 + $0x70] sm:$0xf]
      %v282 = vld [vmem:[%s1 + $0x74] sm:$0xf]
      %v283 = vld [vmem:[%s1 + $0x78] sm:$0xf]
      %v284 = vld [vmem:[%s1 + $0x7c] sm:$0xf]
      %v285 = vld [vmem:[%s1 + $0x80] sm:$0xf]
      %v286 = vld [vmem:[%s1 + $0x84] sm:$0xf]
      %v287 = vld [vmem:[%s1 + $0x88] sm:$0xf]
      %v288 = vld [vmem:[%s1 + $0x8c] sm:$0xf]
      %v289 = vld [vmem:[%s1 + $0x90] sm:$0xf]
      %v290 = vld [vmem:[%s1 + $0x94] sm:$0xf]
      %v291 = vld [vmem:[%s1 + $0x98] sm:$0xf]
      %v292 = vld [vmem:[%s1 + $0x9c] sm:$0xf]
      %v293 = vld [vmem:[%s1 + $0xa0] sm:$0xf]
      %v294 = vld [vmem:[%s1 + $0xa4] sm:$0xf]
      %v295 = vld [vmem:[%s1 + $0xa8] sm:$0xf]
      %v296 = vld [vmem:[%s1 + $0xac] sm:$0xf]
      %v297 = vld [vmem:[%s1 + $0xb0] sm:$0xf]
      %v298 = vld [vmem:[%s1 + $0xb4] sm:$0xf]
      %v299 = vld [vmem:[%s1 + $0xb8] sm:$0xf]
      %v300 = vld [vmem:[%s1 + $0xbc] sm:$0xf]
      %v301 = vld [vmem:[%s1 + $0xc0] sm:$0xf]
      %v302 = vld [vmem:[%s1 + $0xc4] sm:$0xf]
      %v303 = vld [vmem:[%s1 + $0xc8] sm:$0xf]
      %v304 = vld [vmem:[%s1 + $0xcc] sm:$0xf]
      %v305 = vld [vmem:[%s1 + $0xd0] sm:$0xf]
      %v306 = vld [vmem:[%s1 + $0xd4] sm:$0xf]
      %v307 = vld [vmem:[%s1 + $0xd8] sm:$0xf]
      %v308 = vld [vmem:[%s1 + $0xdc] sm:$0xf]
      %v309 = vld [vmem:[%s1 + $0xe0] sm:$0xf]
      %v310 = vld [vmem:[%s1 + $0xe4] sm:$0xf]
      %v311 = vld [vmem:[%s1 + $0xe8] sm:$0xf]
      %v312 = vld [vmem:[%s1 + $0xec] sm:$0xf]
      %v313 = vld [vmem:[%s1 + $0xf0] sm:$0xf]
      %v314 = vld [vmem:[%s1 + $0xf4] sm:$0xf]
      %v315 = vld [vmem:[%s1 + $0xf8] sm:$0xf]
      %v316 = vld [vmem:[%s1 + $0xfc] sm:$0xf]
      %v317 = vld [vmem:[%s1 + $0x100] sm:$0xf]
      %v318 = vld [vmem:[%s1 + $0x104] sm:$0xf]
      %v319 = vld [vmem:[%s1 + $0x108] sm:$0xf]
      %v320 = vld [vmem:[%s1 + $0x10c] sm:$0xf]
      %v321 = vld [vmem:[%s1 + $0x110] sm:$0xf]
      %v322 = vld [vmem:[%s1 + $0x114] sm:$0xf]
      %v323 = vld [vmem:[%s1 + $0x118] sm:$0xf]
      %v324 = vld [vmem:[%s1 + $0x11c] sm:$0xf]
      %v325 = vld [vmem:[%s1 + $0x120] sm:$0xf]
      %v326 = vld [vmem:[%s1 + $0x124] sm:$0xf]
      %v327 = vld [vmem:[%s1 + $0x128] sm:$0xf]
      %v328 = vld [vmem:[%s1 + $0x12c] sm:$0xf]
      %v329 = vld [vmem:[%s1 + $0x130] sm:$0xf]
      %v330 = vld [vmem:[%s1 + $0x134] sm:$0xf]
      %v331 = vld [vmem:[%s1 + $0x138] sm:$0xf]
      %v332 = vld [vmem:[%s1 + $0x13c] sm:$0xf]
      %v333 = vld [vmem:[%s1 + $0x140] sm:$0xf]
      %v334 = vld [vmem:[%s1 + $0x144] sm:$0xf]
      %v335 = vld [vmem:[%s1 + $0x148] sm:$0xf]
      %v336 = vld [vmem:[%s1 + $0x14c] sm:$0xf]
      %v337 = vld [vmem:[%s1 + $0x150] sm:$0xf]
      %v338 = vld [vmem:[%s1 + $0x154] sm:$0xf]
      %v339 = vld [vmem:[%s1 + $0x158] sm:$0xf]
      %v340 = vld [vmem:[%s1 + $0x15c] sm:$0xf]
      %v341 = vld [vmem:[%s1 + $0x160] sm:$0xf]
      %v342 = vld [vmem:[%s1 + $0x164] sm:$0xf]
      %v343 = vld [vmem:[%s1 + $0x168] sm:$0xf]
      %v344 = vld [vmem:[%s1 + $0x16c] sm:$0xf]
      %v345 = vld [vmem:[%s1 + $0x170] sm:$0xf]
      %v346 = vld [vmem:[%s1 + $0x174] sm:$0xf]
      %v347 = vld [vmem:[%s1 + $0x178] sm:$0xf]
      %v348 = vld [vmem:[%s1 + $0x17c] sm:$0xf]
      %v349 = vld [vmem:[%s1 + $0x180] sm:$0xf]
      %v350 = vld [vmem:[%s1 + $0x184] sm:$0xf]
      %v351 = vld [vmem:[%s1 + $0x188] sm:$0xf]
      %v352 = vld [vmem:[%s1 + $0x18c] sm:$0xf]
      %v353 = vld [vmem:[%s1 + $0x190] sm:$0xf]
      %v354 = vld [vmem:[%s1 + $0x194] sm:$0xf]
      %v355 = vld [vmem:[%s1 + $0x198] sm:$0xf]
      %v356 = vld [vmem:[%s1 + $0x19c] sm:$0xf]
      %v357 = vld [vmem:[%s1 + $0x1a0] sm:$0xf]
      %v358 = vld [vmem:[%s1 + $0x1a4] sm:$0xf]
      %v359 = vld [vmem:[%s1 + $0x1a8] sm:$0xf]
      %v360 = vld [vmem:[%s1 + $0x1ac] sm:$0xf]
      %v361 = vld [vmem:[%s1 + $0x1b0] sm:$0xf]
      %v362 = vld [vmem:[%s1 + $0x1b4] sm:$0xf]
      %v363 = vld [vmem:[%s1 + $0x1b8] sm:$0xf]
      %v364 = vld [vmem:[%s1 + $0x1bc] sm:$0xf]
      %v365 = vld [vmem:[%s1 + $0x1c0] sm:$0xf]
      %v366 = vld [vmem:[%s1 + $0x1c4] sm:$0xf]
      %v367 = vld [vmem:[%s1 + $0x1c8] sm:$0xf]
      %v368 = vld [vmem:[%s1 + $0x1cc] sm:$0xf]
      %v369 = vld [vmem:[%s1 + $0x1d0] sm:$0xf]
      %v370 = vld [vmem:[%s1 + $0x1d4] sm:$0xf]
      %v371 = vld [vmem:[%s1 + $0x1d8] sm:$0xf]
      %v372 = vld [vmem:[%s1 + $0x1dc] sm:$0xf]
      %v373 = vld [vmem:[%s1 + $0x1e0] sm:$0xf]
      %v374 = vld [vmem:[%s1 + $0x1e4] sm:$0xf]
      %v375 = vld [vmem:[%s1 + $0x1e8] sm:$0xf]
      %v376 = vld [vmem:[%s1 + $0x1ec] sm:$0xf]
      %v377 = vld [vmem:[%s1 + $0x1f0] sm:$0xf]
      %v378 = vld [vmem:[%s1 + $0x1f4] sm:$0xf]
      %v379 = vld [vmem:[%s1 + $0x1f8] sm:$0xf]
      %v380 = vld [vmem:[%s1 + $0x1fc] sm:$0xf]
      %v381 = vld [vmem:[%s1 + $0x200] sm:$0xf]
      %v382 = vld [vmem:[%s1 + $0x204] sm:$0xf]
      %v383 = vld [vmem:[%s1 + $0x208] sm:$0xf]
      %v384 = vld [vmem:[%s1 + $0x20c] sm:$0xf]
      %v385 = vld [vmem:[%s1 + $0x210] sm:$0xf]
      %v386 = vld [vmem:[%s1 + $0x214] sm:$0xf]
      %v387 = vld [vmem:[%s1 + $0x218] sm:$0xf]
      %v388 = vld [vmem:[%s1 + $0x21c] sm:$0xf]
      %v389 = vld [vmem:[%s1 + $0x220] sm:$0xf]
      %v390 = vld [vmem:[%s1 + $0x224] sm:$0xf]
      %v391 = vld [vmem:[%s1 + $0x228] sm:$0xf]
      %v392 = vld [vmem:[%s1 + $0x22c] sm:$0xf]
      %v393 = vld [vmem:[%s1 + $0x230] sm:$0xf]
      %v394 = vld [vmem:[%s1 + $0x234] sm:$0xf]
      %v395 = vld [vmem:[%s1 + $0x238] sm:$0xf]
      %v396 = vld [vmem:[%s1 + $0x23c] sm:$0xf]
      %v397 = vld [vmem:[%s1 + $0x240] sm:$0xf]
      %v398 = vld [vmem:[%s1 + $0x244] sm:$0xf]
      %v399 = vld [vmem:[%s1 + $0x248] sm:$0xf]
      %v400 = vld [vmem:[%s1 + $0x24c] sm:$0xf]
      %v401 = vld [vmem:[%s1 + $0x250] sm:$0xf]
      %v402 = vld [vmem:[%s1 + $0x254] sm:$0xf]
      %v403 = vld [vmem:[%s1 + $0x258] sm:$0xf]
      %v404 = vld [vmem:[%s1 + $0x25c] sm:$0xf]
      %v405 = vld [vmem:[%s1 + $0x260] sm:$0xf]
      %v406 = vld [vmem:[%s1 + $0x264] sm:$0xf]
      %v407 = vld [vmem:[%s1 + $0x268] sm:$0xf]
      %v408 = vld [vmem:[%s1 + $0x26c] sm:$0xf]
      %v409 = vld [vmem:[%s1 + $0x270] sm:$0xf]
      %v410 = vld [vmem:[%s1 + $0x274] sm:$0xf]
      %v411 = vld [vmem:[%s1 + $0x278] sm:$0xf]
      %v412 = vld [vmem:[%s1 + $0x27c] sm:$0xf]
      %v413 = vld [vmem:[%s1 + $0x280] sm:$0xf]
      %v414 = vld [vmem:[%s1 + $0x284] sm:$0xf]
      %v415 = vld [vmem:[%s1 + $0x288] sm:$0xf]
      %v416 = vld [vmem:[%s1 + $0x28c] sm:$0xf]
      %v417 = vld [vmem:[%s1 + $0x290] sm:$0xf]
      %v418 = vld [vmem:[%s1 + $0x294] sm:$0xf]
      %v419 = vld [vmem:[%s1 + $0x298] sm:$0xf]
      %v420 = vld [vmem:[%s1 + $0x29c] sm:$0xf]
      %v421 = vld [vmem:[%s1 + $0x2a0] sm:$0xf]
      %v422 = vld [vmem:[%s1 + $0x2a4] sm:$0xf]
      %v423 = vld [vmem:[%s1 + $0x2a8] sm:$0xf]
      %v424 = vld [vmem:[%s1 + $0x2ac] sm:$0xf]
      %v425 = vld [vmem:[%s1 + $0x2b0] sm:$0xf]
      %v426 = vld [vmem:[%s1 + $0x2b4] sm:$0xf]
      %v427 = vld [vmem:[%s1 + $0x2b8] sm:$0xf]
      %v428 = vld [vmem:[%s1 + $0x2bc] sm:$0xf]
      %v429 = vld [vmem:[%s1 + $0x2c0] sm:$0xf]
      %v430 = vld [vmem:[%s1 + $0x2c4] sm:$0xf]
      %v431 = vld [vmem:[%s1 + $0x2c8] sm:$0xf]
      %v432 = vld [vmem:[%s1 + $0x2cc] sm:$0xf]
      %v433 = vld [vmem:[%s1 + $0x2d0] sm:$0xf]
      %v434 = vld [vmem:[%s1 + $0x2d4] sm:$0xf]
      %v435 = vld [vmem:[%s1 + $0x2d8] sm:$0xf]
      %v436 = vld [vmem:[%s1 + $0x2dc] sm:$0xf]
      %v437 = vld [vmem:[%s1 + $0x2e0] sm:$0xf]
      %v438 = vld [vmem:[%s1 + $0x2e4] sm:$0xf]
      %v439 = vld [vmem:[%s1 + $0x2e8] sm:$0xf]
      %v440 = vld [vmem:[%s1 + $0x2ec] sm:$0xf]
      %v441 = vld [vmem:[%s1 + $0x2f0] sm:$0xf]
      %v442 = vld [vmem:[%s1 + $0x2f4] sm:$0xf]
      %v443 = vld [vmem:[%s1 + $0x2f8] sm:$0xf]
      %v444 = vld [vmem:[%s1 + $0x2fc] sm:$0xf]
      %v445 = vld [vmem:[%s1 + $0x300] sm:$0xf]
      %v446 = vld [vmem:[%s1 + $0x304] sm:$0xf]
      %v447 = vld [vmem:[%s1 + $0x308] sm:$0xf]
      %v448 = vld [vmem:[%s1 + $0x30c] sm:$0xf]
      %v449 = vld [vmem:[%s1 + $0x310] sm:$0xf]
      %v450 = vld [vmem:[%s1 + $0x314] sm:$0xf]
      %v451 = vld [vmem:[%s1 + $0x318] sm:$0xf]
      %v452 = vld [vmem:[%s1 + $0x31c] sm:$0xf]
      %v453 = vld [vmem:[%s2] sm:$0x1]
      %v454 = vld [vmem:[%s246] sm:$0xff]
      %v455 = vld [vmem:[%s246 + $0x8] sm:$0xff]
      %v456 = vld [vmem:[%s246 + $0x10] sm:$0xff]
      %v457 = vld [vmem:[%s246 + $0x18] sm:$0xff]
      %v458 = vld [vmem:[%s246 + $0x20] sm:$0xff]
      %v459 = vld [vmem:[%s246 + $0x28] sm:$0xff]
      %v460 = vld [vmem:[%s246 + $0x30] sm:$0xf]
      %v461 = vld [vmem:[%s246 + $0x34] sm:$0xff]
      %v462 = vld [vmem:[%s246 + $0x3c] sm:$0xff]
      %v463 = vld [vmem:[%s246 + $0x44] sm:$0xff]
      %v464 = vld [vmem:[%s246 + $0x4c] sm:$0xff]
      %v465 = vld [vmem:[%s246 + $0x54] sm:$0xff]
      %v466 = vld [vmem:[%s246 + $0x5c] sm:$0xff]
      %v467 = vld [vmem:[%s246 + $0x64] sm:$0xf]
      %v468 = vld [vmem:[%s246 + $0x68] sm:$0xff]
      %v469 = vld [vmem:[%s246 + $0x70] sm:$0xff]
      %v470 = vld [vmem:[%s246 + $0x78] sm:$0xff]
      %v471 = vld [vmem:[%s246 + $0x80] sm:$0xff]
      %v472 = vld [vmem:[%s246 + $0x88] sm:$0xff]
      %v473 = vld [vmem:[%s246 + $0x90] sm:$0xff]
      %v474 = vld [vmem:[%s246 + $0x98] sm:$0xf]
      %v475 = vld [vmem:[%s246 + $0x9c] sm:$0x11]
      %v476 = vld [vmem:[%s246 + $0xa4] sm:$0x11]
      %v477 = vld [vmem:[%s246 + $0xac] sm:$0x11]
      %v478 = vld [vmem:[%s246 + $0xb4] sm:$0x11]
      %v479 = vld [vmem:[%s246 + $0xbc] sm:$0x11]
      %v480 = vld [vmem:[%s246 + $0xc4] sm:$0x11]
      %v481 = vld [vmem:[%s246 + $0xcc] sm:$0x1]
      %v483 = vlaneseq
      %v484 = vshrl.u32 %v483, 7
      %v485 = vsub.s32 0, %v484
      %v486 = vrot.slane %v453, %v485
      %v516 = vunpack.c.l.b16 %v454
      %v517 = vunpack.c.h.b16 %v454
      %v518 = vunpack.c.l.b16 %v455
      %v519 = vunpack.c.h.b16 %v455
      %v520 = vunpack.c.l.b16 %v456
      %v521 = vunpack.c.h.b16 %v456
      %v522 = vunpack.c.l.b16 %v457
      %v523 = vunpack.c.h.b16 %v457
      %v524 = vunpack.c.l.b16 %v458
      %v525 = vunpack.c.h.b16 %v458
      %v526 = vunpack.c.l.b16 %v459
      %v527 = vunpack.c.h.b16 %v459
      %v528 = vunpack.c.l.b16 %v460
      %v529 = vunpack.c.l.b16 %v461
      %v530 = vunpack.c.h.b16 %v461
      %v531 = vunpack.c.l.b16 %v462
      %v532 = vunpack.c.h.b16 %v462
      %v533 = vunpack.c.l.b16 %v463
      %v534 = vunpack.c.h.b16 %v463
      %v535 = vunpack.c.l.b16 %v464
      %v536 = vunpack.c.h.b16 %v464
      %v537 = vunpack.c.l.b16 %v465
      %v538 = vunpack.c.h.b16 %v465
      %v539 = vunpack.c.l.b16 %v466
      %v540 = vunpack.c.h.b16 %v466
      %v541 = vunpack.c.l.b16 %v467
      %v542 = vunpack.c.l.b16 %v468
      %v543 = vunpack.c.h.b16 %v468
      %v544 = vunpack.c.l.b16 %v469
      %v545 = vunpack.c.h.b16 %v469
      %v546 = vunpack.c.l.b16 %v470
      %v547 = vunpack.c.h.b16 %v470
      %v548 = vunpack.c.l.b16 %v471
      %v549 = vunpack.c.h.b16 %v471
      %v550 = vunpack.c.l.b16 %v472
      %v551 = vunpack.c.h.b16 %v472
      %v552 = vunpack.c.l.b16 %v473
      %v553 = vunpack.c.h.b16 %v473
      %v554 = vunpack.c.l.b16 %v474
      %v555 = vunpack.c.l.b16 %v475
      %v556 = vunpack.c.h.b16 %v475
      %v557 = vunpack.c.l.b16 %v476
      %v558 = vunpack.c.h.b16 %v476
      %v559 = vunpack.c.l.b16 %v477
      %v560 = vunpack.c.h.b16 %v477
      %v561 = vunpack.c.l.b16 %v478
      %v562 = vunpack.c.h.b16 %v478
      %v563 = vunpack.c.l.b16 %v479
      %v564 = vunpack.c.h.b16 %v479
      %v565 = vunpack.c.l.b16 %v480
      %v566 = vunpack.c.h.b16 %v480
      %v567 = vunpack.c.l.b16 %v481
      %v568 = vpack.c.b16 %v529, %v516
      %v569 = vpack.c.b16 %v530, %v517
      %v570 = vpack.c.b16 %v531, %v518
      %v571 = vpack.c.b16 %v532, %v519
      %v572 = vpack.c.b16 %v533, %v520
      %v573 = vpack.c.b16 %v534, %v521
      %v574 = vpack.c.b16 %v535, %v522
      %v575 = vpack.c.b16 %v536, %v523
      %v576 = vpack.c.b16 %v537, %v524
      %v577 = vpack.c.b16 %v538, %v525
      %v578 = vpack.c.b16 %v539, %v526
      %v579 = vpack.c.b16 %v540, %v527
      %v580 = vpack.c.b16 %v541, %v528
      %v581 = vpack.c.b16 %v555, %v542
      %v582 = vpack.c.b16 %v556, %v543
      %v583 = vpack.c.b16 %v557, %v544
      %v584 = vpack.c.b16 %v558, %v545
      %v585 = vpack.c.b16 %v559, %v546
      %v586 = vpack.c.b16 %v560, %v547
      %v587 = vpack.c.b16 %v561, %v548
      %v588 = vpack.c.b16 %v562, %v549
      %v589 = vpack.c.b16 %v563, %v550
      %v590 = vpack.c.b16 %v564, %v551
      %v591 = vpack.c.b16 %v565, %v552
      %v592 = vpack.c.b16 %v566, %v553
      %v593 = vpack.c.b16 %v567, %v554
      %v818 = vunpack.c.l.b16 %v253
      %v819 = vunpack.c.l.b16 %v254
      %v820 = vunpack.c.l.b16 %v255
      %v821 = vunpack.c.l.b16 %v256
      %v822 = vunpack.c.l.b16 %v257
      %v823 = vunpack.c.l.b16 %v258
      %v824 = vunpack.c.l.b16 %v259
      %v825 = vunpack.c.l.b16 %v260
      %v826 = vunpack.c.l.b16 %v261
      %v827 = vunpack.c.l.b16 %v262
      %v828 = vunpack.c.l.b16 %v263
      %v829 = vunpack.c.l.b16 %v264
      %v830 = vunpack.c.l.b16 %v265
      %v831 = vunpack.c.l.b16 %v266
      %v832 = vunpack.c.l.b16 %v267
      %v833 = vunpack.c.l.b16 %v268
      %v834 = vunpack.c.l.b16 %v269
      %v835 = vunpack.c.l.b16 %v270
      %v836 = vunpack.c.l.b16 %v271
      %v837 = vunpack.c.l.b16 %v272
      %v838 = vunpack.c.l.b16 %v273
      %v839 = vunpack.c.l.b16 %v274
      %v840 = vunpack.c.l.b16 %v275
      %v841 = vunpack.c.l.b16 %v276
      %v842 = vunpack.c.l.b16 %v277
      %v843 = vunpack.c.l.b16 %v278
      %v844 = vunpack.c.l.b16 %v279
      %v845 = vunpack.c.l.b16 %v280
      %v846 = vunpack.c.l.b16 %v281
      %v847 = vunpack.c.l.b16 %v282
      %v848 = vunpack.c.l.b16 %v283
      %v849 = vunpack.c.l.b16 %v284
      %v850 = vunpack.c.l.b16 %v285
      %v851 = vunpack.c.l.b16 %v286
      %v852 = vunpack.c.l.b16 %v287
      %v853 = vunpack.c.l.b16 %v288
      %v854 = vunpack.c.l.b16 %v289
      %v855 = vunpack.c.l.b16 %v290
      %v856 = vunpack.c.l.b16 %v291
      %v857 = vunpack.c.l.b16 %v292
      %v858 = vunpack.c.l.b16 %v293
      %v859 = vunpack.c.l.b16 %v294
      %v860 = vunpack.c.l.b16 %v295
      %v861 = vunpack.c.l.b16 %v296
      %v862 = vunpack.c.l.b16 %v297
      %v863 = vunpack.c.l.b16 %v298
      %v864 = vunpack.c.l.b16 %v299
      %v865 = vunpack.c.l.b16 %v300
      %v866 = vunpack.c.l.b16 %v301
      %v867 = vunpack.c.l.b16 %v302
      %v868 = vunpack.c.l.b16 %v303
      %v869 = vunpack.c.l.b16 %v304
      %v870 = vunpack.c.l.b16 %v305
      %v871 = vunpack.c.l.b16 %v306
      %v872 = vunpack.c.l.b16 %v307
      %v873 = vunpack.c.l.b16 %v308
      %v874 = vunpack.c.l.b16 %v309
      %v875 = vunpack.c.l.b16 %v310
      %v876 = vunpack.c.l.b16 %v311
      %v877 = vunpack.c.l.b16 %v312
      %v878 = vunpack.c.l.b16 %v313
      %v879 = vunpack.c.l.b16 %v314
      %v880 = vunpack.c.l.b16 %v315
      %v881 = vunpack.c.l.b16 %v316
      %v882 = vunpack.c.l.b16 %v317
      %v883 = vunpack.c.l.b16 %v318
      %v884 = vunpack.c.l.b16 %v319
      %v885 = vunpack.c.l.b16 %v320
      %v886 = vunpack.c.l.b16 %v321
      %v887 = vunpack.c.l.b16 %v322
      %v888 = vunpack.c.l.b16 %v323
      %v889 = vunpack.c.l.b16 %v324
      %v890 = vunpack.c.l.b16 %v325
      %v891 = vunpack.c.l.b16 %v326
      %v892 = vunpack.c.l.b16 %v327
      %v893 = vunpack.c.l.b16 %v328
      %v894 = vunpack.c.l.b16 %v329
      %v895 = vunpack.c.l.b16 %v330
      %v896 = vunpack.c.l.b16 %v331
      %v897 = vunpack.c.l.b16 %v332
      %v898 = vunpack.c.l.b16 %v333
      %v899 = vunpack.c.l.b16 %v334
      %v900 = vunpack.c.l.b16 %v335
      %v901 = vunpack.c.l.b16 %v336
      %v902 = vunpack.c.l.b16 %v337
      %v903 = vunpack.c.l.b16 %v338
      %v904 = vunpack.c.l.b16 %v339
      %v905 = vunpack.c.l.b16 %v340
      %v906 = vunpack.c.l.b16 %v341
      %v907 = vunpack.c.l.b16 %v342
      %v908 = vunpack.c.l.b16 %v343
      %v909 = vunpack.c.l.b16 %v344
      %v910 = vunpack.c.l.b16 %v345
      %v911 = vunpack.c.l.b16 %v346
      %v912 = vunpack.c.l.b16 %v347
      %v913 = vunpack.c.l.b16 %v348
      %v914 = vunpack.c.l.b16 %v349
      %v915 = vunpack.c.l.b16 %v350
      %v916 = vunpack.c.l.b16 %v351
      %v917 = vunpack.c.l.b16 %v352
      %v918 = vunpack.c.l.b16 %v353
      %v919 = vunpack.c.l.b16 %v354
      %v920 = vunpack.c.l.b16 %v355
      %v921 = vunpack.c.l.b16 %v356
      %v922 = vunpack.c.l.b16 %v357
      %v923 = vunpack.c.l.b16 %v358
      %v924 = vunpack.c.l.b16 %v359
      %v925 = vunpack.c.l.b16 %v360
      %v926 = vunpack.c.l.b16 %v361
      %v927 = vunpack.c.l.b16 %v362
      %v928 = vunpack.c.l.b16 %v363
      %v929 = vunpack.c.l.b16 %v364
      %v930 = vunpack.c.l.b16 %v365
      %v931 = vunpack.c.l.b16 %v366
      %v932 = vunpack.c.l.b16 %v367
      %v933 = vunpack.c.l.b16 %v368
      %v934 = vunpack.c.l.b16 %v369
      %v935 = vunpack.c.l.b16 %v370
      %v936 = vunpack.c.l.b16 %v371
      %v937 = vunpack.c.l.b16 %v372
      %v938 = vunpack.c.l.b16 %v373
      %v939 = vunpack.c.l.b16 %v374
      %v940 = vunpack.c.l.b16 %v375
      %v941 = vunpack.c.l.b16 %v376
      %v942 = vunpack.c.l.b16 %v377
      %v943 = vunpack.c.l.b16 %v378
      %v944 = vunpack.c.l.b16 %v379
      %v945 = vunpack.c.l.b16 %v380
      %v946 = vunpack.c.l.b16 %v381
      %v947 = vunpack.c.l.b16 %v382
      %v948 = vunpack.c.l.b16 %v383
      %v949 = vunpack.c.l.b16 %v384
      %v950 = vunpack.c.l.b16 %v385
      %v951 = vunpack.c.l.b16 %v386
      %v952 = vunpack.c.l.b16 %v387
      %v953 = vunpack.c.l.b16 %v388
      %v954 = vunpack.c.l.b16 %v389
      %v955 = vunpack.c.l.b16 %v390
      %v956 = vunpack.c.l.b16 %v391
      %v957 = vunpack.c.l.b16 %v392
      %v958 = vunpack.c.l.b16 %v393
      %v959 = vunpack.c.l.b16 %v394
      %v960 = vunpack.c.l.b16 %v395
      %v961 = vunpack.c.l.b16 %v396
      %v962 = vunpack.c.l.b16 %v397
      %v963 = vunpack.c.l.b16 %v398
      %v964 = vunpack.c.l.b16 %v399
      %v965 = vunpack.c.l.b16 %v400
      %v966 = vunpack.c.l.b16 %v401
      %v967 = vunpack.c.l.b16 %v402
      %v968 = vunpack.c.l.b16 %v403
      %v969 = vunpack.c.l.b16 %v404
      %v970 = vunpack.c.l.b16 %v405
      %v971 = vunpack.c.l.b16 %v406
      %v972 = vunpack.c.l.b16 %v407
      %v973 = vunpack.c.l.b16 %v408
      %v974 = vunpack.c.l.b16 %v409
      %v975 = vunpack.c.l.b16 %v410
      %v976 = vunpack.c.l.b16 %v411
      %v977 = vunpack.c.l.b16 %v412
      %v978 = vunpack.c.l.b16 %v413
      %v979 = vunpack.c.l.b16 %v414
      %v980 = vunpack.c.l.b16 %v415
      %v981 = vunpack.c.l.b16 %v416
      %v982 = vunpack.c.l.b16 %v417
      %v983 = vunpack.c.l.b16 %v418
      %v984 = vunpack.c.l.b16 %v419
      %v985 = vunpack.c.l.b16 %v420
      %v986 = vunpack.c.l.b16 %v421
      %v987 = vunpack.c.l.b16 %v422
      %v988 = vunpack.c.l.b16 %v423
      %v989 = vunpack.c.l.b16 %v424
      %v990 = vunpack.c.l.b16 %v425
      %v991 = vunpack.c.l.b16 %v426
      %v992 = vunpack.c.l.b16 %v427
      %v993 = vunpack.c.l.b16 %v428
      %v994 = vunpack.c.l.b16 %v429
      %v995 = vunpack.c.l.b16 %v430
      %v996 = vunpack.c.l.b16 %v431
      %v997 = vunpack.c.l.b16 %v432
      %v998 = vunpack.c.l.b16 %v433
      %v999 = vunpack.c.l.b16 %v434
      %v1000 = vunpack.c.l.b16 %v435
      %v1001 = vunpack.c.l.b16 %v436
      %v1002 = vunpack.c.l.b16 %v437
      %v1003 = vunpack.c.l.b16 %v438
      %v1004 = vunpack.c.l.b16 %v439
      %v1005 = vunpack.c.l.b16 %v440
      %v1006 = vunpack.c.l.b16 %v441
      %v1007 = vunpack.c.l.b16 %v442
      %v1008 = vunpack.c.l.b16 %v443
      %v1009 = vunpack.c.l.b16 %v444
      %v1010 = vunpack.c.l.b16 %v445
      %v1011 = vunpack.c.l.b16 %v446
      %v1012 = vunpack.c.l.b16 %v447
      %v1013 = vunpack.c.l.b16 %v448
      %v1014 = vunpack.c.l.b16 %v449
      %v1015 = vunpack.c.l.b16 %v450
      %v1016 = vunpack.c.l.b16 %v451
      %v1017 = vunpack.c.l.b16 %v452
      %v1018 = vpack.c.b16 %v819, %v818
      %v1019 = vpack.c.b16 %v821, %v820
      %v1020 = vpack.c.b16 %v823, %v822
      %v1021 = vpack.c.b16 %v825, %v824
      %v1022 = vpack.c.b16 %v827, %v826
      %v1023 = vpack.c.b16 %v829, %v828
      %v1024 = vpack.c.b16 %v831, %v830
      %v1025 = vpack.c.b16 %v833, %v832
      %v1026 = vpack.c.b16 %v835, %v834
      %v1027 = vpack.c.b16 %v837, %v836
      %v1028 = vpack.c.b16 %v839, %v838
      %v1029 = vpack.c.b16 %v841, %v840
      %v1030 = vpack.c.b16 %v843, %v842
      %v1031 = vpack.c.b16 %v845, %v844
      %v1032 = vpack.c.b16 %v847, %v846
      %v1033 = vpack.c.b16 %v849, %v848
      %v1034 = vpack.c.b16 %v851, %v850
      %v1035 = vpack.c.b16 %v853, %v852
      %v1036 = vpack.c.b16 %v855, %v854
      %v1037 = vpack.c.b16 %v857, %v856
      %v1038 = vpack.c.b16 %v859, %v858
      %v1039 = vpack.c.b16 %v861, %v860
      %v1040 = vpack.c.b16 %v863, %v862
      %v1041 = vpack.c.b16 %v865, %v864
      %v1042 = vpack.c.b16 %v867, %v866
      %v1043 = vpack.c.b16 %v869, %v868
      %v1044 = vpack.c.b16 %v871, %v870
      %v1045 = vpack.c.b16 %v873, %v872
      %v1046 = vpack.c.b16 %v875, %v874
      %v1047 = vpack.c.b16 %v877, %v876
      %v1048 = vpack.c.b16 %v879, %v878
      %v1049 = vpack.c.b16 %v881, %v880
      %v1050 = vpack.c.b16 %v883, %v882
      %v1051 = vpack.c.b16 %v885, %v884
      %v1052 = vpack.c.b16 %v887, %v886
      %v1053 = vpack.c.b16 %v889, %v888
      %v1054 = vpack.c.b16 %v891, %v890
      %v1055 = vpack.c.b16 %v893, %v892
      %v1056 = vpack.c.b16 %v895, %v894
      %v1057 = vpack.c.b16 %v897, %v896
      %v1058 = vpack.c.b16 %v899, %v898
      %v1059 = vpack.c.b16 %v901, %v900
      %v1060 = vpack.c.b16 %v903, %v902
      %v1061 = vpack.c.b16 %v905, %v904
      %v1062 = vpack.c.b16 %v907, %v906
      %v1063 = vpack.c.b16 %v909, %v908
      %v1064 = vpack.c.b16 %v911, %v910
      %v1065 = vpack.c.b16 %v913, %v912
      %v1066 = vpack.c.b16 %v915, %v914
      %v1067 = vpack.c.b16 %v917, %v916
      %v1068 = vpack.c.b16 %v919, %v918
      %v1069 = vpack.c.b16 %v921, %v920
      %v1070 = vpack.c.b16 %v923, %v922
      %v1071 = vpack.c.b16 %v925, %v924
      %v1072 = vpack.c.b16 %v927, %v926
      %v1073 = vpack.c.b16 %v929, %v928
      %v1074 = vpack.c.b16 %v931, %v930
      %v1075 = vpack.c.b16 %v933, %v932
      %v1076 = vpack.c.b16 %v935, %v934
      %v1077 = vpack.c.b16 %v937, %v936
      %v1078 = vpack.c.b16 %v939, %v938
      %v1079 = vpack.c.b16 %v941, %v940
      %v1080 = vpack.c.b16 %v943, %v942
      %v1081 = vpack.c.b16 %v945, %v944
      %v1082 = vpack.c.b16 %v947, %v946
      %v1083 = vpack.c.b16 %v949, %v948
      %v1084 = vpack.c.b16 %v951, %v950
      %v1085 = vpack.c.b16 %v953, %v952
      %v1086 = vpack.c.b16 %v955, %v954
      %v1087 = vpack.c.b16 %v957, %v956
      %v1088 = vpack.c.b16 %v959, %v958
      %v1089 = vpack.c.b16 %v961, %v960
      %v1090 = vpack.c.b16 %v963, %v962
      %v1091 = vpack.c.b16 %v965, %v964
      %v1092 = vpack.c.b16 %v967, %v966
      %v1093 = vpack.c.b16 %v969, %v968
      %v1094 = vpack.c.b16 %v971, %v970
      %v1095 = vpack.c.b16 %v973, %v972
      %v1096 = vpack.c.b16 %v975, %v974
      %v1097 = vpack.c.b16 %v977, %v976
      %v1098 = vpack.c.b16 %v979, %v978
      %v1099 = vpack.c.b16 %v981, %v980
      %v1100 = vpack.c.b16 %v983, %v982
      %v1101 = vpack.c.b16 %v985, %v984
      %v1102 = vpack.c.b16 %v987, %v986
      %v1103 = vpack.c.b16 %v989, %v988
      %v1104 = vpack.c.b16 %v991, %v990
      %v1105 = vpack.c.b16 %v993, %v992
      %v1106 = vpack.c.b16 %v995, %v994
      %v1107 = vpack.c.b16 %v997, %v996
      %v1108 = vpack.c.b16 %v999, %v998
      %v1109 = vpack.c.b16 %v1001, %v1000
      %v1110 = vpack.c.b16 %v1003, %v1002
      %v1111 = vpack.c.b16 %v1005, %v1004
      %v1112 = vpack.c.b16 %v1007, %v1006
      %v1113 = vpack.c.b16 %v1009, %v1008
      %v1114 = vpack.c.b16 %v1011, %v1010
      %v1115 = vpack.c.b16 %v1013, %v1012
      %v1116 = vpack.c.b16 %v1015, %v1014
      %v1117 = vpack.c.b16 %v1017, %v1016
      %vm1218 = vcmask 523264
      %v1220 = vsel %vm1218, %v580, 0
      %v1223 = vsel %vm1218, %v593, 0
      %1225 = vmatprep.subr.bf16.mxu0 0
      %1226 = vmatpush1.bf16.msra.mxu0 %v1025
      %1227 = vmatprep.subr.bf16.mxu0 0
      %1228 = vmatpush1.bf16.msra.mxu0 %v1024
      %1229 = vmatprep.subr.bf16.mxu0 0
      %1230 = vmatpush1.bf16.msra.mxu0 %v1023
      %1231 = vmatprep.subr.bf16.mxu0 0
      %1232 = vmatpush1.bf16.msra.mxu0 %v1022
      %1233 = vmatprep.subr.bf16.mxu0 0
      %1234 = vmatpush1.bf16.msra.mxu0 %v1021
      %1235 = vmatprep.subr.bf16.mxu0 0
      %1236 = vmatpush1.bf16.msra.mxu0 %v1020
      %1237 = vmatprep.subr.bf16.mxu0 0
      %1238 = vmatpush1.bf16.msra.mxu0 %v1019
      %1239 = vmatprep.subr.bf16.mxu0 0
      %1240 = vmatpush1.bf16.msra.mxu0 %v1018
      %1241 = vmatprep.subr.bf16.mxu0 0
      %1242 = vmatpush2.bf16.msra.mxu0 %v1033
      %1243 = vmatprep.subr.bf16.mxu0 0
      %1244 = vmatpush2.bf16.msra.mxu0 %v1032
      %1245 = vmatprep.subr.bf16.mxu0 0
      %1246 = vmatpush2.bf16.msra.mxu0 %v1031
      %1247 = vmatprep.subr.bf16.mxu0 0
      %1248 = vmatpush2.bf16.msra.mxu0 %v1030
      %1249 = vmatprep.subr.bf16.mxu0 0
      %1250 = vmatpush2.bf16.msra.mxu0 %v1029
      %1251 = vmatprep.subr.bf16.mxu0 0
      %1252 = vmatpush2.bf16.msra.mxu0 %v1028
      %1253 = vmatprep.subr.bf16.mxu0 0
      %1254 = vmatpush2.bf16.msra.mxu0 %v1027
      %1255 = vmatprep.subr.bf16.mxu0 0
      %1256 = vmatpush2.bf16.msra.mxu0 %v1026
      %1257 = vmatprep.mubr.bf16.mxu0 %v569
      %1258 = vmatmul.mubr.bf16.gmra.mxu0 %v568
      %v1259 = vpop.f32.mrf.mxu0
      %v1260 = vadd.f32 %v486, %v1259
      %v1261 = vpop.f32.mrf.mxu0
      %v1262 = vpop.f32.mrf.mxu0
      %v1263 = vadd.f32 %v486, %v1262
      %v1264 = vpop.f32.mrf.mxu0
      %1265 = vmatprep.mubr.bf16.mxu0 %v582
      %1266 = vmatmul.mubr.bf16.gmra.mxu0 %v581
      %v1267 = vpop.f32.mrf.mxu0
      %v1268 = vadd.f32 %v486, %v1267
      %v1269 = vpop.f32.mrf.mxu0
      %v1270 = vpop.f32.mrf.mxu0
      %v1271 = vadd.f32 %v486, %v1270
      %v1272 = vpop.f32.mrf.mxu0
      %1273 = vdwg.mxu0
      %1274 = vmatprep.subr.bf16.mxu0 0
      %1275 = vmatpush1.bf16.msra.mxu0 %v1041
      %1276 = vmatprep.subr.bf16.mxu0 0
      %1277 = vmatpush1.bf16.msra.mxu0 %v1040
      %1278 = vmatprep.subr.bf16.mxu0 0
      %1279 = vmatpush1.bf16.msra.mxu0 %v1039
      %1280 = vmatprep.subr.bf16.mxu0 0
      %1281 = vmatpush1.bf16.msra.mxu0 %v1038
      %1282 = vmatprep.subr.bf16.mxu0 0
      %1283 = vmatpush1.bf16.msra.mxu0 %v1037
      %1284 = vmatprep.subr.bf16.mxu0 0
      %1285 = vmatpush1.bf16.msra.mxu0 %v1036
      %1286 = vmatprep.subr.bf16.mxu0 0
      %1287 = vmatpush1.bf16.msra.mxu0 %v1035
      %1288 = vmatprep.subr.bf16.mxu0 0
      %1289 = vmatpush1.bf16.msra.mxu0 %v1034
      %1290 = vmatprep.subr.bf16.mxu0 0
      %1291 = vmatpush2.bf16.msra.mxu0 %v1049
      %1292 = vmatprep.subr.bf16.mxu0 0
      %1293 = vmatpush2.bf16.msra.mxu0 %v1048
      %1294 = vmatprep.subr.bf16.mxu0 0
      %1295 = vmatpush2.bf16.msra.mxu0 %v1047
      %1296 = vmatprep.subr.bf16.mxu0 0
      %1297 = vmatpush2.bf16.msra.mxu0 %v1046
      %1298 = vmatprep.subr.bf16.mxu0 0
      %1299 = vmatpush2.bf16.msra.mxu0 %v1045
      %1300 = vmatprep.subr.bf16.mxu0 0
      %1301 = vmatpush2.bf16.msra.mxu0 %v1044
      %1302 = vmatprep.subr.bf16.mxu0 0
      %1303 = vmatpush2.bf16.msra.mxu0 %v1043
      %1304 = vmatprep.subr.bf16.mxu0 0
      %1305 = vmatpush2.bf16.msra.mxu0 %v1042
      %1306 = vmatprep.mubr.bf16.mxu0 %v571
      %1307 = vmatmul.mubr.bf16.gmra.mxu0 %v570
      %v1308 = vpop.f32.mrf.mxu0
      %v1309 = vadd.f32 %v1260, %v1308
      %v1310 = vpop.f32.mrf.mxu0
      %v1311 = vpop.f32.mrf.mxu0
      %v1312 = vadd.f32 %v1263, %v1311
      %v1313 = vpop.f32.mrf.mxu0
      %1314 = vmatprep.mubr.bf16.mxu0 %v584
      %1315 = vmatmul.mubr.bf16.gmra.mxu0 %v583
      %v1316 = vpop.f32.mrf.mxu0
      %v1317 = vadd.f32 %v1268, %v1316
      %v1318 = vpop.f32.mrf.mxu0
      %v1319 = vpop.f32.mrf.mxu0
      %v1320 = vadd.f32 %v1271, %v1319
      %v1321 = vpop.f32.mrf.mxu0
      %1322 = vdwg.mxu0
      %1323 = vmatprep.subr.bf16.mxu0 0
      %1324 = vmatpush1.bf16.msra.mxu0 %v1057
      %1325 = vmatprep.subr.bf16.mxu0 0
      %1326 = vmatpush1.bf16.msra.mxu0 %v1056
      %1327 = vmatprep.subr.bf16.mxu0 0
      %1328 = vmatpush1.bf16.msra.mxu0 %v1055
      %1329 = vmatprep.subr.bf16.mxu0 0
      %1330 = vmatpush1.bf16.msra.mxu0 %v1054
      %1331 = vmatprep.subr.bf16.mxu0 0
      %1332 = vmatpush1.bf16.msra.mxu0 %v1053
      %1333 = vmatprep.subr.bf16.mxu0 0
      %1334 = vmatpush1.bf16.msra.mxu0 %v1052
      %1335 = vmatprep.subr.bf16.mxu0 0
      %1336 = vmatpush1.bf16.msra.mxu0 %v1051
      %1337 = vmatprep.subr.bf16.mxu0 0
      %1338 = vmatpush1.bf16.msra.mxu0 %v1050
      %1339 = vmatprep.subr.bf16.mxu0 0
      %1340 = vmatpush2.bf16.msra.mxu0 %v1065
      %1341 = vmatprep.subr.bf16.mxu0 0
      %1342 = vmatpush2.bf16.msra.mxu0 %v1064
      %1343 = vmatprep.subr.bf16.mxu0 0
      %1344 = vmatpush2.bf16.msra.mxu0 %v1063
      %1345 = vmatprep.subr.bf16.mxu0 0
      %1346 = vmatpush2.bf16.msra.mxu0 %v1062
      %1347 = vmatprep.subr.bf16.mxu0 0
      %1348 = vmatpush2.bf16.msra.mxu0 %v1061
      %1349 = vmatprep.subr.bf16.mxu0 0
      %1350 = vmatpush2.bf16.msra.mxu0 %v1060
      %1351 = vmatprep.subr.bf16.mxu0 0
      %1352 = vmatpush2.bf16.msra.mxu0 %v1059
      %1353 = vmatprep.subr.bf16.mxu0 0
      %1354 = vmatpush2.bf16.msra.mxu0 %v1058
      %1355 = vmatprep.mubr.bf16.mxu0 %v573
      %1356 = vmatmul.mubr.bf16.gmra.mxu0 %v572
      %v1357 = vpop.f32.mrf.mxu0
      %v1358 = vadd.f32 %v1309, %v1357
      %v1359 = vpop.f32.mrf.mxu0
      %v1360 = vpop.f32.mrf.mxu0
      %v1361 = vadd.f32 %v1312, %v1360
      %v1362 = vpop.f32.mrf.mxu0
      %1363 = vmatprep.mubr.bf16.mxu0 %v586
      %1364 = vmatmul.mubr.bf16.gmra.mxu0 %v585
      %v1365 = vpop.f32.mrf.mxu0
      %v1366 = vadd.f32 %v1317, %v1365
      %v1367 = vpop.f32.mrf.mxu0
      %v1368 = vpop.f32.mrf.mxu0
      %v1369 = vadd.f32 %v1320, %v1368
      %v1370 = vpop.f32.mrf.mxu0
      %1371 = vdwg.mxu0
      %1372 = vmatprep.subr.bf16.mxu0 0
      %1373 = vmatpush1.bf16.msra.mxu0 %v1073
      %1374 = vmatprep.subr.bf16.mxu0 0
      %1375 = vmatpush1.bf16.msra.mxu0 %v1072
      %1376 = vmatprep.subr.bf16.mxu0 0
      %1377 = vmatpush1.bf16.msra.mxu0 %v1071
      %1378 = vmatprep.subr.bf16.mxu0 0
      %1379 = vmatpush1.bf16.msra.mxu0 %v1070
      %1380 = vmatprep.subr.bf16.mxu0 0
      %1381 = vmatpush1.bf16.msra.mxu0 %v1069
      %1382 = vmatprep.subr.bf16.mxu0 0
      %1383 = vmatpush1.bf16.msra.mxu0 %v1068
      %1384 = vmatprep.subr.bf16.mxu0 0
      %1385 = vmatpush1.bf16.msra.mxu0 %v1067
      %1386 = vmatprep.subr.bf16.mxu0 0
      %1387 = vmatpush1.bf16.msra.mxu0 %v1066
      %1388 = vmatprep.subr.bf16.mxu0 0
      %1389 = vmatpush2.bf16.msra.mxu0 %v1081
      %1390 = vmatprep.subr.bf16.mxu0 0
      %1391 = vmatpush2.bf16.msra.mxu0 %v1080
      %1392 = vmatprep.subr.bf16.mxu0 0
      %1393 = vmatpush2.bf16.msra.mxu0 %v1079
      %1394 = vmatprep.subr.bf16.mxu0 0
      %1395 = vmatpush2.bf16.msra.mxu0 %v1078
      %1396 = vmatprep.subr.bf16.mxu0 0
      %1397 = vmatpush2.bf16.msra.mxu0 %v1077
      %1398 = vmatprep.subr.bf16.mxu0 0
      %1399 = vmatpush2.bf16.msra.mxu0 %v1076
      %1400 = vmatprep.subr.bf16.mxu0 0
      %1401 = vmatpush2.bf16.msra.mxu0 %v1075
      %1402 = vmatprep.subr.bf16.mxu0 0
      %1403 = vmatpush2.bf16.msra.mxu0 %v1074
      %1404 = vmatprep.mubr.bf16.mxu0 %v575
      %1405 = vmatmul.mubr.bf16.gmra.mxu0 %v574
      %v1406 = vpop.f32.mrf.mxu0
      %v1407 = vadd.f32 %v1358, %v1406
      %v1408 = vpop.f32.mrf.mxu0
      %v1409 = vpop.f32.mrf.mxu0
      %v1410 = vadd.f32 %v1361, %v1409
      %v1411 = vpop.f32.mrf.mxu0
      %1412 = vmatprep.mubr.bf16.mxu0 %v588
      %1413 = vmatmul.mubr.bf16.gmra.mxu0 %v587
      %v1414 = vpop.f32.mrf.mxu0
      %v1415 = vadd.f32 %v1366, %v1414
      %v1416 = vpop.f32.mrf.mxu0
      %v1417 = vpop.f32.mrf.mxu0
      %v1418 = vadd.f32 %v1369, %v1417
      %v1419 = vpop.f32.mrf.mxu0
      %1420 = vdwg.mxu0
      %1421 = vmatprep.subr.bf16.mxu0 0
      %1422 = vmatpush1.bf16.msra.mxu0 %v1089
      %1423 = vmatprep.subr.bf16.mxu0 0
      %1424 = vmatpush1.bf16.msra.mxu0 %v1088
      %1425 = vmatprep.subr.bf16.mxu0 0
      %1426 = vmatpush1.bf16.msra.mxu0 %v1087
      %1427 = vmatprep.subr.bf16.mxu0 0
      %1428 = vmatpush1.bf16.msra.mxu0 %v1086
      %1429 = vmatprep.subr.bf16.mxu0 0
      %1430 = vmatpush1.bf16.msra.mxu0 %v1085
      %1431 = vmatprep.subr.bf16.mxu0 0
      %1432 = vmatpush1.bf16.msra.mxu0 %v1084
      %1433 = vmatprep.subr.bf16.mxu0 0
      %1434 = vmatpush1.bf16.msra.mxu0 %v1083
      %1435 = vmatprep.subr.bf16.mxu0 0
      %1436 = vmatpush1.bf16.msra.mxu0 %v1082
      %1437 = vmatprep.subr.bf16.mxu0 0
      %1438 = vmatpush2.bf16.msra.mxu0 %v1097
      %1439 = vmatprep.subr.bf16.mxu0 0
      %1440 = vmatpush2.bf16.msra.mxu0 %v1096
      %1441 = vmatprep.subr.bf16.mxu0 0
      %1442 = vmatpush2.bf16.msra.mxu0 %v1095
      %1443 = vmatprep.subr.bf16.mxu0 0
      %1444 = vmatpush2.bf16.msra.mxu0 %v1094
      %1445 = vmatprep.subr.bf16.mxu0 0
      %1446 = vmatpush2.bf16.msra.mxu0 %v1093
      %1447 = vmatprep.subr.bf16.mxu0 0
      %1448 = vmatpush2.bf16.msra.mxu0 %v1092
      %1449 = vmatprep.subr.bf16.mxu0 0
      %1450 = vmatpush2.bf16.msra.mxu0 %v1091
      %1451 = vmatprep.subr.bf16.mxu0 0
      %1452 = vmatpush2.bf16.msra.mxu0 %v1090
      %1453 = vmatprep.mubr.bf16.mxu0 %v577
      %1454 = vmatmul.mubr.bf16.gmra.mxu0 %v576
      %v1455 = vpop.f32.mrf.mxu0
      %v1456 = vadd.f32 %v1407, %v1455
      %v1457 = vpop.f32.mrf.mxu0
      %v1458 = vpop.f32.mrf.mxu0
      %v1459 = vadd.f32 %v1410, %v1458
      %v1460 = vpop.f32.mrf.mxu0
      %1461 = vmatprep.mubr.bf16.mxu0 %v590
      %1462 = vmatmul.mubr.bf16.gmra.mxu0 %v589
      %v1463 = vpop.f32.mrf.mxu0
      %v1464 = vadd.f32 %v1415, %v1463
      %v1465 = vpop.f32.mrf.mxu0
      %v1466 = vpop.f32.mrf.mxu0
      %v1467 = vadd.f32 %v1418, %v1466
      %v1468 = vpop.f32.mrf.mxu0
      %1469 = vdwg.mxu0
      %1470 = vmatprep.subr.bf16.mxu0 0
      %1471 = vmatpush1.bf16.msra.mxu0 %v1105
      %1472 = vmatprep.subr.bf16.mxu0 0
      %1473 = vmatpush1.bf16.msra.mxu0 %v1104
      %1474 = vmatprep.subr.bf16.mxu0 0
      %1475 = vmatpush1.bf16.msra.mxu0 %v1103
      %1476 = vmatprep.subr.bf16.mxu0 0
      %1477 = vmatpush1.bf16.msra.mxu0 %v1102
      %1478 = vmatprep.subr.bf16.mxu0 0
      %1479 = vmatpush1.bf16.msra.mxu0 %v1101
      %1480 = vmatprep.subr.bf16.mxu0 0
      %1481 = vmatpush1.bf16.msra.mxu0 %v1100
      %1482 = vmatprep.subr.bf16.mxu0 0
      %1483 = vmatpush1.bf16.msra.mxu0 %v1099
      %1484 = vmatprep.subr.bf16.mxu0 0
      %1485 = vmatpush1.bf16.msra.mxu0 %v1098
      %1486 = vmatprep.subr.bf16.mxu0 0
      %1487 = vmatpush2.bf16.msra.mxu0 %v1113
      %1488 = vmatprep.subr.bf16.mxu0 0
      %1489 = vmatpush2.bf16.msra.mxu0 %v1112
      %1490 = vmatprep.subr.bf16.mxu0 0
      %1491 = vmatpush2.bf16.msra.mxu0 %v1111
      %1492 = vmatprep.subr.bf16.mxu0 0
      %1493 = vmatpush2.bf16.msra.mxu0 %v1110
      %1494 = vmatprep.subr.bf16.mxu0 0
      %1495 = vmatpush2.bf16.msra.mxu0 %v1109
      %1496 = vmatprep.subr.bf16.mxu0 0
      %1497 = vmatpush2.bf16.msra.mxu0 %v1108
      %1498 = vmatprep.subr.bf16.mxu0 0
      %1499 = vmatpush2.bf16.msra.mxu0 %v1107
      %1500 = vmatprep.subr.bf16.mxu0 0
      %1501 = vmatpush2.bf16.msra.mxu0 %v1106
      %1502 = vmatprep.mubr.bf16.mxu0 %v579
      %1503 = vmatmul.mubr.bf16.gmra.mxu0 %v578
      %v1504 = vpop.f32.mrf.mxu0
      %v1505 = vadd.f32 %v1456, %v1504
      %v1506 = vpop.f32.mrf.mxu0
      %v1507 = vpop.f32.mrf.mxu0
      %v1508 = vadd.f32 %v1459, %v1507
      %v1509 = vpop.f32.mrf.mxu0
      %1510 = vmatprep.mubr.bf16.mxu0 %v592
      %1511 = vmatmul.mubr.bf16.gmra.mxu0 %v591
      %v1512 = vpop.f32.mrf.mxu0
      %v1513 = vadd.f32 %v1464, %v1512
      %v1514 = vpop.f32.mrf.mxu0
      %v1515 = vpop.f32.mrf.mxu0
      %v1516 = vadd.f32 %v1467, %v1515
      %v1517 = vpop.f32.mrf.mxu0
      %1518 = vdwg.mxu0
      %1519 = vmatprep.subr.bf16.mxu0 0
      %1520 = vmatpush1.bf16.msra.mxu0 0
      %1521 = vmatprep.subr.bf16.mxu0 0
      %1522 = vmatpush1.bf16.msra.mxu0 0
      %1523 = vmatprep.subr.bf16.mxu0 0
      %1524 = vmatpush1.bf16.msra.mxu0 0
      %1525 = vmatprep.subr.bf16.mxu0 0
      %1526 = vmatpush1.bf16.msra.mxu0 0
      %1527 = vmatprep.subr.bf16.mxu0 0
      %1528 = vmatpush1.bf16.msra.mxu0 %v1117
      %1529 = vmatprep.subr.bf16.mxu0 0
      %1530 = vmatpush1.bf16.msra.mxu0 %v1116
      %1531 = vmatprep.subr.bf16.mxu0 0
      %1532 = vmatpush1.bf16.msra.mxu0 %v1115
      %1533 = vmatprep.subr.bf16.mxu0 0
      %1534 = vmatpush1.bf16.msra.mxu0 %v1114
      %1535 = vmatprep.subr.bf16.mxu0 0
      %1536 = vmatpush2.bf16.msra.mxu0 0
      %1537 = vmatprep.subr.bf16.mxu0 0
      %1538 = vmatpush2.bf16.msra.mxu0 0
      %1539 = vmatprep.subr.bf16.mxu0 0
      %1540 = vmatpush2.bf16.msra.mxu0 0
      %1541 = vmatprep.subr.bf16.mxu0 0
      %1542 = vmatpush2.bf16.msra.mxu0 0
      %1543 = vmatprep.subr.bf16.mxu0 0
      %1544 = vmatpush2.bf16.msra.mxu0 0
      %1545 = vmatprep.subr.bf16.mxu0 0
      %1546 = vmatpush2.bf16.msra.mxu0 0
      %1547 = vmatprep.subr.bf16.mxu0 0
      %1548 = vmatpush2.bf16.msra.mxu0 0
      %1549 = vmatprep.subr.bf16.mxu0 0
      %1550 = vmatpush2.bf16.msra.mxu0 0
      %1551 = vmatprep.mubr.bf16.mxu0 0
      %1552 = vmatmul.mubr.bf16.gmra.mxu0 %v1220
      %v1553 = vpop.f32.mrf.mxu0
      %v1554 = vadd.f32 %v1505, %v1553
      %v1555 = vpop.f32.mrf.mxu0
      %v1556 = vpop.f32.mrf.mxu0
      %v1557 = vadd.f32 %v1508, %v1556
      %v1558 = vpop.f32.mrf.mxu0
      %1559 = vmatprep.mubr.bf16.mxu0 0
      %1560 = vmatmul.mubr.bf16.gmra.mxu0 %v1223
      %v1561 = vpop.f32.mrf.mxu0
      %v1562 = vadd.f32 %v1513, %v1561
      %v1563 = vpop.f32.mrf.mxu0
      %v1564 = vpop.f32.mrf.mxu0
      %v1565 = vadd.f32 %v1516, %v1564
      %v1566 = vpop.f32.mrf.mxu0
      %1567 = vdwg.mxu0
      %1568 = vst.msk [vmem:[#allocation2] sm:$0xff] %vm1218, %v1554
      %1569 = vst.msk [vmem:[#allocation2 + $0x8] sm:$0xff] %vm1218, %v1557
      %1570 = vst.msk [vmem:[#allocation2 + $0x10] sm:$0xff] %vm1218, %v1562
      %vm1571 = vcmask 516096
      %1572 = vst.msk [vmem:[#allocation2 + $0x18] sm:$0x1] %vm1571, %v1565
      %v1573 = vsel %vm1218, %v1554, 0.0
      %v1574 = vsel %vm1218, %v1557, 0.0
      %v1575 = vadd.f32 %v1573, %v1574
      %v1576 = vsel %vm1218, %v1562, 0.0
      %v1577 = vadd.f32 %v1575, %v1576
      %v1578 = vsel %vm1571, %v1565, 0.0
      %v1579 = vadd.f32 %v1577, %v1578
      %v1580 = vrot.slane %v1579, 4
      %v1581 = vadd.f32 %v1579, %v1580
      %v1582 = vrot.slane %v1581, 2
      %v1583 = vadd.f32 %v1581, %v1582
      %v1584 = vrot.slane %v1583, 1
      %v1585 = vadd.f32 %v1583, %v1584
      %v1586 = vadd.f32 %v1585, 0.0
      %v1587 = vmul.f32 %v1554, %v1554
      %v1588 = vmul.f32 %v1557, %v1557
      %v1589 = vmul.f32 %v1562, %v1562
      %v1590 = vmul.f32 %v1565, %v1565
      %v1591 = vsel %vm1218, %v1587, 0.0
      %v1592 = vsel %vm1218, %v1588, 0.0
      %v1593 = vadd.f32 %v1591, %v1592
      %v1594 = vsel %vm1218, %v1589, 0.0
      %v1595 = vadd.f32 %v1593, %v1594
      %v1596 = vsel %vm1571, %v1590, 0.0
      %v1597 = vadd.f32 %v1595, %v1596
      %v1598 = vrot.slane %v1597, 4
      %v1599 = vadd.f32 %v1597, %v1598
      %v1600 = vrot.slane %v1599, 2
      %v1601 = vadd.f32 %v1599, %v1600
      %v1602 = vrot.slane %v1601, 1
      %v1603 = vadd.f32 %v1601, %v1602
      %v1604 = vadd.f32 %v1603, 0.0
      %s1605 = scalar_lea.vmem %s246, 208
      %v1606 = vld [vmem:[%s1605] sm:$0xff]
      %v1607 = vld [vmem:[%s1605 + $0x8] sm:$0xff]
      %v1608 = vld [vmem:[%s1605 + $0x10] sm:$0xff]
      %v1609 = vld [vmem:[%s1605 + $0x18] sm:$0xff]
      %v1610 = vld [vmem:[%s1605 + $0x20] sm:$0xff]
      %v1611 = vld [vmem:[%s1605 + $0x28] sm:$0xff]
      %v1612 = vld [vmem:[%s1605 + $0x30] sm:$0xf]
      %v1613 = vld [vmem:[%s1605 + $0x34] sm:$0xff]
      %v1614 = vld [vmem:[%s1605 + $0x3c] sm:$0xff]
      %v1615 = vld [vmem:[%s1605 + $0x44] sm:$0xff]
      %v1616 = vld [vmem:[%s1605 + $0x4c] sm:$0xff]
      %v1617 = vld [vmem:[%s1605 + $0x54] sm:$0xff]
      %v1618 = vld [vmem:[%s1605 + $0x5c] sm:$0xff]
      %v1619 = vld [vmem:[%s1605 + $0x64] sm:$0xf]
      %v1620 = vld [vmem:[%s1605 + $0x68] sm:$0xff]
      %v1621 = vld [vmem:[%s1605 + $0x70] sm:$0xff]
      %v1622 = vld [vmem:[%s1605 + $0x78] sm:$0xff]
      %v1623 = vld [vmem:[%s1605 + $0x80] sm:$0xff]
      %v1624 = vld [vmem:[%s1605 + $0x88] sm:$0xff]
      %v1625 = vld [vmem:[%s1605 + $0x90] sm:$0xff]
      %v1626 = vld [vmem:[%s1605 + $0x98] sm:$0xf]
      %v1627 = vld [vmem:[%s1605 + $0x9c] sm:$0x11]
      %v1628 = vld [vmem:[%s1605 + $0xa4] sm:$0x11]
      %v1629 = vld [vmem:[%s1605 + $0xac] sm:$0x11]
      %v1630 = vld [vmem:[%s1605 + $0xb4] sm:$0x11]
      %v1631 = vld [vmem:[%s1605 + $0xbc] sm:$0x11]
      %v1632 = vld [vmem:[%s1605 + $0xc4] sm:$0x11]
      %v1633 = vld [vmem:[%s1605 + $0xcc] sm:$0x1]
      %v1662 = vunpack.c.l.b16 %v1606
      %v1663 = vunpack.c.h.b16 %v1606
      %v1664 = vunpack.c.l.b16 %v1607
      %v1665 = vunpack.c.h.b16 %v1607
      %v1666 = vunpack.c.l.b16 %v1608
      %v1667 = vunpack.c.h.b16 %v1608
      %v1668 = vunpack.c.l.b16 %v1609
      %v1669 = vunpack.c.h.b16 %v1609
      %v1670 = vunpack.c.l.b16 %v1610
      %v1671 = vunpack.c.h.b16 %v1610
      %v1672 = vunpack.c.l.b16 %v1611
      %v1673 = vunpack.c.h.b16 %v1611
      %v1674 = vunpack.c.l.b16 %v1612
      %v1675 = vunpack.c.l.b16 %v1613
      %v1676 = vunpack.c.h.b16 %v1613
      %v1677 = vunpack.c.l.b16 %v1614
      %v1678 = vunpack.c.h.b16 %v1614
      %v1679 = vunpack.c.l.b16 %v1615
      %v1680 = vunpack.c.h.b16 %v1615
      %v1681 = vunpack.c.l.b16 %v1616
      %v1682 = vunpack.c.h.b16 %v1616
      %v1683 = vunpack.c.l.b16 %v1617
      %v1684 = vunpack.c.h.b16 %v1617
      %v1685 = vunpack.c.l.b16 %v1618
      %v1686 = vunpack.c.h.b16 %v1618
      %v1687 = vunpack.c.l.b16 %v1619
      %v1688 = vunpack.c.l.b16 %v1620
      %v1689 = vunpack.c.h.b16 %v1620
      %v1690 = vunpack.c.l.b16 %v1621
      %v1691 = vunpack.c.h.b16 %v1621
      %v1692 = vunpack.c.l.b16 %v1622
      %v1693 = vunpack.c.h.b16 %v1622
      %v1694 = vunpack.c.l.b16 %v1623
      %v1695 = vunpack.c.h.b16 %v1623
      %v1696 = vunpack.c.l.b16 %v1624
      %v1697 = vunpack.c.h.b16 %v1624
      %v1698 = vunpack.c.l.b16 %v1625
      %v1699 = vunpack.c.h.b16 %v1625
      %v1700 = vunpack.c.l.b16 %v1626
      %v1701 = vunpack.c.l.b16 %v1627
      %v1702 = vunpack.c.h.b16 %v1627
      %v1703 = vunpack.c.l.b16 %v1628
      %v1704 = vunpack.c.h.b16 %v1628
      %v1705 = vunpack.c.l.b16 %v1629
      %v1706 = vunpack.c.h.b16 %v1629
      %v1707 = vunpack.c.l.b16 %v1630
      %v1708 = vunpack.c.h.b16 %v1630
      %v1709 = vunpack.c.l.b16 %v1631
      %v1710 = vunpack.c.h.b16 %v1631
      %v1711 = vunpack.c.l.b16 %v1632
      %v1712 = vunpack.c.h.b16 %v1632
      %v1713 = vunpack.c.l.b16 %v1633
      %v1714 = vpack.c.b16 %v1675, %v1662
      %v1715 = vpack.c.b16 %v1676, %v1663
      %v1716 = vpack.c.b16 %v1677, %v1664
      %v1717 = vpack.c.b16 %v1678, %v1665
      %v1718 = vpack.c.b16 %v1679, %v1666
      %v1719 = vpack.c.b16 %v1680, %v1667
      %v1720 = vpack.c.b16 %v1681, %v1668
      %v1721 = vpack.c.b16 %v1682, %v1669
      %v1722 = vpack.c.b16 %v1683, %v1670
      %v1723 = vpack.c.b16 %v1684, %v1671
      %v1724 = vpack.c.b16 %v1685, %v1672
      %v1725 = vpack.c.b16 %v1686, %v1673
      %v1726 = vpack.c.b16 %v1687, %v1674
      %v1727 = vpack.c.b16 %v1701, %v1688
      %v1728 = vpack.c.b16 %v1702, %v1689
      %v1729 = vpack.c.b16 %v1703, %v1690
      %v1730 = vpack.c.b16 %v1704, %v1691
      %v1731 = vpack.c.b16 %v1705, %v1692
      %v1732 = vpack.c.b16 %v1706, %v1693
      %v1733 = vpack.c.b16 %v1707, %v1694
      %v1734 = vpack.c.b16 %v1708, %v1695
      %v1735 = vpack.c.b16 %v1709, %v1696
      %v1736 = vpack.c.b16 %v1710, %v1697
      %v1737 = vpack.c.b16 %v1711, %v1698
      %v1738 = vpack.c.b16 %v1712, %v1699
      %v1739 = vpack.c.b16 %v1713, %v1700
      %v1765 = vsel %vm1218, %v1726, 0
      %v1768 = vsel %vm1218, %v1739, 0
      %1770 = vmatprep.subr.bf16.mxu0 0
      %1771 = vmatpush1.bf16.msra.mxu0 %v1025
      %1772 = vmatprep.subr.bf16.mxu0 0
      %1773 = vmatpush1.bf16.msra.mxu0 %v1024
      %1774 = vmatprep.subr.bf16.mxu0 0
      %1775 = vmatpush1.bf16.msra.mxu0 %v1023
      %1776 = vmatprep.subr.bf16.mxu0 0
      %1777 = vmatpush1.bf16.msra.mxu0 %v1022
      %1778 = vmatprep.subr.bf16.mxu0 0
      %1779 = vmatpush1.bf16.msra.mxu0 %v1021
      %1780 = vmatprep.subr.bf16.mxu0 0
      %1781 = vmatpush1.bf16.msra.mxu0 %v1020
      %1782 = vmatprep.subr.bf16.mxu0 0
      %1783 = vmatpush1.bf16.msra.mxu0 %v1019
      %1784 = vmatprep.subr.bf16.mxu0 0
      %1785 = vmatpush1.bf16.msra.mxu0 %v1018
      %1786 = vmatprep.subr.bf16.mxu0 0
      %1787 = vmatpush2.bf16.msra.mxu0 %v1033
      %1788 = vmatprep.subr.bf16.mxu0 0
      %1789 = vmatpush2.bf16.msra.mxu0 %v1032
      %1790 = vmatprep.subr.bf16.mxu0 0
      %1791 = vmatpush2.bf16.msra.mxu0 %v1031
      %1792 = vmatprep.subr.bf16.mxu0 0
      %1793 = vmatpush2.bf16.msra.mxu0 %v1030
      %1794 = vmatprep.subr.bf16.mxu0 0
      %1795 = vmatpush2.bf16.msra.mxu0 %v1029
      %1796 = vmatprep.subr.bf16.mxu0 0
      %1797 = vmatpush2.bf16.msra.mxu0 %v1028
      %1798 = vmatprep.subr.bf16.mxu0 0
      %1799 = vmatpush2.bf16.msra.mxu0 %v1027
      %1800 = vmatprep.subr.bf16.mxu0 0
      %1801 = vmatpush2.bf16.msra.mxu0 %v1026
      %1802 = vmatprep.mubr.bf16.mxu0 %v1715
      %1803 = vmatmul.mubr.bf16.gmra.mxu0 %v1714
      %v1804 = vpop.f32.mrf.mxu0
      %v1805 = vadd.f32 %v486, %v1804
      %v1806 = vpop.f32.mrf.mxu0
      %v1807 = vpop.f32.mrf.mxu0
      %v1808 = vadd.f32 %v486, %v1807
      %v1809 = vpop.f32.mrf.mxu0
      %1810 = vmatprep.mubr.bf16.mxu0 %v1728
      %1811 = vmatmul.mubr.bf16.gmra.mxu0 %v1727
      %v1812 = vpop.f32.mrf.mxu0
      %v1813 = vadd.f32 %v486, %v1812
      %v1814 = vpop.f32.mrf.mxu0
      %v1815 = vpop.f32.mrf.mxu0
      %v1816 = vadd.f32 %v486, %v1815
      %v1817 = vpop.f32.mrf.mxu0
      %1818 = vdwg.mxu0
      %1819 = vmatprep.subr.bf16.mxu0 0
      %1820 = vmatpush1.bf16.msra.mxu0 %v1041
      %1821 = vmatprep.subr.bf16.mxu0 0
      %1822 = vmatpush1.bf16.msra.mxu0 %v1040
      %1823 = vmatprep.subr.bf16.mxu0 0
      %1824 = vmatpush1.bf16.msra.mxu0 %v1039
      %1825 = vmatprep.subr.bf16.mxu0 0
      %1826 = vmatpush1.bf16.msra.mxu0 %v1038
      %1827 = vmatprep.subr.bf16.mxu0 0
      %1828 = vmatpush1.bf16.msra.mxu0 %v1037
      %1829 = vmatprep.subr.bf16.mxu0 0
      %1830 = vmatpush1.bf16.msra.mxu0 %v1036
      %1831 = vmatprep.subr.bf16.mxu0 0
      %1832 = vmatpush1.bf16.msra.mxu0 %v1035
      %1833 = vmatprep.subr.bf16.mxu0 0
      %1834 = vmatpush1.bf16.msra.mxu0 %v1034
      %1835 = vmatprep.subr.bf16.mxu0 0
      %1836 = vmatpush2.bf16.msra.mxu0 %v1049
      %1837 = vmatprep.subr.bf16.mxu0 0
      %1838 = vmatpush2.bf16.msra.mxu0 %v1048
      %1839 = vmatprep.subr.bf16.mxu0 0
      %1840 = vmatpush2.bf16.msra.mxu0 %v1047
      %1841 = vmatprep.subr.bf16.mxu0 0
      %1842 = vmatpush2.bf16.msra.mxu0 %v1046
      %1843 = vmatprep.subr.bf16.mxu0 0
      %1844 = vmatpush2.bf16.msra.mxu0 %v1045
      %1845 = vmatprep.subr.bf16.mxu0 0
      %1846 = vmatpush2.bf16.msra.mxu0 %v1044
      %1847 = vmatprep.subr.bf16.mxu0 0
      %1848 = vmatpush2.bf16.msra.mxu0 %v1043
      %1849 = vmatprep.subr.bf16.mxu0 0
      %1850 = vmatpush2.bf16.msra.mxu0 %v1042
      %1851 = vmatprep.mubr.bf16.mxu0 %v1717
      %1852 = vmatmul.mubr.bf16.gmra.mxu0 %v1716
      %v1853 = vpop.f32.mrf.mxu0
      %v1854 = vadd.f32 %v1805, %v1853
      %v1855 = vpop.f32.mrf.mxu0
      %v1856 = vpop.f32.mrf.mxu0
      %v1857 = vadd.f32 %v1808, %v1856
      %v1858 = vpop.f32.mrf.mxu0
      %1859 = vmatprep.mubr.bf16.mxu0 %v1730
      %1860 = vmatmul.mubr.bf16.gmra.mxu0 %v1729
      %v1861 = vpop.f32.mrf.mxu0
      %v1862 = vadd.f32 %v1813, %v1861
      %v1863 = vpop.f32.mrf.mxu0
      %v1864 = vpop.f32.mrf.mxu0
      %v1865 = vadd.f32 %v1816, %v1864
      %v1866 = vpop.f32.mrf.mxu0
      %1867 = vdwg.mxu0
      %1868 = vmatprep.subr.bf16.mxu0 0
      %1869 = vmatpush1.bf16.msra.mxu0 %v1057
      %1870 = vmatprep.subr.bf16.mxu0 0
      %1871 = vmatpush1.bf16.msra.mxu0 %v1056
      %1872 = vmatprep.subr.bf16.mxu0 0
      %1873 = vmatpush1.bf16.msra.mxu0 %v1055
      %1874 = vmatprep.subr.bf16.mxu0 0
      %1875 = vmatpush1.bf16.msra.mxu0 %v1054
      %1876 = vmatprep.subr.bf16.mxu0 0
      %1877 = vmatpush1.bf16.msra.mxu0 %v1053
      %1878 = vmatprep.subr.bf16.mxu0 0
      %1879 = vmatpush1.bf16.msra.mxu0 %v1052
      %1880 = vmatprep.subr.bf16.mxu0 0
      %1881 = vmatpush1.bf16.msra.mxu0 %v1051
      %1882 = vmatprep.subr.bf16.mxu0 0
      %1883 = vmatpush1.bf16.msra.mxu0 %v1050
      %1884 = vmatprep.subr.bf16.mxu0 0
      %1885 = vmatpush2.bf16.msra.mxu0 %v1065
      %1886 = vmatprep.subr.bf16.mxu0 0
      %1887 = vmatpush2.bf16.msra.mxu0 %v1064
      %1888 = vmatprep.subr.bf16.mxu0 0
      %1889 = vmatpush2.bf16.msra.mxu0 %v1063
      %1890 = vmatprep.subr.bf16.mxu0 0
      %1891 = vmatpush2.bf16.msra.mxu0 %v1062
      %1892 = vmatprep.subr.bf16.mxu0 0
      %1893 = vmatpush2.bf16.msra.mxu0 %v1061
      %1894 = vmatprep.subr.bf16.mxu0 0
      %1895 = vmatpush2.bf16.msra.mxu0 %v1060
      %1896 = vmatprep.subr.bf16.mxu0 0
      %1897 = vmatpush2.bf16.msra.mxu0 %v1059
      %1898 = vmatprep.subr.bf16.mxu0 0
      %1899 = vmatpush2.bf16.msra.mxu0 %v1058
      %1900 = vmatprep.mubr.bf16.mxu0 %v1719
      %1901 = vmatmul.mubr.bf16.gmra.mxu0 %v1718
      %v1902 = vpop.f32.mrf.mxu0
      %v1903 = vadd.f32 %v1854, %v1902
      %v1904 = vpop.f32.mrf.mxu0
      %v1905 = vpop.f32.mrf.mxu0
      %v1906 = vadd.f32 %v1857, %v1905
      %v1907 = vpop.f32.mrf.mxu0
      %1908 = vmatprep.mubr.bf16.mxu0 %v1732
      %1909 = vmatmul.mubr.bf16.gmra.mxu0 %v1731
      %v1910 = vpop.f32.mrf.mxu0
      %v1911 = vadd.f32 %v1862, %v1910
      %v1912 = vpop.f32.mrf.mxu0
      %v1913 = vpop.f32.mrf.mxu0
      %v1914 = vadd.f32 %v1865, %v1913
      %v1915 = vpop.f32.mrf.mxu0
      %1916 = vdwg.mxu0
      %1917 = vmatprep.subr.bf16.mxu0 0
      %1918 = vmatpush1.bf16.msra.mxu0 %v1073
      %1919 = vmatprep.subr.bf16.mxu0 0
      %1920 = vmatpush1.bf16.msra.mxu0 %v1072
      %1921 = vmatprep.subr.bf16.mxu0 0
      %1922 = vmatpush1.bf16.msra.mxu0 %v1071
      %1923 = vmatprep.subr.bf16.mxu0 0
      %1924 = vmatpush1.bf16.msra.mxu0 %v1070
      %1925 = vmatprep.subr.bf16.mxu0 0
      %1926 = vmatpush1.bf16.msra.mxu0 %v1069
      %1927 = vmatprep.subr.bf16.mxu0 0
      %1928 = vmatpush1.bf16.msra.mxu0 %v1068
      %1929 = vmatprep.subr.bf16.mxu0 0
      %1930 = vmatpush1.bf16.msra.mxu0 %v1067
      %1931 = vmatprep.subr.bf16.mxu0 0
      %1932 = vmatpush1.bf16.msra.mxu0 %v1066
      %1933 = vmatprep.subr.bf16.mxu0 0
      %1934 = vmatpush2.bf16.msra.mxu0 %v1081
      %1935 = vmatprep.subr.bf16.mxu0 0
      %1936 = vmatpush2.bf16.msra.mxu0 %v1080
      %1937 = vmatprep.subr.bf16.mxu0 0
      %1938 = vmatpush2.bf16.msra.mxu0 %v1079
      %1939 = vmatprep.subr.bf16.mxu0 0
      %1940 = vmatpush2.bf16.msra.mxu0 %v1078
      %1941 = vmatprep.subr.bf16.mxu0 0
      %1942 = vmatpush2.bf16.msra.mxu0 %v1077
      %1943 = vmatprep.subr.bf16.mxu0 0
      %1944 = vmatpush2.bf16.msra.mxu0 %v1076
      %1945 = vmatprep.subr.bf16.mxu0 0
      %1946 = vmatpush2.bf16.msra.mxu0 %v1075
      %1947 = vmatprep.subr.bf16.mxu0 0
      %1948 = vmatpush2.bf16.msra.mxu0 %v1074
      %1949 = vmatprep.mubr.bf16.mxu0 %v1721
      %1950 = vmatmul.mubr.bf16.gmra.mxu0 %v1720
      %v1951 = vpop.f32.mrf.mxu0
      %v1952 = vadd.f32 %v1903, %v1951
      %v1953 = vpop.f32.mrf.mxu0
      %v1954 = vpop.f32.mrf.mxu0
      %v1955 = vadd.f32 %v1906, %v1954
      %v1956 = vpop.f32.mrf.mxu0
      %1957 = vmatprep.mubr.bf16.mxu0 %v1734
      %1958 = vmatmul.mubr.bf16.gmra.mxu0 %v1733
      %v1959 = vpop.f32.mrf.mxu0
      %v1960 = vadd.f32 %v1911, %v1959
      %v1961 = vpop.f32.mrf.mxu0
      %v1962 = vpop.f32.mrf.mxu0
      %v1963 = vadd.f32 %v1914, %v1962
      %v1964 = vpop.f32.mrf.mxu0
      %1965 = vdwg.mxu0
      %1966 = vmatprep.subr.bf16.mxu0 0
      %1967 = vmatpush1.bf16.msra.mxu0 %v1089
      %1968 = vmatprep.subr.bf16.mxu0 0
      %1969 = vmatpush1.bf16.msra.mxu0 %v1088
      %1970 = vmatprep.subr.bf16.mxu0 0
      %1971 = vmatpush1.bf16.msra.mxu0 %v1087
      %1972 = vmatprep.subr.bf16.mxu0 0
      %1973 = vmatpush1.bf16.msra.mxu0 %v1086
      %1974 = vmatprep.subr.bf16.mxu0 0
      %1975 = vmatpush1.bf16.msra.mxu0 %v1085
      %1976 = vmatprep.subr.bf16.mxu0 0
      %1977 = vmatpush1.bf16.msra.mxu0 %v1084
      %1978 = vmatprep.subr.bf16.mxu0 0
      %1979 = vmatpush1.bf16.msra.mxu0 %v1083
      %1980 = vmatprep.subr.bf16.mxu0 0
      %1981 = vmatpush1.bf16.msra.mxu0 %v1082
      %1982 = vmatprep.subr.bf16.mxu0 0
      %1983 = vmatpush2.bf16.msra.mxu0 %v1097
      %1984 = vmatprep.subr.bf16.mxu0 0
      %1985 = vmatpush2.bf16.msra.mxu0 %v1096
      %1986 = vmatprep.subr.bf16.mxu0 0
      %1987 = vmatpush2.bf16.msra.mxu0 %v1095
      %1988 = vmatprep.subr.bf16.mxu0 0
      %1989 = vmatpush2.bf16.msra.mxu0 %v1094
      %1990 = vmatprep.subr.bf16.mxu0 0
      %1991 = vmatpush2.bf16.msra.mxu0 %v1093
      %1992 = vmatprep.subr.bf16.mxu0 0
      %1993 = vmatpush2.bf16.msra.mxu0 %v1092
      %1994 = vmatprep.subr.bf16.mxu0 0
      %1995 = vmatpush2.bf16.msra.mxu0 %v1091
      %1996 = vmatprep.subr.bf16.mxu0 0
      %1997 = vmatpush2.bf16.msra.mxu0 %v1090
      %1998 = vmatprep.mubr.bf16.mxu0 %v1723
      %1999 = vmatmul.mubr.bf16.gmra.mxu0 %v1722
      %v2000 = vpop.f32.mrf.mxu0
      %v2001 = vadd.f32 %v1952, %v2000
      %v2002 = vpop.f32.mrf.mxu0
      %v2003 = vpop.f32.mrf.mxu0
      %v2004 = vadd.f32 %v1955, %v2003
      %v2005 = vpop.f32.mrf.mxu0
      %2006 = vmatprep.mubr.bf16.mxu0 %v1736
      %2007 = vmatmul.mubr.bf16.gmra.mxu0 %v1735
      %v2008 = vpop.f32.mrf.mxu0
      %v2009 = vadd.f32 %v1960, %v2008
      %v2010 = vpop.f32.mrf.mxu0
      %v2011 = vpop.f32.mrf.mxu0
      %v2012 = vadd.f32 %v1963, %v2011
      %v2013 = vpop.f32.mrf.mxu0
      %2014 = vdwg.mxu0
      %2015 = vmatprep.subr.bf16.mxu0 0
      %2016 = vmatpush1.bf16.msra.mxu0 %v1105
      %2017 = vmatprep.subr.bf16.mxu0 0
      %2018 = vmatpush1.bf16.msra.mxu0 %v1104
      %2019 = vmatprep.subr.bf16.mxu0 0
      %2020 = vmatpush1.bf16.msra.mxu0 %v1103
      %2021 = vmatprep.subr.bf16.mxu0 0
      %2022 = vmatpush1.bf16.msra.mxu0 %v1102
      %2023 = vmatprep.subr.bf16.mxu0 0
      %2024 = vmatpush1.bf16.msra.mxu0 %v1101
      %2025 = vmatprep.subr.bf16.mxu0 0
      %2026 = vmatpush1.bf16.msra.mxu0 %v1100
      %2027 = vmatprep.subr.bf16.mxu0 0
      %2028 = vmatpush1.bf16.msra.mxu0 %v1099
      %2029 = vmatprep.subr.bf16.mxu0 0
      %2030 = vmatpush1.bf16.msra.mxu0 %v1098
      %2031 = vmatprep.subr.bf16.mxu0 0
      %2032 = vmatpush2.bf16.msra.mxu0 %v1113
      %2033 = vmatprep.subr.bf16.mxu0 0
      %2034 = vmatpush2.bf16.msra.mxu0 %v1112
      %2035 = vmatprep.subr.bf16.mxu0 0
      %2036 = vmatpush2.bf16.msra.mxu0 %v1111
      %2037 = vmatprep.subr.bf16.mxu0 0
      %2038 = vmatpush2.bf16.msra.mxu0 %v1110
      %2039 = vmatprep.subr.bf16.mxu0 0
      %2040 = vmatpush2.bf16.msra.mxu0 %v1109
      %2041 = vmatprep.subr.bf16.mxu0 0
      %2042 = vmatpush2.bf16.msra.mxu0 %v1108
      %2043 = vmatprep.subr.bf16.mxu0 0
      %2044 = vmatpush2.bf16.msra.mxu0 %v1107
      %2045 = vmatprep.subr.bf16.mxu0 0
      %2046 = vmatpush2.bf16.msra.mxu0 %v1106
      %2047 = vmatprep.mubr.bf16.mxu0 %v1725
      %2048 = vmatmul.mubr.bf16.gmra.mxu0 %v1724
      %v2049 = vpop.f32.mrf.mxu0
      %v2050 = vadd.f32 %v2001, %v2049
      %v2051 = vpop.f32.mrf.mxu0
      %v2052 = vpop.f32.mrf.mxu0
      %v2053 = vadd.f32 %v2004, %v2052
      %v2054 = vpop.f32.mrf.mxu0
      %2055 = vmatprep.mubr.bf16.mxu0 %v1738
      %2056 = vmatmul.mubr.bf16.gmra.mxu0 %v1737
      %v2057 = vpop.f32.mrf.mxu0
      %v2058 = vadd.f32 %v2009, %v2057
      %v2059 = vpop.f32.mrf.mxu0
      %v2060 = vpop.f32.mrf.mxu0
      %v2061 = vadd.f32 %v2012, %v2060
      %v2062 = vpop.f32.mrf.mxu0
      %2063 = vdwg.mxu0
      %2064 = vmatprep.subr.bf16.mxu0 0
      %2065 = vmatpush1.bf16.msra.mxu0 0
      %2066 = vmatprep.subr.bf16.mxu0 0
      %2067 = vmatpush1.bf16.msra.mxu0 0
      %2068 = vmatprep.subr.bf16.mxu0 0
      %2069 = vmatpush1.bf16.msra.mxu0 0
      %2070 = vmatprep.subr.bf16.mxu0 0
      %2071 = vmatpush1.bf16.msra.mxu0 0
      %2072 = vmatprep.subr.bf16.mxu0 0
      %2073 = vmatpush1.bf16.msra.mxu0 %v1117
      %2074 = vmatprep.subr.bf16.mxu0 0
      %2075 = vmatpush1.bf16.msra.mxu0 %v1116
      %2076 = vmatprep.subr.bf16.mxu0 0
      %2077 = vmatpush1.bf16.msra.mxu0 %v1115
      %2078 = vmatprep.subr.bf16.mxu0 0
      %2079 = vmatpush1.bf16.msra.mxu0 %v1114
      %2080 = vmatprep.subr.bf16.mxu0 0
      %2081 = vmatpush2.bf16.msra.mxu0 0
      %2082 = vmatprep.subr.bf16.mxu0 0
      %2083 = vmatpush2.bf16.msra.mxu0 0
      %2084 = vmatprep.subr.bf16.mxu0 0
      %2085 = vmatpush2.bf16.msra.mxu0 0
      %2086 = vmatprep.subr.bf16.mxu0 0
      %2087 = vmatpush2.bf16.msra.mxu0 0
      %2088 = vmatprep.subr.bf16.mxu0 0
      %2089 = vmatpush2.bf16.msra.mxu0 0
      %2090 = vmatprep.subr.bf16.mxu0 0
      %2091 = vmatpush2.bf16.msra.mxu0 0
      %2092 = vmatprep.subr.bf16.mxu0 0
      %2093 = vmatpush2.bf16.msra.mxu0 0
      %2094 = vmatprep.subr.bf16.mxu0 0
      %2095 = vmatpush2.bf16.msra.mxu0 0
      %2096 = vmatprep.mubr.bf16.mxu0 0
      %2097 = vmatmul.mubr.bf16.gmra.mxu0 %v1765
      %v2098 = vpop.f32.mrf.mxu0
      %v2099 = vadd.f32 %v2050, %v2098
      %v2100 = vpop.f32.mrf.mxu0
      %v2101 = vpop.f32.mrf.mxu0
      %v2102 = vadd.f32 %v2053, %v2101
      %v2103 = vpop.f32.mrf.mxu0
      %2104 = vmatprep.mubr.bf16.mxu0 0
      %2105 = vmatmul.mubr.bf16.gmra.mxu0 %v1768
      %v2106 = vpop.f32.mrf.mxu0
      %v2107 = vadd.f32 %v2058, %v2106
      %v2108 = vpop.f32.mrf.mxu0
      %v2109 = vpop.f32.mrf.mxu0
      %v2110 = vadd.f32 %v2061, %v2109
      %v2111 = vpop.f32.mrf.mxu0
      %2112 = vdwg.mxu0
      %s2113 = scalar_lea.vmem [#allocation2], 32
      %2114 = vst.msk [vmem:[%s2113] sm:$0xff] %vm1218, %v2099
      %2115 = vst.msk [vmem:[%s2113 + $0x8] sm:$0xff] %vm1218, %v2102
      %2116 = vst.msk [vmem:[%s2113 + $0x10] sm:$0xff] %vm1218, %v2107
      %2117 = vst.msk [vmem:[%s2113 + $0x18] sm:$0x1] %vm1571, %v2110
      %v2118 = vsel %vm1218, %v2099, 0.0
      %v2119 = vsel %vm1218, %v2102, 0.0
      %v2120 = vadd.f32 %v2118, %v2119
      %v2121 = vsel %vm1218, %v2107, 0.0
      %v2122 = vadd.f32 %v2120, %v2121
      %v2123 = vsel %vm1571, %v2110, 0.0
      %v2124 = vadd.f32 %v2122, %v2123
      %v2125 = vrot.slane %v2124, 4
      %v2126 = vadd.f32 %v2124, %v2125
      %v2127 = vrot.slane %v2126, 2
      %v2128 = vadd.f32 %v2126, %v2127
      %v2129 = vrot.slane %v2128, 1
      %v2130 = vadd.f32 %v2128, %v2129
      %v2131 = vadd.f32 %v1586, %v2130
      %v2132 = vmul.f32 %v2099, %v2099
      %v2133 = vmul.f32 %v2102, %v2102
      %v2134 = vmul.f32 %v2107, %v2107
      %v2135 = vmul.f32 %v2110, %v2110
      %v2136 = vsel %vm1218, %v2132, 0.0
      %v2137 = vsel %vm1218, %v2133, 0.0
      %v2138 = vadd.f32 %v2136, %v2137
      %v2139 = vsel %vm1218, %v2134, 0.0
      %v2140 = vadd.f32 %v2138, %v2139
      %v2141 = vsel %vm1571, %v2135, 0.0
      %v2142 = vadd.f32 %v2140, %v2141
      %v2143 = vrot.slane %v2142, 4
      %v2144 = vadd.f32 %v2142, %v2143
      %v2145 = vrot.slane %v2144, 2
      %v2146 = vadd.f32 %v2144, %v2145
      %v2147 = vrot.slane %v2146, 1
      %v2148 = vadd.f32 %v2146, %v2147
      %v2149 = vadd.f32 %v1604, %v2148
      %s2150 = scalar_lea.vmem %s246, 416
      %v2151 = vld [vmem:[%s2150] sm:$0xff]
      %v2152 = vld [vmem:[%s2150 + $0x8] sm:$0xff]
      %v2153 = vld [vmem:[%s2150 + $0x10] sm:$0xff]
      %v2154 = vld [vmem:[%s2150 + $0x18] sm:$0xff]
      %v2155 = vld [vmem:[%s2150 + $0x20] sm:$0xff]
      %v2156 = vld [vmem:[%s2150 + $0x28] sm:$0xff]
      %v2157 = vld [vmem:[%s2150 + $0x30] sm:$0xf]
      %v2158 = vld [vmem:[%s2150 + $0x34] sm:$0xff]
      %v2159 = vld [vmem:[%s2150 + $0x3c] sm:$0xff]
      %v2160 = vld [vmem:[%s2150 + $0x44] sm:$0xff]
      %v2161 = vld [vmem:[%s2150 + $0x4c] sm:$0xff]
      %v2162 = vld [vmem:[%s2150 + $0x54] sm:$0xff]
      %v2163 = vld [vmem:[%s2150 + $0x5c] sm:$0xff]
      %v2164 = vld [vmem:[%s2150 + $0x64] sm:$0xf]
      %v2165 = vld [vmem:[%s2150 + $0x68] sm:$0xff]
      %v2166 = vld [vmem:[%s2150 + $0x70] sm:$0xff]
      %v2167 = vld [vmem:[%s2150 + $0x78] sm:$0xff]
      %v2168 = vld [vmem:[%s2150 + $0x80] sm:$0xff]
      %v2169 = vld [vmem:[%s2150 + $0x88] sm:$0xff]
      %v2170 = vld [vmem:[%s2150 + $0x90] sm:$0xff]
      %v2171 = vld [vmem:[%s2150 + $0x98] sm:$0xf]
      %v2172 = vld [vmem:[%s2150 + $0x9c] sm:$0x11]
      %v2173 = vld [vmem:[%s2150 + $0xa4] sm:$0x11]
      %v2174 = vld [vmem:[%s2150 + $0xac] sm:$0x11]
      %v2175 = vld [vmem:[%s2150 + $0xb4] sm:$0x11]
      %v2176 = vld [vmem:[%s2150 + $0xbc] sm:$0x11]
      %v2177 = vld [vmem:[%s2150 + $0xc4] sm:$0x11]
      %v2178 = vld [vmem:[%s2150 + $0xcc] sm:$0x1]
      %v2207 = vunpack.c.l.b16 %v2151
      %v2208 = vunpack.c.h.b16 %v2151
      %v2209 = vunpack.c.l.b16 %v2152
      %v2210 = vunpack.c.h.b16 %v2152
      %v2211 = vunpack.c.l.b16 %v2153
      %v2212 = vunpack.c.h.b16 %v2153
      %v2213 = vunpack.c.l.b16 %v2154
      %v2214 = vunpack.c.h.b16 %v2154
      %v2215 = vunpack.c.l.b16 %v2155
      %v2216 = vunpack.c.h.b16 %v2155
      %v2217 = vunpack.c.l.b16 %v2156
      %v2218 = vunpack.c.h.b16 %v2156
      %v2219 = vunpack.c.l.b16 %v2157
      %v2220 = vunpack.c.l.b16 %v2158
      %v2221 = vunpack.c.h.b16 %v2158
      %v2222 = vunpack.c.l.b16 %v2159
      %v2223 = vunpack.c.h.b16 %v2159
      %v2224 = vunpack.c.l.b16 %v2160
      %v2225 = vunpack.c.h.b16 %v2160
      %v2226 = vunpack.c.l.b16 %v2161
      %v2227 = vunpack.c.h.b16 %v2161
      %v2228 = vunpack.c.l.b16 %v2162
      %v2229 = vunpack.c.h.b16 %v2162
      %v2230 = vunpack.c.l.b16 %v2163
      %v2231 = vunpack.c.h.b16 %v2163
      %v2232 = vunpack.c.l.b16 %v2164
      %v2233 = vunpack.c.l.b16 %v2165
      %v2234 = vunpack.c.h.b16 %v2165
      %v2235 = vunpack.c.l.b16 %v2166
      %v2236 = vunpack.c.h.b16 %v2166
      %v2237 = vunpack.c.l.b16 %v2167
      %v2238 = vunpack.c.h.b16 %v2167
      %v2239 = vunpack.c.l.b16 %v2168
      %v2240 = vunpack.c.h.b16 %v2168
      %v2241 = vunpack.c.l.b16 %v2169
      %v2242 = vunpack.c.h.b16 %v2169
      %v2243 = vunpack.c.l.b16 %v2170
      %v2244 = vunpack.c.h.b16 %v2170
      %v2245 = vunpack.c.l.b16 %v2171
      %v2246 = vunpack.c.l.b16 %v2172
      %v2247 = vunpack.c.h.b16 %v2172
      %v2248 = vunpack.c.l.b16 %v2173
      %v2249 = vunpack.c.h.b16 %v2173
      %v2250 = vunpack.c.l.b16 %v2174
      %v2251 = vunpack.c.h.b16 %v2174
      %v2252 = vunpack.c.l.b16 %v2175
      %v2253 = vunpack.c.h.b16 %v2175
      %v2254 = vunpack.c.l.b16 %v2176
      %v2255 = vunpack.c.h.b16 %v2176
      %v2256 = vunpack.c.l.b16 %v2177
      %v2257 = vunpack.c.h.b16 %v2177
      %v2258 = vunpack.c.l.b16 %v2178
      %v2259 = vpack.c.b16 %v2220, %v2207
      %v2260 = vpack.c.b16 %v2221, %v2208
      %v2261 = vpack.c.b16 %v2222, %v2209
      %v2262 = vpack.c.b16 %v2223, %v2210
      %v2263 = vpack.c.b16 %v2224, %v2211
      %v2264 = vpack.c.b16 %v2225, %v2212
      %v2265 = vpack.c.b16 %v2226, %v2213
      %v2266 = vpack.c.b16 %v2227, %v2214
      %v2267 = vpack.c.b16 %v2228, %v2215
      %v2268 = vpack.c.b16 %v2229, %v2216
      %v2269 = vpack.c.b16 %v2230, %v2217
      %v2270 = vpack.c.b16 %v2231, %v2218
      %v2271 = vpack.c.b16 %v2232, %v2219
      %v2272 = vpack.c.b16 %v2246, %v2233
      %v2273 = vpack.c.b16 %v2247, %v2234
      %v2274 = vpack.c.b16 %v2248, %v2235
      %v2275 = vpack.c.b16 %v2249, %v2236
      %v2276 = vpack.c.b16 %v2250, %v2237
      %v2277 = vpack.c.b16 %v2251, %v2238
      %v2278 = vpack.c.b16 %v2252, %v2239
      %v2279 = vpack.c.b16 %v2253, %v2240
      %v2280 = vpack.c.b16 %v2254, %v2241
      %v2281 = vpack.c.b16 %v2255, %v2242
      %v2282 = vpack.c.b16 %v2256, %v2243
      %v2283 = vpack.c.b16 %v2257, %v2244
      %v2284 = vpack.c.b16 %v2258, %v2245
      %v2310 = vsel %vm1218, %v2271, 0
      %v2313 = vsel %vm1218, %v2284, 0
      %2315 = vmatprep.subr.bf16.mxu0 0
      %2316 = vmatpush1.bf16.msra.mxu0 %v1025
      %2317 = vmatprep.subr.bf16.mxu0 0
      %2318 = vmatpush1.bf16.msra.mxu0 %v1024
      %2319 = vmatprep.subr.bf16.mxu0 0
      %2320 = vmatpush1.bf16.msra.mxu0 %v1023
      %2321 = vmatprep.subr.bf16.mxu0 0
      %2322 = vmatpush1.bf16.msra.mxu0 %v1022
      %2323 = vmatprep.subr.bf16.mxu0 0
      %2324 = vmatpush1.bf16.msra.mxu0 %v1021
      %2325 = vmatprep.subr.bf16.mxu0 0
      %2326 = vmatpush1.bf16.msra.mxu0 %v1020
      %2327 = vmatprep.subr.bf16.mxu0 0
      %2328 = vmatpush1.bf16.msra.mxu0 %v1019
      %2329 = vmatprep.subr.bf16.mxu0 0
      %2330 = vmatpush1.bf16.msra.mxu0 %v1018
      %2331 = vmatprep.subr.bf16.mxu0 0
      %2332 = vmatpush2.bf16.msra.mxu0 %v1033
      %2333 = vmatprep.subr.bf16.mxu0 0
      %2334 = vmatpush2.bf16.msra.mxu0 %v1032
      %2335 = vmatprep.subr.bf16.mxu0 0
      %2336 = vmatpush2.bf16.msra.mxu0 %v1031
      %2337 = vmatprep.subr.bf16.mxu0 0
      %2338 = vmatpush2.bf16.msra.mxu0 %v1030
      %2339 = vmatprep.subr.bf16.mxu0 0
      %2340 = vmatpush2.bf16.msra.mxu0 %v1029
      %2341 = vmatprep.subr.bf16.mxu0 0
      %2342 = vmatpush2.bf16.msra.mxu0 %v1028
      %2343 = vmatprep.subr.bf16.mxu0 0
      %2344 = vmatpush2.bf16.msra.mxu0 %v1027
      %2345 = vmatprep.subr.bf16.mxu0 0
      %2346 = vmatpush2.bf16.msra.mxu0 %v1026
      %2347 = vmatprep.mubr.bf16.mxu0 %v2260
      %2348 = vmatmul.mubr.bf16.gmra.mxu0 %v2259
      %v2349 = vpop.f32.mrf.mxu0
      %v2350 = vadd.f32 %v486, %v2349
      %v2351 = vpop.f32.mrf.mxu0
      %v2352 = vpop.f32.mrf.mxu0
      %v2353 = vadd.f32 %v486, %v2352
      %v2354 = vpop.f32.mrf.mxu0
      %2355 = vmatprep.mubr.bf16.mxu0 %v2273
      %2356 = vmatmul.mubr.bf16.gmra.mxu0 %v2272
      %v2357 = vpop.f32.mrf.mxu0
      %v2358 = vadd.f32 %v486, %v2357
      %v2359 = vpop.f32.mrf.mxu0
      %v2360 = vpop.f32.mrf.mxu0
      %v2361 = vadd.f32 %v486, %v2360
      %v2362 = vpop.f32.mrf.mxu0
      %2363 = vdwg.mxu0
      %2364 = vmatprep.subr.bf16.mxu0 0
      %2365 = vmatpush1.bf16.msra.mxu0 %v1041
      %2366 = vmatprep.subr.bf16.mxu0 0
      %2367 = vmatpush1.bf16.msra.mxu0 %v1040
      %2368 = vmatprep.subr.bf16.mxu0 0
      %2369 = vmatpush1.bf16.msra.mxu0 %v1039
      %2370 = vmatprep.subr.bf16.mxu0 0
      %2371 = vmatpush1.bf16.msra.mxu0 %v1038
      %2372 = vmatprep.subr.bf16.mxu0 0
      %2373 = vmatpush1.bf16.msra.mxu0 %v1037
      %2374 = vmatprep.subr.bf16.mxu0 0
      %2375 = vmatpush1.bf16.msra.mxu0 %v1036
      %2376 = vmatprep.subr.bf16.mxu0 0
      %2377 = vmatpush1.bf16.msra.mxu0 %v1035
      %2378 = vmatprep.subr.bf16.mxu0 0
      %2379 = vmatpush1.bf16.msra.mxu0 %v1034
      %2380 = vmatprep.subr.bf16.mxu0 0
      %2381 = vmatpush2.bf16.msra.mxu0 %v1049
      %2382 = vmatprep.subr.bf16.mxu0 0
      %2383 = vmatpush2.bf16.msra.mxu0 %v1048
      %2384 = vmatprep.subr.bf16.mxu0 0
      %2385 = vmatpush2.bf16.msra.mxu0 %v1047
      %2386 = vmatprep.subr.bf16.mxu0 0
      %2387 = vmatpush2.bf16.msra.mxu0 %v1046
      %2388 = vmatprep.subr.bf16.mxu0 0
      %2389 = vmatpush2.bf16.msra.mxu0 %v1045
      %2390 = vmatprep.subr.bf16.mxu0 0
      %2391 = vmatpush2.bf16.msra.mxu0 %v1044
      %2392 = vmatprep.subr.bf16.mxu0 0
      %2393 = vmatpush2.bf16.msra.mxu0 %v1043
      %2394 = vmatprep.subr.bf16.mxu0 0
      %2395 = vmatpush2.bf16.msra.mxu0 %v1042
      %2396 = vmatprep.mubr.bf16.mxu0 %v2262
      %2397 = vmatmul.mubr.bf16.gmra.mxu0 %v2261
      %v2398 = vpop.f32.mrf.mxu0
      %v2399 = vadd.f32 %v2350, %v2398
      %v2400 = vpop.f32.mrf.mxu0
      %v2401 = vpop.f32.mrf.mxu0
      %v2402 = vadd.f32 %v2353, %v2401
      %v2403 = vpop.f32.mrf.mxu0
      %2404 = vmatprep.mubr.bf16.mxu0 %v2275
      %2405 = vmatmul.mubr.bf16.gmra.mxu0 %v2274
      %v2406 = vpop.f32.mrf.mxu0
      %v2407 = vadd.f32 %v2358, %v2406
      %v2408 = vpop.f32.mrf.mxu0
      %v2409 = vpop.f32.mrf.mxu0
      %v2410 = vadd.f32 %v2361, %v2409
      %v2411 = vpop.f32.mrf.mxu0
      %2412 = vdwg.mxu0
      %2413 = vmatprep.subr.bf16.mxu0 0
      %2414 = vmatpush1.bf16.msra.mxu0 %v1057
      %2415 = vmatprep.subr.bf16.mxu0 0
      %2416 = vmatpush1.bf16.msra.mxu0 %v1056
      %2417 = vmatprep.subr.bf16.mxu0 0
      %2418 = vmatpush1.bf16.msra.mxu0 %v1055
      %2419 = vmatprep.subr.bf16.mxu0 0
      %2420 = vmatpush1.bf16.msra.mxu0 %v1054
      %2421 = vmatprep.subr.bf16.mxu0 0
      %2422 = vmatpush1.bf16.msra.mxu0 %v1053
      %2423 = vmatprep.subr.bf16.mxu0 0
      %2424 = vmatpush1.bf16.msra.mxu0 %v1052
      %2425 = vmatprep.subr.bf16.mxu0 0
      %2426 = vmatpush1.bf16.msra.mxu0 %v1051
      %2427 = vmatprep.subr.bf16.mxu0 0
      %2428 = vmatpush1.bf16.msra.mxu0 %v1050
      %2429 = vmatprep.subr.bf16.mxu0 0
      %2430 = vmatpush2.bf16.msra.mxu0 %v1065
      %2431 = vmatprep.subr.bf16.mxu0 0
      %2432 = vmatpush2.bf16.msra.mxu0 %v1064
      %2433 = vmatprep.subr.bf16.mxu0 0
      %2434 = vmatpush2.bf16.msra.mxu0 %v1063
      %2435 = vmatprep.subr.bf16.mxu0 0
      %2436 = vmatpush2.bf16.msra.mxu0 %v1062
      %2437 = vmatprep.subr.bf16.mxu0 0
      %2438 = vmatpush2.bf16.msra.mxu0 %v1061
      %2439 = vmatprep.subr.bf16.mxu0 0
      %2440 = vmatpush2.bf16.msra.mxu0 %v1060
      %2441 = vmatprep.subr.bf16.mxu0 0
      %2442 = vmatpush2.bf16.msra.mxu0 %v1059
      %2443 = vmatprep.subr.bf16.mxu0 0
      %2444 = vmatpush2.bf16.msra.mxu0 %v1058
      %2445 = vmatprep.mubr.bf16.mxu0 %v2264
      %2446 = vmatmul.mubr.bf16.gmra.mxu0 %v2263
      %v2447 = vpop.f32.mrf.mxu0
      %v2448 = vadd.f32 %v2399, %v2447
      %v2449 = vpop.f32.mrf.mxu0
      %v2450 = vpop.f32.mrf.mxu0
      %v2451 = vadd.f32 %v2402, %v2450
      %v2452 = vpop.f32.mrf.mxu0
      %2453 = vmatprep.mubr.bf16.mxu0 %v2277
      %2454 = vmatmul.mubr.bf16.gmra.mxu0 %v2276
      %v2455 = vpop.f32.mrf.mxu0
      %v2456 = vadd.f32 %v2407, %v2455
      %v2457 = vpop.f32.mrf.mxu0
      %v2458 = vpop.f32.mrf.mxu0
      %v2459 = vadd.f32 %v2410, %v2458
      %v2460 = vpop.f32.mrf.mxu0
      %2461 = vdwg.mxu0
      %2462 = vmatprep.subr.bf16.mxu0 0
      %2463 = vmatpush1.bf16.msra.mxu0 %v1073
      %2464 = vmatprep.subr.bf16.mxu0 0
      %2465 = vmatpush1.bf16.msra.mxu0 %v1072
      %2466 = vmatprep.subr.bf16.mxu0 0
      %2467 = vmatpush1.bf16.msra.mxu0 %v1071
      %2468 = vmatprep.subr.bf16.mxu0 0
      %2469 = vmatpush1.bf16.msra.mxu0 %v1070
      %2470 = vmatprep.subr.bf16.mxu0 0
      %2471 = vmatpush1.bf16.msra.mxu0 %v1069
      %2472 = vmatprep.subr.bf16.mxu0 0
      %2473 = vmatpush1.bf16.msra.mxu0 %v1068
      %2474 = vmatprep.subr.bf16.mxu0 0
      %2475 = vmatpush1.bf16.msra.mxu0 %v1067
      %2476 = vmatprep.subr.bf16.mxu0 0
      %2477 = vmatpush1.bf16.msra.mxu0 %v1066
      %2478 = vmatprep.subr.bf16.mxu0 0
      %2479 = vmatpush2.bf16.msra.mxu0 %v1081
      %2480 = vmatprep.subr.bf16.mxu0 0
      %2481 = vmatpush2.bf16.msra.mxu0 %v1080
      %2482 = vmatprep.subr.bf16.mxu0 0
      %2483 = vmatpush2.bf16.msra.mxu0 %v1079
      %2484 = vmatprep.subr.bf16.mxu0 0
      %2485 = vmatpush2.bf16.msra.mxu0 %v1078
      %2486 = vmatprep.subr.bf16.mxu0 0
      %2487 = vmatpush2.bf16.msra.mxu0 %v1077
      %2488 = vmatprep.subr.bf16.mxu0 0
      %2489 = vmatpush2.bf16.msra.mxu0 %v1076
      %2490 = vmatprep.subr.bf16.mxu0 0
      %2491 = vmatpush2.bf16.msra.mxu0 %v1075
      %2492 = vmatprep.subr.bf16.mxu0 0
      %2493 = vmatpush2.bf16.msra.mxu0 %v1074
      %2494 = vmatprep.mubr.bf16.mxu0 %v2266
      %2495 = vmatmul.mubr.bf16.gmra.mxu0 %v2265
      %v2496 = vpop.f32.mrf.mxu0
      %v2497 = vadd.f32 %v2448, %v2496
      %v2498 = vpop.f32.mrf.mxu0
      %v2499 = vpop.f32.mrf.mxu0
      %v2500 = vadd.f32 %v2451, %v2499
      %v2501 = vpop.f32.mrf.mxu0
      %2502 = vmatprep.mubr.bf16.mxu0 %v2279
      %2503 = vmatmul.mubr.bf16.gmra.mxu0 %v2278
      %v2504 = vpop.f32.mrf.mxu0
      %v2505 = vadd.f32 %v2456, %v2504
      %v2506 = vpop.f32.mrf.mxu0
      %v2507 = vpop.f32.mrf.mxu0
      %v2508 = vadd.f32 %v2459, %v2507
      %v2509 = vpop.f32.mrf.mxu0
      %2510 = vdwg.mxu0
      %2511 = vmatprep.subr.bf16.mxu0 0
      %2512 = vmatpush1.bf16.msra.mxu0 %v1089
      %2513 = vmatprep.subr.bf16.mxu0 0
      %2514 = vmatpush1.bf16.msra.mxu0 %v1088
      %2515 = vmatprep.subr.bf16.mxu0 0
      %2516 = vmatpush1.bf16.msra.mxu0 %v1087
      %2517 = vmatprep.subr.bf16.mxu0 0
      %2518 = vmatpush1.bf16.msra.mxu0 %v1086
      %2519 = vmatprep.subr.bf16.mxu0 0
      %2520 = vmatpush1.bf16.msra.mxu0 %v1085
      %2521 = vmatprep.subr.bf16.mxu0 0
      %2522 = vmatpush1.bf16.msra.mxu0 %v1084
      %2523 = vmatprep.subr.bf16.mxu0 0
      %2524 = vmatpush1.bf16.msra.mxu0 %v1083
      %2525 = vmatprep.subr.bf16.mxu0 0
      %2526 = vmatpush1.bf16.msra.mxu0 %v1082
      %2527 = vmatprep.subr.bf16.mxu0 0
      %2528 = vmatpush2.bf16.msra.mxu0 %v1097
      %2529 = vmatprep.subr.bf16.mxu0 0
      %2530 = vmatpush2.bf16.msra.mxu0 %v1096
      %2531 = vmatprep.subr.bf16.mxu0 0
      %2532 = vmatpush2.bf16.msra.mxu0 %v1095
      %2533 = vmatprep.subr.bf16.mxu0 0
      %2534 = vmatpush2.bf16.msra.mxu0 %v1094
      %2535 = vmatprep.subr.bf16.mxu0 0
      %2536 = vmatpush2.bf16.msra.mxu0 %v1093
      %2537 = vmatprep.subr.bf16.mxu0 0
      %2538 = vmatpush2.bf16.msra.mxu0 %v1092
      %2539 = vmatprep.subr.bf16.mxu0 0
      %2540 = vmatpush2.bf16.msra.mxu0 %v1091
      %2541 = vmatprep.subr.bf16.mxu0 0
      %2542 = vmatpush2.bf16.msra.mxu0 %v1090
      %2543 = vmatprep.mubr.bf16.mxu0 %v2268
      %2544 = vmatmul.mubr.bf16.gmra.mxu0 %v2267
      %v2545 = vpop.f32.mrf.mxu0
      %v2546 = vadd.f32 %v2497, %v2545
      %v2547 = vpop.f32.mrf.mxu0
      %v2548 = vpop.f32.mrf.mxu0
      %v2549 = vadd.f32 %v2500, %v2548
      %v2550 = vpop.f32.mrf.mxu0
      %2551 = vmatprep.mubr.bf16.mxu0 %v2281
      %2552 = vmatmul.mubr.bf16.gmra.mxu0 %v2280
      %v2553 = vpop.f32.mrf.mxu0
      %v2554 = vadd.f32 %v2505, %v2553
      %v2555 = vpop.f32.mrf.mxu0
      %v2556 = vpop.f32.mrf.mxu0
      %v2557 = vadd.f32 %v2508, %v2556
      %v2558 = vpop.f32.mrf.mxu0
      %2559 = vdwg.mxu0
      %2560 = vmatprep.subr.bf16.mxu0 0
      %2561 = vmatpush1.bf16.msra.mxu0 %v1105
      %2562 = vmatprep.subr.bf16.mxu0 0
      %2563 = vmatpush1.bf16.msra.mxu0 %v1104
      %2564 = vmatprep.subr.bf16.mxu0 0
      %2565 = vmatpush1.bf16.msra.mxu0 %v1103
      %2566 = vmatprep.subr.bf16.mxu0 0
      %2567 = vmatpush1.bf16.msra.mxu0 %v1102
      %2568 = vmatprep.subr.bf16.mxu0 0
      %2569 = vmatpush1.bf16.msra.mxu0 %v1101
      %2570 = vmatprep.subr.bf16.mxu0 0
      %2571 = vmatpush1.bf16.msra.mxu0 %v1100
      %2572 = vmatprep.subr.bf16.mxu0 0
      %2573 = vmatpush1.bf16.msra.mxu0 %v1099
      %2574 = vmatprep.subr.bf16.mxu0 0
      %2575 = vmatpush1.bf16.msra.mxu0 %v1098
      %2576 = vmatprep.subr.bf16.mxu0 0
      %2577 = vmatpush2.bf16.msra.mxu0 %v1113
      %2578 = vmatprep.subr.bf16.mxu0 0
      %2579 = vmatpush2.bf16.msra.mxu0 %v1112
      %2580 = vmatprep.subr.bf16.mxu0 0
      %2581 = vmatpush2.bf16.msra.mxu0 %v1111
      %2582 = vmatprep.subr.bf16.mxu0 0
      %2583 = vmatpush2.bf16.msra.mxu0 %v1110
      %2584 = vmatprep.subr.bf16.mxu0 0
      %2585 = vmatpush2.bf16.msra.mxu0 %v1109
      %2586 = vmatprep.subr.bf16.mxu0 0
      %2587 = vmatpush2.bf16.msra.mxu0 %v1108
      %2588 = vmatprep.subr.bf16.mxu0 0
      %2589 = vmatpush2.bf16.msra.mxu0 %v1107
      %2590 = vmatprep.subr.bf16.mxu0 0
      %2591 = vmatpush2.bf16.msra.mxu0 %v1106
      %2592 = vmatprep.mubr.bf16.mxu0 %v2270
      %2593 = vmatmul.mubr.bf16.gmra.mxu0 %v2269
      %v2594 = vpop.f32.mrf.mxu0
      %v2595 = vadd.f32 %v2546, %v2594
      %v2596 = vpop.f32.mrf.mxu0
      %v2597 = vpop.f32.mrf.mxu0
      %v2598 = vadd.f32 %v2549, %v2597
      %v2599 = vpop.f32.mrf.mxu0
      %2600 = vmatprep.mubr.bf16.mxu0 %v2283
      %2601 = vmatmul.mubr.bf16.gmra.mxu0 %v2282
      %v2602 = vpop.f32.mrf.mxu0
      %v2603 = vadd.f32 %v2554, %v2602
      %v2604 = vpop.f32.mrf.mxu0
      %v2605 = vpop.f32.mrf.mxu0
      %v2606 = vadd.f32 %v2557, %v2605
      %v2607 = vpop.f32.mrf.mxu0
      %2608 = vdwg.mxu0
      %2609 = vmatprep.subr.bf16.mxu0 0
      %2610 = vmatpush1.bf16.msra.mxu0 0
      %2611 = vmatprep.subr.bf16.mxu0 0
      %2612 = vmatpush1.bf16.msra.mxu0 0
      %2613 = vmatprep.subr.bf16.mxu0 0
      %2614 = vmatpush1.bf16.msra.mxu0 0
      %2615 = vmatprep.subr.bf16.mxu0 0
      %2616 = vmatpush1.bf16.msra.mxu0 0
      %2617 = vmatprep.subr.bf16.mxu0 0
      %2618 = vmatpush1.bf16.msra.mxu0 %v1117
      %2619 = vmatprep.subr.bf16.mxu0 0
      %2620 = vmatpush1.bf16.msra.mxu0 %v1116
      %2621 = vmatprep.subr.bf16.mxu0 0
      %2622 = vmatpush1.bf16.msra.mxu0 %v1115
      %2623 = vmatprep.subr.bf16.mxu0 0
      %2624 = vmatpush1.bf16.msra.mxu0 %v1114
      %2625 = vmatprep.subr.bf16.mxu0 0
      %2626 = vmatpush2.bf16.msra.mxu0 0
      %2627 = vmatprep.subr.bf16.mxu0 0
      %2628 = vmatpush2.bf16.msra.mxu0 0
      %2629 = vmatprep.subr.bf16.mxu0 0
      %2630 = vmatpush2.bf16.msra.mxu0 0
      %2631 = vmatprep.subr.bf16.mxu0 0
      %2632 = vmatpush2.bf16.msra.mxu0 0
      %2633 = vmatprep.subr.bf16.mxu0 0
      %2634 = vmatpush2.bf16.msra.mxu0 0
      %2635 = vmatprep.subr.bf16.mxu0 0
      %2636 = vmatpush2.bf16.msra.mxu0 0
      %2637 = vmatprep.subr.bf16.mxu0 0
      %2638 = vmatpush2.bf16.msra.mxu0 0
      %2639 = vmatprep.subr.bf16.mxu0 0
      %2640 = vmatpush2.bf16.msra.mxu0 0
      %2641 = vmatprep.mubr.bf16.mxu0 0
      %2642 = vmatmul.mubr.bf16.gmra.mxu0 %v2310
      %v2643 = vpop.f32.mrf.mxu0
      %v2644 = vadd.f32 %v2595, %v2643
      %v2645 = vpop.f32.mrf.mxu0
      %v2646 = vpop.f32.mrf.mxu0
      %v2647 = vadd.f32 %v2598, %v2646
      %v2648 = vpop.f32.mrf.mxu0
      %2649 = vmatprep.mubr.bf16.mxu0 0
      %2650 = vmatmul.mubr.bf16.gmra.mxu0 %v2313
      %v2651 = vpop.f32.mrf.mxu0
      %v2652 = vadd.f32 %v2603, %v2651
      %v2653 = vpop.f32.mrf.mxu0
      %v2654 = vpop.f32.mrf.mxu0
      %v2655 = vadd.f32 %v2606, %v2654
      %v2656 = vpop.f32.mrf.mxu0
      %2657 = vdwg.mxu0
      %s2658 = scalar_lea.vmem [#allocation2], 64
      %2659 = vst.msk [vmem:[%s2658] sm:$0xff] %vm1218, %v2644
      %2660 = vst.msk [vmem:[%s2658 + $0x8] sm:$0xff] %vm1218, %v2647
      %2661 = vst.msk [vmem:[%s2658 + $0x10] sm:$0xff] %vm1218, %v2652
      %2662 = vst.msk [vmem:[%s2658 + $0x18] sm:$0x1] %vm1571, %v2655
      %v2663 = vsel %vm1218, %v2644, 0.0
      %v2664 = vsel %vm1218, %v2647, 0.0
      %v2665 = vadd.f32 %v2663, %v2664
      %v2666 = vsel %vm1218, %v2652, 0.0
      %v2667 = vadd.f32 %v2665, %v2666
      %v2668 = vsel %vm1571, %v2655, 0.0
      %v2669 = vadd.f32 %v2667, %v2668
      %v2670 = vrot.slane %v2669, 4
      %v2671 = vadd.f32 %v2669, %v2670
      %v2672 = vrot.slane %v2671, 2
      %v2673 = vadd.f32 %v2671, %v2672
      %v2674 = vrot.slane %v2673, 1
      %v2675 = vadd.f32 %v2673, %v2674
      %v2676 = vadd.f32 %v2131, %v2675
      %v2677 = vmul.f32 %v2644, %v2644
      %v2678 = vmul.f32 %v2647, %v2647
      %v2679 = vmul.f32 %v2652, %v2652
      %v2680 = vmul.f32 %v2655, %v2655
      %v2681 = vsel %vm1218, %v2677, 0.0
      %v2682 = vsel %vm1218, %v2678, 0.0
      %v2683 = vadd.f32 %v2681, %v2682
      %v2684 = vsel %vm1218, %v2679, 0.0
      %v2685 = vadd.f32 %v2683, %v2684
      %v2686 = vsel %vm1571, %v2680, 0.0
      %v2687 = vadd.f32 %v2685, %v2686
      %v2688 = vrot.slane %v2687, 4
      %v2689 = vadd.f32 %v2687, %v2688
      %v2690 = vrot.slane %v2689, 2
      %v2691 = vadd.f32 %v2689, %v2690
      %v2692 = vrot.slane %v2691, 1
      %v2693 = vadd.f32 %v2691, %v2692
      %v2694 = vadd.f32 %v2149, %v2693
      %s2695 = scalar_lea.vmem %s246, 624
      %v2696 = vld [vmem:[%s2695] sm:$0xff]
      %v2697 = vld [vmem:[%s2695 + $0x8] sm:$0xff]
      %v2698 = vld [vmem:[%s2695 + $0x10] sm:$0xff]
      %v2699 = vld [vmem:[%s2695 + $0x18] sm:$0xff]
      %v2700 = vld [vmem:[%s2695 + $0x20] sm:$0xff]
      %v2701 = vld [vmem:[%s2695 + $0x28] sm:$0xff]
      %v2702 = vld [vmem:[%s2695 + $0x30] sm:$0xf]
      %v2703 = vld [vmem:[%s2695 + $0x34] sm:$0xff]
      %v2704 = vld [vmem:[%s2695 + $0x3c] sm:$0xff]
      %v2705 = vld [vmem:[%s2695 + $0x44] sm:$0xff]
      %v2706 = vld [vmem:[%s2695 + $0x4c] sm:$0xff]
      %v2707 = vld [vmem:[%s2695 + $0x54] sm:$0xff]
      %v2708 = vld [vmem:[%s2695 + $0x5c] sm:$0xff]
      %v2709 = vld [vmem:[%s2695 + $0x64] sm:$0xf]
      %v2710 = vld [vmem:[%s2695 + $0x68] sm:$0xff]
      %v2711 = vld [vmem:[%s2695 + $0x70] sm:$0xff]
      %v2712 = vld [vmem:[%s2695 + $0x78] sm:$0xff]
      %v2713 = vld [vmem:[%s2695 + $0x80] sm:$0xff]
      %v2714 = vld [vmem:[%s2695 + $0x88] sm:$0xff]
      %v2715 = vld [vmem:[%s2695 + $0x90] sm:$0xff]
      %v2716 = vld [vmem:[%s2695 + $0x98] sm:$0xf]
      %v2717 = vld [vmem:[%s2695 + $0x9c] sm:$0x11]
      %v2718 = vld [vmem:[%s2695 + $0xa4] sm:$0x11]
      %v2719 = vld [vmem:[%s2695 + $0xac] sm:$0x11]
      %v2720 = vld [vmem:[%s2695 + $0xb4] sm:$0x11]
      %v2721 = vld [vmem:[%s2695 + $0xbc] sm:$0x11]
      %v2722 = vld [vmem:[%s2695 + $0xc4] sm:$0x11]
      %v2723 = vld [vmem:[%s2695 + $0xcc] sm:$0x1]
      %v2752 = vunpack.c.l.b16 %v2696
      %v2753 = vunpack.c.h.b16 %v2696
      %v2754 = vunpack.c.l.b16 %v2697
      %v2755 = vunpack.c.h.b16 %v2697
      %v2756 = vunpack.c.l.b16 %v2698
      %v2757 = vunpack.c.h.b16 %v2698
      %v2758 = vunpack.c.l.b16 %v2699
      %v2759 = vunpack.c.h.b16 %v2699
      %v2760 = vunpack.c.l.b16 %v2700
      %v2761 = vunpack.c.h.b16 %v2700
      %v2762 = vunpack.c.l.b16 %v2701
      %v2763 = vunpack.c.h.b16 %v2701
      %v2764 = vunpack.c.l.b16 %v2702
      %v2765 = vunpack.c.l.b16 %v2703
      %v2766 = vunpack.c.h.b16 %v2703
      %v2767 = vunpack.c.l.b16 %v2704
      %v2768 = vunpack.c.h.b16 %v2704
      %v2769 = vunpack.c.l.b16 %v2705
      %v2770 = vunpack.c.h.b16 %v2705
      %v2771 = vunpack.c.l.b16 %v2706
      %v2772 = vunpack.c.h.b16 %v2706
      %v2773 = vunpack.c.l.b16 %v2707
      %v2774 = vunpack.c.h.b16 %v2707
      %v2775 = vunpack.c.l.b16 %v2708
      %v2776 = vunpack.c.h.b16 %v2708
      %v2777 = vunpack.c.l.b16 %v2709
      %v2778 = vunpack.c.l.b16 %v2710
      %v2779 = vunpack.c.h.b16 %v2710
      %v2780 = vunpack.c.l.b16 %v2711
      %v2781 = vunpack.c.h.b16 %v2711
      %v2782 = vunpack.c.l.b16 %v2712
      %v2783 = vunpack.c.h.b16 %v2712
      %v2784 = vunpack.c.l.b16 %v2713
      %v2785 = vunpack.c.h.b16 %v2713
      %v2786 = vunpack.c.l.b16 %v2714
      %v2787 = vunpack.c.h.b16 %v2714
      %v2788 = vunpack.c.l.b16 %v2715
      %v2789 = vunpack.c.h.b16 %v2715
      %v2790 = vunpack.c.l.b16 %v2716
      %v2791 = vunpack.c.l.b16 %v2717
      %v2792 = vunpack.c.h.b16 %v2717
      %v2793 = vunpack.c.l.b16 %v2718
      %v2794 = vunpack.c.h.b16 %v2718
      %v2795 = vunpack.c.l.b16 %v2719
      %v2796 = vunpack.c.h.b16 %v2719
      %v2797 = vunpack.c.l.b16 %v2720
      %v2798 = vunpack.c.h.b16 %v2720
      %v2799 = vunpack.c.l.b16 %v2721
      %v2800 = vunpack.c.h.b16 %v2721
      %v2801 = vunpack.c.l.b16 %v2722
      %v2802 = vunpack.c.h.b16 %v2722
      %v2803 = vunpack.c.l.b16 %v2723
      %v2804 = vpack.c.b16 %v2765, %v2752
      %v2805 = vpack.c.b16 %v2766, %v2753
      %v2806 = vpack.c.b16 %v2767, %v2754
      %v2807 = vpack.c.b16 %v2768, %v2755
      %v2808 = vpack.c.b16 %v2769, %v2756
      %v2809 = vpack.c.b16 %v2770, %v2757
      %v2810 = vpack.c.b16 %v2771, %v2758
      %v2811 = vpack.c.b16 %v2772, %v2759
      %v2812 = vpack.c.b16 %v2773, %v2760
      %v2813 = vpack.c.b16 %v2774, %v2761
      %v2814 = vpack.c.b16 %v2775, %v2762
      %v2815 = vpack.c.b16 %v2776, %v2763
      %v2816 = vpack.c.b16 %v2777, %v2764
      %v2817 = vpack.c.b16 %v2791, %v2778
      %v2818 = vpack.c.b16 %v2792, %v2779
      %v2819 = vpack.c.b16 %v2793, %v2780
      %v2820 = vpack.c.b16 %v2794, %v2781
      %v2821 = vpack.c.b16 %v2795, %v2782
      %v2822 = vpack.c.b16 %v2796, %v2783
      %v2823 = vpack.c.b16 %v2797, %v2784
      %v2824 = vpack.c.b16 %v2798, %v2785
      %v2825 = vpack.c.b16 %v2799, %v2786
      %v2826 = vpack.c.b16 %v2800, %v2787
      %v2827 = vpack.c.b16 %v2801, %v2788
      %v2828 = vpack.c.b16 %v2802, %v2789
      %v2829 = vpack.c.b16 %v2803, %v2790
      %v2855 = vsel %vm1218, %v2816, 0
      %v2858 = vsel %vm1218, %v2829, 0
      %2860 = vmatprep.subr.bf16.mxu0 0
      %2861 = vmatpush1.bf16.msra.mxu0 %v1025
      %2862 = vmatprep.subr.bf16.mxu0 0
      %2863 = vmatpush1.bf16.msra.mxu0 %v1024
      %2864 = vmatprep.subr.bf16.mxu0 0
      %2865 = vmatpush1.bf16.msra.mxu0 %v1023
      %2866 = vmatprep.subr.bf16.mxu0 0
      %2867 = vmatpush1.bf16.msra.mxu0 %v1022
      %2868 = vmatprep.subr.bf16.mxu0 0
      %2869 = vmatpush1.bf16.msra.mxu0 %v1021
      %2870 = vmatprep.subr.bf16.mxu0 0
      %2871 = vmatpush1.bf16.msra.mxu0 %v1020
      %2872 = vmatprep.subr.bf16.mxu0 0
      %2873 = vmatpush1.bf16.msra.mxu0 %v1019
      %2874 = vmatprep.subr.bf16.mxu0 0
      %2875 = vmatpush1.bf16.msra.mxu0 %v1018
      %2876 = vmatprep.subr.bf16.mxu0 0
      %2877 = vmatpush2.bf16.msra.mxu0 %v1033
      %2878 = vmatprep.subr.bf16.mxu0 0
      %2879 = vmatpush2.bf16.msra.mxu0 %v1032
      %2880 = vmatprep.subr.bf16.mxu0 0
      %2881 = vmatpush2.bf16.msra.mxu0 %v1031
      %2882 = vmatprep.subr.bf16.mxu0 0
      %2883 = vmatpush2.bf16.msra.mxu0 %v1030
      %2884 = vmatprep.subr.bf16.mxu0 0
      %2885 = vmatpush2.bf16.msra.mxu0 %v1029
      %2886 = vmatprep.subr.bf16.mxu0 0
      %2887 = vmatpush2.bf16.msra.mxu0 %v1028
      %2888 = vmatprep.subr.bf16.mxu0 0
      %2889 = vmatpush2.bf16.msra.mxu0 %v1027
      %2890 = vmatprep.subr.bf16.mxu0 0
      %2891 = vmatpush2.bf16.msra.mxu0 %v1026
      %2892 = vmatprep.mubr.bf16.mxu0 %v2805
      %2893 = vmatmul.mubr.bf16.gmra.mxu0 %v2804
      %v2894 = vpop.f32.mrf.mxu0
      %v2895 = vadd.f32 %v486, %v2894
      %v2896 = vpop.f32.mrf.mxu0
      %v2897 = vpop.f32.mrf.mxu0
      %v2898 = vadd.f32 %v486, %v2897
      %v2899 = vpop.f32.mrf.mxu0
      %2900 = vmatprep.mubr.bf16.mxu0 %v2818
      %2901 = vmatmul.mubr.bf16.gmra.mxu0 %v2817
      %v2902 = vpop.f32.mrf.mxu0
      %v2903 = vadd.f32 %v486, %v2902
      %v2904 = vpop.f32.mrf.mxu0
      %v2905 = vpop.f32.mrf.mxu0
      %v2906 = vadd.f32 %v486, %v2905
      %v2907 = vpop.f32.mrf.mxu0
      %2908 = vdwg.mxu0
      %2909 = vmatprep.subr.bf16.mxu0 0
      %2910 = vmatpush1.bf16.msra.mxu0 %v1041
      %2911 = vmatprep.subr.bf16.mxu0 0
      %2912 = vmatpush1.bf16.msra.mxu0 %v1040
      %2913 = vmatprep.subr.bf16.mxu0 0
      %2914 = vmatpush1.bf16.msra.mxu0 %v1039
      %2915 = vmatprep.subr.bf16.mxu0 0
      %2916 = vmatpush1.bf16.msra.mxu0 %v1038
      %2917 = vmatprep.subr.bf16.mxu0 0
      %2918 = vmatpush1.bf16.msra.mxu0 %v1037
      %2919 = vmatprep.subr.bf16.mxu0 0
      %2920 = vmatpush1.bf16.msra.mxu0 %v1036
      %2921 = vmatprep.subr.bf16.mxu0 0
      %2922 = vmatpush1.bf16.msra.mxu0 %v1035
      %2923 = vmatprep.subr.bf16.mxu0 0
      %2924 = vmatpush1.bf16.msra.mxu0 %v1034
      %2925 = vmatprep.subr.bf16.mxu0 0
      %2926 = vmatpush2.bf16.msra.mxu0 %v1049
      %2927 = vmatprep.subr.bf16.mxu0 0
      %2928 = vmatpush2.bf16.msra.mxu0 %v1048
      %2929 = vmatprep.subr.bf16.mxu0 0
      %2930 = vmatpush2.bf16.msra.mxu0 %v1047
      %2931 = vmatprep.subr.bf16.mxu0 0
      %2932 = vmatpush2.bf16.msra.mxu0 %v1046
      %2933 = vmatprep.subr.bf16.mxu0 0
      %2934 = vmatpush2.bf16.msra.mxu0 %v1045
      %2935 = vmatprep.subr.bf16.mxu0 0
      %2936 = vmatpush2.bf16.msra.mxu0 %v1044
      %2937 = vmatprep.subr.bf16.mxu0 0
      %2938 = vmatpush2.bf16.msra.mxu0 %v1043
      %2939 = vmatprep.subr.bf16.mxu0 0
      %2940 = vmatpush2.bf16.msra.mxu0 %v1042
      %2941 = vmatprep.mubr.bf16.mxu0 %v2807
      %2942 = vmatmul.mubr.bf16.gmra.mxu0 %v2806
      %v2943 = vpop.f32.mrf.mxu0
      %v2944 = vadd.f32 %v2895, %v2943
      %v2945 = vpop.f32.mrf.mxu0
      %v2946 = vpop.f32.mrf.mxu0
      %v2947 = vadd.f32 %v2898, %v2946
      %v2948 = vpop.f32.mrf.mxu0
      %2949 = vmatprep.mubr.bf16.mxu0 %v2820
      %2950 = vmatmul.mubr.bf16.gmra.mxu0 %v2819
      %v2951 = vpop.f32.mrf.mxu0
      %v2952 = vadd.f32 %v2903, %v2951
      %v2953 = vpop.f32.mrf.mxu0
      %v2954 = vpop.f32.mrf.mxu0
      %v2955 = vadd.f32 %v2906, %v2954
      %v2956 = vpop.f32.mrf.mxu0
      %2957 = vdwg.mxu0
      %2958 = vmatprep.subr.bf16.mxu0 0
      %2959 = vmatpush1.bf16.msra.mxu0 %v1057
      %2960 = vmatprep.subr.bf16.mxu0 0
      %2961 = vmatpush1.bf16.msra.mxu0 %v1056
      %2962 = vmatprep.subr.bf16.mxu0 0
      %2963 = vmatpush1.bf16.msra.mxu0 %v1055
      %2964 = vmatprep.subr.bf16.mxu0 0
      %2965 = vmatpush1.bf16.msra.mxu0 %v1054
      %2966 = vmatprep.subr.bf16.mxu0 0
      %2967 = vmatpush1.bf16.msra.mxu0 %v1053
      %2968 = vmatprep.subr.bf16.mxu0 0
      %2969 = vmatpush1.bf16.msra.mxu0 %v1052
      %2970 = vmatprep.subr.bf16.mxu0 0
      %2971 = vmatpush1.bf16.msra.mxu0 %v1051
      %2972 = vmatprep.subr.bf16.mxu0 0
      %2973 = vmatpush1.bf16.msra.mxu0 %v1050
      %2974 = vmatprep.subr.bf16.mxu0 0
      %2975 = vmatpush2.bf16.msra.mxu0 %v1065
      %2976 = vmatprep.subr.bf16.mxu0 0
      %2977 = vmatpush2.bf16.msra.mxu0 %v1064
      %2978 = vmatprep.subr.bf16.mxu0 0
      %2979 = vmatpush2.bf16.msra.mxu0 %v1063
      %2980 = vmatprep.subr.bf16.mxu0 0
      %2981 = vmatpush2.bf16.msra.mxu0 %v1062
      %2982 = vmatprep.subr.bf16.mxu0 0
      %2983 = vmatpush2.bf16.msra.mxu0 %v1061
      %2984 = vmatprep.subr.bf16.mxu0 0
      %2985 = vmatpush2.bf16.msra.mxu0 %v1060
      %2986 = vmatprep.subr.bf16.mxu0 0
      %2987 = vmatpush2.bf16.msra.mxu0 %v1059
      %2988 = vmatprep.subr.bf16.mxu0 0
      %2989 = vmatpush2.bf16.msra.mxu0 %v1058
      %2990 = vmatprep.mubr.bf16.mxu0 %v2809
      %2991 = vmatmul.mubr.bf16.gmra.mxu0 %v2808
      %v2992 = vpop.f32.mrf.mxu0
      %v2993 = vadd.f32 %v2944, %v2992
      %v2994 = vpop.f32.mrf.mxu0
      %v2995 = vpop.f32.mrf.mxu0
      %v2996 = vadd.f32 %v2947, %v2995
      %v2997 = vpop.f32.mrf.mxu0
      %2998 = vmatprep.mubr.bf16.mxu0 %v2822
      %2999 = vmatmul.mubr.bf16.gmra.mxu0 %v2821
      %v3000 = vpop.f32.mrf.mxu0
      %v3001 = vadd.f32 %v2952, %v3000
      %v3002 = vpop.f32.mrf.mxu0
      %v3003 = vpop.f32.mrf.mxu0
      %v3004 = vadd.f32 %v2955, %v3003
      %v3005 = vpop.f32.mrf.mxu0
      %3006 = vdwg.mxu0
      %3007 = vmatprep.subr.bf16.mxu0 0
      %3008 = vmatpush1.bf16.msra.mxu0 %v1073
      %3009 = vmatprep.subr.bf16.mxu0 0
      %3010 = vmatpush1.bf16.msra.mxu0 %v1072
      %3011 = vmatprep.subr.bf16.mxu0 0
      %3012 = vmatpush1.bf16.msra.mxu0 %v1071
      %3013 = vmatprep.subr.bf16.mxu0 0
      %3014 = vmatpush1.bf16.msra.mxu0 %v1070
      %3015 = vmatprep.subr.bf16.mxu0 0
      %3016 = vmatpush1.bf16.msra.mxu0 %v1069
      %3017 = vmatprep.subr.bf16.mxu0 0
      %3018 = vmatpush1.bf16.msra.mxu0 %v1068
      %3019 = vmatprep.subr.bf16.mxu0 0
      %3020 = vmatpush1.bf16.msra.mxu0 %v1067
      %3021 = vmatprep.subr.bf16.mxu0 0
      %3022 = vmatpush1.bf16.msra.mxu0 %v1066
      %3023 = vmatprep.subr.bf16.mxu0 0
      %3024 = vmatpush2.bf16.msra.mxu0 %v1081
      %3025 = vmatprep.subr.bf16.mxu0 0
      %3026 = vmatpush2.bf16.msra.mxu0 %v1080
      %3027 = vmatprep.subr.bf16.mxu0 0
      %3028 = vmatpush2.bf16.msra.mxu0 %v1079
      %3029 = vmatprep.subr.bf16.mxu0 0
      %3030 = vmatpush2.bf16.msra.mxu0 %v1078
      %3031 = vmatprep.subr.bf16.mxu0 0
      %3032 = vmatpush2.bf16.msra.mxu0 %v1077
      %3033 = vmatprep.subr.bf16.mxu0 0
      %3034 = vmatpush2.bf16.msra.mxu0 %v1076
      %3035 = vmatprep.subr.bf16.mxu0 0
      %3036 = vmatpush2.bf16.msra.mxu0 %v1075
      %3037 = vmatprep.subr.bf16.mxu0 0
      %3038 = vmatpush2.bf16.msra.mxu0 %v1074
      %3039 = vmatprep.mubr.bf16.mxu0 %v2811
      %3040 = vmatmul.mubr.bf16.gmra.mxu0 %v2810
      %v3041 = vpop.f32.mrf.mxu0
      %v3042 = vadd.f32 %v2993, %v3041
      %v3043 = vpop.f32.mrf.mxu0
      %v3044 = vpop.f32.mrf.mxu0
      %v3045 = vadd.f32 %v2996, %v3044
      %v3046 = vpop.f32.mrf.mxu0
      %3047 = vmatprep.mubr.bf16.mxu0 %v2824
      %3048 = vmatmul.mubr.bf16.gmra.mxu0 %v2823
      %v3049 = vpop.f32.mrf.mxu0
      %v3050 = vadd.f32 %v3001, %v3049
      %v3051 = vpop.f32.mrf.mxu0
      %v3052 = vpop.f32.mrf.mxu0
      %v3053 = vadd.f32 %v3004, %v3052
      %v3054 = vpop.f32.mrf.mxu0
      %3055 = vdwg.mxu0
      %3056 = vmatprep.subr.bf16.mxu0 0
      %3057 = vmatpush1.bf16.msra.mxu0 %v1089
      %3058 = vmatprep.subr.bf16.mxu0 0
      %3059 = vmatpush1.bf16.msra.mxu0 %v1088
      %3060 = vmatprep.subr.bf16.mxu0 0
      %3061 = vmatpush1.bf16.msra.mxu0 %v1087
      %3062 = vmatprep.subr.bf16.mxu0 0
      %3063 = vmatpush1.bf16.msra.mxu0 %v1086
      %3064 = vmatprep.subr.bf16.mxu0 0
      %3065 = vmatpush1.bf16.msra.mxu0 %v1085
      %3066 = vmatprep.subr.bf16.mxu0 0
      %3067 = vmatpush1.bf16.msra.mxu0 %v1084
      %3068 = vmatprep.subr.bf16.mxu0 0
      %3069 = vmatpush1.bf16.msra.mxu0 %v1083
      %3070 = vmatprep.subr.bf16.mxu0 0
      %3071 = vmatpush1.bf16.msra.mxu0 %v1082
      %3072 = vmatprep.subr.bf16.mxu0 0
      %3073 = vmatpush2.bf16.msra.mxu0 %v1097
      %3074 = vmatprep.subr.bf16.mxu0 0
      %3075 = vmatpush2.bf16.msra.mxu0 %v1096
      %3076 = vmatprep.subr.bf16.mxu0 0
      %3077 = vmatpush2.bf16.msra.mxu0 %v1095
      %3078 = vmatprep.subr.bf16.mxu0 0
      %3079 = vmatpush2.bf16.msra.mxu0 %v1094
      %3080 = vmatprep.subr.bf16.mxu0 0
      %3081 = vmatpush2.bf16.msra.mxu0 %v1093
      %3082 = vmatprep.subr.bf16.mxu0 0
      %3083 = vmatpush2.bf16.msra.mxu0 %v1092
      %3084 = vmatprep.subr.bf16.mxu0 0
      %3085 = vmatpush2.bf16.msra.mxu0 %v1091
      %3086 = vmatprep.subr.bf16.mxu0 0
      %3087 = vmatpush2.bf16.msra.mxu0 %v1090
      %3088 = vmatprep.mubr.bf16.mxu0 %v2813
      %3089 = vmatmul.mubr.bf16.gmra.mxu0 %v2812
      %v3090 = vpop.f32.mrf.mxu0
      %v3091 = vadd.f32 %v3042, %v3090
      %v3092 = vpop.f32.mrf.mxu0
      %v3093 = vpop.f32.mrf.mxu0
      %v3094 = vadd.f32 %v3045, %v3093
      %v3095 = vpop.f32.mrf.mxu0
      %3096 = vmatprep.mubr.bf16.mxu0 %v2826
      %3097 = vmatmul.mubr.bf16.gmra.mxu0 %v2825
      %v3098 = vpop.f32.mrf.mxu0
      %v3099 = vadd.f32 %v3050, %v3098
      %v3100 = vpop.f32.mrf.mxu0
      %v3101 = vpop.f32.mrf.mxu0
      %v3102 = vadd.f32 %v3053, %v3101
      %v3103 = vpop.f32.mrf.mxu0
      %3104 = vdwg.mxu0
      %3105 = vmatprep.subr.bf16.mxu0 0
      %3106 = vmatpush1.bf16.msra.mxu0 %v1105
      %3107 = vmatprep.subr.bf16.mxu0 0
      %3108 = vmatpush1.bf16.msra.mxu0 %v1104
      %3109 = vmatprep.subr.bf16.mxu0 0
      %3110 = vmatpush1.bf16.msra.mxu0 %v1103
      %3111 = vmatprep.subr.bf16.mxu0 0
      %3112 = vmatpush1.bf16.msra.mxu0 %v1102
      %3113 = vmatprep.subr.bf16.mxu0 0
      %3114 = vmatpush1.bf16.msra.mxu0 %v1101
      %3115 = vmatprep.subr.bf16.mxu0 0
      %3116 = vmatpush1.bf16.msra.mxu0 %v1100
      %3117 = vmatprep.subr.bf16.mxu0 0
      %3118 = vmatpush1.bf16.msra.mxu0 %v1099
      %3119 = vmatprep.subr.bf16.mxu0 0
      %3120 = vmatpush1.bf16.msra.mxu0 %v1098
      %3121 = vmatprep.subr.bf16.mxu0 0
      %3122 = vmatpush2.bf16.msra.mxu0 %v1113
      %3123 = vmatprep.subr.bf16.mxu0 0
      %3124 = vmatpush2.bf16.msra.mxu0 %v1112
      %3125 = vmatprep.subr.bf16.mxu0 0
      %3126 = vmatpush2.bf16.msra.mxu0 %v1111
      %3127 = vmatprep.subr.bf16.mxu0 0
      %3128 = vmatpush2.bf16.msra.mxu0 %v1110
      %3129 = vmatprep.subr.bf16.mxu0 0
      %3130 = vmatpush2.bf16.msra.mxu0 %v1109
      %3131 = vmatprep.subr.bf16.mxu0 0
      %3132 = vmatpush2.bf16.msra.mxu0 %v1108
      %3133 = vmatprep.subr.bf16.mxu0 0
      %3134 = vmatpush2.bf16.msra.mxu0 %v1107
      %3135 = vmatprep.subr.bf16.mxu0 0
      %3136 = vmatpush2.bf16.msra.mxu0 %v1106
      %3137 = vmatprep.mubr.bf16.mxu0 %v2815
      %3138 = vmatmul.mubr.bf16.gmra.mxu0 %v2814
      %v3139 = vpop.f32.mrf.mxu0
      %v3140 = vadd.f32 %v3091, %v3139
      %v3141 = vpop.f32.mrf.mxu0
      %v3142 = vpop.f32.mrf.mxu0
      %v3143 = vadd.f32 %v3094, %v3142
      %v3144 = vpop.f32.mrf.mxu0
      %3145 = vmatprep.mubr.bf16.mxu0 %v2828
      %3146 = vmatmul.mubr.bf16.gmra.mxu0 %v2827
      %v3147 = vpop.f32.mrf.mxu0
      %v3148 = vadd.f32 %v3099, %v3147
      %v3149 = vpop.f32.mrf.mxu0
      %v3150 = vpop.f32.mrf.mxu0
      %v3151 = vadd.f32 %v3102, %v3150
      %v3152 = vpop.f32.mrf.mxu0
      %3153 = vdwg.mxu0
      %3154 = vmatprep.subr.bf16.mxu0 0
      %3155 = vmatpush1.bf16.msra.mxu0 0
      %3156 = vmatprep.subr.bf16.mxu0 0
      %3157 = vmatpush1.bf16.msra.mxu0 0
      %3158 = vmatprep.subr.bf16.mxu0 0
      %3159 = vmatpush1.bf16.msra.mxu0 0
      %3160 = vmatprep.subr.bf16.mxu0 0
      %3161 = vmatpush1.bf16.msra.mxu0 0
      %3162 = vmatprep.subr.bf16.mxu0 0
      %3163 = vmatpush1.bf16.msra.mxu0 %v1117
      %3164 = vmatprep.subr.bf16.mxu0 0
      %3165 = vmatpush1.bf16.msra.mxu0 %v1116
      %3166 = vmatprep.subr.bf16.mxu0 0
      %3167 = vmatpush1.bf16.msra.mxu0 %v1115
      %3168 = vmatprep.subr.bf16.mxu0 0
      %3169 = vmatpush1.bf16.msra.mxu0 %v1114
      %3170 = vmatprep.subr.bf16.mxu0 0
      %3171 = vmatpush2.bf16.msra.mxu0 0
      %3172 = vmatprep.subr.bf16.mxu0 0
      %3173 = vmatpush2.bf16.msra.mxu0 0
      %3174 = vmatprep.subr.bf16.mxu0 0
      %3175 = vmatpush2.bf16.msra.mxu0 0
      %3176 = vmatprep.subr.bf16.mxu0 0
      %3177 = vmatpush2.bf16.msra.mxu0 0
      %3178 = vmatprep.subr.bf16.mxu0 0
      %3179 = vmatpush2.bf16.msra.mxu0 0
      %3180 = vmatprep.subr.bf16.mxu0 0
      %3181 = vmatpush2.bf16.msra.mxu0 0
      %3182 = vmatprep.subr.bf16.mxu0 0
      %3183 = vmatpush2.bf16.msra.mxu0 0
      %3184 = vmatprep.subr.bf16.mxu0 0
      %3185 = vmatpush2.bf16.msra.mxu0 0
      %3186 = vmatprep.mubr.bf16.mxu0 0
      %3187 = vmatmul.mubr.bf16.gmra.mxu0 %v2855
      %v3188 = vpop.f32.mrf.mxu0
      %v3189 = vadd.f32 %v3140, %v3188
      %v3190 = vpop.f32.mrf.mxu0
      %v3191 = vpop.f32.mrf.mxu0
      %v3192 = vadd.f32 %v3143, %v3191
      %v3193 = vpop.f32.mrf.mxu0
      %3194 = vmatprep.mubr.bf16.mxu0 0
      %3195 = vmatmul.mubr.bf16.gmra.mxu0 %v2858
      %v3196 = vpop.f32.mrf.mxu0
      %v3197 = vadd.f32 %v3148, %v3196
      %v3198 = vpop.f32.mrf.mxu0
      %v3199 = vpop.f32.mrf.mxu0
      %v3200 = vadd.f32 %v3151, %v3199
      %v3201 = vpop.f32.mrf.mxu0
      %3202 = vdwg.mxu0
      %s3203 = scalar_lea.vmem [#allocation2], 96
      %3204 = vst.msk [vmem:[%s3203] sm:$0xff] %vm1218, %v3189
      %3205 = vst.msk [vmem:[%s3203 + $0x8] sm:$0xff] %vm1218, %v3192
      %3206 = vst.msk [vmem:[%s3203 + $0x10] sm:$0xff] %vm1218, %v3197
      %3207 = vst.msk [vmem:[%s3203 + $0x18] sm:$0x1] %vm1571, %v3200
      %v3208 = vsel %vm1218, %v3189, 0.0
      %v3209 = vsel %vm1218, %v3192, 0.0
      %v3210 = vadd.f32 %v3208, %v3209
      %v3211 = vsel %vm1218, %v3197, 0.0
      %v3212 = vadd.f32 %v3210, %v3211
      %v3213 = vsel %vm1571, %v3200, 0.0
      %v3214 = vadd.f32 %v3212, %v3213
      %v3215 = vrot.slane %v3214, 4
      %v3216 = vadd.f32 %v3214, %v3215
      %v3217 = vrot.slane %v3216, 2
      %v3218 = vadd.f32 %v3216, %v3217
      %v3219 = vrot.slane %v3218, 1
      %v3220 = vadd.f32 %v3218, %v3219
      %v3221 = vadd.f32 %v2676, %v3220
      %v3222 = vmul.f32 %v3189, %v3189
      %v3223 = vmul.f32 %v3192, %v3192
      %v3224 = vmul.f32 %v3197, %v3197
      %v3225 = vmul.f32 %v3200, %v3200
      %v3226 = vsel %vm1218, %v3222, 0.0
      %v3227 = vsel %vm1218, %v3223, 0.0
      %v3228 = vadd.f32 %v3226, %v3227
      %v3229 = vsel %vm1218, %v3224, 0.0
      %v3230 = vadd.f32 %v3228, %v3229
      %v3231 = vsel %vm1571, %v3225, 0.0
      %v3232 = vadd.f32 %v3230, %v3231
      %v3233 = vrot.slane %v3232, 4
      %v3234 = vadd.f32 %v3232, %v3233
      %v3235 = vrot.slane %v3234, 2
      %v3236 = vadd.f32 %v3234, %v3235
      %v3237 = vrot.slane %v3236, 1
      %v3238 = vadd.f32 %v3236, %v3237
      %v3239 = vadd.f32 %v2694, %v3238
      %v3240 = vld [vmem:[%s5] sm:$0xff]
      %v3241 = vld [vmem:[%s5 + $0x8] sm:$0xff]
      %v3242 = vld [vmem:[%s5 + $0x10] sm:$0xff]
      %v3243 = vld [vmem:[%s5 + $0x18] sm:$0xff]
      %v3244 = vld [vmem:[%s5 + $0x20] sm:$0xff]
      %v3245 = vld [vmem:[%s5 + $0x28] sm:$0xff]
      %v3246 = vld [vmem:[%s5 + $0x30] sm:$0xff]
      %v3247 = vld [vmem:[%s5 + $0x38] sm:$0xff]
      %v3249 = vsel %vm1218, %v3221, 0
      %3251 = vmatprep.subr.mxu0 0.0
      %3252 = vmatpush1.msra.mxu0 0.0
      %3253 = vmatprep.subr.mxu0 0.0
      %3254 = vmatpush1.msra.mxu0 0.0
      %3255 = vmatprep.subr.mxu0 0.0
      %3256 = vmatpush1.msra.mxu0 0.0
      %3257 = vmatprep.subr.mxu0 0.0
      %3258 = vmatpush1.msra.mxu0 0.0
      %3259 = vmatprep.subr.mxu0 0.0
      %3260 = vmatpush1.msra.mxu0 0.0
      %3261 = vmatprep.subr.mxu0 0.0
      %3262 = vmatpush1.msra.mxu0 0.0
      %3263 = vmatprep.subr.mxu0 0.0
      %3264 = vmatpush1.msra.mxu0 0.0
      %3265 = vmatprep.subr.mxu0 0.0
      %3266 = vmatpush1.msra.mxu0 0.0
      %3267 = vmatprep.subr.mxu0 0.0
      %3268 = vmatpush1.msra.mxu0 %v3247
      %3269 = vmatprep.subr.mxu0 0.0
      %3270 = vmatpush1.msra.mxu0 %v3246
      %3271 = vmatprep.subr.mxu0 0.0
      %3272 = vmatpush1.msra.mxu0 %v3245
      %3273 = vmatprep.subr.mxu0 0.0
      %3274 = vmatpush1.msra.mxu0 %v3244
      %3275 = vmatprep.subr.mxu0 0.0
      %3276 = vmatpush1.msra.mxu0 %v3243
      %3277 = vmatprep.subr.mxu0 0.0
      %3278 = vmatpush1.msra.mxu0 %v3242
      %3279 = vmatprep.subr.mxu0 0.0
      %3280 = vmatpush1.msra.mxu0 %v3241
      %3281 = vmatprep.subr.mxu0 0.0
      %3282 = vmatpush1.msra.mxu0 %v3240
      %3283 = vmatprep.subr.mxu0 0.0
      %3284 = vmatpush2.msra.mxu0 0.0
      %3285 = vmatprep.subr.mxu0 0.0
      %3286 = vmatpush2.msra.mxu0 0.0
      %3287 = vmatprep.subr.mxu0 0.0
      %3288 = vmatpush2.msra.mxu0 0.0
      %3289 = vmatprep.subr.mxu0 0.0
      %3290 = vmatpush2.msra.mxu0 0.0
      %3291 = vmatprep.subr.mxu0 0.0
      %3292 = vmatpush2.msra.mxu0 0.0
      %3293 = vmatprep.subr.mxu0 0.0
      %3294 = vmatpush2.msra.mxu0 0.0
      %3295 = vmatprep.subr.mxu0 0.0
      %3296 = vmatpush2.msra.mxu0 0.0
      %3297 = vmatprep.subr.mxu0 0.0
      %3298 = vmatpush2.msra.mxu0 0.0
      %3299 = vmatprep.subr.mxu0 0.0
      %3300 = vmatpush2.msra.mxu0 0.0
      %3301 = vmatprep.subr.mxu0 0.0
      %3302 = vmatpush2.msra.mxu0 0.0
      %3303 = vmatprep.subr.mxu0 0.0
      %3304 = vmatpush2.msra.mxu0 0.0
      %3305 = vmatprep.subr.mxu0 0.0
      %3306 = vmatpush2.msra.mxu0 0.0
      %3307 = vmatprep.subr.mxu0 0.0
      %3308 = vmatpush2.msra.mxu0 0.0
      %3309 = vmatprep.subr.mxu0 0.0
      %3310 = vmatpush2.msra.mxu0 0.0
      %3311 = vmatprep.subr.mxu0 0.0
      %3312 = vmatpush2.msra.mxu0 0.0
      %3313 = vmatprep.subr.mxu0 0.0
      %3314 = vmatpush2.msra.mxu0 0.0
      %3315 = vmatprep.mubr.f32.mxu0 0.0
      %3316 = vmatmul.mubr.f32.gmra.mxu0 %v3249
      %v3317 = vpop.f32.mrf.mxu0
      %v3318 = vadd.f32 0.0, %v3317
      %v3319 = vpop.f32.mrf.mxu0
      %3320 = vdwg.mxu0
      %v3321 = vmul.f32 %v3318, 0.0003125
      %v3323 = vsel %vm1218, %v3239, 0
      %3325 = vmatprep.subr.mxu0 0.0
      %3326 = vmatpush1.msra.mxu0 0.0
      %3327 = vmatprep.subr.mxu0 0.0
      %3328 = vmatpush1.msra.mxu0 0.0
      %3329 = vmatprep.subr.mxu0 0.0
      %3330 = vmatpush1.msra.mxu0 0.0
      %3331 = vmatprep.subr.mxu0 0.0
      %3332 = vmatpush1.msra.mxu0 0.0
      %3333 = vmatprep.subr.mxu0 0.0
      %3334 = vmatpush1.msra.mxu0 0.0
      %3335 = vmatprep.subr.mxu0 0.0
      %3336 = vmatpush1.msra.mxu0 0.0
      %3337 = vmatprep.subr.mxu0 0.0
      %3338 = vmatpush1.msra.mxu0 0.0
      %3339 = vmatprep.subr.mxu0 0.0
      %3340 = vmatpush1.msra.mxu0 0.0
      %3341 = vmatprep.subr.mxu0 0.0
      %3342 = vmatpush1.msra.mxu0 %v3247
      %3343 = vmatprep.subr.mxu0 0.0
      %3344 = vmatpush1.msra.mxu0 %v3246
      %3345 = vmatprep.subr.mxu0 0.0
      %3346 = vmatpush1.msra.mxu0 %v3245
      %3347 = vmatprep.subr.mxu0 0.0
      %3348 = vmatpush1.msra.mxu0 %v3244
      %3349 = vmatprep.subr.mxu0 0.0
      %3350 = vmatpush1.msra.mxu0 %v3243
      %3351 = vmatprep.subr.mxu0 0.0
      %3352 = vmatpush1.msra.mxu0 %v3242
      %3353 = vmatprep.subr.mxu0 0.0
      %3354 = vmatpush1.msra.mxu0 %v3241
      %3355 = vmatprep.subr.mxu0 0.0
      %3356 = vmatpush1.msra.mxu0 %v3240
      %3357 = vmatprep.subr.mxu0 0.0
      %3358 = vmatpush2.msra.mxu0 0.0
      %3359 = vmatprep.subr.mxu0 0.0
      %3360 = vmatpush2.msra.mxu0 0.0
      %3361 = vmatprep.subr.mxu0 0.0
      %3362 = vmatpush2.msra.mxu0 0.0
      %3363 = vmatprep.subr.mxu0 0.0
      %3364 = vmatpush2.msra.mxu0 0.0
      %3365 = vmatprep.subr.mxu0 0.0
      %3366 = vmatpush2.msra.mxu0 0.0
      %3367 = vmatprep.subr.mxu0 0.0
      %3368 = vmatpush2.msra.mxu0 0.0
      %3369 = vmatprep.subr.mxu0 0.0
      %3370 = vmatpush2.msra.mxu0 0.0
      %3371 = vmatprep.subr.mxu0 0.0
      %3372 = vmatpush2.msra.mxu0 0.0
      %3373 = vmatprep.subr.mxu0 0.0
      %3374 = vmatpush2.msra.mxu0 0.0
      %3375 = vmatprep.subr.mxu0 0.0
      %3376 = vmatpush2.msra.mxu0 0.0
      %3377 = vmatprep.subr.mxu0 0.0
      %3378 = vmatpush2.msra.mxu0 0.0
      %3379 = vmatprep.subr.mxu0 0.0
      %3380 = vmatpush2.msra.mxu0 0.0
      %3381 = vmatprep.subr.mxu0 0.0
      %3382 = vmatpush2.msra.mxu0 0.0
      %3383 = vmatprep.subr.mxu0 0.0
      %3384 = vmatpush2.msra.mxu0 0.0
      %3385 = vmatprep.subr.mxu0 0.0
      %3386 = vmatpush2.msra.mxu0 0.0
      %3387 = vmatprep.subr.mxu0 0.0
      %3388 = vmatpush2.msra.mxu0 0.0
      %3389 = vmatprep.mubr.f32.mxu0 0.0
      %3390 = vmatmul.mubr.f32.gmra.mxu0 %v3323
      %v3391 = vpop.f32.mrf.mxu0
      %v3392 = vadd.f32 0.0, %v3391
      %v3393 = vpop.f32.mrf.mxu0
      %3394 = vdwg.mxu0
      %v3395 = vmul.f32 %v3392, 0.0003125
      %v3396 = vmul.f32 %v3321, %v3321
      %v3397 = vsub.f32 %v3395, %v3396
      %v3398 = vld [vmem:[%s3] sm:$0x1]
      %v3399 = vadd.f32 %v3397, 1e-05
      %v3400 = vrsqrt.pop %v3399
      %v3401 = vmul.f32 %v3398, %v3400
      %v3402 = vld [vmem:[%s4] sm:$0x1]
      %v3403 = vmul.f32 %v3321, %v3401
      %v3404 = vsub.f32 %v3402, %v3403
      %v3405 = vld [vmem:[#allocation2] sm:$0xff]
      %v3406 = vld [vmem:[#allocation2 + $0x8] sm:$0xff]
      %v3407 = vld [vmem:[#allocation2 + $0x10] sm:$0xff]
      %v3408 = vld [vmem:[#allocation2 + $0x18] sm:$0x1]
      %v3410 = vlaneseq
      %v3411 = vshrl.u32 %v3410, 7
      %v3412 = vsub.s32 0, %v3411
      %v3413 = vrot.slane %v3401, %v3412
      %v3415 = vmul.f32 %v3405, %v3413
      %v3416 = vmul.f32 %v3406, %v3413
      %v3417 = vmul.f32 %v3407, %v3413
      %v3418 = vmul.f32 %v3408, %v3413
      %v3420 = vlaneseq
      %v3421 = vshrl.u32 %v3420, 7
      %v3422 = vsub.s32 0, %v3421
      %v3423 = vrot.slane %v3404, %v3422
      %v3425 = vadd.f32 %v3415, %v3423
      %v3426 = vadd.f32 %v3416, %v3423
      %v3427 = vadd.f32 %v3417, %v3423
      %v3428 = vadd.f32 %v3418, %v3423
      %v3429 = vld [vmem:[%s2113] sm:$0xff]
      %v3430 = vld [vmem:[%s2113 + $0x8] sm:$0xff]
      %v3431 = vld [vmem:[%s2113 + $0x10] sm:$0xff]
      %v3432 = vld [vmem:[%s2113 + $0x18] sm:$0x1]
      %v3433 = vmul.f32 %v3429, %v3413
      %v3434 = vmul.f32 %v3430, %v3413
      %v3435 = vmul.f32 %v3431, %v3413
      %v3436 = vmul.f32 %v3432, %v3413
      %v3437 = vadd.f32 %v3433, %v3423
      %v3438 = vadd.f32 %v3434, %v3423
      %v3439 = vadd.f32 %v3435, %v3423
      %v3440 = vadd.f32 %v3436, %v3423
      %v3441 = vmax.f32 %v3425, %v3437
      %v3442 = vmax.f32 %v3426, %v3438
      %v3443 = vmax.f32 %v3427, %v3439
      %v3444 = vmax.f32 %v3428, %v3440
      %v3445 = vld [vmem:[%s2658] sm:$0xff]
      %v3446 = vld [vmem:[%s2658 + $0x8] sm:$0xff]
      %v3447 = vld [vmem:[%s2658 + $0x10] sm:$0xff]
      %v3448 = vld [vmem:[%s2658 + $0x18] sm:$0x1]
      %v3449 = vmul.f32 %v3445, %v3413
      %v3450 = vmul.f32 %v3446, %v3413
      %v3451 = vmul.f32 %v3447, %v3413
      %v3452 = vmul.f32 %v3448, %v3413
      %v3453 = vadd.f32 %v3449, %v3423
      %v3454 = vadd.f32 %v3450, %v3423
      %v3455 = vadd.f32 %v3451, %v3423
      %v3456 = vadd.f32 %v3452, %v3423
      %v3457 = vmax.f32 %v3441, %v3453
      %v3458 = vmax.f32 %v3442, %v3454
      %v3459 = vmax.f32 %v3443, %v3455
      %v3460 = vmax.f32 %v3444, %v3456
      %v3461 = vld [vmem:[%s3203] sm:$0xff]
      %v3462 = vld [vmem:[%s3203 + $0x8] sm:$0xff]
      %v3463 = vld [vmem:[%s3203 + $0x10] sm:$0xff]
      %v3464 = vld [vmem:[%s3203 + $0x18] sm:$0x1]
      %v3465 = vmul.f32 %v3461, %v3413
      %v3466 = vmul.f32 %v3462, %v3413
      %v3467 = vmul.f32 %v3463, %v3413
      %v3468 = vmul.f32 %v3464, %v3413
      %v3469 = vadd.f32 %v3465, %v3423
      %v3470 = vadd.f32 %v3466, %v3423
      %v3471 = vadd.f32 %v3467, %v3423
      %v3472 = vadd.f32 %v3468, %v3423
      %v3473 = vmax.f32 %v3457, %v3469
      %v3474 = vmax.f32 %v3458, %v3470
      %v3475 = vmax.f32 %v3459, %v3471
      %v3476 = vmax.f32 %v3460, %v3472
      %v3477 = vmax.f32 %v3473, 0.0
      %v3478 = vmax.f32 %v3474, 0.0
      %v3479 = vmax.f32 %v3475, 0.0
      %v3480 = vmax.f32 %v3476, 0.0
      %v3481 = vpack.c.bf16 %v3478, %v3477
      %v3482 = vpack.c.bf16 %v3480, %v3479
      %v3485 = vunpack.c.l.b16 %v3481
      %v3486 = vunpack.c.h.b16 %v3481
      %v3487 = vunpack.c.l.b16 %v3482
      %v3488 = vunpack.c.h.b16 %v3482
      %v3489 = vpack.c.b16 %v3485, %v3485
      %v3490 = vpack.c.b16 %v3486, %v3486
      %v3491 = vpack.c.b16 %v3487, %v3487
      %v3492 = vpack.c.b16 %v3488, %v3488
      %vm3497 = vcmask 519168
      %3498 = vst.msk [vmem:[%s251] sm:$0xf] %vm3497, %v3489
      %3499 = vst.msk [vmem:[%s251 + $0x4] sm:$0xf] %vm3497, %v3490
      %3500 = vst.msk [vmem:[%s251 + $0x8] sm:$0xf] %vm3497, %v3491
      %vm3501 = vcmask 516096
      %vm3502 = vsmask.f32 256
      %vm3503 = vmand %vm3501, %vm3502
      %v3504 = vld [vmem:[%s251 + $0xc] sm:$0x1]
      %v3505 = vsel %vm3503, %v3492, %v3504
      %3506 = vst [vmem:[%s251 + $0xc] sm:$0x1] %v3505
      %p3507 = scmp.lt.s32.totalorder %s17, 1
      %s3508 = scalar_select %p3507, %s17, 1
      %s3509 = smul.addr %s3508, 4
      %s3510 = smul.addr %s3509, 4
      %s3511 = scalar_lea.vmem %s6, %s3510
      // Predicated region
      $region45: #{forward.4} parent=43 // pred_check
        %p3512 = pneg %p166
      $region46: #{forward.4} parent=43 // pred_check_branch
        %3514 = sbr.rel (%p3512) target = $region48
      $region47: #{forward.4} parent=43 // pred_region
        _
      $region48: #{forward.4} parent=43 // pred_fallthru
        _
    $region44: #{forward.4} parent=5 // pred_fallthru
      _
    %p3515 = scmp.le.s32.totalorder 2, %s12
    // Predicated region
    $region49: #{forward.4} parent=5 // pred_check
      %p3516 = pneg %p3515
    $region50: #{forward.4} parent=5 // pred_check_branch
      %3518 = sbr.rel (%p3516) target = $region52
    $region51: #{forward.4} parent=5 // pred_region
      %s3519 = ssub.s32 %s12, 2
      // Predicated region
      $region53: #{forward.4} parent=51 // pred_check
        %p3520 = pneg %p172
      $region54: #{forward.4} parent=51 // pred_check_branch
        %3522 = sbr.rel (%p3520) target = $region56
      $region55: #{forward.4} parent=51 // pred_region
        %p3523 = scmp.lt.s32.totalorder %s18, 1
        %s3524 = scalar_select %p3523, %s18, 1
        %s3525 = smul.addr %s3524, 4
        %s3526 = smul.addr %s3525, 4
        %s3527 = scalar_lea.vmem %s6, %s3526
      $region56: #{forward.4} parent=51 // pred_fallthru
        _
    $region52: #{forward.4} parent=5 // pred_fallthru
      _
  $region6: #{forward.4} parent=0 // loop_footer
    %s16 = sadd.s32 1, %s12
  $region7: #{forward.4} parent=0 // loop_footer_branch
    %11 = sbr.rel target = $region3
  $region8: #{forward.4} parent=0 // loop_exit
    _

// kernel: forward.5
$region0: #{forward.5}
  #allocation0 [shape = 'u32[]', space=smem, size = 0x4, offset = 0x4, fixed_abs, tag = 'smem constant byte address 0x4 - core index']
  #allocation1 [shape = 'u32[144,128]{1,0:T(1,128)}', space=vmem, size = 0x12000, scoped, tag = 'internal scratch']
  %s0 = inlined_call_operand.vmem [shape: bf16[2,1600], index: 0, kind: input, shape index: {}]
  %s1 = inlined_call_operand.vmem [shape: bf16[1600,384], index: 1, kind: input, shape index: {}]
  %s2 = inlined_call_operand.vmem [shape: f32[1,384], index: 2, kind: input, shape index: {}]
  %s3 = inlined_call_operand.vmem [shape: bf16[384,192], index: 3, kind: input, shape index: {}]
  %s4 = inlined_call_operand.vmem [shape: f32[1,192], index: 4, kind: input, shape index: {}]
  %s5 = inlined_call_operand.vmem [shape: bf16[192,128], index: 5, kind: input, shape index: {}]
  %s6 = inlined_call_operand.vmem [shape: f32[1,128], index: 6, kind: input, shape index: {}]
  %s7 = inlined_call_operand.hbm [shape: f32[2,128], index: 7, kind: output, shape index: {}]
  %s8 = sld [smem:[#allocation0]]
  $region38: #{forward.5} parent=0
    _
  %s10 = ssub.s32 1, %s8
  %s11 = scalar_select 0, %s10, %s8
  $region1: #{forward.5} parent=0
    #allocation2 [shape = 'u8[1024]{0}', space=vmem, size = 0x400, scoped, tag = 'output window, operand 0, single buffered']
    #allocation3 [shape = 's32[1]{0}', space=sflag, size = 0x4, scoped, tag = 'scoped memory for forward.5']
    %12 = vsyncpa [#allocation3], 0
    // Predicated region
    $region2: #{forward.5} parent=1 // pred_check
      _
    $region3: #{forward.5} parent=1 // pred_check_branch
      %14 = sbr.rel (0) target = $region5
    $region4: #{forward.5} parent=1 // pred_region
      _
    $region5: #{forward.5} parent=1 // pred_fallthru
      _
    // Predicated region
    $region6: #{forward.5} parent=1 // pred_check
      _
    $region7: #{forward.5} parent=1 // pred_check_branch
      %16 = sbr.rel (0) target = $region9
    $region8: #{forward.5} parent=1 // pred_region
      _
    $region9: #{forward.5} parent=1 // pred_fallthru
      _
    // Predicated region
    $region10: #{forward.5} parent=1 // pred_check
      _
    $region11: #{forward.5} parent=1 // pred_check_branch
      %18 = sbr.rel (0) target = $region13
    $region12: #{forward.5} parent=1 // pred_region
      _
    $region13: #{forward.5} parent=1 // pred_fallthru
      _
    // Predicated region
    $region14: #{forward.5} parent=1 // pred_check
      _
    $region15: #{forward.5} parent=1 // pred_check_branch
      %20 = sbr.rel (0) target = $region17
    $region16: #{forward.5} parent=1 // pred_region
      _
    $region17: #{forward.5} parent=1 // pred_fallthru
      _
    // Predicated region
    $region18: #{forward.5} parent=1 // pred_check
      _
    $region19: #{forward.5} parent=1 // pred_check_branch
      %22 = sbr.rel (0) target = $region21
    $region20: #{forward.5} parent=1 // pred_region
      _
    $region21: #{forward.5} parent=1 // pred_fallthru
      _
    // Predicated region
    $region22: #{forward.5} parent=1 // pred_check
      _
    $region23: #{forward.5} parent=1 // pred_check_branch
      %24 = sbr.rel (0) target = $region25
    $region24: #{forward.5} parent=1 // pred_region
      _
    $region25: #{forward.5} parent=1 // pred_fallthru
      _
    // Predicated region
    $region26: #{forward.5} parent=1 // pred_check
      _
    $region27: #{forward.5} parent=1 // pred_check_branch
      %26 = sbr.rel (0) target = $region29
    $region28: #{forward.5} parent=1 // pred_region
      _
    $region29: #{forward.5} parent=1 // pred_fallthru
      _
    %v28 = vld [vmem:[%s0] sm:$0xff]
    %v29 = vld [vmem:[%s0 + $0x8] sm:$0x1f]
    %v30 = vld [vmem:[%s1] sm:$0xff]
    %v31 = vld [vmem:[%s1 + $0x8] sm:$0xf]
    %v32 = vld [vmem:[%s1 + $0xc] sm:$0xff]
    %v33 = vld [vmem:[%s1 + $0x14] sm:$0xf]
    %v34 = vld [vmem:[%s1 + $0x18] sm:$0xff]
    %v35 = vld [vmem:[%s1 + $0x20] sm:$0xf]
    %v36 = vld [vmem:[%s1 + $0x24] sm:$0xff]
    %v37 = vld [vmem:[%s1 + $0x2c] sm:$0xf]
    %v38 = vld [vmem:[%s1 + $0x30] sm:$0xff]
    %v39 = vld [vmem:[%s1 + $0x38] sm:$0xf]
    %v40 = vld [vmem:[%s1 + $0x3c] sm:$0xff]
    %v41 = vld [vmem:[%s1 + $0x44] sm:$0xf]
    %v42 = vld [vmem:[%s1 + $0x48] sm:$0xff]
    %v43 = vld [vmem:[%s1 + $0x50] sm:$0xf]
    %v44 = vld [vmem:[%s1 + $0x54] sm:$0xff]
    %v45 = vld [vmem:[%s1 + $0x5c] sm:$0xf]
    %v46 = vld [vmem:[%s1 + $0x60] sm:$0xff]
    %v47 = vld [vmem:[%s1 + $0x68] sm:$0xf]
    %v48 = vld [vmem:[%s1 + $0x6c] sm:$0xff]
    %v49 = vld [vmem:[%s1 + $0x74] sm:$0xf]
    %v50 = vld [vmem:[%s1 + $0x78] sm:$0xff]
    %v51 = vld [vmem:[%s1 + $0x80] sm:$0xf]
    %v52 = vld [vmem:[%s1 + $0x84] sm:$0xff]
    %v53 = vld [vmem:[%s1 + $0x8c] sm:$0xf]
    %v54 = vld [vmem:[%s1 + $0x90] sm:$0xff]
    %v55 = vld [vmem:[%s1 + $0x98] sm:$0xf]
    %v56 = vld [vmem:[%s1 + $0x9c] sm:$0xff]
    %v57 = vld [vmem:[%s1 + $0xa4] sm:$0xf]
    %v58 = vld [vmem:[%s1 + $0xa8] sm:$0xff]
    %v59 = vld [vmem:[%s1 + $0xb0] sm:$0xf]
    %v60 = vld [vmem:[%s1 + $0xb4] sm:$0xff]
    %v61 = vld [vmem:[%s1 + $0xbc] sm:$0xf]
    %v62 = vld [vmem:[%s1 + $0xc0] sm:$0xff]
    %v63 = vld [vmem:[%s1 + $0xc8] sm:$0xf]
    %v64 = vld [vmem:[%s1 + $0xcc] sm:$0xff]
    %v65 = vld [vmem:[%s1 + $0xd4] sm:$0xf]
    %v66 = vld [vmem:[%s1 + $0xd8] sm:$0xff]
    %v67 = vld [vmem:[%s1 + $0xe0] sm:$0xf]
    %v68 = vld [vmem:[%s1 + $0xe4] sm:$0xff]
    %v69 = vld [vmem:[%s1 + $0xec] sm:$0xf]
    %v70 = vld [vmem:[%s1 + $0xf0] sm:$0xff]
    %v71 = vld [vmem:[%s1 + $0xf8] sm:$0xf]
    %v72 = vld [vmem:[%s1 + $0xfc] sm:$0xff]
    %v73 = vld [vmem:[%s1 + $0x104] sm:$0xf]
    %v74 = vld [vmem:[%s1 + $0x108] sm:$0xff]
    %v75 = vld [vmem:[%s1 + $0x110] sm:$0xf]
    %v76 = vld [vmem:[%s1 + $0x114] sm:$0xff]
    %v77 = vld [vmem:[%s1 + $0x11c] sm:$0xf]
    %v78 = vld [vmem:[%s1 + $0x120] sm:$0xff]
    %v79 = vld [vmem:[%s1 + $0x128] sm:$0xf]
    %v80 = vld [vmem:[%s1 + $0x12c] sm:$0xff]
    %v81 = vld [vmem:[%s1 + $0x134] sm:$0xf]
    %v82 = vld [vmem:[%s1 + $0x138] sm:$0xff]
    %v83 = vld [vmem:[%s1 + $0x140] sm:$0xf]
    %v84 = vld [vmem:[%s1 + $0x144] sm:$0xff]
    %v85 = vld [vmem:[%s1 + $0x14c] sm:$0xf]
    %v86 = vld [vmem:[%s1 + $0x150] sm:$0xff]
    %v87 = vld [vmem:[%s1 + $0x158] sm:$0xf]
    %v88 = vld [vmem:[%s1 + $0x15c] sm:$0xff]
    %v89 = vld [vmem:[%s1 + $0x164] sm:$0xf]
    %v90 = vld [vmem:[%s1 + $0x168] sm:$0xff]
    %v91 = vld [vmem:[%s1 + $0x170] sm:$0xf]
    %v92 = vld [vmem:[%s1 + $0x174] sm:$0xff]
    %v93 = vld [vmem:[%s1 + $0x17c] sm:$0xf]
    %v94 = vld [vmem:[%s1 + $0x180] sm:$0xff]
    %v95 = vld [vmem:[%s1 + $0x188] sm:$0xf]
    %v96 = vld [vmem:[%s1 + $0x18c] sm:$0xff]
    %v97 = vld [vmem:[%s1 + $0x194] sm:$0xf]
    %v98 = vld [vmem:[%s1 + $0x198] sm:$0xff]
    %v99 = vld [vmem:[%s1 + $0x1a0] sm:$0xf]
    %v100 = vld [vmem:[%s1 + $0x1a4] sm:$0xff]
    %v101 = vld [vmem:[%s1 + $0x1ac] sm:$0xf]
    %v102 = vld [vmem:[%s1 + $0x1b0] sm:$0xff]
    %v103 = vld [vmem:[%s1 + $0x1b8] sm:$0xf]
    %v104 = vld [vmem:[%s1 + $0x1bc] sm:$0xff]
    %v105 = vld [vmem:[%s1 + $0x1c4] sm:$0xf]
    %v106 = vld [vmem:[%s1 + $0x1c8] sm:$0xff]
    %v107 = vld [vmem:[%s1 + $0x1d0] sm:$0xf]
    %v108 = vld [vmem:[%s1 + $0x1d4] sm:$0xff]
    %v109 = vld [vmem:[%s1 + $0x1dc] sm:$0xf]
    %v110 = vld [vmem:[%s1 + $0x1e0] sm:$0xff]
    %v111 = vld [vmem:[%s1 + $0x1e8] sm:$0xf]
    %v112 = vld [vmem:[%s1 + $0x1ec] sm:$0xff]
    %v113 = vld [vmem:[%s1 + $0x1f4] sm:$0xf]
    %v114 = vld [vmem:[%s1 + $0x1f8] sm:$0xff]
    %v115 = vld [vmem:[%s1 + $0x200] sm:$0xf]
    %v116 = vld [vmem:[%s1 + $0x204] sm:$0xff]
    %v117 = vld [vmem:[%s1 + $0x20c] sm:$0xf]
    %v118 = vld [vmem:[%s1 + $0x210] sm:$0xff]
    %v119 = vld [vmem:[%s1 + $0x218] sm:$0xf]
    %v120 = vld [vmem:[%s1 + $0x21c] sm:$0xff]
    %v121 = vld [vmem:[%s1 + $0x224] sm:$0xf]
    %v122 = vld [vmem:[%s1 + $0x228] sm:$0xff]
    %v123 = vld [vmem:[%s1 + $0x230] sm:$0xf]
    %v124 = vld [vmem:[%s1 + $0x234] sm:$0xff]
    %v125 = vld [vmem:[%s1 + $0x23c] sm:$0xf]
    %v126 = vld [vmem:[%s1 + $0x240] sm:$0xff]
    %v127 = vld [vmem:[%s1 + $0x248] sm:$0xf]
    %v128 = vld [vmem:[%s1 + $0x24c] sm:$0xff]
    %v129 = vld [vmem:[%s1 + $0x254] sm:$0xf]
    %v130 = vld [vmem:[%s1 + $0x258] sm:$0xff]
    %v131 = vld [vmem:[%s1 + $0x260] sm:$0xf]
    %v132 = vld [vmem:[%s1 + $0x264] sm:$0xff]
    %v133 = vld [vmem:[%s1 + $0x26c] sm:$0xf]
    %v134 = vld [vmem:[%s1 + $0x270] sm:$0xff]
    %v135 = vld [vmem:[%s1 + $0x278] sm:$0xf]
    %v136 = vld [vmem:[%s1 + $0x27c] sm:$0xff]
    %v137 = vld [vmem:[%s1 + $0x284] sm:$0xf]
    %v138 = vld [vmem:[%s1 + $0x288] sm:$0xff]
    %v139 = vld [vmem:[%s1 + $0x290] sm:$0xf]
    %v140 = vld [vmem:[%s1 + $0x294] sm:$0xff]
    %v141 = vld [vmem:[%s1 + $0x29c] sm:$0xf]
    %v142 = vld [vmem:[%s1 + $0x2a0] sm:$0xff]
    %v143 = vld [vmem:[%s1 + $0x2a8] sm:$0xf]
    %v144 = vld [vmem:[%s1 + $0x2ac] sm:$0xff]
    %v145 = vld [vmem:[%s1 + $0x2b4] sm:$0xf]
    %v146 = vld [vmem:[%s1 + $0x2b8] sm:$0xff]
    %v147 = vld [vmem:[%s1 + $0x2c0] sm:$0xf]
    %v148 = vld [vmem:[%s1 + $0x2c4] sm:$0xff]
    %v149 = vld [vmem:[%s1 + $0x2cc] sm:$0xf]
    %v150 = vld [vmem:[%s1 + $0x2d0] sm:$0xff]
    %v151 = vld [vmem:[%s1 + $0x2d8] sm:$0xf]
    %v152 = vld [vmem:[%s1 + $0x2dc] sm:$0xff]
    %v153 = vld [vmem:[%s1 + $0x2e4] sm:$0xf]
    %v154 = vld [vmem:[%s1 + $0x2e8] sm:$0xff]
    %v155 = vld [vmem:[%s1 + $0x2f0] sm:$0xf]
    %v156 = vld [vmem:[%s1 + $0x2f4] sm:$0xff]
    %v157 = vld [vmem:[%s1 + $0x2fc] sm:$0xf]
    %v158 = vld [vmem:[%s1 + $0x300] sm:$0xff]
    %v159 = vld [vmem:[%s1 + $0x308] sm:$0xf]
    %v160 = vld [vmem:[%s1 + $0x30c] sm:$0xff]
    %v161 = vld [vmem:[%s1 + $0x314] sm:$0xf]
    %v162 = vld [vmem:[%s1 + $0x318] sm:$0xff]
    %v163 = vld [vmem:[%s1 + $0x320] sm:$0xf]
    %v164 = vld [vmem:[%s1 + $0x324] sm:$0xff]
    %v165 = vld [vmem:[%s1 + $0x32c] sm:$0xf]
    %v166 = vld [vmem:[%s1 + $0x330] sm:$0xff]
    %v167 = vld [vmem:[%s1 + $0x338] sm:$0xf]
    %v168 = vld [vmem:[%s1 + $0x33c] sm:$0xff]
    %v169 = vld [vmem:[%s1 + $0x344] sm:$0xf]
    %v170 = vld [vmem:[%s1 + $0x348] sm:$0xff]
    %v171 = vld [vmem:[%s1 + $0x350] sm:$0xf]
    %v172 = vld [vmem:[%s1 + $0x354] sm:$0xff]
    %v173 = vld [vmem:[%s1 + $0x35c] sm:$0xf]
    %v174 = vld [vmem:[%s1 + $0x360] sm:$0xff]
    %v175 = vld [vmem:[%s1 + $0x368] sm:$0xf]
    %v176 = vld [vmem:[%s1 + $0x36c] sm:$0xff]
    %v177 = vld [vmem:[%s1 + $0x374] sm:$0xf]
    %v178 = vld [vmem:[%s1 + $0x378] sm:$0xff]
    %v179 = vld [vmem:[%s1 + $0x380] sm:$0xf]
    %v180 = vld [vmem:[%s1 + $0x384] sm:$0xff]
    %v181 = vld [vmem:[%s1 + $0x38c] sm:$0xf]
    %v182 = vld [vmem:[%s1 + $0x390] sm:$0xff]
    %v183 = vld [vmem:[%s1 + $0x398] sm:$0xf]
    %v184 = vld [vmem:[%s1 + $0x39c] sm:$0xff]
    %v185 = vld [vmem:[%s1 + $0x3a4] sm:$0xf]
    %v186 = vld [vmem:[%s1 + $0x3a8] sm:$0xff]
    %v187 = vld [vmem:[%s1 + $0x3b0] sm:$0xf]
    %v188 = vld [vmem:[%s1 + $0x3b4] sm:$0xff]
    %v189 = vld [vmem:[%s1 + $0x3bc] sm:$0xf]
    %v190 = vld [vmem:[%s1 + $0x3c0] sm:$0xff]
    %v191 = vld [vmem:[%s1 + $0x3c8] sm:$0xf]
    %v192 = vld [vmem:[%s1 + $0x3cc] sm:$0xff]
    %v193 = vld [vmem:[%s1 + $0x3d4] sm:$0xf]
    %v194 = vld [vmem:[%s1 + $0x3d8] sm:$0xff]
    %v195 = vld [vmem:[%s1 + $0x3e0] sm:$0xf]
    %v196 = vld [vmem:[%s1 + $0x3e4] sm:$0xff]
    %v197 = vld [vmem:[%s1 + $0x3ec] sm:$0xf]
    %v198 = vld [vmem:[%s1 + $0x3f0] sm:$0xff]
    %v199 = vld [vmem:[%s1 + $0x3f8] sm:$0xf]
    %v200 = vld [vmem:[%s1 + $0x3fc] sm:$0xff]
    %v201 = vld [vmem:[%s1 + $0x404] sm:$0xf]
    %v202 = vld [vmem:[%s1 + $0x408] sm:$0xff]
    %v203 = vld [vmem:[%s1 + $0x410] sm:$0xf]
    %v204 = vld [vmem:[%s1 + $0x414] sm:$0xff]
    %v205 = vld [vmem:[%s1 + $0x41c] sm:$0xf]
    %v206 = vld [vmem:[%s1 + $0x420] sm:$0xff]
    %v207 = vld [vmem:[%s1 + $0x428] sm:$0xf]
    %v208 = vld [vmem:[%s1 + $0x42c] sm:$0xff]
    %v209 = vld [vmem:[%s1 + $0x434] sm:$0xf]
    %v210 = vld [vmem:[%s1 + $0x438] sm:$0xff]
    %v211 = vld [vmem:[%s1 + $0x440] sm:$0xf]
    %v212 = vld [vmem:[%s1 + $0x444] sm:$0xff]
    %v213 = vld [vmem:[%s1 + $0x44c] sm:$0xf]
    %v214 = vld [vmem:[%s1 + $0x450] sm:$0xff]
    %v215 = vld [vmem:[%s1 + $0x458] sm:$0xf]
    %v216 = vld [vmem:[%s1 + $0x45c] sm:$0xff]
    %v217 = vld [vmem:[%s1 + $0x464] sm:$0xf]
    %v218 = vld [vmem:[%s1 + $0x468] sm:$0xff]
    %v219 = vld [vmem:[%s1 + $0x470] sm:$0xf]
    %v220 = vld [vmem:[%s1 + $0x474] sm:$0xff]
    %v221 = vld [vmem:[%s1 + $0x47c] sm:$0xf]
    %v222 = vld [vmem:[%s1 + $0x480] sm:$0xff]
    %v223 = vld [vmem:[%s1 + $0x488] sm:$0xf]
    %v224 = vld [vmem:[%s1 + $0x48c] sm:$0xff]
    %v225 = vld [vmem:[%s1 + $0x494] sm:$0xf]
    %v226 = vld [vmem:[%s1 + $0x498] sm:$0xff]
    %v227 = vld [vmem:[%s1 + $0x4a0] sm:$0xf]
    %v228 = vld [vmem:[%s1 + $0x4a4] sm:$0xff]
    %v229 = vld [vmem:[%s1 + $0x4ac] sm:$0xf]
    %v230 = vld [vmem:[%s1 + $0x4b0] sm:$0xff]
    %v231 = vld [vmem:[%s1 + $0x4b8] sm:$0xf]
    %v232 = vld [vmem:[%s1 + $0x4bc] sm:$0xff]
    %v233 = vld [vmem:[%s1 + $0x4c4] sm:$0xf]
    %v234 = vld [vmem:[%s1 + $0x4c8] sm:$0xff]
    %v235 = vld [vmem:[%s1 + $0x4d0] sm:$0xf]
    %v236 = vld [vmem:[%s1 + $0x4d4] sm:$0xff]
    %v237 = vld [vmem:[%s1 + $0x4dc] sm:$0xf]
    %v238 = vld [vmem:[%s1 + $0x4e0] sm:$0xff]
    %v239 = vld [vmem:[%s1 + $0x4e8] sm:$0xf]
    %v240 = vld [vmem:[%s1 + $0x4ec] sm:$0xff]
    %v241 = vld [vmem:[%s1 + $0x4f4] sm:$0xf]
    %v242 = vld [vmem:[%s1 + $0x4f8] sm:$0xff]
    %v243 = vld [vmem:[%s1 + $0x500] sm:$0xf]
    %v244 = vld [vmem:[%s1 + $0x504] sm:$0xff]
    %v245 = vld [vmem:[%s1 + $0x50c] sm:$0xf]
    %v246 = vld [vmem:[%s1 + $0x510] sm:$0xff]
    %v247 = vld [vmem:[%s1 + $0x518] sm:$0xf]
    %v248 = vld [vmem:[%s1 + $0x51c] sm:$0xff]
    %v249 = vld [vmem:[%s1 + $0x524] sm:$0xf]
    %v250 = vld [vmem:[%s1 + $0x528] sm:$0xff]
    %v251 = vld [vmem:[%s1 + $0x530] sm:$0xf]
    %v252 = vld [vmem:[%s1 + $0x534] sm:$0xff]
    %v253 = vld [vmem:[%s1 + $0x53c] sm:$0xf]
    %v254 = vld [vmem:[%s1 + $0x540] sm:$0xff]
    %v255 = vld [vmem:[%s1 + $0x548] sm:$0xf]
    %v256 = vld [vmem:[%s1 + $0x54c] sm:$0xff]
    %v257 = vld [vmem:[%s1 + $0x554] sm:$0xf]
    %v258 = vld [vmem:[%s1 + $0x558] sm:$0xff]
    %v259 = vld [vmem:[%s1 + $0x560] sm:$0xf]
    %v260 = vld [vmem:[%s1 + $0x564] sm:$0xff]
    %v261 = vld [vmem:[%s1 + $0x56c] sm:$0xf]
    %v262 = vld [vmem:[%s1 + $0x570] sm:$0xff]
    %v263 = vld [vmem:[%s1 + $0x578] sm:$0xf]
    %v264 = vld [vmem:[%s1 + $0x57c] sm:$0xff]
    %v265 = vld [vmem:[%s1 + $0x584] sm:$0xf]
    %v266 = vld [vmem:[%s1 + $0x588] sm:$0xff]
    %v267 = vld [vmem:[%s1 + $0x590] sm:$0xf]
    %v268 = vld [vmem:[%s1 + $0x594] sm:$0xff]
    %v269 = vld [vmem:[%s1 + $0x59c] sm:$0xf]
    %v270 = vld [vmem:[%s1 + $0x5a0] sm:$0xff]
    %v271 = vld [vmem:[%s1 + $0x5a8] sm:$0xf]
    %v272 = vld [vmem:[%s1 + $0x5ac] sm:$0xff]
    %v273 = vld [vmem:[%s1 + $0x5b4] sm:$0xf]
    %v274 = vld [vmem:[%s1 + $0x5b8] sm:$0xff]
    %v275 = vld [vmem:[%s1 + $0x5c0] sm:$0xf]
    %v276 = vld [vmem:[%s1 + $0x5c4] sm:$0xff]
    %v277 = vld [vmem:[%s1 + $0x5cc] sm:$0xf]
    %v278 = vld [vmem:[%s1 + $0x5d0] sm:$0xff]
    %v279 = vld [vmem:[%s1 + $0x5d8] sm:$0xf]
    %v280 = vld [vmem:[%s1 + $0x5dc] sm:$0xff]
    %v281 = vld [vmem:[%s1 + $0x5e4] sm:$0xf]
    %v282 = vld [vmem:[%s1 + $0x5e8] sm:$0xff]
    %v283 = vld [vmem:[%s1 + $0x5f0] sm:$0xf]
    %v284 = vld [vmem:[%s1 + $0x5f4] sm:$0xff]
    %v285 = vld [vmem:[%s1 + $0x5fc] sm:$0xf]
    %v286 = vld [vmem:[%s1 + $0x600] sm:$0xff]
    %v287 = vld [vmem:[%s1 + $0x608] sm:$0xf]
    %v288 = vld [vmem:[%s1 + $0x60c] sm:$0xff]
    %v289 = vld [vmem:[%s1 + $0x614] sm:$0xf]
    %v290 = vld [vmem:[%s1 + $0x618] sm:$0xff]
    %v291 = vld [vmem:[%s1 + $0x620] sm:$0xf]
    %v292 = vld [vmem:[%s1 + $0x624] sm:$0xff]
    %v293 = vld [vmem:[%s1 + $0x62c] sm:$0xf]
    %v294 = vld [vmem:[%s1 + $0x630] sm:$0xff]
    %v295 = vld [vmem:[%s1 + $0x638] sm:$0xf]
    %v296 = vld [vmem:[%s1 + $0x63c] sm:$0xff]
    %v297 = vld [vmem:[%s1 + $0x644] sm:$0xf]
    %v298 = vld [vmem:[%s1 + $0x648] sm:$0xff]
    %v299 = vld [vmem:[%s1 + $0x650] sm:$0xf]
    %v300 = vld [vmem:[%s1 + $0x654] sm:$0xff]
    %v301 = vld [vmem:[%s1 + $0x65c] sm:$0xf]
    %v302 = vld [vmem:[%s1 + $0x660] sm:$0xff]
    %v303 = vld [vmem:[%s1 + $0x668] sm:$0xf]
    %v304 = vld [vmem:[%s1 + $0x66c] sm:$0xff]
    %v305 = vld [vmem:[%s1 + $0x674] sm:$0xf]
    %v306 = vld [vmem:[%s1 + $0x678] sm:$0xff]
    %v307 = vld [vmem:[%s1 + $0x680] sm:$0xf]
    %v308 = vld [vmem:[%s1 + $0x684] sm:$0xff]
    %v309 = vld [vmem:[%s1 + $0x68c] sm:$0xf]
    %v310 = vld [vmem:[%s1 + $0x690] sm:$0xff]
    %v311 = vld [vmem:[%s1 + $0x698] sm:$0xf]
    %v312 = vld [vmem:[%s1 + $0x69c] sm:$0xff]
    %v313 = vld [vmem:[%s1 + $0x6a4] sm:$0xf]
    %v314 = vld [vmem:[%s1 + $0x6a8] sm:$0xff]
    %v315 = vld [vmem:[%s1 + $0x6b0] sm:$0xf]
    %v316 = vld [vmem:[%s1 + $0x6b4] sm:$0xff]
    %v317 = vld [vmem:[%s1 + $0x6bc] sm:$0xf]
    %v318 = vld [vmem:[%s1 + $0x6c0] sm:$0xff]
    %v319 = vld [vmem:[%s1 + $0x6c8] sm:$0xf]
    %v320 = vld [vmem:[%s1 + $0x6cc] sm:$0xff]
    %v321 = vld [vmem:[%s1 + $0x6d4] sm:$0xf]
    %v322 = vld [vmem:[%s1 + $0x6d8] sm:$0xff]
    %v323 = vld [vmem:[%s1 + $0x6e0] sm:$0xf]
    %v324 = vld [vmem:[%s1 + $0x6e4] sm:$0xff]
    %v325 = vld [vmem:[%s1 + $0x6ec] sm:$0xf]
    %v326 = vld [vmem:[%s1 + $0x6f0] sm:$0xff]
    %v327 = vld [vmem:[%s1 + $0x6f8] sm:$0xf]
    %v328 = vld [vmem:[%s1 + $0x6fc] sm:$0xff]
    %v329 = vld [vmem:[%s1 + $0x704] sm:$0xf]
    %v330 = vld [vmem:[%s1 + $0x708] sm:$0xff]
    %v331 = vld [vmem:[%s1 + $0x710] sm:$0xf]
    %v332 = vld [vmem:[%s1 + $0x714] sm:$0xff]
    %v333 = vld [vmem:[%s1 + $0x71c] sm:$0xf]
    %v334 = vld [vmem:[%s1 + $0x720] sm:$0xff]
    %v335 = vld [vmem:[%s1 + $0x728] sm:$0xf]
    %v336 = vld [vmem:[%s1 + $0x72c] sm:$0xff]
    %v337 = vld [vmem:[%s1 + $0x734] sm:$0xf]
    %v338 = vld [vmem:[%s1 + $0x738] sm:$0xff]
    %v339 = vld [vmem:[%s1 + $0x740] sm:$0xf]
    %v340 = vld [vmem:[%s1 + $0x744] sm:$0xff]
    %v341 = vld [vmem:[%s1 + $0x74c] sm:$0xf]
    %v342 = vld [vmem:[%s1 + $0x750] sm:$0xff]
    %v343 = vld [vmem:[%s1 + $0x758] sm:$0xf]
    %v344 = vld [vmem:[%s1 + $0x75c] sm:$0xff]
    %v345 = vld [vmem:[%s1 + $0x764] sm:$0xf]
    %v346 = vld [vmem:[%s1 + $0x768] sm:$0xff]
    %v347 = vld [vmem:[%s1 + $0x770] sm:$0xf]
    %v348 = vld [vmem:[%s1 + $0x774] sm:$0xff]
    %v349 = vld [vmem:[%s1 + $0x77c] sm:$0xf]
    %v350 = vld [vmem:[%s1 + $0x780] sm:$0xff]
    %v351 = vld [vmem:[%s1 + $0x788] sm:$0xf]
    %v352 = vld [vmem:[%s1 + $0x78c] sm:$0xff]
    %v353 = vld [vmem:[%s1 + $0x794] sm:$0xf]
    %v354 = vld [vmem:[%s1 + $0x798] sm:$0xff]
    %v355 = vld [vmem:[%s1 + $0x7a0] sm:$0xf]
    %v356 = vld [vmem:[%s1 + $0x7a4] sm:$0xff]
    %v357 = vld [vmem:[%s1 + $0x7ac] sm:$0xf]
    %v358 = vld [vmem:[%s1 + $0x7b0] sm:$0xff]
    %v359 = vld [vmem:[%s1 + $0x7b8] sm:$0xf]
    %v360 = vld [vmem:[%s1 + $0x7bc] sm:$0xff]
    %v361 = vld [vmem:[%s1 + $0x7c4] sm:$0xf]
    %v362 = vld [vmem:[%s1 + $0x7c8] sm:$0xff]
    %v363 = vld [vmem:[%s1 + $0x7d0] sm:$0xf]
    %v364 = vld [vmem:[%s1 + $0x7d4] sm:$0xff]
    %v365 = vld [vmem:[%s1 + $0x7dc] sm:$0xf]
    %v366 = vld [vmem:[%s1 + $0x7e0] sm:$0xff]
    %v367 = vld [vmem:[%s1 + $0x7e8] sm:$0xf]
    %v368 = vld [vmem:[%s1 + $0x7ec] sm:$0xff]
    %v369 = vld [vmem:[%s1 + $0x7f4] sm:$0xf]
    %v370 = vld [vmem:[%s1 + $0x7f8] sm:$0xff]
    %v371 = vld [vmem:[%s1 + $0x800] sm:$0xf]
    %v372 = vld [vmem:[%s1 + $0x804] sm:$0xff]
    %v373 = vld [vmem:[%s1 + $0x80c] sm:$0xf]
    %v374 = vld [vmem:[%s1 + $0x810] sm:$0xff]
    %v375 = vld [vmem:[%s1 + $0x818] sm:$0xf]
    %v376 = vld [vmem:[%s1 + $0x81c] sm:$0xff]
    %v377 = vld [vmem:[%s1 + $0x824] sm:$0xf]
    %v378 = vld [vmem:[%s1 + $0x828] sm:$0xff]
    %v379 = vld [vmem:[%s1 + $0x830] sm:$0xf]
    %v380 = vld [vmem:[%s1 + $0x834] sm:$0xff]
    %v381 = vld [vmem:[%s1 + $0x83c] sm:$0xf]
    %v382 = vld [vmem:[%s1 + $0x840] sm:$0xff]
    %v383 = vld [vmem:[%s1 + $0x848] sm:$0xf]
    %v384 = vld [vmem:[%s1 + $0x84c] sm:$0xff]
    %v385 = vld [vmem:[%s1 + $0x854] sm:$0xf]
    %v386 = vld [vmem:[%s1 + $0x858] sm:$0xff]
    %v387 = vld [vmem:[%s1 + $0x860] sm:$0xf]
    %v388 = vld [vmem:[%s1 + $0x864] sm:$0xff]
    %v389 = vld [vmem:[%s1 + $0x86c] sm:$0xf]
    %v390 = vld [vmem:[%s1 + $0x870] sm:$0xff]
    %v391 = vld [vmem:[%s1 + $0x878] sm:$0xf]
    %v392 = vld [vmem:[%s1 + $0x87c] sm:$0xff]
    %v393 = vld [vmem:[%s1 + $0x884] sm:$0xf]
    %v394 = vld [vmem:[%s1 + $0x888] sm:$0xff]
    %v395 = vld [vmem:[%s1 + $0x890] sm:$0xf]
    %v396 = vld [vmem:[%s1 + $0x894] sm:$0xff]
    %v397 = vld [vmem:[%s1 + $0x89c] sm:$0xf]
    %v398 = vld [vmem:[%s1 + $0x8a0] sm:$0xff]
    %v399 = vld [vmem:[%s1 + $0x8a8] sm:$0xf]
    %v400 = vld [vmem:[%s1 + $0x8ac] sm:$0xff]
    %v401 = vld [vmem:[%s1 + $0x8b4] sm:$0xf]
    %v402 = vld [vmem:[%s1 + $0x8b8] sm:$0xff]
    %v403 = vld [vmem:[%s1 + $0x8c0] sm:$0xf]
    %v404 = vld [vmem:[%s1 + $0x8c4] sm:$0xff]
    %v405 = vld [vmem:[%s1 + $0x8cc] sm:$0xf]
    %v406 = vld [vmem:[%s1 + $0x8d0] sm:$0xff]
    %v407 = vld [vmem:[%s1 + $0x8d8] sm:$0xf]
    %v408 = vld [vmem:[%s1 + $0x8dc] sm:$0xff]
    %v409 = vld [vmem:[%s1 + $0x8e4] sm:$0xf]
    %v410 = vld [vmem:[%s1 + $0x8e8] sm:$0xff]
    %v411 = vld [vmem:[%s1 + $0x8f0] sm:$0xf]
    %v412 = vld [vmem:[%s1 + $0x8f4] sm:$0xff]
    %v413 = vld [vmem:[%s1 + $0x8fc] sm:$0xf]
    %v414 = vld [vmem:[%s1 + $0x900] sm:$0xff]
    %v415 = vld [vmem:[%s1 + $0x908] sm:$0xf]
    %v416 = vld [vmem:[%s1 + $0x90c] sm:$0xff]
    %v417 = vld [vmem:[%s1 + $0x914] sm:$0xf]
    %v418 = vld [vmem:[%s1 + $0x918] sm:$0xff]
    %v419 = vld [vmem:[%s1 + $0x920] sm:$0xf]
    %v420 = vld [vmem:[%s1 + $0x924] sm:$0xff]
    %v421 = vld [vmem:[%s1 + $0x92c] sm:$0xf]
    %v422 = vld [vmem:[%s1 + $0x930] sm:$0xff]
    %v423 = vld [vmem:[%s1 + $0x938] sm:$0xf]
    %v424 = vld [vmem:[%s1 + $0x93c] sm:$0xff]
    %v425 = vld [vmem:[%s1 + $0x944] sm:$0xf]
    %v426 = vld [vmem:[%s1 + $0x948] sm:$0xff]
    %v427 = vld [vmem:[%s1 + $0x950] sm:$0xf]
    %v428 = vld [vmem:[%s1 + $0x954] sm:$0xff]
    %v429 = vld [vmem:[%s1 + $0x95c] sm:$0xf]
    %v430 = vld [vmem:[%s2] sm:$0x7]
    %v432 = vlaneseq
    %v433 = vshrl.u32 %v432, 7
    %v434 = vsub.s32 0, %v433
    %v435 = vrot.slane %v430, %v434
    %v436 = vlaneseq
    %v437 = vshrl.u32 %v436, 7
    %v438 = vsub.s32 1, %v437
    %v439 = vrot.slane %v430, %v438
    %v440 = vlaneseq
    %v441 = vshrl.u32 %v440, 7
    %v442 = vsub.s32 2, %v441
    %v443 = vrot.slane %v430, %v442
    %v449 = vcombine.high %v28, %v28
    %v451 = vunpack.c.l.s4 1966171168
    %v452 = vunpack.c.0.s8 %v451
    %v453 = vlaneseq
    %v454 = vshrl.u32 %v453, 7
    %v455 = vsub.s32 %v452, %v454
    %v456 = vrot.slane %v28, %v455
    %v458 = vunpack.c.l.s4 1966171168
    %v459 = vunpack.c.0.s8 %v458
    %v460 = vlaneseq
    %v461 = vshrl.u32 %v460, 7
    %v462 = vsub.s32 %v459, %v461
    %v463 = vrot.slane %v449, %v462
    %v464 = vcombine.high %v456, %v456
    %v465 = vcombine.high %v463, %v463
    %v467 = vunpack.c.l.s4 1966171168
    %v468 = vunpack.c.0.s8 %v467
    %v469 = vlaneseq
    %v470 = vshrl.u32 %v469, 7
    %v471 = vsub.s32 %v468, %v470
    %v472 = vrot.slane %v456, %v471
    %v474 = vunpack.c.l.s4 1966171168
    %v475 = vunpack.c.0.s8 %v474
    %v476 = vlaneseq
    %v477 = vshrl.u32 %v476, 7
    %v478 = vsub.s32 %v475, %v477
    %v479 = vrot.slane %v463, %v478
    %v481 = vunpack.c.l.s4 1966171168
    %v482 = vunpack.c.0.s8 %v481
    %v483 = vlaneseq
    %v484 = vshrl.u32 %v483, 7
    %v485 = vsub.s32 %v482, %v484
    %v486 = vrot.slane %v464, %v485
    %v488 = vunpack.c.l.s4 1966171168
    %v489 = vunpack.c.0.s8 %v488
    %v490 = vlaneseq
    %v491 = vshrl.u32 %v490, 7
    %v492 = vsub.s32 %v489, %v491
    %v493 = vrot.slane %v465, %v492
    %v494 = vcombine.high %v472, %v472
    %v495 = vcombine.high %v479, %v479
    %v496 = vcombine.high %v486, %v486
    %v497 = vcombine.high %v493, %v493
    %v498 = vcombine.high %v29, %v29
    %v500 = vunpack.c.l.s4 1966171168
    %v501 = vunpack.c.0.s8 %v500
    %v502 = vlaneseq
    %v503 = vshrl.u32 %v502, 7
    %v504 = vsub.s32 %v501, %v503
    %v505 = vrot.slane %v29, %v504
    %v507 = vunpack.c.l.s4 1966171168
    %v508 = vunpack.c.0.s8 %v507
    %v509 = vlaneseq
    %v510 = vshrl.u32 %v509, 7
    %v511 = vsub.s32 %v508, %v510
    %v512 = vrot.slane %v498, %v511
    %v513 = vcombine.high %v505, %v505
    %v515 = vunpack.c.l.s4 1966171168
    %v516 = vunpack.c.0.s8 %v515
    %v517 = vlaneseq
    %v518 = vshrl.u32 %v517, 7
    %v519 = vsub.s32 %v516, %v518
    %v520 = vrot.slane %v505, %v519
    %v522 = vunpack.c.l.s4 1966171168
    %v523 = vunpack.c.0.s8 %v522
    %v524 = vlaneseq
    %v525 = vshrl.u32 %v524, 7
    %v526 = vsub.s32 %v523, %v525
    %v527 = vrot.slane %v512, %v526
    %v529 = vunpack.c.l.s4 1966171168
    %v530 = vunpack.c.0.s8 %v529
    %v531 = vlaneseq
    %v532 = vshrl.u32 %v531, 7
    %v533 = vsub.s32 %v530, %v532
    %v534 = vrot.slane %v513, %v533
    %v535 = vcombine.high %v520, %v520
    %v536 = vcombine.high %v534, %v534
    %v949 = vunpack.c.l.b16 %v30
    %v950 = vunpack.c.h.b16 %v30
    %v951 = vunpack.c.l.b16 %v31
    %v952 = vunpack.c.l.b16 %v32
    %v953 = vunpack.c.h.b16 %v32
    %v954 = vunpack.c.l.b16 %v33
    %v955 = vunpack.c.l.b16 %v34
    %v956 = vunpack.c.h.b16 %v34
    %v957 = vunpack.c.l.b16 %v35
    %v958 = vunpack.c.l.b16 %v36
    %v959 = vunpack.c.h.b16 %v36
    %v960 = vunpack.c.l.b16 %v37
    %v961 = vunpack.c.l.b16 %v38
    %v962 = vunpack.c.h.b16 %v38
    %v963 = vunpack.c.l.b16 %v39
    %v964 = vunpack.c.l.b16 %v40
    %v965 = vunpack.c.h.b16 %v40
    %v966 = vunpack.c.l.b16 %v41
    %v967 = vunpack.c.l.b16 %v42
    %v968 = vunpack.c.h.b16 %v42
    %v969 = vunpack.c.l.b16 %v43
    %v970 = vunpack.c.l.b16 %v44
    %v971 = vunpack.c.h.b16 %v44
    %v972 = vunpack.c.l.b16 %v45
    %v973 = vunpack.c.l.b16 %v46
    %v974 = vunpack.c.h.b16 %v46
    %v975 = vunpack.c.l.b16 %v47
    %v976 = vunpack.c.l.b16 %v48
    %v977 = vunpack.c.h.b16 %v48
    %v978 = vunpack.c.l.b16 %v49
    %v979 = vunpack.c.l.b16 %v50
    %v980 = vunpack.c.h.b16 %v50
    %v981 = vunpack.c.l.b16 %v51
    %v982 = vunpack.c.l.b16 %v52
    %v983 = vunpack.c.h.b16 %v52
    %v984 = vunpack.c.l.b16 %v53
    %v985 = vunpack.c.l.b16 %v54
    %v986 = vunpack.c.h.b16 %v54
    %v987 = vunpack.c.l.b16 %v55
    %v988 = vunpack.c.l.b16 %v56
    %v989 = vunpack.c.h.b16 %v56
    %v990 = vunpack.c.l.b16 %v57
    %v991 = vunpack.c.l.b16 %v58
    %v992 = vunpack.c.h.b16 %v58
    %v993 = vunpack.c.l.b16 %v59
    %v994 = vunpack.c.l.b16 %v60
    %v995 = vunpack.c.h.b16 %v60
    %v996 = vunpack.c.l.b16 %v61
    %v997 = vunpack.c.l.b16 %v62
    %v998 = vunpack.c.h.b16 %v62
    %v999 = vunpack.c.l.b16 %v63
    %v1000 = vunpack.c.l.b16 %v64
    %v1001 = vunpack.c.h.b16 %v64
    %v1002 = vunpack.c.l.b16 %v65
    %v1003 = vunpack.c.l.b16 %v66
    %v1004 = vunpack.c.h.b16 %v66
    %v1005 = vunpack.c.l.b16 %v67
    %v1006 = vunpack.c.l.b16 %v68
    %v1007 = vunpack.c.h.b16 %v68
    %v1008 = vunpack.c.l.b16 %v69
    %v1009 = vunpack.c.l.b16 %v70
    %v1010 = vunpack.c.h.b16 %v70
    %v1011 = vunpack.c.l.b16 %v71
    %v1012 = vunpack.c.l.b16 %v72
    %v1013 = vunpack.c.h.b16 %v72
    %v1014 = vunpack.c.l.b16 %v73
    %v1015 = vunpack.c.l.b16 %v74
    %v1016 = vunpack.c.h.b16 %v74
    %v1017 = vunpack.c.l.b16 %v75
    %v1018 = vunpack.c.l.b16 %v76
    %v1019 = vunpack.c.h.b16 %v76
    %v1020 = vunpack.c.l.b16 %v77
    %v1021 = vunpack.c.l.b16 %v78
    %v1022 = vunpack.c.h.b16 %v78
    %v1023 = vunpack.c.l.b16 %v79
    %v1024 = vunpack.c.l.b16 %v80
    %v1025 = vunpack.c.h.b16 %v80
    %v1026 = vunpack.c.l.b16 %v81
    %v1027 = vunpack.c.l.b16 %v82
    %v1028 = vunpack.c.h.b16 %v82
    %v1029 = vunpack.c.l.b16 %v83
    %v1030 = vunpack.c.l.b16 %v84
    %v1031 = vunpack.c.h.b16 %v84
    %v1032 = vunpack.c.l.b16 %v85
    %v1033 = vunpack.c.l.b16 %v86
    %v1034 = vunpack.c.h.b16 %v86
    %v1035 = vunpack.c.l.b16 %v87
    %v1036 = vunpack.c.l.b16 %v88
    %v1037 = vunpack.c.h.b16 %v88
    %v1038 = vunpack.c.l.b16 %v89
    %v1039 = vunpack.c.l.b16 %v90
    %v1040 = vunpack.c.h.b16 %v90
    %v1041 = vunpack.c.l.b16 %v91
    %v1042 = vunpack.c.l.b16 %v92
    %v1043 = vunpack.c.h.b16 %v92
    %v1044 = vunpack.c.l.b16 %v93
    %v1045 = vunpack.c.l.b16 %v94
    %v1046 = vunpack.c.h.b16 %v94
    %v1047 = vunpack.c.l.b16 %v95
    %v1048 = vunpack.c.l.b16 %v96
    %v1049 = vunpack.c.h.b16 %v96
    %v1050 = vunpack.c.l.b16 %v97
    %v1051 = vunpack.c.l.b16 %v98
    %v1052 = vunpack.c.h.b16 %v98
    %v1053 = vunpack.c.l.b16 %v99
    %v1054 = vunpack.c.l.b16 %v100
    %v1055 = vunpack.c.h.b16 %v100
    %v1056 = vunpack.c.l.b16 %v101
    %v1057 = vunpack.c.l.b16 %v102
    %v1058 = vunpack.c.h.b16 %v102
    %v1059 = vunpack.c.l.b16 %v103
    %v1060 = vunpack.c.l.b16 %v104
    %v1061 = vunpack.c.h.b16 %v104
    %v1062 = vunpack.c.l.b16 %v105
    %v1063 = vunpack.c.l.b16 %v106
    %v1064 = vunpack.c.h.b16 %v106
    %v1065 = vunpack.c.l.b16 %v107
    %v1066 = vunpack.c.l.b16 %v108
    %v1067 = vunpack.c.h.b16 %v108
    %v1068 = vunpack.c.l.b16 %v109
    %v1069 = vunpack.c.l.b16 %v110
    %v1070 = vunpack.c.h.b16 %v110
    %v1071 = vunpack.c.l.b16 %v111
    %v1072 = vunpack.c.l.b16 %v112
    %v1073 = vunpack.c.h.b16 %v112
    %v1074 = vunpack.c.l.b16 %v113
    %v1075 = vunpack.c.l.b16 %v114
    %v1076 = vunpack.c.h.b16 %v114
    %v1077 = vunpack.c.l.b16 %v115
    %v1078 = vunpack.c.l.b16 %v116
    %v1079 = vunpack.c.h.b16 %v116
    %v1080 = vunpack.c.l.b16 %v117
    %v1081 = vunpack.c.l.b16 %v118
    %v1082 = vunpack.c.h.b16 %v118
    %v1083 = vunpack.c.l.b16 %v119
    %v1084 = vunpack.c.l.b16 %v120
    %v1085 = vunpack.c.h.b16 %v120
    %v1086 = vunpack.c.l.b16 %v121
    %v1087 = vunpack.c.l.b16 %v122
    %v1088 = vunpack.c.h.b16 %v122
    %v1089 = vunpack.c.l.b16 %v123
    %v1090 = vunpack.c.l.b16 %v124
    %v1091 = vunpack.c.h.b16 %v124
    %v1092 = vunpack.c.l.b16 %v125
    %v1093 = vunpack.c.l.b16 %v126
    %v1094 = vunpack.c.h.b16 %v126
    %v1095 = vunpack.c.l.b16 %v127
    %v1096 = vunpack.c.l.b16 %v128
    %v1097 = vunpack.c.h.b16 %v128
    %v1098 = vunpack.c.l.b16 %v129
    %v1099 = vunpack.c.l.b16 %v130
    %v1100 = vunpack.c.h.b16 %v130
    %v1101 = vunpack.c.l.b16 %v131
    %v1102 = vunpack.c.l.b16 %v132
    %v1103 = vunpack.c.h.b16 %v132
    %v1104 = vunpack.c.l.b16 %v133
    %v1105 = vunpack.c.l.b16 %v134
    %v1106 = vunpack.c.h.b16 %v134
    %v1107 = vunpack.c.l.b16 %v135
    %v1108 = vunpack.c.l.b16 %v136
    %v1109 = vunpack.c.h.b16 %v136
    %v1110 = vunpack.c.l.b16 %v137
    %v1111 = vunpack.c.l.b16 %v138
    %v1112 = vunpack.c.h.b16 %v138
    %v1113 = vunpack.c.l.b16 %v139
    %v1114 = vunpack.c.l.b16 %v140
    %v1115 = vunpack.c.h.b16 %v140
    %v1116 = vunpack.c.l.b16 %v141
    %v1117 = vunpack.c.l.b16 %v142
    %v1118 = vunpack.c.h.b16 %v142
    %v1119 = vunpack.c.l.b16 %v143
    %v1120 = vunpack.c.l.b16 %v144
    %v1121 = vunpack.c.h.b16 %v144
    %v1122 = vunpack.c.l.b16 %v145
    %v1123 = vunpack.c.l.b16 %v146
    %v1124 = vunpack.c.h.b16 %v146
    %v1125 = vunpack.c.l.b16 %v147
    %v1126 = vunpack.c.l.b16 %v148
    %v1127 = vunpack.c.h.b16 %v148
    %v1128 = vunpack.c.l.b16 %v149
    %v1129 = vunpack.c.l.b16 %v150
    %v1130 = vunpack.c.h.b16 %v150
    %v1131 = vunpack.c.l.b16 %v151
    %v1132 = vunpack.c.l.b16 %v152
    %v1133 = vunpack.c.h.b16 %v152
    %v1134 = vunpack.c.l.b16 %v153
    %v1135 = vunpack.c.l.b16 %v154
    %v1136 = vunpack.c.h.b16 %v154
    %v1137 = vunpack.c.l.b16 %v155
    %v1138 = vunpack.c.l.b16 %v156
    %v1139 = vunpack.c.h.b16 %v156
    %v1140 = vunpack.c.l.b16 %v157
    %v1141 = vunpack.c.l.b16 %v158
    %v1142 = vunpack.c.h.b16 %v158
    %v1143 = vunpack.c.l.b16 %v159
    %v1144 = vunpack.c.l.b16 %v160
    %v1145 = vunpack.c.h.b16 %v160
    %v1146 = vunpack.c.l.b16 %v161
    %v1147 = vunpack.c.l.b16 %v162
    %v1148 = vunpack.c.h.b16 %v162
    %v1149 = vunpack.c.l.b16 %v163
    %v1150 = vunpack.c.l.b16 %v164
    %v1151 = vunpack.c.h.b16 %v164
    %v1152 = vunpack.c.l.b16 %v165
    %v1153 = vunpack.c.l.b16 %v166
    %v1154 = vunpack.c.h.b16 %v166
    %v1155 = vunpack.c.l.b16 %v167
    %v1156 = vunpack.c.l.b16 %v168
    %v1157 = vunpack.c.h.b16 %v168
    %v1158 = vunpack.c.l.b16 %v169
    %v1159 = vunpack.c.l.b16 %v170
    %v1160 = vunpack.c.h.b16 %v170
    %v1161 = vunpack.c.l.b16 %v171
    %v1162 = vunpack.c.l.b16 %v172
    %v1163 = vunpack.c.h.b16 %v172
    %v1164 = vunpack.c.l.b16 %v173
    %v1165 = vunpack.c.l.b16 %v174
    %v1166 = vunpack.c.h.b16 %v174
    %v1167 = vunpack.c.l.b16 %v175
    %v1168 = vunpack.c.l.b16 %v176
    %v1169 = vunpack.c.h.b16 %v176
    %v1170 = vunpack.c.l.b16 %v177
    %v1171 = vunpack.c.l.b16 %v178
    %v1172 = vunpack.c.h.b16 %v178
    %v1173 = vunpack.c.l.b16 %v179
    %v1174 = vunpack.c.l.b16 %v180
    %v1175 = vunpack.c.h.b16 %v180
    %v1176 = vunpack.c.l.b16 %v181
    %v1177 = vunpack.c.l.b16 %v182
    %v1178 = vunpack.c.h.b16 %v182
    %v1179 = vunpack.c.l.b16 %v183
    %v1180 = vunpack.c.l.b16 %v184
    %v1181 = vunpack.c.h.b16 %v184
    %v1182 = vunpack.c.l.b16 %v185
    %v1183 = vunpack.c.l.b16 %v186
    %v1184 = vunpack.c.h.b16 %v186
    %v1185 = vunpack.c.l.b16 %v187
    %v1186 = vunpack.c.l.b16 %v188
    %v1187 = vunpack.c.h.b16 %v188
    %v1188 = vunpack.c.l.b16 %v189
    %v1189 = vunpack.c.l.b16 %v190
    %v1190 = vunpack.c.h.b16 %v190
    %v1191 = vunpack.c.l.b16 %v191
    %v1192 = vunpack.c.l.b16 %v192
    %v1193 = vunpack.c.h.b16 %v192
    %v1194 = vunpack.c.l.b16 %v193
    %v1195 = vunpack.c.l.b16 %v194
    %v1196 = vunpack.c.h.b16 %v194
    %v1197 = vunpack.c.l.b16 %v195
    %v1198 = vunpack.c.l.b16 %v196
    %v1199 = vunpack.c.h.b16 %v196
    %v1200 = vunpack.c.l.b16 %v197
    %v1201 = vunpack.c.l.b16 %v198
    %v1202 = vunpack.c.h.b16 %v198
    %v1203 = vunpack.c.l.b16 %v199
    %v1204 = vunpack.c.l.b16 %v200
    %v1205 = vunpack.c.h.b16 %v200
    %v1206 = vunpack.c.l.b16 %v201
    %v1207 = vunpack.c.l.b16 %v202
    %v1208 = vunpack.c.h.b16 %v202
    %v1209 = vunpack.c.l.b16 %v203
    %v1210 = vunpack.c.l.b16 %v204
    %v1211 = vunpack.c.h.b16 %v204
    %v1212 = vunpack.c.l.b16 %v205
    %v1213 = vunpack.c.l.b16 %v206
    %v1214 = vunpack.c.h.b16 %v206
    %v1215 = vunpack.c.l.b16 %v207
    %v1216 = vunpack.c.l.b16 %v208
    %v1217 = vunpack.c.h.b16 %v208
    %v1218 = vunpack.c.l.b16 %v209
    %v1219 = vunpack.c.l.b16 %v210
    %v1220 = vunpack.c.h.b16 %v210
    %v1221 = vunpack.c.l.b16 %v211
    %v1222 = vunpack.c.l.b16 %v212
    %v1223 = vunpack.c.h.b16 %v212
    %v1224 = vunpack.c.l.b16 %v213
    %v1225 = vunpack.c.l.b16 %v214
    %v1226 = vunpack.c.h.b16 %v214
    %v1227 = vunpack.c.l.b16 %v215
    %v1228 = vunpack.c.l.b16 %v216
    %v1229 = vunpack.c.h.b16 %v216
    %v1230 = vunpack.c.l.b16 %v217
    %v1231 = vunpack.c.l.b16 %v218
    %v1232 = vunpack.c.h.b16 %v218
    %v1233 = vunpack.c.l.b16 %v219
    %v1234 = vunpack.c.l.b16 %v220
    %v1235 = vunpack.c.h.b16 %v220
    %v1236 = vunpack.c.l.b16 %v221
    %v1237 = vunpack.c.l.b16 %v222
    %v1238 = vunpack.c.h.b16 %v222
    %v1239 = vunpack.c.l.b16 %v223
    %v1240 = vunpack.c.l.b16 %v224
    %v1241 = vunpack.c.h.b16 %v224
    %v1242 = vunpack.c.l.b16 %v225
    %v1243 = vunpack.c.l.b16 %v226
    %v1244 = vunpack.c.h.b16 %v226
    %v1245 = vunpack.c.l.b16 %v227
    %v1246 = vunpack.c.l.b16 %v228
    %v1247 = vunpack.c.h.b16 %v228
    %v1248 = vunpack.c.l.b16 %v229
    %v1249 = vunpack.c.l.b16 %v230
    %v1250 = vunpack.c.h.b16 %v230
    %v1251 = vunpack.c.l.b16 %v231
    %v1252 = vunpack.c.l.b16 %v232
    %v1253 = vunpack.c.h.b16 %v232
    %v1254 = vunpack.c.l.b16 %v233
    %v1255 = vunpack.c.l.b16 %v234
    %v1256 = vunpack.c.h.b16 %v234
    %v1257 = vunpack.c.l.b16 %v235
    %v1258 = vunpack.c.l.b16 %v236
    %v1259 = vunpack.c.h.b16 %v236
    %v1260 = vunpack.c.l.b16 %v237
    %v1261 = vunpack.c.l.b16 %v238
    %v1262 = vunpack.c.h.b16 %v238
    %v1263 = vunpack.c.l.b16 %v239
    %v1264 = vunpack.c.l.b16 %v240
    %v1265 = vunpack.c.h.b16 %v240
    %v1266 = vunpack.c.l.b16 %v241
    %v1267 = vunpack.c.l.b16 %v242
    %v1268 = vunpack.c.h.b16 %v242
    %v1269 = vunpack.c.l.b16 %v243
    %v1270 = vunpack.c.l.b16 %v244
    %v1271 = vunpack.c.h.b16 %v244
    %v1272 = vunpack.c.l.b16 %v245
    %v1273 = vunpack.c.l.b16 %v246
    %v1274 = vunpack.c.h.b16 %v246
    %v1275 = vunpack.c.l.b16 %v247
    %v1276 = vunpack.c.l.b16 %v248
    %v1277 = vunpack.c.h.b16 %v248
    %v1278 = vunpack.c.l.b16 %v249
    %v1279 = vunpack.c.l.b16 %v250
    %v1280 = vunpack.c.h.b16 %v250
    %v1281 = vunpack.c.l.b16 %v251
    %v1282 = vunpack.c.l.b16 %v252
    %v1283 = vunpack.c.h.b16 %v252
    %v1284 = vunpack.c.l.b16 %v253
    %v1285 = vunpack.c.l.b16 %v254
    %v1286 = vunpack.c.h.b16 %v254
    %v1287 = vunpack.c.l.b16 %v255
    %v1288 = vunpack.c.l.b16 %v256
    %v1289 = vunpack.c.h.b16 %v256
    %v1290 = vunpack.c.l.b16 %v257
    %v1291 = vunpack.c.l.b16 %v258
    %v1292 = vunpack.c.h.b16 %v258
    %v1293 = vunpack.c.l.b16 %v259
    %v1294 = vunpack.c.l.b16 %v260
    %v1295 = vunpack.c.h.b16 %v260
    %v1296 = vunpack.c.l.b16 %v261
    %v1297 = vunpack.c.l.b16 %v262
    %v1298 = vunpack.c.h.b16 %v262
    %v1299 = vunpack.c.l.b16 %v263
    %v1300 = vunpack.c.l.b16 %v264
    %v1301 = vunpack.c.h.b16 %v264
    %v1302 = vunpack.c.l.b16 %v265
    %v1303 = vunpack.c.l.b16 %v266
    %v1304 = vunpack.c.h.b16 %v266
    %v1305 = vunpack.c.l.b16 %v267
    %v1306 = vunpack.c.l.b16 %v268
    %v1307 = vunpack.c.h.b16 %v268
    %v1308 = vunpack.c.l.b16 %v269
    %v1309 = vunpack.c.l.b16 %v270
    %v1310 = vunpack.c.h.b16 %v270
    %v1311 = vunpack.c.l.b16 %v271
    %v1312 = vunpack.c.l.b16 %v272
    %v1313 = vunpack.c.h.b16 %v272
    %v1314 = vunpack.c.l.b16 %v273
    %v1315 = vunpack.c.l.b16 %v274
    %v1316 = vunpack.c.h.b16 %v274
    %v1317 = vunpack.c.l.b16 %v275
    %v1318 = vunpack.c.l.b16 %v276
    %v1319 = vunpack.c.h.b16 %v276
    %v1320 = vunpack.c.l.b16 %v277
    %v1321 = vunpack.c.l.b16 %v278
    %v1322 = vunpack.c.h.b16 %v278
    %v1323 = vunpack.c.l.b16 %v279
    %v1324 = vunpack.c.l.b16 %v280
    %v1325 = vunpack.c.h.b16 %v280
    %v1326 = vunpack.c.l.b16 %v281
    %v1327 = vunpack.c.l.b16 %v282
    %v1328 = vunpack.c.h.b16 %v282
    %v1329 = vunpack.c.l.b16 %v283
    %v1330 = vunpack.c.l.b16 %v284
    %v1331 = vunpack.c.h.b16 %v284
    %v1332 = vunpack.c.l.b16 %v285
    %v1333 = vunpack.c.l.b16 %v286
    %v1334 = vunpack.c.h.b16 %v286
    %v1335 = vunpack.c.l.b16 %v287
    %v1336 = vunpack.c.l.b16 %v288
    %v1337 = vunpack.c.h.b16 %v288
    %v1338 = vunpack.c.l.b16 %v289
    %v1339 = vunpack.c.l.b16 %v290
    %v1340 = vunpack.c.h.b16 %v290
    %v1341 = vunpack.c.l.b16 %v291
    %v1342 = vunpack.c.l.b16 %v292
    %v1343 = vunpack.c.h.b16 %v292
    %v1344 = vunpack.c.l.b16 %v293
    %v1345 = vunpack.c.l.b16 %v294
    %v1346 = vunpack.c.h.b16 %v294
    %v1347 = vunpack.c.l.b16 %v295
    %v1348 = vunpack.c.l.b16 %v296
    %v1349 = vunpack.c.h.b16 %v296
    %v1350 = vunpack.c.l.b16 %v297
    %v1351 = vunpack.c.l.b16 %v298
    %v1352 = vunpack.c.h.b16 %v298
    %v1353 = vunpack.c.l.b16 %v299
    %v1354 = vunpack.c.l.b16 %v300
    %v1355 = vunpack.c.h.b16 %v300
    %v1356 = vunpack.c.l.b16 %v301
    %v1357 = vunpack.c.l.b16 %v302
    %v1358 = vunpack.c.h.b16 %v302
    %v1359 = vunpack.c.l.b16 %v303
    %v1360 = vunpack.c.l.b16 %v304
    %v1361 = vunpack.c.h.b16 %v304
    %v1362 = vunpack.c.l.b16 %v305
    %v1363 = vunpack.c.l.b16 %v306
    %v1364 = vunpack.c.h.b16 %v306
    %v1365 = vunpack.c.l.b16 %v307
    %v1366 = vunpack.c.l.b16 %v308
    %v1367 = vunpack.c.h.b16 %v308
    %v1368 = vunpack.c.l.b16 %v309
    %v1369 = vunpack.c.l.b16 %v310
    %v1370 = vunpack.c.h.b16 %v310
    %v1371 = vunpack.c.l.b16 %v311
    %v1372 = vunpack.c.l.b16 %v312
    %v1373 = vunpack.c.h.b16 %v312
    %v1374 = vunpack.c.l.b16 %v313
    %v1375 = vunpack.c.l.b16 %v314
    %v1376 = vunpack.c.h.b16 %v314
    %v1377 = vunpack.c.l.b16 %v315
    %v1378 = vunpack.c.l.b16 %v316
    %v1379 = vunpack.c.h.b16 %v316
    %v1380 = vunpack.c.l.b16 %v317
    %v1381 = vunpack.c.l.b16 %v318
    %v1382 = vunpack.c.h.b16 %v318
    %v1383 = vunpack.c.l.b16 %v319
    %v1384 = vunpack.c.l.b16 %v320
    %v1385 = vunpack.c.h.b16 %v320
    %v1386 = vunpack.c.l.b16 %v321
    %v1387 = vunpack.c.l.b16 %v322
    %v1388 = vunpack.c.h.b16 %v322
    %v1389 = vunpack.c.l.b16 %v323
    %v1390 = vunpack.c.l.b16 %v324
    %v1391 = vunpack.c.h.b16 %v324
    %v1392 = vunpack.c.l.b16 %v325
    %v1393 = vunpack.c.l.b16 %v326
    %v1394 = vunpack.c.h.b16 %v326
    %v1395 = vunpack.c.l.b16 %v327
    %v1396 = vunpack.c.l.b16 %v328
    %v1397 = vunpack.c.h.b16 %v328
    %v1398 = vunpack.c.l.b16 %v329
    %v1399 = vunpack.c.l.b16 %v330
    %v1400 = vunpack.c.h.b16 %v330
    %v1401 = vunpack.c.l.b16 %v331
    %v1402 = vunpack.c.l.b16 %v332
    %v1403 = vunpack.c.h.b16 %v332
    %v1404 = vunpack.c.l.b16 %v333
    %v1405 = vunpack.c.l.b16 %v334
    %v1406 = vunpack.c.h.b16 %v334
    %v1407 = vunpack.c.l.b16 %v335
    %v1408 = vunpack.c.l.b16 %v336
    %v1409 = vunpack.c.h.b16 %v336
    %v1410 = vunpack.c.l.b16 %v337
    %v1411 = vunpack.c.l.b16 %v338
    %v1412 = vunpack.c.h.b16 %v338
    %v1413 = vunpack.c.l.b16 %v339
    %v1414 = vunpack.c.l.b16 %v340
    %v1415 = vunpack.c.h.b16 %v340
    %v1416 = vunpack.c.l.b16 %v341
    %v1417 = vunpack.c.l.b16 %v342
    %v1418 = vunpack.c.h.b16 %v342
    %v1419 = vunpack.c.l.b16 %v343
    %v1420 = vunpack.c.l.b16 %v344
    %v1421 = vunpack.c.h.b16 %v344
    %v1422 = vunpack.c.l.b16 %v345
    %v1423 = vunpack.c.l.b16 %v346
    %v1424 = vunpack.c.h.b16 %v346
    %v1425 = vunpack.c.l.b16 %v347
    %v1426 = vunpack.c.l.b16 %v348
    %v1427 = vunpack.c.h.b16 %v348
    %v1428 = vunpack.c.l.b16 %v349
    %v1429 = vunpack.c.l.b16 %v350
    %v1430 = vunpack.c.h.b16 %v350
    %v1431 = vunpack.c.l.b16 %v351
    %v1432 = vunpack.c.l.b16 %v352
    %v1433 = vunpack.c.h.b16 %v352
    %v1434 = vunpack.c.l.b16 %v353
    %v1435 = vunpack.c.l.b16 %v354
    %v1436 = vunpack.c.h.b16 %v354
    %v1437 = vunpack.c.l.b16 %v355
    %v1438 = vunpack.c.l.b16 %v356
    %v1439 = vunpack.c.h.b16 %v356
    %v1440 = vunpack.c.l.b16 %v357
    %v1441 = vunpack.c.l.b16 %v358
    %v1442 = vunpack.c.h.b16 %v358
    %v1443 = vunpack.c.l.b16 %v359
    %v1444 = vunpack.c.l.b16 %v360
    %v1445 = vunpack.c.h.b16 %v360
    %v1446 = vunpack.c.l.b16 %v361
    %v1447 = vunpack.c.l.b16 %v362
    %v1448 = vunpack.c.h.b16 %v362
    %v1449 = vunpack.c.l.b16 %v363
    %v1450 = vunpack.c.l.b16 %v364
    %v1451 = vunpack.c.h.b16 %v364
    %v1452 = vunpack.c.l.b16 %v365
    %v1453 = vunpack.c.l.b16 %v366
    %v1454 = vunpack.c.h.b16 %v366
    %v1455 = vunpack.c.l.b16 %v367
    %v1456 = vunpack.c.l.b16 %v368
    %v1457 = vunpack.c.h.b16 %v368
    %v1458 = vunpack.c.l.b16 %v369
    %v1459 = vunpack.c.l.b16 %v370
    %v1460 = vunpack.c.h.b16 %v370
    %v1461 = vunpack.c.l.b16 %v371
    %v1462 = vunpack.c.l.b16 %v372
    %v1463 = vunpack.c.h.b16 %v372
    %v1464 = vunpack.c.l.b16 %v373
    %v1465 = vunpack.c.l.b16 %v374
    %v1466 = vunpack.c.h.b16 %v374
    %v1467 = vunpack.c.l.b16 %v375
    %v1468 = vunpack.c.l.b16 %v376
    %v1469 = vunpack.c.h.b16 %v376
    %v1470 = vunpack.c.l.b16 %v377
    %v1471 = vunpack.c.l.b16 %v378
    %v1472 = vunpack.c.h.b16 %v378
    %v1473 = vunpack.c.l.b16 %v379
    %v1474 = vunpack.c.l.b16 %v380
    %v1475 = vunpack.c.h.b16 %v380
    %v1476 = vunpack.c.l.b16 %v381
    %v1477 = vunpack.c.l.b16 %v382
    %v1478 = vunpack.c.h.b16 %v382
    %v1479 = vunpack.c.l.b16 %v383
    %v1480 = vunpack.c.l.b16 %v384
    %v1481 = vunpack.c.h.b16 %v384
    %v1482 = vunpack.c.l.b16 %v385
    %v1483 = vunpack.c.l.b16 %v386
    %v1484 = vunpack.c.h.b16 %v386
    %v1485 = vunpack.c.l.b16 %v387
    %v1486 = vunpack.c.l.b16 %v388
    %v1487 = vunpack.c.h.b16 %v388
    %v1488 = vunpack.c.l.b16 %v389
    %v1489 = vunpack.c.l.b16 %v390
    %v1490 = vunpack.c.h.b16 %v390
    %v1491 = vunpack.c.l.b16 %v391
    %v1492 = vunpack.c.l.b16 %v392
    %v1493 = vunpack.c.h.b16 %v392
    %v1494 = vunpack.c.l.b16 %v393
    %v1495 = vunpack.c.l.b16 %v394
    %v1496 = vunpack.c.h.b16 %v394
    %v1497 = vunpack.c.l.b16 %v395
    %v1498 = vunpack.c.l.b16 %v396
    %v1499 = vunpack.c.h.b16 %v396
    %v1500 = vunpack.c.l.b16 %v397
    %v1501 = vunpack.c.l.b16 %v398
    %v1502 = vunpack.c.h.b16 %v398
    %v1503 = vunpack.c.l.b16 %v399
    %v1504 = vunpack.c.l.b16 %v400
    %v1505 = vunpack.c.h.b16 %v400
    %v1506 = vunpack.c.l.b16 %v401
    %v1507 = vunpack.c.l.b16 %v402
    %v1508 = vunpack.c.h.b16 %v402
    %v1509 = vunpack.c.l.b16 %v403
    %v1510 = vunpack.c.l.b16 %v404
    %v1511 = vunpack.c.h.b16 %v404
    %v1512 = vunpack.c.l.b16 %v405
    %v1513 = vunpack.c.l.b16 %v406
    %v1514 = vunpack.c.h.b16 %v406
    %v1515 = vunpack.c.l.b16 %v407
    %v1516 = vunpack.c.l.b16 %v408
    %v1517 = vunpack.c.h.b16 %v408
    %v1518 = vunpack.c.l.b16 %v409
    %v1519 = vunpack.c.l.b16 %v410
    %v1520 = vunpack.c.h.b16 %v410
    %v1521 = vunpack.c.l.b16 %v411
    %v1522 = vunpack.c.l.b16 %v412
    %v1523 = vunpack.c.h.b16 %v412
    %v1524 = vunpack.c.l.b16 %v413
    %v1525 = vunpack.c.l.b16 %v414
    %v1526 = vunpack.c.h.b16 %v414
    %v1527 = vunpack.c.l.b16 %v415
    %v1528 = vunpack.c.l.b16 %v416
    %v1529 = vunpack.c.h.b16 %v416
    %v1530 = vunpack.c.l.b16 %v417
    %v1531 = vunpack.c.l.b16 %v418
    %v1532 = vunpack.c.h.b16 %v418
    %v1533 = vunpack.c.l.b16 %v419
    %v1534 = vunpack.c.l.b16 %v420
    %v1535 = vunpack.c.h.b16 %v420
    %v1536 = vunpack.c.l.b16 %v421
    %v1537 = vunpack.c.l.b16 %v422
    %v1538 = vunpack.c.h.b16 %v422
    %v1539 = vunpack.c.l.b16 %v423
    %v1540 = vunpack.c.l.b16 %v424
    %v1541 = vunpack.c.h.b16 %v424
    %v1542 = vunpack.c.l.b16 %v425
    %v1543 = vunpack.c.l.b16 %v426
    %v1544 = vunpack.c.h.b16 %v426
    %v1545 = vunpack.c.l.b16 %v427
    %v1546 = vunpack.c.l.b16 %v428
    %v1547 = vunpack.c.h.b16 %v428
    %v1548 = vunpack.c.l.b16 %v429
    %v1549 = vpack.c.b16 %v952, %v949
    %v1550 = vpack.c.b16 %v953, %v950
    %v1551 = vpack.c.b16 %v954, %v951
    %v1552 = vpack.c.b16 %v958, %v955
    %v1553 = vpack.c.b16 %v959, %v956
    %v1554 = vpack.c.b16 %v960, %v957
    %v1555 = vpack.c.b16 %v964, %v961
    %v1556 = vpack.c.b16 %v965, %v962
    %v1557 = vpack.c.b16 %v966, %v963
    %v1558 = vpack.c.b16 %v970, %v967
    %v1559 = vpack.c.b16 %v971, %v968
    %v1560 = vpack.c.b16 %v972, %v969
    %v1561 = vpack.c.b16 %v976, %v973
    %v1562 = vpack.c.b16 %v977, %v974
    %v1563 = vpack.c.b16 %v978, %v975
    %v1564 = vpack.c.b16 %v982, %v979
    %v1565 = vpack.c.b16 %v983, %v980
    %v1566 = vpack.c.b16 %v984, %v981
    %v1567 = vpack.c.b16 %v988, %v985
    %v1568 = vpack.c.b16 %v989, %v986
    %v1569 = vpack.c.b16 %v990, %v987
    %v1570 = vpack.c.b16 %v994, %v991
    %v1571 = vpack.c.b16 %v995, %v992
    %v1572 = vpack.c.b16 %v996, %v993
    %v1573 = vpack.c.b16 %v1000, %v997
    %v1574 = vpack.c.b16 %v1001, %v998
    %v1575 = vpack.c.b16 %v1002, %v999
    %v1576 = vpack.c.b16 %v1006, %v1003
    %v1577 = vpack.c.b16 %v1007, %v1004
    %v1578 = vpack.c.b16 %v1008, %v1005
    %v1579 = vpack.c.b16 %v1012, %v1009
    %v1580 = vpack.c.b16 %v1013, %v1010
    %v1581 = vpack.c.b16 %v1014, %v1011
    %v1582 = vpack.c.b16 %v1018, %v1015
    %v1583 = vpack.c.b16 %v1019, %v1016
    %v1584 = vpack.c.b16 %v1020, %v1017
    %v1585 = vpack.c.b16 %v1024, %v1021
    %v1586 = vpack.c.b16 %v1025, %v1022
    %v1587 = vpack.c.b16 %v1026, %v1023
    %v1588 = vpack.c.b16 %v1030, %v1027
    %v1589 = vpack.c.b16 %v1031, %v1028
    %v1590 = vpack.c.b16 %v1032, %v1029
    %v1591 = vpack.c.b16 %v1036, %v1033
    %v1592 = vpack.c.b16 %v1037, %v1034
    %v1593 = vpack.c.b16 %v1038, %v1035
    %v1594 = vpack.c.b16 %v1042, %v1039
    %v1595 = vpack.c.b16 %v1043, %v1040
    %v1596 = vpack.c.b16 %v1044, %v1041
    %v1597 = vpack.c.b16 %v1048, %v1045
    %v1598 = vpack.c.b16 %v1049, %v1046
    %v1599 = vpack.c.b16 %v1050, %v1047
    %v1600 = vpack.c.b16 %v1054, %v1051
    %v1601 = vpack.c.b16 %v1055, %v1052
    %v1602 = vpack.c.b16 %v1056, %v1053
    %v1603 = vpack.c.b16 %v1060, %v1057
    %v1604 = vpack.c.b16 %v1061, %v1058
    %v1605 = vpack.c.b16 %v1062, %v1059
    %v1606 = vpack.c.b16 %v1066, %v1063
    %v1607 = vpack.c.b16 %v1067, %v1064
    %v1608 = vpack.c.b16 %v1068, %v1065
    %v1609 = vpack.c.b16 %v1072, %v1069
    %v1610 = vpack.c.b16 %v1073, %v1070
    %v1611 = vpack.c.b16 %v1074, %v1071
    %v1612 = vpack.c.b16 %v1078, %v1075
    %v1613 = vpack.c.b16 %v1079, %v1076
    %v1614 = vpack.c.b16 %v1080, %v1077
    %v1615 = vpack.c.b16 %v1084, %v1081
    %v1616 = vpack.c.b16 %v1085, %v1082
    %v1617 = vpack.c.b16 %v1086, %v1083
    %v1618 = vpack.c.b16 %v1090, %v1087
    %v1619 = vpack.c.b16 %v1091, %v1088
    %v1620 = vpack.c.b16 %v1092, %v1089
    %v1621 = vpack.c.b16 %v1096, %v1093
    %v1622 = vpack.c.b16 %v1097, %v1094
    %v1623 = vpack.c.b16 %v1098, %v1095
    %v1624 = vpack.c.b16 %v1102, %v1099
    %v1625 = vpack.c.b16 %v1103, %v1100
    %v1626 = vpack.c.b16 %v1104, %v1101
    %v1627 = vpack.c.b16 %v1108, %v1105
    %v1628 = vpack.c.b16 %v1109, %v1106
    %v1629 = vpack.c.b16 %v1110, %v1107
    %v1630 = vpack.c.b16 %v1114, %v1111
    %v1631 = vpack.c.b16 %v1115, %v1112
    %v1632 = vpack.c.b16 %v1116, %v1113
    %v1633 = vpack.c.b16 %v1120, %v1117
    %v1634 = vpack.c.b16 %v1121, %v1118
    %v1635 = vpack.c.b16 %v1122, %v1119
    %v1636 = vpack.c.b16 %v1126, %v1123
    %v1637 = vpack.c.b16 %v1127, %v1124
    %v1638 = vpack.c.b16 %v1128, %v1125
    %v1639 = vpack.c.b16 %v1132, %v1129
    %v1640 = vpack.c.b16 %v1133, %v1130
    %v1641 = vpack.c.b16 %v1134, %v1131
    %v1642 = vpack.c.b16 %v1138, %v1135
    %v1643 = vpack.c.b16 %v1139, %v1136
    %v1644 = vpack.c.b16 %v1140, %v1137
    %v1645 = vpack.c.b16 %v1144, %v1141
    %v1646 = vpack.c.b16 %v1145, %v1142
    %v1647 = vpack.c.b16 %v1146, %v1143
    %v1648 = vpack.c.b16 %v1150, %v1147
    %v1649 = vpack.c.b16 %v1151, %v1148
    %v1650 = vpack.c.b16 %v1152, %v1149
    %v1651 = vpack.c.b16 %v1156, %v1153
    %v1652 = vpack.c.b16 %v1157, %v1154
    %v1653 = vpack.c.b16 %v1158, %v1155
    %v1654 = vpack.c.b16 %v1162, %v1159
    %v1655 = vpack.c.b16 %v1163, %v1160
    %v1656 = vpack.c.b16 %v1164, %v1161
    %v1657 = vpack.c.b16 %v1168, %v1165
    %v1658 = vpack.c.b16 %v1169, %v1166
    %v1659 = vpack.c.b16 %v1170, %v1167
    %v1660 = vpack.c.b16 %v1174, %v1171
    %v1661 = vpack.c.b16 %v1175, %v1172
    %v1662 = vpack.c.b16 %v1176, %v1173
    %v1663 = vpack.c.b16 %v1180, %v1177
    %v1664 = vpack.c.b16 %v1181, %v1178
    %v1665 = vpack.c.b16 %v1182, %v1179
    %v1666 = vpack.c.b16 %v1186, %v1183
    %v1667 = vpack.c.b16 %v1187, %v1184
    %v1668 = vpack.c.b16 %v1188, %v1185
    %v1669 = vpack.c.b16 %v1192, %v1189
    %v1670 = vpack.c.b16 %v1193, %v1190
    %v1671 = vpack.c.b16 %v1194, %v1191
    %v1672 = vpack.c.b16 %v1198, %v1195
    %v1673 = vpack.c.b16 %v1199, %v1196
    %v1674 = vpack.c.b16 %v1200, %v1197
    %v1675 = vpack.c.b16 %v1204, %v1201
    %v1676 = vpack.c.b16 %v1205, %v1202
    %v1677 = vpack.c.b16 %v1206, %v1203
    %v1678 = vpack.c.b16 %v1210, %v1207
    %v1679 = vpack.c.b16 %v1211, %v1208
    %v1680 = vpack.c.b16 %v1212, %v1209
    %v1681 = vpack.c.b16 %v1216, %v1213
    %v1682 = vpack.c.b16 %v1217, %v1214
    %v1683 = vpack.c.b16 %v1218, %v1215
    %v1684 = vpack.c.b16 %v1222, %v1219
    %v1685 = vpack.c.b16 %v1223, %v1220
    %v1686 = vpack.c.b16 %v1224, %v1221
    %v1687 = vpack.c.b16 %v1228, %v1225
    %v1688 = vpack.c.b16 %v1229, %v1226
    %v1689 = vpack.c.b16 %v1230, %v1227
    %v1690 = vpack.c.b16 %v1234, %v1231
    %v1691 = vpack.c.b16 %v1235, %v1232
    %v1692 = vpack.c.b16 %v1236, %v1233
    %v1693 = vpack.c.b16 %v1240, %v1237
    %v1694 = vpack.c.b16 %v1241, %v1238
    %v1695 = vpack.c.b16 %v1242, %v1239
    %v1696 = vpack.c.b16 %v1246, %v1243
    %v1697 = vpack.c.b16 %v1247, %v1244
    %v1698 = vpack.c.b16 %v1248, %v1245
    %v1699 = vpack.c.b16 %v1252, %v1249
    %v1700 = vpack.c.b16 %v1253, %v1250
    %v1701 = vpack.c.b16 %v1254, %v1251
    %v1702 = vpack.c.b16 %v1258, %v1255
    %v1703 = vpack.c.b16 %v1259, %v1256
    %v1704 = vpack.c.b16 %v1260, %v1257
    %v1705 = vpack.c.b16 %v1264, %v1261
    %v1706 = vpack.c.b16 %v1265, %v1262
    %v1707 = vpack.c.b16 %v1266, %v1263
    %v1708 = vpack.c.b16 %v1270, %v1267
    %v1709 = vpack.c.b16 %v1271, %v1268
    %v1710 = vpack.c.b16 %v1272, %v1269
    %v1711 = vpack.c.b16 %v1276, %v1273
    %v1712 = vpack.c.b16 %v1277, %v1274
    %v1713 = vpack.c.b16 %v1278, %v1275
    %v1714 = vpack.c.b16 %v1282, %v1279
    %v1715 = vpack.c.b16 %v1283, %v1280
    %v1716 = vpack.c.b16 %v1284, %v1281
    %v1717 = vpack.c.b16 %v1288, %v1285
    %v1718 = vpack.c.b16 %v1289, %v1286
    %v1719 = vpack.c.b16 %v1290, %v1287
    %v1720 = vpack.c.b16 %v1294, %v1291
    %v1721 = vpack.c.b16 %v1295, %v1292
    %v1722 = vpack.c.b16 %v1296, %v1293
    %v1723 = vpack.c.b16 %v1300, %v1297
    %v1724 = vpack.c.b16 %v1301, %v1298
    %v1725 = vpack.c.b16 %v1302, %v1299
    %v1726 = vpack.c.b16 %v1306, %v1303
    %v1727 = vpack.c.b16 %v1307, %v1304
    %v1728 = vpack.c.b16 %v1308, %v1305
    %v1729 = vpack.c.b16 %v1312, %v1309
    %v1730 = vpack.c.b16 %v1313, %v1310
    %v1731 = vpack.c.b16 %v1314, %v1311
    %v1732 = vpack.c.b16 %v1318, %v1315
    %v1733 = vpack.c.b16 %v1319, %v1316
    %v1734 = vpack.c.b16 %v1320, %v1317
    %v1735 = vpack.c.b16 %v1324, %v1321
    %v1736 = vpack.c.b16 %v1325, %v1322
    %v1737 = vpack.c.b16 %v1326, %v1323
    %v1738 = vpack.c.b16 %v1330, %v1327
    %v1739 = vpack.c.b16 %v1331, %v1328
    %v1740 = vpack.c.b16 %v1332, %v1329
    %v1741 = vpack.c.b16 %v1336, %v1333
    %v1742 = vpack.c.b16 %v1337, %v1334
    %v1743 = vpack.c.b16 %v1338, %v1335
    %v1744 = vpack.c.b16 %v1342, %v1339
    %v1745 = vpack.c.b16 %v1343, %v1340
    %v1746 = vpack.c.b16 %v1344, %v1341
    %v1747 = vpack.c.b16 %v1348, %v1345
    %v1748 = vpack.c.b16 %v1349, %v1346
    %v1749 = vpack.c.b16 %v1350, %v1347
    %v1750 = vpack.c.b16 %v1354, %v1351
    %v1751 = vpack.c.b16 %v1355, %v1352
    %v1752 = vpack.c.b16 %v1356, %v1353
    %v1753 = vpack.c.b16 %v1360, %v1357
    %v1754 = vpack.c.b16 %v1361, %v1358
    %v1755 = vpack.c.b16 %v1362, %v1359
    %v1756 = vpack.c.b16 %v1366, %v1363
    %v1757 = vpack.c.b16 %v1367, %v1364
    %v1758 = vpack.c.b16 %v1368, %v1365
    %v1759 = vpack.c.b16 %v1372, %v1369
    %v1760 = vpack.c.b16 %v1373, %v1370
    %v1761 = vpack.c.b16 %v1374, %v1371
    %v1762 = vpack.c.b16 %v1378, %v1375
    %v1763 = vpack.c.b16 %v1379, %v1376
    %v1764 = vpack.c.b16 %v1380, %v1377
    %v1765 = vpack.c.b16 %v1384, %v1381
    %v1766 = vpack.c.b16 %v1385, %v1382
    %v1767 = vpack.c.b16 %v1386, %v1383
    %v1768 = vpack.c.b16 %v1390, %v1387
    %v1769 = vpack.c.b16 %v1391, %v1388
    %v1770 = vpack.c.b16 %v1392, %v1389
    %v1771 = vpack.c.b16 %v1396, %v1393
    %v1772 = vpack.c.b16 %v1397, %v1394
    %v1773 = vpack.c.b16 %v1398, %v1395
    %v1774 = vpack.c.b16 %v1402, %v1399
    %v1775 = vpack.c.b16 %v1403, %v1400
    %v1776 = vpack.c.b16 %v1404, %v1401
    %v1777 = vpack.c.b16 %v1408, %v1405
    %v1778 = vpack.c.b16 %v1409, %v1406
    %v1779 = vpack.c.b16 %v1410, %v1407
    %v1780 = vpack.c.b16 %v1414, %v1411
    %v1781 = vpack.c.b16 %v1415, %v1412
    %v1782 = vpack.c.b16 %v1416, %v1413
    %v1783 = vpack.c.b16 %v1420, %v1417
    %v1784 = vpack.c.b16 %v1421, %v1418
    %v1785 = vpack.c.b16 %v1422, %v1419
    %v1786 = vpack.c.b16 %v1426, %v1423
    %v1787 = vpack.c.b16 %v1427, %v1424
    %v1788 = vpack.c.b16 %v1428, %v1425
    %v1789 = vpack.c.b16 %v1432, %v1429
    %v1790 = vpack.c.b16 %v1433, %v1430
    %v1791 = vpack.c.b16 %v1434, %v1431
    %v1792 = vpack.c.b16 %v1438, %v1435
    %v1793 = vpack.c.b16 %v1439, %v1436
    %v1794 = vpack.c.b16 %v1440, %v1437
    %v1795 = vpack.c.b16 %v1444, %v1441
    %v1796 = vpack.c.b16 %v1445, %v1442
    %v1797 = vpack.c.b16 %v1446, %v1443
    %v1798 = vpack.c.b16 %v1450, %v1447
    %v1799 = vpack.c.b16 %v1451, %v1448
    %v1800 = vpack.c.b16 %v1452, %v1449
    %v1801 = vpack.c.b16 %v1456, %v1453
    %v1802 = vpack.c.b16 %v1457, %v1454
    %v1803 = vpack.c.b16 %v1458, %v1455
    %v1804 = vpack.c.b16 %v1462, %v1459
    %v1805 = vpack.c.b16 %v1463, %v1460
    %v1806 = vpack.c.b16 %v1464, %v1461
    %v1807 = vpack.c.b16 %v1468, %v1465
    %v1808 = vpack.c.b16 %v1469, %v1466
    %v1809 = vpack.c.b16 %v1470, %v1467
    %v1810 = vpack.c.b16 %v1474, %v1471
    %v1811 = vpack.c.b16 %v1475, %v1472
    %v1812 = vpack.c.b16 %v1476, %v1473
    %v1813 = vpack.c.b16 %v1480, %v1477
    %v1814 = vpack.c.b16 %v1481, %v1478
    %v1815 = vpack.c.b16 %v1482, %v1479
    %v1816 = vpack.c.b16 %v1486, %v1483
    %v1817 = vpack.c.b16 %v1487, %v1484
    %v1818 = vpack.c.b16 %v1488, %v1485
    %v1819 = vpack.c.b16 %v1492, %v1489
    %v1820 = vpack.c.b16 %v1493, %v1490
    %v1821 = vpack.c.b16 %v1494, %v1491
    %v1822 = vpack.c.b16 %v1498, %v1495
    %v1823 = vpack.c.b16 %v1499, %v1496
    %v1824 = vpack.c.b16 %v1500, %v1497
    %v1825 = vpack.c.b16 %v1504, %v1501
    %v1826 = vpack.c.b16 %v1505, %v1502
    %v1827 = vpack.c.b16 %v1506, %v1503
    %v1828 = vpack.c.b16 %v1510, %v1507
    %v1829 = vpack.c.b16 %v1511, %v1508
    %v1830 = vpack.c.b16 %v1512, %v1509
    %v1831 = vpack.c.b16 %v1516, %v1513
    %v1832 = vpack.c.b16 %v1517, %v1514
    %v1833 = vpack.c.b16 %v1518, %v1515
    %v1834 = vpack.c.b16 %v1522, %v1519
    %v1835 = vpack.c.b16 %v1523, %v1520
    %v1836 = vpack.c.b16 %v1524, %v1521
    %v1837 = vpack.c.b16 %v1528, %v1525
    %v1838 = vpack.c.b16 %v1529, %v1526
    %v1839 = vpack.c.b16 %v1530, %v1527
    %v1840 = vpack.c.b16 %v1534, %v1531
    %v1841 = vpack.c.b16 %v1535, %v1532
    %v1842 = vpack.c.b16 %v1536, %v1533
    %v1843 = vpack.c.b16 %v1540, %v1537
    %v1844 = vpack.c.b16 %v1541, %v1538
    %v1845 = vpack.c.b16 %v1542, %v1539
    %v1846 = vpack.c.b16 %v1546, %v1543
    %v1847 = vpack.c.b16 %v1547, %v1544
    %v1848 = vpack.c.b16 %v1548, %v1545
    %vm2149 = vcmask 523264
    %v2151 = vsel %vm2149, %v527, 0
    %2153 = vmatprep.subr.bf16.mxu0 %v1571
    %2154 = vmatpush1.bf16.msra.mxu0 %v1570
    %2155 = vmatprep.subr.bf16.mxu0 %v1568
    %2156 = vmatpush1.bf16.msra.mxu0 %v1567
    %2157 = vmatprep.subr.bf16.mxu0 %v1565
    %2158 = vmatpush1.bf16.msra.mxu0 %v1564
    %2159 = vmatprep.subr.bf16.mxu0 %v1562
    %2160 = vmatpush1.bf16.msra.mxu0 %v1561
    %2161 = vmatprep.subr.bf16.mxu0 %v1559
    %2162 = vmatpush1.bf16.msra.mxu0 %v1558
    %2163 = vmatprep.subr.bf16.mxu0 %v1556
    %2164 = vmatpush1.bf16.msra.mxu0 %v1555
    %2165 = vmatprep.subr.bf16.mxu0 %v1553
    %2166 = vmatpush1.bf16.msra.mxu0 %v1552
    %2167 = vmatprep.subr.bf16.mxu0 %v1550
    %2168 = vmatpush1.bf16.msra.mxu0 %v1549
    %2169 = vmatprep.subr.bf16.mxu0 %v1595
    %2170 = vmatpush2.bf16.msra.mxu0 %v1594
    %2171 = vmatprep.subr.bf16.mxu0 %v1592
    %2172 = vmatpush2.bf16.msra.mxu0 %v1591
    %2173 = vmatprep.subr.bf16.mxu0 %v1589
    %2174 = vmatpush2.bf16.msra.mxu0 %v1588
    %2175 = vmatprep.subr.bf16.mxu0 %v1586
    %2176 = vmatpush2.bf16.msra.mxu0 %v1585
    %2177 = vmatprep.subr.bf16.mxu0 %v1583
    %2178 = vmatpush2.bf16.msra.mxu0 %v1582
    %2179 = vmatprep.subr.bf16.mxu0 %v1580
    %2180 = vmatpush2.bf16.msra.mxu0 %v1579
    %2181 = vmatprep.subr.bf16.mxu0 %v1577
    %2182 = vmatpush2.bf16.msra.mxu0 %v1576
    %2183 = vmatprep.subr.bf16.mxu0 %v1574
    %2184 = vmatpush2.bf16.msra.mxu0 %v1573
    %2185 = vmatprep.mubr.bf16.mxu0 %v486
    %2186 = vmatmul.mubr.bf16.gmra.mxu0 %v472
    %v2187 = vpop.f32.mrf.mxu0
    %v2188 = vadd.f32 %v435, %v2187
    %v2189 = vpop.f32.mrf.mxu0
    %v2190 = vadd.f32 %v439, %v2189
    %v2191 = vpop.f32.mrf.mxu0
    %v2192 = vpop.f32.mrf.mxu0
    %2193 = vdwg.mxu0
    %2194 = vmatprep.subr.bf16.mxu0 %v1619
    %2195 = vmatpush1.bf16.msra.mxu0 %v1618
    %2196 = vmatprep.subr.bf16.mxu0 %v1616
    %2197 = vmatpush1.bf16.msra.mxu0 %v1615
    %2198 = vmatprep.subr.bf16.mxu0 %v1613
    %2199 = vmatpush1.bf16.msra.mxu0 %v1612
    %2200 = vmatprep.subr.bf16.mxu0 %v1610
    %2201 = vmatpush1.bf16.msra.mxu0 %v1609
    %2202 = vmatprep.subr.bf16.mxu0 %v1607
    %2203 = vmatpush1.bf16.msra.mxu0 %v1606
    %2204 = vmatprep.subr.bf16.mxu0 %v1604
    %2205 = vmatpush1.bf16.msra.mxu0 %v1603
    %2206 = vmatprep.subr.bf16.mxu0 %v1601
    %2207 = vmatpush1.bf16.msra.mxu0 %v1600
    %2208 = vmatprep.subr.bf16.mxu0 %v1598
    %2209 = vmatpush1.bf16.msra.mxu0 %v1597
    %2210 = vmatprep.subr.bf16.mxu0 %v1643
    %2211 = vmatpush2.bf16.msra.mxu0 %v1642
    %2212 = vmatprep.subr.bf16.mxu0 %v1640
    %2213 = vmatpush2.bf16.msra.mxu0 %v1639
    %2214 = vmatprep.subr.bf16.mxu0 %v1637
    %2215 = vmatpush2.bf16.msra.mxu0 %v1636
    %2216 = vmatprep.subr.bf16.mxu0 %v1634
    %2217 = vmatpush2.bf16.msra.mxu0 %v1633
    %2218 = vmatprep.subr.bf16.mxu0 %v1631
    %2219 = vmatpush2.bf16.msra.mxu0 %v1630
    %2220 = vmatprep.subr.bf16.mxu0 %v1628
    %2221 = vmatpush2.bf16.msra.mxu0 %v1627
    %2222 = vmatprep.subr.bf16.mxu0 %v1625
    %2223 = vmatpush2.bf16.msra.mxu0 %v1624
    %2224 = vmatprep.subr.bf16.mxu0 %v1622
    %2225 = vmatpush2.bf16.msra.mxu0 %v1621
    %2226 = vmatprep.mubr.bf16.mxu0 %v496
    %2227 = vmatmul.mubr.bf16.gmra.mxu0 %v494
    %v2228 = vpop.f32.mrf.mxu0
    %v2229 = vadd.f32 %v2188, %v2228
    %v2230 = vpop.f32.mrf.mxu0
    %v2231 = vadd.f32 %v2190, %v2230
    %v2232 = vpop.f32.mrf.mxu0
    %v2233 = vpop.f32.mrf.mxu0
    %2234 = vdwg.mxu0
    %2235 = vmatprep.subr.bf16.mxu0 %v1667
    %2236 = vmatpush1.bf16.msra.mxu0 %v1666
    %2237 = vmatprep.subr.bf16.mxu0 %v1664
    %2238 = vmatpush1.bf16.msra.mxu0 %v1663
    %2239 = vmatprep.subr.bf16.mxu0 %v1661
    %2240 = vmatpush1.bf16.msra.mxu0 %v1660
    %2241 = vmatprep.subr.bf16.mxu0 %v1658
    %2242 = vmatpush1.bf16.msra.mxu0 %v1657
    %2243 = vmatprep.subr.bf16.mxu0 %v1655
    %2244 = vmatpush1.bf16.msra.mxu0 %v1654
    %2245 = vmatprep.subr.bf16.mxu0 %v1652
    %2246 = vmatpush1.bf16.msra.mxu0 %v1651
    %2247 = vmatprep.subr.bf16.mxu0 %v1649
    %2248 = vmatpush1.bf16.msra.mxu0 %v1648
    %2249 = vmatprep.subr.bf16.mxu0 %v1646
    %2250 = vmatpush1.bf16.msra.mxu0 %v1645
    %2251 = vmatprep.subr.bf16.mxu0 %v1691
    %2252 = vmatpush2.bf16.msra.mxu0 %v1690
    %2253 = vmatprep.subr.bf16.mxu0 %v1688
    %2254 = vmatpush2.bf16.msra.mxu0 %v1687
    %2255 = vmatprep.subr.bf16.mxu0 %v1685
    %2256 = vmatpush2.bf16.msra.mxu0 %v1684
    %2257 = vmatprep.subr.bf16.mxu0 %v1682
    %2258 = vmatpush2.bf16.msra.mxu0 %v1681
    %2259 = vmatprep.subr.bf16.mxu0 %v1679
    %2260 = vmatpush2.bf16.msra.mxu0 %v1678
    %2261 = vmatprep.subr.bf16.mxu0 %v1676
    %2262 = vmatpush2.bf16.msra.mxu0 %v1675
    %2263 = vmatprep.subr.bf16.mxu0 %v1673
    %2264 = vmatpush2.bf16.msra.mxu0 %v1672
    %2265 = vmatprep.subr.bf16.mxu0 %v1670
    %2266 = vmatpush2.bf16.msra.mxu0 %v1669
    %2267 = vmatprep.mubr.bf16.mxu0 %v493
    %2268 = vmatmul.mubr.bf16.gmra.mxu0 %v479
    %v2269 = vpop.f32.mrf.mxu0
    %v2270 = vadd.f32 %v2229, %v2269
    %v2271 = vpop.f32.mrf.mxu0
    %v2272 = vadd.f32 %v2231, %v2271
    %v2273 = vpop.f32.mrf.mxu0
    %v2274 = vpop.f32.mrf.mxu0
    %2275 = vdwg.mxu0
    %2276 = vmatprep.subr.bf16.mxu0 %v1715
    %2277 = vmatpush1.bf16.msra.mxu0 %v1714
    %2278 = vmatprep.subr.bf16.mxu0 %v1712
    %2279 = vmatpush1.bf16.msra.mxu0 %v1711
    %2280 = vmatprep.subr.bf16.mxu0 %v1709
    %2281 = vmatpush1.bf16.msra.mxu0 %v1708
    %2282 = vmatprep.subr.bf16.mxu0 %v1706
    %2283 = vmatpush1.bf16.msra.mxu0 %v1705
    %2284 = vmatprep.subr.bf16.mxu0 %v1703
    %2285 = vmatpush1.bf16.msra.mxu0 %v1702
    %2286 = vmatprep.subr.bf16.mxu0 %v1700
    %2287 = vmatpush1.bf16.msra.mxu0 %v1699
    %2288 = vmatprep.subr.bf16.mxu0 %v1697
    %2289 = vmatpush1.bf16.msra.mxu0 %v1696
    %2290 = vmatprep.subr.bf16.mxu0 %v1694
    %2291 = vmatpush1.bf16.msra.mxu0 %v1693
    %2292 = vmatprep.subr.bf16.mxu0 %v1739
    %2293 = vmatpush2.bf16.msra.mxu0 %v1738
    %2294 = vmatprep.subr.bf16.mxu0 %v1736
    %2295 = vmatpush2.bf16.msra.mxu0 %v1735
    %2296 = vmatprep.subr.bf16.mxu0 %v1733
    %2297 = vmatpush2.bf16.msra.mxu0 %v1732
    %2298 = vmatprep.subr.bf16.mxu0 %v1730
    %2299 = vmatpush2.bf16.msra.mxu0 %v1729
    %2300 = vmatprep.subr.bf16.mxu0 %v1727
    %2301 = vmatpush2.bf16.msra.mxu0 %v1726
    %2302 = vmatprep.subr.bf16.mxu0 %v1724
    %2303 = vmatpush2.bf16.msra.mxu0 %v1723
    %2304 = vmatprep.subr.bf16.mxu0 %v1721
    %2305 = vmatpush2.bf16.msra.mxu0 %v1720
    %2306 = vmatprep.subr.bf16.mxu0 %v1718
    %2307 = vmatpush2.bf16.msra.mxu0 %v1717
    %2308 = vmatprep.mubr.bf16.mxu0 %v497
    %2309 = vmatmul.mubr.bf16.gmra.mxu0 %v495
    %v2310 = vpop.f32.mrf.mxu0
    %v2311 = vadd.f32 %v2270, %v2310
    %v2312 = vpop.f32.mrf.mxu0
    %v2313 = vadd.f32 %v2272, %v2312
    %v2314 = vpop.f32.mrf.mxu0
    %v2315 = vpop.f32.mrf.mxu0
    %2316 = vdwg.mxu0
    %2317 = vmatprep.subr.bf16.mxu0 %v1763
    %2318 = vmatpush1.bf16.msra.mxu0 %v1762
    %2319 = vmatprep.subr.bf16.mxu0 %v1760
    %2320 = vmatpush1.bf16.msra.mxu0 %v1759
    %2321 = vmatprep.subr.bf16.mxu0 %v1757
    %2322 = vmatpush1.bf16.msra.mxu0 %v1756
    %2323 = vmatprep.subr.bf16.mxu0 %v1754
    %2324 = vmatpush1.bf16.msra.mxu0 %v1753
    %2325 = vmatprep.subr.bf16.mxu0 %v1751
    %2326 = vmatpush1.bf16.msra.mxu0 %v1750
    %2327 = vmatprep.subr.bf16.mxu0 %v1748
    %2328 = vmatpush1.bf16.msra.mxu0 %v1747
    %2329 = vmatprep.subr.bf16.mxu0 %v1745
    %2330 = vmatpush1.bf16.msra.mxu0 %v1744
    %2331 = vmatprep.subr.bf16.mxu0 %v1742
    %2332 = vmatpush1.bf16.msra.mxu0 %v1741
    %2333 = vmatprep.subr.bf16.mxu0 %v1787
    %2334 = vmatpush2.bf16.msra.mxu0 %v1786
    %2335 = vmatprep.subr.bf16.mxu0 %v1784
    %2336 = vmatpush2.bf16.msra.mxu0 %v1783
    %2337 = vmatprep.subr.bf16.mxu0 %v1781
    %2338 = vmatpush2.bf16.msra.mxu0 %v1780
    %2339 = vmatprep.subr.bf16.mxu0 %v1778
    %2340 = vmatpush2.bf16.msra.mxu0 %v1777
    %2341 = vmatprep.subr.bf16.mxu0 %v1775
    %2342 = vmatpush2.bf16.msra.mxu0 %v1774
    %2343 = vmatprep.subr.bf16.mxu0 %v1772
    %2344 = vmatpush2.bf16.msra.mxu0 %v1771
    %2345 = vmatprep.subr.bf16.mxu0 %v1769
    %2346 = vmatpush2.bf16.msra.mxu0 %v1768
    %2347 = vmatprep.subr.bf16.mxu0 %v1766
    %2348 = vmatpush2.bf16.msra.mxu0 %v1765
    %2349 = vmatprep.mubr.bf16.mxu0 %v534
    %2350 = vmatmul.mubr.bf16.gmra.mxu0 %v520
    %v2351 = vpop.f32.mrf.mxu0
    %v2352 = vadd.f32 %v2311, %v2351
    %v2353 = vpop.f32.mrf.mxu0
    %v2354 = vadd.f32 %v2313, %v2353
    %v2355 = vpop.f32.mrf.mxu0
    %v2356 = vpop.f32.mrf.mxu0
    %2357 = vdwg.mxu0
    %2358 = vmatprep.subr.bf16.mxu0 %v1811
    %2359 = vmatpush1.bf16.msra.mxu0 %v1810
    %2360 = vmatprep.subr.bf16.mxu0 %v1808
    %2361 = vmatpush1.bf16.msra.mxu0 %v1807
    %2362 = vmatprep.subr.bf16.mxu0 %v1805
    %2363 = vmatpush1.bf16.msra.mxu0 %v1804
    %2364 = vmatprep.subr.bf16.mxu0 %v1802
    %2365 = vmatpush1.bf16.msra.mxu0 %v1801
    %2366 = vmatprep.subr.bf16.mxu0 %v1799
    %2367 = vmatpush1.bf16.msra.mxu0 %v1798
    %2368 = vmatprep.subr.bf16.mxu0 %v1796
    %2369 = vmatpush1.bf16.msra.mxu0 %v1795
    %2370 = vmatprep.subr.bf16.mxu0 %v1793
    %2371 = vmatpush1.bf16.msra.mxu0 %v1792
    %2372 = vmatprep.subr.bf16.mxu0 %v1790
    %2373 = vmatpush1.bf16.msra.mxu0 %v1789
    %2374 = vmatprep.subr.bf16.mxu0 %v1835
    %2375 = vmatpush2.bf16.msra.mxu0 %v1834
    %2376 = vmatprep.subr.bf16.mxu0 %v1832
    %2377 = vmatpush2.bf16.msra.mxu0 %v1831
    %2378 = vmatprep.subr.bf16.mxu0 %v1829
    %2379 = vmatpush2.bf16.msra.mxu0 %v1828
    %2380 = vmatprep.subr.bf16.mxu0 %v1826
    %2381 = vmatpush2.bf16.msra.mxu0 %v1825
    %2382 = vmatprep.subr.bf16.mxu0 %v1823
    %2383 = vmatpush2.bf16.msra.mxu0 %v1822
    %2384 = vmatprep.subr.bf16.mxu0 %v1820
    %2385 = vmatpush2.bf16.msra.mxu0 %v1819
    %2386 = vmatprep.subr.bf16.mxu0 %v1817
    %2387 = vmatpush2.bf16.msra.mxu0 %v1816
    %2388 = vmatprep.subr.bf16.mxu0 %v1814
    %2389 = vmatpush2.bf16.msra.mxu0 %v1813
    %2390 = vmatprep.mubr.bf16.mxu0 %v536
    %2391 = vmatmul.mubr.bf16.gmra.mxu0 %v535
    %v2392 = vpop.f32.mrf.mxu0
    %v2393 = vadd.f32 %v2352, %v2392
    %v2394 = vpop.f32.mrf.mxu0
    %v2395 = vadd.f32 %v2354, %v2394
    %v2396 = vpop.f32.mrf.mxu0
    %v2397 = vpop.f32.mrf.mxu0
    %2398 = vdwg.mxu0
    %2399 = vmatprep.subr.bf16.mxu0 0
    %2400 = vmatpush1.bf16.msra.mxu0 0
    %2401 = vmatprep.subr.bf16.mxu0 0
    %2402 = vmatpush1.bf16.msra.mxu0 0
    %2403 = vmatprep.subr.bf16.mxu0 0
    %2404 = vmatpush1.bf16.msra.mxu0 0
    %2405 = vmatprep.subr.bf16.mxu0 0
    %2406 = vmatpush1.bf16.msra.mxu0 0
    %2407 = vmatprep.subr.bf16.mxu0 %v1847
    %2408 = vmatpush1.bf16.msra.mxu0 %v1846
    %2409 = vmatprep.subr.bf16.mxu0 %v1844
    %2410 = vmatpush1.bf16.msra.mxu0 %v1843
    %2411 = vmatprep.subr.bf16.mxu0 %v1841
    %2412 = vmatpush1.bf16.msra.mxu0 %v1840
    %2413 = vmatprep.subr.bf16.mxu0 %v1838
    %2414 = vmatpush1.bf16.msra.mxu0 %v1837
    %2415 = vmatprep.subr.bf16.mxu0 0
    %2416 = vmatpush2.bf16.msra.mxu0 0
    %2417 = vmatprep.subr.bf16.mxu0 0
    %2418 = vmatpush2.bf16.msra.mxu0 0
    %2419 = vmatprep.subr.bf16.mxu0 0
    %2420 = vmatpush2.bf16.msra.mxu0 0
    %2421 = vmatprep.subr.bf16.mxu0 0
    %2422 = vmatpush2.bf16.msra.mxu0 0
    %2423 = vmatprep.subr.bf16.mxu0 0
    %2424 = vmatpush2.bf16.msra.mxu0 0
    %2425 = vmatprep.subr.bf16.mxu0 0
    %2426 = vmatpush2.bf16.msra.mxu0 0
    %2427 = vmatprep.subr.bf16.mxu0 0
    %2428 = vmatpush2.bf16.msra.mxu0 0
    %2429 = vmatprep.subr.bf16.mxu0 0
    %2430 = vmatpush2.bf16.msra.mxu0 0
    %2431 = vmatprep.mubr.bf16.mxu0 0
    %2432 = vmatmul.mubr.bf16.gmra.mxu0 %v2151
    %v2433 = vpop.f32.mrf.mxu0
    %v2434 = vadd.f32 %v2393, %v2433
    %v2435 = vpop.f32.mrf.mxu0
    %v2436 = vadd.f32 %v2395, %v2435
    %v2437 = vpop.f32.mrf.mxu0
    %v2438 = vpop.f32.mrf.mxu0
    %2439 = vdwg.mxu0
    %2440 = vmatprep.subr.bf16.mxu0 0
    %2441 = vmatpush1.bf16.msra.mxu0 %v1572
    %2442 = vmatprep.subr.bf16.mxu0 0
    %2443 = vmatpush1.bf16.msra.mxu0 %v1569
    %2444 = vmatprep.subr.bf16.mxu0 0
    %2445 = vmatpush1.bf16.msra.mxu0 %v1566
    %2446 = vmatprep.subr.bf16.mxu0 0
    %2447 = vmatpush1.bf16.msra.mxu0 %v1563
    %2448 = vmatprep.subr.bf16.mxu0 0
    %2449 = vmatpush1.bf16.msra.mxu0 %v1560
    %2450 = vmatprep.subr.bf16.mxu0 0
    %2451 = vmatpush1.bf16.msra.mxu0 %v1557
    %2452 = vmatprep.subr.bf16.mxu0 0
    %2453 = vmatpush1.bf16.msra.mxu0 %v1554
    %2454 = vmatprep.subr.bf16.mxu0 0
    %2455 = vmatpush1.bf16.msra.mxu0 %v1551
    %2456 = vmatprep.subr.bf16.mxu0 0
    %2457 = vmatpush2.bf16.msra.mxu0 %v1596
    %2458 = vmatprep.subr.bf16.mxu0 0
    %2459 = vmatpush2.bf16.msra.mxu0 %v1593
    %2460 = vmatprep.subr.bf16.mxu0 0
    %2461 = vmatpush2.bf16.msra.mxu0 %v1590
    %2462 = vmatprep.subr.bf16.mxu0 0
    %2463 = vmatpush2.bf16.msra.mxu0 %v1587
    %2464 = vmatprep.subr.bf16.mxu0 0
    %2465 = vmatpush2.bf16.msra.mxu0 %v1584
    %2466 = vmatprep.subr.bf16.mxu0 0
    %2467 = vmatpush2.bf16.msra.mxu0 %v1581
    %2468 = vmatprep.subr.bf16.mxu0 0
    %2469 = vmatpush2.bf16.msra.mxu0 %v1578
    %2470 = vmatprep.subr.bf16.mxu0 0
    %2471 = vmatpush2.bf16.msra.mxu0 %v1575
    %2472 = vmatprep.mubr.bf16.mxu0 %v486
    %2473 = vmatmul.mubr.bf16.gmra.mxu0 %v472
    %v2474 = vpop.f32.mrf.mxu0
    %v2475 = vadd.f32 %v443, %v2474
    %v2476 = vpop.f32.mrf.mxu0
    %v2477 = vpop.f32.mrf.mxu0
    %v2478 = vpop.f32.mrf.mxu0
    %2479 = vdwg.mxu0
    %2480 = vmatprep.subr.bf16.mxu0 0
    %2481 = vmatpush1.bf16.msra.mxu0 %v1620
    %2482 = vmatprep.subr.bf16.mxu0 0
    %2483 = vmatpush1.bf16.msra.mxu0 %v1617
    %2484 = vmatprep.subr.bf16.mxu0 0
    %2485 = vmatpush1.bf16.msra.mxu0 %v1614
    %2486 = vmatprep.subr.bf16.mxu0 0
    %2487 = vmatpush1.bf16.msra.mxu0 %v1611
    %2488 = vmatprep.subr.bf16.mxu0 0
    %2489 = vmatpush1.bf16.msra.mxu0 %v1608
    %2490 = vmatprep.subr.bf16.mxu0 0
    %2491 = vmatpush1.bf16.msra.mxu0 %v1605
    %2492 = vmatprep.subr.bf16.mxu0 0
    %2493 = vmatpush1.bf16.msra.mxu0 %v1602
    %2494 = vmatprep.subr.bf16.mxu0 0
    %2495 = vmatpush1.bf16.msra.mxu0 %v1599
    %2496 = vmatprep.subr.bf16.mxu0 0
    %2497 = vmatpush2.bf16.msra.mxu0 %v1644
    %2498 = vmatprep.subr.bf16.mxu0 0
    %2499 = vmatpush2.bf16.msra.mxu0 %v1641
    %2500 = vmatprep.subr.bf16.mxu0 0
    %2501 = vmatpush2.bf16.msra.mxu0 %v1638
    %2502 = vmatprep.subr.bf16.mxu0 0
    %2503 = vmatpush2.bf16.msra.mxu0 %v1635
    %2504 = vmatprep.subr.bf16.mxu0 0
    %2505 = vmatpush2.bf16.msra.mxu0 %v1632
    %2506 = vmatprep.subr.bf16.mxu0 0
    %2507 = vmatpush2.bf16.msra.mxu0 %v1629
    %2508 = vmatprep.subr.bf16.mxu0 0
    %2509 = vmatpush2.bf16.msra.mxu0 %v1626
    %2510 = vmatprep.subr.bf16.mxu0 0
    %2511 = vmatpush2.bf16.msra.mxu0 %v1623
    %2512 = vmatprep.mubr.bf16.mxu0 %v496
    %2513 = vmatmul.mubr.bf16.gmra.mxu0 %v494
    %v2514 = vpop.f32.mrf.mxu0
    %v2515 = vadd.f32 %v2475, %v2514
    %v2516 = vpop.f32.mrf.mxu0
    %v2517 = vpop.f32.mrf.mxu0
    %v2518 = vpop.f32.mrf.mxu0
    %2519 = vdwg.mxu0
    %2520 = vmatprep.subr.bf16.mxu0 0
    %2521 = vmatpush1.bf16.msra.mxu0 %v1668
    %2522 = vmatprep.subr.bf16.mxu0 0
    %2523 = vmatpush1.bf16.msra.mxu0 %v1665
    %2524 = vmatprep.subr.bf16.mxu0 0
    %2525 = vmatpush1.bf16.msra.mxu0 %v1662
    %2526 = vmatprep.subr.bf16.mxu0 0
    %2527 = vmatpush1.bf16.msra.mxu0 %v1659
    %2528 = vmatprep.subr.bf16.mxu0 0
    %2529 = vmatpush1.bf16.msra.mxu0 %v1656
    %2530 = vmatprep.subr.bf16.mxu0 0
    %2531 = vmatpush1.bf16.msra.mxu0 %v1653
    %2532 = vmatprep.subr.bf16.mxu0 0
    %2533 = vmatpush1.bf16.msra.mxu0 %v1650
    %2534 = vmatprep.subr.bf16.mxu0 0
    %2535 = vmatpush1.bf16.msra.mxu0 %v1647
    %2536 = vmatprep.subr.bf16.mxu0 0
    %2537 = vmatpush2.bf16.msra.mxu0 %v1692
    %2538 = vmatprep.subr.bf16.mxu0 0
    %2539 = vmatpush2.bf16.msra.mxu0 %v1689
    %2540 = vmatprep.subr.bf16.mxu0 0
    %2541 = vmatpush2.bf16.msra.mxu0 %v1686
    %2542 = vmatprep.subr.bf16.mxu0 0
    %2543 = vmatpush2.bf16.msra.mxu0 %v1683
    %2544 = vmatprep.subr.bf16.mxu0 0
    %2545 = vmatpush2.bf16.msra.mxu0 %v1680
    %2546 = vmatprep.subr.bf16.mxu0 0
    %2547 = vmatpush2.bf16.msra.mxu0 %v1677
    %2548 = vmatprep.subr.bf16.mxu0 0
    %2549 = vmatpush2.bf16.msra.mxu0 %v1674
    %2550 = vmatprep.subr.bf16.mxu0 0
    %2551 = vmatpush2.bf16.msra.mxu0 %v1671
    %2552 = vmatprep.mubr.bf16.mxu0 %v493
    %2553 = vmatmul.mubr.bf16.gmra.mxu0 %v479
    %v2554 = vpop.f32.mrf.mxu0
    %v2555 = vadd.f32 %v2515, %v2554
    %v2556 = vpop.f32.mrf.mxu0
    %v2557 = vpop.f32.mrf.mxu0
    %v2558 = vpop.f32.mrf.mxu0
    %2559 = vdwg.mxu0
    %2560 = vmatprep.subr.bf16.mxu0 0
    %2561 = vmatpush1.bf16.msra.mxu0 %v1716
    %2562 = vmatprep.subr.bf16.mxu0 0
    %2563 = vmatpush1.bf16.msra.mxu0 %v1713
    %2564 = vmatprep.subr.bf16.mxu0 0
    %2565 = vmatpush1.bf16.msra.mxu0 %v1710
    %2566 = vmatprep.subr.bf16.mxu0 0
    %2567 = vmatpush1.bf16.msra.mxu0 %v1707
    %2568 = vmatprep.subr.bf16.mxu0 0
    %2569 = vmatpush1.bf16.msra.mxu0 %v1704
    %2570 = vmatprep.subr.bf16.mxu0 0
    %2571 = vmatpush1.bf16.msra.mxu0 %v1701
    %2572 = vmatprep.subr.bf16.mxu0 0
    %2573 = vmatpush1.bf16.msra.mxu0 %v1698
    %2574 = vmatprep.subr.bf16.mxu0 0
    %2575 = vmatpush1.bf16.msra.mxu0 %v1695
    %2576 = vmatprep.subr.bf16.mxu0 0
    %2577 = vmatpush2.bf16.msra.mxu0 %v1740
    %2578 = vmatprep.subr.bf16.mxu0 0
    %2579 = vmatpush2.bf16.msra.mxu0 %v1737
    %2580 = vmatprep.subr.bf16.mxu0 0
    %2581 = vmatpush2.bf16.msra.mxu0 %v1734
    %2582 = vmatprep.subr.bf16.mxu0 0
    %2583 = vmatpush2.bf16.msra.mxu0 %v1731
    %2584 = vmatprep.subr.bf16.mxu0 0
    %2585 = vmatpush2.bf16.msra.mxu0 %v1728
    %2586 = vmatprep.subr.bf16.mxu0 0
    %2587 = vmatpush2.bf16.msra.mxu0 %v1725
    %2588 = vmatprep.subr.bf16.mxu0 0
    %2589 = vmatpush2.bf16.msra.mxu0 %v1722
    %2590 = vmatprep.subr.bf16.mxu0 0
    %2591 = vmatpush2.bf16.msra.mxu0 %v1719
    %2592 = vmatprep.mubr.bf16.mxu0 %v497
    %2593 = vmatmul.mubr.bf16.gmra.mxu0 %v495
    %v2594 = vpop.f32.mrf.mxu0
    %v2595 = vadd.f32 %v2555, %v2594
    %v2596 = vpop.f32.mrf.mxu0
    %v2597 = vpop.f32.mrf.mxu0
    %v2598 = vpop.f32.mrf.mxu0
    %2599 = vdwg.mxu0
    %2600 = vmatprep.subr.bf16.mxu0 0
    %2601 = vmatpush1.bf16.msra.mxu0 %v1764
    %2602 = vmatprep.subr.bf16.mxu0 0
    %2603 = vmatpush1.bf16.msra.mxu0 %v1761
    %2604 = vmatprep.subr.bf16.mxu0 0
    %2605 = vmatpush1.bf16.msra.mxu0 %v1758
    %2606 = vmatprep.subr.bf16.mxu0 0
    %2607 = vmatpush1.bf16.msra.mxu0 %v1755
    %2608 = vmatprep.subr.bf16.mxu0 0
    %2609 = vmatpush1.bf16.msra.mxu0 %v1752
    %2610 = vmatprep.subr.bf16.mxu0 0
    %2611 = vmatpush1.bf16.msra.mxu0 %v1749
    %2612 = vmatprep.subr.bf16.mxu0 0
    %2613 = vmatpush1.bf16.msra.mxu0 %v1746
    %2614 = vmatprep.subr.bf16.mxu0 0
    %2615 = vmatpush1.bf16.msra.mxu0 %v1743
    %2616 = vmatprep.subr.bf16.mxu0 0
    %2617 = vmatpush2.bf16.msra.mxu0 %v1788
    %2618 = vmatprep.subr.bf16.mxu0 0
    %2619 = vmatpush2.bf16.msra.mxu0 %v1785
    %2620 = vmatprep.subr.bf16.mxu0 0
    %2621 = vmatpush2.bf16.msra.mxu0 %v1782
    %2622 = vmatprep.subr.bf16.mxu0 0
    %2623 = vmatpush2.bf16.msra.mxu0 %v1779
    %2624 = vmatprep.subr.bf16.mxu0 0
    %2625 = vmatpush2.bf16.msra.mxu0 %v1776
    %2626 = vmatprep.subr.bf16.mxu0 0
    %2627 = vmatpush2.bf16.msra.mxu0 %v1773
    %2628 = vmatprep.subr.bf16.mxu0 0
    %2629 = vmatpush2.bf16.msra.mxu0 %v1770
    %2630 = vmatprep.subr.bf16.mxu0 0
    %2631 = vmatpush2.bf16.msra.mxu0 %v1767
    %2632 = vmatprep.mubr.bf16.mxu0 %v534
    %2633 = vmatmul.mubr.bf16.gmra.mxu0 %v520
    %v2634 = vpop.f32.mrf.mxu0
    %v2635 = vadd.f32 %v2595, %v2634
    %v2636 = vpop.f32.mrf.mxu0
    %v2637 = vpop.f32.mrf.mxu0
    %v2638 = vpop.f32.mrf.mxu0
    %2639 = vdwg.mxu0
    %2640 = vmatprep.subr.bf16.mxu0 0
    %2641 = vmatpush1.bf16.msra.mxu0 %v1812
    %2642 = vmatprep.subr.bf16.mxu0 0
    %2643 = vmatpush1.bf16.msra.mxu0 %v1809
    %2644 = vmatprep.subr.bf16.mxu0 0
    %2645 = vmatpush1.bf16.msra.mxu0 %v1806
    %2646 = vmatprep.subr.bf16.mxu0 0
    %2647 = vmatpush1.bf16.msra.mxu0 %v1803
    %2648 = vmatprep.subr.bf16.mxu0 0
    %2649 = vmatpush1.bf16.msra.mxu0 %v1800
    %2650 = vmatprep.subr.bf16.mxu0 0
    %2651 = vmatpush1.bf16.msra.mxu0 %v1797
    %2652 = vmatprep.subr.bf16.mxu0 0
    %2653 = vmatpush1.bf16.msra.mxu0 %v1794
    %2654 = vmatprep.subr.bf16.mxu0 0
    %2655 = vmatpush1.bf16.msra.mxu0 %v1791
    %2656 = vmatprep.subr.bf16.mxu0 0
    %2657 = vmatpush2.bf16.msra.mxu0 %v1836
    %2658 = vmatprep.subr.bf16.mxu0 0
    %2659 = vmatpush2.bf16.msra.mxu0 %v1833
    %2660 = vmatprep.subr.bf16.mxu0 0
    %2661 = vmatpush2.bf16.msra.mxu0 %v1830
    %2662 = vmatprep.subr.bf16.mxu0 0
    %2663 = vmatpush2.bf16.msra.mxu0 %v1827
    %2664 = vmatprep.subr.bf16.mxu0 0
    %2665 = vmatpush2.bf16.msra.mxu0 %v1824
    %2666 = vmatprep.subr.bf16.mxu0 0
    %2667 = vmatpush2.bf16.msra.mxu0 %v1821
    %2668 = vmatprep.subr.bf16.mxu0 0
    %2669 = vmatpush2.bf16.msra.mxu0 %v1818
    %2670 = vmatprep.subr.bf16.mxu0 0
    %2671 = vmatpush2.bf16.msra.mxu0 %v1815
    %2672 = vmatprep.mubr.bf16.mxu0 %v536
    %2673 = vmatmul.mubr.bf16.gmra.mxu0 %v535
    %v2674 = vpop.f32.mrf.mxu0
    %v2675 = vadd.f32 %v2635, %v2674
    %v2676 = vpop.f32.mrf.mxu0
    %v2677 = vpop.f32.mrf.mxu0
    %v2678 = vpop.f32.mrf.mxu0
    %2679 = vdwg.mxu0
    %2680 = vmatprep.subr.bf16.mxu0 0
    %2681 = vmatpush1.bf16.msra.mxu0 0
    %2682 = vmatprep.subr.bf16.mxu0 0
    %2683 = vmatpush1.bf16.msra.mxu0 0
    %2684 = vmatprep.subr.bf16.mxu0 0
    %2685 = vmatpush1.bf16.msra.mxu0 0
    %2686 = vmatprep.subr.bf16.mxu0 0
    %2687 = vmatpush1.bf16.msra.mxu0 0
    %2688 = vmatprep.subr.bf16.mxu0 0
    %2689 = vmatpush1.bf16.msra.mxu0 %v1848
    %2690 = vmatprep.subr.bf16.mxu0 0
    %2691 = vmatpush1.bf16.msra.mxu0 %v1845
    %2692 = vmatprep.subr.bf16.mxu0 0
    %2693 = vmatpush1.bf16.msra.mxu0 %v1842
    %2694 = vmatprep.subr.bf16.mxu0 0
    %2695 = vmatpush1.bf16.msra.mxu0 %v1839
    %2696 = vmatprep.subr.bf16.mxu0 0
    %2697 = vmatpush2.bf16.msra.mxu0 0
    %2698 = vmatprep.subr.bf16.mxu0 0
    %2699 = vmatpush2.bf16.msra.mxu0 0
    %2700 = vmatprep.subr.bf16.mxu0 0
    %2701 = vmatpush2.bf16.msra.mxu0 0
    %2702 = vmatprep.subr.bf16.mxu0 0
    %2703 = vmatpush2.bf16.msra.mxu0 0
    %2704 = vmatprep.subr.bf16.mxu0 0
    %2705 = vmatpush2.bf16.msra.mxu0 0
    %2706 = vmatprep.subr.bf16.mxu0 0
    %2707 = vmatpush2.bf16.msra.mxu0 0
    %2708 = vmatprep.subr.bf16.mxu0 0
    %2709 = vmatpush2.bf16.msra.mxu0 0
    %2710 = vmatprep.subr.bf16.mxu0 0
    %2711 = vmatpush2.bf16.msra.mxu0 0
    %2712 = vmatprep.mubr.bf16.mxu0 0
    %2713 = vmatmul.mubr.bf16.gmra.mxu0 %v2151
    %v2714 = vpop.f32.mrf.mxu0
    %v2715 = vadd.f32 %v2675, %v2714
    %v2716 = vpop.f32.mrf.mxu0
    %v2717 = vpop.f32.mrf.mxu0
    %v2718 = vpop.f32.mrf.mxu0
    %2719 = vdwg.mxu0
    %v2720 = vmax.f32 %v2434, 0.0
    %v2721 = vmax.f32 %v2436, 0.0
    %v2722 = vmax.f32 %v2715, 0.0
    %v2723 = vpack.c.bf16 %v2720, %v2720
    %v2724 = vpack.c.bf16 %v2721, %v2721
    %v2725 = vpack.c.bf16 %v2722, %v2722
    %v2726 = vld [vmem:[%s3] sm:$0xff]
    %v2727 = vld [vmem:[%s3 + $0x8] sm:$0xff]
    %v2728 = vld [vmem:[%s3 + $0x10] sm:$0xff]
    %v2729 = vld [vmem:[%s3 + $0x18] sm:$0xff]
    %v2730 = vld [vmem:[%s3 + $0x20] sm:$0xff]
    %v2731 = vld [vmem:[%s3 + $0x28] sm:$0xff]
    %v2732 = vld [vmem:[%s3 + $0x30] sm:$0xff]
    %v2733 = vld [vmem:[%s3 + $0x38] sm:$0xff]
    %v2734 = vld [vmem:[%s3 + $0x40] sm:$0xff]
    %v2735 = vld [vmem:[%s3 + $0x48] sm:$0xff]
    %v2736 = vld [vmem:[%s3 + $0x50] sm:$0xff]
    %v2737 = vld [vmem:[%s3 + $0x58] sm:$0xff]
    %v2738 = vld [vmem:[%s3 + $0x60] sm:$0xff]
    %v2739 = vld [vmem:[%s3 + $0x68] sm:$0xff]
    %v2740 = vld [vmem:[%s3 + $0x70] sm:$0xff]
    %v2741 = vld [vmem:[%s3 + $0x78] sm:$0xff]
    %v2742 = vld [vmem:[%s3 + $0x80] sm:$0xff]
    %v2743 = vld [vmem:[%s3 + $0x88] sm:$0xff]
    %v2744 = vld [vmem:[%s3 + $0x90] sm:$0xff]
    %v2745 = vld [vmem:[%s3 + $0x98] sm:$0xff]
    %v2746 = vld [vmem:[%s3 + $0xa0] sm:$0xff]
    %v2747 = vld [vmem:[%s3 + $0xa8] sm:$0xff]
    %v2748 = vld [vmem:[%s3 + $0xb0] sm:$0xff]
    %v2749 = vld [vmem:[%s3 + $0xb8] sm:$0xff]
    %v2750 = vld [vmem:[%s3 + $0xc0] sm:$0xff]
    %v2751 = vld [vmem:[%s3 + $0xc8] sm:$0xff]
    %v2752 = vld [vmem:[%s3 + $0xd0] sm:$0xff]
    %v2753 = vld [vmem:[%s3 + $0xd8] sm:$0xff]
    %v2754 = vld [vmem:[%s3 + $0xe0] sm:$0xff]
    %v2755 = vld [vmem:[%s3 + $0xe8] sm:$0xff]
    %v2756 = vld [vmem:[%s3 + $0xf0] sm:$0xff]
    %v2757 = vld [vmem:[%s3 + $0xf8] sm:$0xff]
    %v2758 = vld [vmem:[%s3 + $0x100] sm:$0xff]
    %v2759 = vld [vmem:[%s3 + $0x108] sm:$0xff]
    %v2760 = vld [vmem:[%s3 + $0x110] sm:$0xff]
    %v2761 = vld [vmem:[%s3 + $0x118] sm:$0xff]
    %v2762 = vld [vmem:[%s3 + $0x120] sm:$0xff]
    %v2763 = vld [vmem:[%s3 + $0x128] sm:$0xff]
    %v2764 = vld [vmem:[%s3 + $0x130] sm:$0xff]
    %v2765 = vld [vmem:[%s3 + $0x138] sm:$0xff]
    %v2766 = vld [vmem:[%s3 + $0x140] sm:$0xff]
    %v2767 = vld [vmem:[%s3 + $0x148] sm:$0xff]
    %v2768 = vld [vmem:[%s3 + $0x150] sm:$0xff]
    %v2769 = vld [vmem:[%s3 + $0x158] sm:$0xff]
    %v2770 = vld [vmem:[%s3 + $0x160] sm:$0xff]
    %v2771 = vld [vmem:[%s3 + $0x168] sm:$0xff]
    %v2772 = vld [vmem:[%s3 + $0x170] sm:$0xff]
    %v2773 = vld [vmem:[%s3 + $0x178] sm:$0xff]
    %v2774 = vld [vmem:[%s4] sm:$0x3]
    %v2776 = vlaneseq
    %v2777 = vshrl.u32 %v2776, 7
    %v2778 = vsub.s32 0, %v2777
    %v2779 = vrot.slane %v2774, %v2778
    %v2780 = vlaneseq
    %v2781 = vshrl.u32 %v2780, 7
    %v2782 = vsub.s32 1, %v2781
    %v2783 = vrot.slane %v2774, %v2782
    %v2834 = vunpack.c.l.b16 %v2726
    %v2835 = vunpack.c.h.b16 %v2726
    %v2836 = vunpack.c.l.b16 %v2727
    %v2837 = vunpack.c.h.b16 %v2727
    %v2838 = vunpack.c.l.b16 %v2728
    %v2839 = vunpack.c.h.b16 %v2728
    %v2840 = vunpack.c.l.b16 %v2729
    %v2841 = vunpack.c.h.b16 %v2729
    %v2842 = vunpack.c.l.b16 %v2730
    %v2843 = vunpack.c.h.b16 %v2730
    %v2844 = vunpack.c.l.b16 %v2731
    %v2845 = vunpack.c.h.b16 %v2731
    %v2846 = vunpack.c.l.b16 %v2732
    %v2847 = vunpack.c.h.b16 %v2732
    %v2848 = vunpack.c.l.b16 %v2733
    %v2849 = vunpack.c.h.b16 %v2733
    %v2850 = vunpack.c.l.b16 %v2734
    %v2851 = vunpack.c.h.b16 %v2734
    %v2852 = vunpack.c.l.b16 %v2735
    %v2853 = vunpack.c.h.b16 %v2735
    %v2854 = vunpack.c.l.b16 %v2736
    %v2855 = vunpack.c.h.b16 %v2736
    %v2856 = vunpack.c.l.b16 %v2737
    %v2857 = vunpack.c.h.b16 %v2737
    %v2858 = vunpack.c.l.b16 %v2738
    %v2859 = vunpack.c.h.b16 %v2738
    %v2860 = vunpack.c.l.b16 %v2739
    %v2861 = vunpack.c.h.b16 %v2739
    %v2862 = vunpack.c.l.b16 %v2740
    %v2863 = vunpack.c.h.b16 %v2740
    %v2864 = vunpack.c.l.b16 %v2741
    %v2865 = vunpack.c.h.b16 %v2741
    %v2866 = vunpack.c.l.b16 %v2742
    %v2867 = vunpack.c.h.b16 %v2742
    %v2868 = vunpack.c.l.b16 %v2743
    %v2869 = vunpack.c.h.b16 %v2743
    %v2870 = vunpack.c.l.b16 %v2744
    %v2871 = vunpack.c.h.b16 %v2744
    %v2872 = vunpack.c.l.b16 %v2745
    %v2873 = vunpack.c.h.b16 %v2745
    %v2874 = vunpack.c.l.b16 %v2746
    %v2875 = vunpack.c.h.b16 %v2746
    %v2876 = vunpack.c.l.b16 %v2747
    %v2877 = vunpack.c.h.b16 %v2747
    %v2878 = vunpack.c.l.b16 %v2748
    %v2879 = vunpack.c.h.b16 %v2748
    %v2880 = vunpack.c.l.b16 %v2749
    %v2881 = vunpack.c.h.b16 %v2749
    %v2882 = vunpack.c.l.b16 %v2750
    %v2883 = vunpack.c.h.b16 %v2750
    %v2884 = vunpack.c.l.b16 %v2751
    %v2885 = vunpack.c.h.b16 %v2751
    %v2886 = vunpack.c.l.b16 %v2752
    %v2887 = vunpack.c.h.b16 %v2752
    %v2888 = vunpack.c.l.b16 %v2753
    %v2889 = vunpack.c.h.b16 %v2753
    %v2890 = vunpack.c.l.b16 %v2754
    %v2891 = vunpack.c.h.b16 %v2754
    %v2892 = vunpack.c.l.b16 %v2755
    %v2893 = vunpack.c.h.b16 %v2755
    %v2894 = vunpack.c.l.b16 %v2756
    %v2895 = vunpack.c.h.b16 %v2756
    %v2896 = vunpack.c.l.b16 %v2757
    %v2897 = vunpack.c.h.b16 %v2757
    %v2898 = vunpack.c.l.b16 %v2758
    %v2899 = vunpack.c.h.b16 %v2758
    %v2900 = vunpack.c.l.b16 %v2759
    %v2901 = vunpack.c.h.b16 %v2759
    %v2902 = vunpack.c.l.b16 %v2760
    %v2903 = vunpack.c.h.b16 %v2760
    %v2904 = vunpack.c.l.b16 %v2761
    %v2905 = vunpack.c.h.b16 %v2761
    %v2906 = vunpack.c.l.b16 %v2762
    %v2907 = vunpack.c.h.b16 %v2762
    %v2908 = vunpack.c.l.b16 %v2763
    %v2909 = vunpack.c.h.b16 %v2763
    %v2910 = vunpack.c.l.b16 %v2764
    %v2911 = vunpack.c.h.b16 %v2764
    %v2912 = vunpack.c.l.b16 %v2765
    %v2913 = vunpack.c.h.b16 %v2765
    %v2914 = vunpack.c.l.b16 %v2766
    %v2915 = vunpack.c.h.b16 %v2766
    %v2916 = vunpack.c.l.b16 %v2767
    %v2917 = vunpack.c.h.b16 %v2767
    %v2918 = vunpack.c.l.b16 %v2768
    %v2919 = vunpack.c.h.b16 %v2768
    %v2920 = vunpack.c.l.b16 %v2769
    %v2921 = vunpack.c.h.b16 %v2769
    %v2922 = vunpack.c.l.b16 %v2770
    %v2923 = vunpack.c.h.b16 %v2770
    %v2924 = vunpack.c.l.b16 %v2771
    %v2925 = vunpack.c.h.b16 %v2771
    %v2926 = vunpack.c.l.b16 %v2772
    %v2927 = vunpack.c.h.b16 %v2772
    %v2928 = vunpack.c.l.b16 %v2773
    %v2929 = vunpack.c.h.b16 %v2773
    %v2930 = vpack.c.b16 %v2836, %v2834
    %v2931 = vpack.c.b16 %v2837, %v2835
    %v2932 = vpack.c.b16 %v2840, %v2838
    %v2933 = vpack.c.b16 %v2841, %v2839
    %v2934 = vpack.c.b16 %v2844, %v2842
    %v2935 = vpack.c.b16 %v2845, %v2843
    %v2936 = vpack.c.b16 %v2848, %v2846
    %v2937 = vpack.c.b16 %v2849, %v2847
    %v2938 = vpack.c.b16 %v2852, %v2850
    %v2939 = vpack.c.b16 %v2853, %v2851
    %v2940 = vpack.c.b16 %v2856, %v2854
    %v2941 = vpack.c.b16 %v2857, %v2855
    %v2942 = vpack.c.b16 %v2860, %v2858
    %v2943 = vpack.c.b16 %v2861, %v2859
    %v2944 = vpack.c.b16 %v2864, %v2862
    %v2945 = vpack.c.b16 %v2865, %v2863
    %v2946 = vpack.c.b16 %v2868, %v2866
    %v2947 = vpack.c.b16 %v2869, %v2867
    %v2948 = vpack.c.b16 %v2872, %v2870
    %v2949 = vpack.c.b16 %v2873, %v2871
    %v2950 = vpack.c.b16 %v2876, %v2874
    %v2951 = vpack.c.b16 %v2877, %v2875
    %v2952 = vpack.c.b16 %v2880, %v2878
    %v2953 = vpack.c.b16 %v2881, %v2879
    %v2954 = vpack.c.b16 %v2884, %v2882
    %v2955 = vpack.c.b16 %v2885, %v2883
    %v2956 = vpack.c.b16 %v2888, %v2886
    %v2957 = vpack.c.b16 %v2889, %v2887
    %v2958 = vpack.c.b16 %v2892, %v2890
    %v2959 = vpack.c.b16 %v2893, %v2891
    %v2960 = vpack.c.b16 %v2896, %v2894
    %v2961 = vpack.c.b16 %v2897, %v2895
    %v2962 = vpack.c.b16 %v2900, %v2898
    %v2963 = vpack.c.b16 %v2901, %v2899
    %v2964 = vpack.c.b16 %v2904, %v2902
    %v2965 = vpack.c.b16 %v2905, %v2903
    %v2966 = vpack.c.b16 %v2908, %v2906
    %v2967 = vpack.c.b16 %v2909, %v2907
    %v2968 = vpack.c.b16 %v2912, %v2910
    %v2969 = vpack.c.b16 %v2913, %v2911
    %v2970 = vpack.c.b16 %v2916, %v2914
    %v2971 = vpack.c.b16 %v2917, %v2915
    %v2972 = vpack.c.b16 %v2920, %v2918
    %v2973 = vpack.c.b16 %v2921, %v2919
    %v2974 = vpack.c.b16 %v2924, %v2922
    %v2975 = vpack.c.b16 %v2925, %v2923
    %v2976 = vpack.c.b16 %v2928, %v2926
    %v2977 = vpack.c.b16 %v2929, %v2927
    %3026 = vmatprep.subr.bf16.mxu0 %v2945
    %3027 = vmatpush1.bf16.msra.mxu0 %v2944
    %3028 = vmatprep.subr.bf16.mxu0 %v2943
    %3029 = vmatpush1.bf16.msra.mxu0 %v2942
    %3030 = vmatprep.subr.bf16.mxu0 %v2941
    %3031 = vmatpush1.bf16.msra.mxu0 %v2940
    %3032 = vmatprep.subr.bf16.mxu0 %v2939
    %3033 = vmatpush1.bf16.msra.mxu0 %v2938
    %3034 = vmatprep.subr.bf16.mxu0 %v2937
    %3035 = vmatpush1.bf16.msra.mxu0 %v2936
    %3036 = vmatprep.subr.bf16.mxu0 %v2935
    %3037 = vmatpush1.bf16.msra.mxu0 %v2934
    %3038 = vmatprep.subr.bf16.mxu0 %v2933
    %3039 = vmatpush1.bf16.msra.mxu0 %v2932
    %3040 = vmatprep.subr.bf16.mxu0 %v2931
    %3041 = vmatpush1.bf16.msra.mxu0 %v2930
    %3042 = vmatprep.subr.bf16.mxu0 %v2961
    %3043 = vmatpush2.bf16.msra.mxu0 %v2960
    %3044 = vmatprep.subr.bf16.mxu0 %v2959
    %3045 = vmatpush2.bf16.msra.mxu0 %v2958
    %3046 = vmatprep.subr.bf16.mxu0 %v2957
    %3047 = vmatpush2.bf16.msra.mxu0 %v2956
    %3048 = vmatprep.subr.bf16.mxu0 %v2955
    %3049 = vmatpush2.bf16.msra.mxu0 %v2954
    %3050 = vmatprep.subr.bf16.mxu0 %v2953
    %3051 = vmatpush2.bf16.msra.mxu0 %v2952
    %3052 = vmatprep.subr.bf16.mxu0 %v2951
    %3053 = vmatpush2.bf16.msra.mxu0 %v2950
    %3054 = vmatprep.subr.bf16.mxu0 %v2949
    %3055 = vmatpush2.bf16.msra.mxu0 %v2948
    %3056 = vmatprep.subr.bf16.mxu0 %v2947
    %3057 = vmatpush2.bf16.msra.mxu0 %v2946
    %3058 = vmatprep.mubr.bf16.mxu0 %v2724
    %3059 = vmatmul.mubr.bf16.gmra.mxu0 %v2723
    %v3060 = vpop.f32.mrf.mxu0
    %v3061 = vadd.f32 %v2779, %v3060
    %v3062 = vpop.f32.mrf.mxu0
    %v3063 = vadd.f32 %v2783, %v3062
    %v3064 = vpop.f32.mrf.mxu0
    %v3065 = vpop.f32.mrf.mxu0
    %3066 = vdwg.mxu0
    %3067 = vmatprep.subr.bf16.mxu0 %v2977
    %3068 = vmatpush1.bf16.msra.mxu0 %v2976
    %3069 = vmatprep.subr.bf16.mxu0 %v2975
    %3070 = vmatpush1.bf16.msra.mxu0 %v2974
    %3071 = vmatprep.subr.bf16.mxu0 %v2973
    %3072 = vmatpush1.bf16.msra.mxu0 %v2972
    %3073 = vmatprep.subr.bf16.mxu0 %v2971
    %3074 = vmatpush1.bf16.msra.mxu0 %v2970
    %3075 = vmatprep.subr.bf16.mxu0 %v2969
    %3076 = vmatpush1.bf16.msra.mxu0 %v2968
    %3077 = vmatprep.subr.bf16.mxu0 %v2967
    %3078 = vmatpush1.bf16.msra.mxu0 %v2966
    %3079 = vmatprep.subr.bf16.mxu0 %v2965
    %3080 = vmatpush1.bf16.msra.mxu0 %v2964
    %3081 = vmatprep.subr.bf16.mxu0 %v2963
    %3082 = vmatpush1.bf16.msra.mxu0 %v2962
    %3083 = vmatprep.subr.bf16.mxu0 0
    %3084 = vmatpush2.bf16.msra.mxu0 0
    %3085 = vmatprep.subr.bf16.mxu0 0
    %3086 = vmatpush2.bf16.msra.mxu0 0
    %3087 = vmatprep.subr.bf16.mxu0 0
    %3088 = vmatpush2.bf16.msra.mxu0 0
    %3089 = vmatprep.subr.bf16.mxu0 0
    %3090 = vmatpush2.bf16.msra.mxu0 0
    %3091 = vmatprep.subr.bf16.mxu0 0
    %3092 = vmatpush2.bf16.msra.mxu0 0
    %3093 = vmatprep.subr.bf16.mxu0 0
    %3094 = vmatpush2.bf16.msra.mxu0 0
    %3095 = vmatprep.subr.bf16.mxu0 0
    %3096 = vmatpush2.bf16.msra.mxu0 0
    %3097 = vmatprep.subr.bf16.mxu0 0
    %3098 = vmatpush2.bf16.msra.mxu0 0
    %3099 = vmatprep.mubr.bf16.mxu0 0
    %3100 = vmatmul.mubr.bf16.gmra.mxu0 %v2725
    %v3101 = vpop.f32.mrf.mxu0
    %v3102 = vadd.f32 %v3061, %v3101
    %v3103 = vpop.f32.mrf.mxu0
    %v3104 = vadd.f32 %v3063, %v3103
    %v3105 = vpop.f32.mrf.mxu0
    %v3106 = vpop.f32.mrf.mxu0
    %3107 = vdwg.mxu0
    %v3108 = vmax.f32 %v3102, 0.0
    %v3109 = vmax.f32 %v3104, 0.0
    %v3110 = vpack.c.bf16 %v3108, %v3108
    %v3111 = vpack.c.bf16 %v3109, %v3109
    %v3112 = vld [vmem:[%s5] sm:$0xf]
    %v3113 = vld [vmem:[%s5 + $0x4] sm:$0xf]
    %v3114 = vld [vmem:[%s5 + $0x8] sm:$0xf]
    %v3115 = vld [vmem:[%s5 + $0xc] sm:$0xf]
    %v3116 = vld [vmem:[%s5 + $0x10] sm:$0xf]
    %v3117 = vld [vmem:[%s5 + $0x14] sm:$0xf]
    %v3118 = vld [vmem:[%s5 + $0x18] sm:$0xf]
    %v3119 = vld [vmem:[%s5 + $0x1c] sm:$0xf]
    %v3120 = vld [vmem:[%s5 + $0x20] sm:$0xf]
    %v3121 = vld [vmem:[%s5 + $0x24] sm:$0xf]
    %v3122 = vld [vmem:[%s5 + $0x28] sm:$0xf]
    %v3123 = vld [vmem:[%s5 + $0x2c] sm:$0xf]
    %v3124 = vld [vmem:[%s5 + $0x30] sm:$0xf]
    %v3125 = vld [vmem:[%s5 + $0x34] sm:$0xf]
    %v3126 = vld [vmem:[%s5 + $0x38] sm:$0xf]
    %v3127 = vld [vmem:[%s5 + $0x3c] sm:$0xf]
    %v3128 = vld [vmem:[%s5 + $0x40] sm:$0xf]
    %v3129 = vld [vmem:[%s5 + $0x44] sm:$0xf]
    %v3130 = vld [vmem:[%s5 + $0x48] sm:$0xf]
    %v3131 = vld [vmem:[%s5 + $0x4c] sm:$0xf]
    %v3132 = vld [vmem:[%s5 + $0x50] sm:$0xf]
    %v3133 = vld [vmem:[%s5 + $0x54] sm:$0xf]
    %v3134 = vld [vmem:[%s5 + $0x58] sm:$0xf]
    %v3135 = vld [vmem:[%s5 + $0x5c] sm:$0xf]
    %v3136 = vld [vmem:[%s6] sm:$0x1]
    %v3138 = vlaneseq
    %v3139 = vshrl.u32 %v3138, 7
    %v3140 = vsub.s32 0, %v3139
    %v3141 = vrot.slane %v3136, %v3140
    %v3167 = vunpack.c.l.b16 %v3112
    %v3168 = vunpack.c.l.b16 %v3113
    %v3169 = vunpack.c.l.b16 %v3114
    %v3170 = vunpack.c.l.b16 %v3115
    %v3171 = vunpack.c.l.b16 %v3116
    %v3172 = vunpack.c.l.b16 %v3117
    %v3173 = vunpack.c.l.b16 %v3118
    %v3174 = vunpack.c.l.b16 %v3119
    %v3175 = vunpack.c.l.b16 %v3120
    %v3176 = vunpack.c.l.b16 %v3121
    %v3177 = vunpack.c.l.b16 %v3122
    %v3178 = vunpack.c.l.b16 %v3123
    %v3179 = vunpack.c.l.b16 %v3124
    %v3180 = vunpack.c.l.b16 %v3125
    %v3181 = vunpack.c.l.b16 %v3126
    %v3182 = vunpack.c.l.b16 %v3127
    %v3183 = vunpack.c.l.b16 %v3128
    %v3184 = vunpack.c.l.b16 %v3129
    %v3185 = vunpack.c.l.b16 %v3130
    %v3186 = vunpack.c.l.b16 %v3131
    %v3187 = vunpack.c.l.b16 %v3132
    %v3188 = vunpack.c.l.b16 %v3133
    %v3189 = vunpack.c.l.b16 %v3134
    %v3190 = vunpack.c.l.b16 %v3135
    %v3191 = vpack.c.b16 %v3168, %v3167
    %v3192 = vpack.c.b16 %v3170, %v3169
    %v3193 = vpack.c.b16 %v3172, %v3171
    %v3194 = vpack.c.b16 %v3174, %v3173
    %v3195 = vpack.c.b16 %v3176, %v3175
    %v3196 = vpack.c.b16 %v3178, %v3177
    %v3197 = vpack.c.b16 %v3180, %v3179
    %v3198 = vpack.c.b16 %v3182, %v3181
    %v3199 = vpack.c.b16 %v3184, %v3183
    %v3200 = vpack.c.b16 %v3186, %v3185
    %v3201 = vpack.c.b16 %v3188, %v3187
    %v3202 = vpack.c.b16 %v3190, %v3189
    %v3216 = vsel %vm2149, %v3111, 0
    %3218 = vmatprep.subr.bf16.mxu0 0
    %3219 = vmatpush1.bf16.msra.mxu0 %v3198
    %3220 = vmatprep.subr.bf16.mxu0 0
    %3221 = vmatpush1.bf16.msra.mxu0 %v3197
    %3222 = vmatprep.subr.bf16.mxu0 0
    %3223 = vmatpush1.bf16.msra.mxu0 %v3196
    %3224 = vmatprep.subr.bf16.mxu0 0
    %3225 = vmatpush1.bf16.msra.mxu0 %v3195
    %3226 = vmatprep.subr.bf16.mxu0 0
    %3227 = vmatpush1.bf16.msra.mxu0 %v3194
    %3228 = vmatprep.subr.bf16.mxu0 0
    %3229 = vmatpush1.bf16.msra.mxu0 %v3193
    %3230 = vmatprep.subr.bf16.mxu0 0
    %3231 = vmatpush1.bf16.msra.mxu0 %v3192
    %3232 = vmatprep.subr.bf16.mxu0 0
    %3233 = vmatpush1.bf16.msra.mxu0 %v3191
    %3234 = vmatprep.subr.bf16.mxu0 0
    %3235 = vmatpush2.bf16.msra.mxu0 0
    %3236 = vmatprep.subr.bf16.mxu0 0
    %3237 = vmatpush2.bf16.msra.mxu0 0
    %3238 = vmatprep.subr.bf16.mxu0 0
    %3239 = vmatpush2.bf16.msra.mxu0 0
    %3240 = vmatprep.subr.bf16.mxu0 0
    %3241 = vmatpush2.bf16.msra.mxu0 0
    %3242 = vmatprep.subr.bf16.mxu0 0
    %3243 = vmatpush2.bf16.msra.mxu0 %v3202
    %3244 = vmatprep.subr.bf16.mxu0 0
    %3245 = vmatpush2.bf16.msra.mxu0 %v3201
    %3246 = vmatprep.subr.bf16.mxu0 0
    %3247 = vmatpush2.bf16.msra.mxu0 %v3200
    %3248 = vmatprep.subr.bf16.mxu0 0
    %3249 = vmatpush2.bf16.msra.mxu0 %v3199
    %3250 = vmatprep.mubr.bf16.mxu0 %v3216
    %3251 = vmatmul.mubr.bf16.gmra.mxu0 %v3110
    %v3252 = vpop.f32.mrf.mxu0
    %v3253 = vadd.f32 %v3141, %v3252
    %v3254 = vpop.f32.mrf.mxu0
    %v3255 = vpop.f32.mrf.mxu0
    %v3256 = vpop.f32.mrf.mxu0
    %3257 = vdwg.mxu0
    %3258 = vst [vmem:[#allocation2] sm:$0x3] %v3253
    // Predicated region
    $region30: #{forward.5} parent=1 // pred_check
      _
    $region31: #{forward.5} parent=1 // pred_check_branch
      %3260 = sbr.rel (0) target = $region33
    $region32: #{forward.5} parent=1 // pred_region
      %s3262 = ssub.s32 32, 32
      %3263 = vsyncadd [#allocation3], %s3262
      %s3265 = sshll.u32 [#allocation2], 4
      %s3266 = int_to_ptr.vmem [resolvable:$true] %s3265
      %3268 = dma.vmem_to_hbm [thread:$0]  %s3266, 32, %s7, [#allocation3]
    $region33: #{forward.5} parent=1 // pred_fallthru
      _
    // Predicated region
    $region34: #{forward.5} parent=1 // pred_check
      _
    $region35: #{forward.5} parent=1 // pred_check_branch
      %3270 = sbr.rel (0) target = $region37
    $region36: #{forward.5} parent=1 // pred_region
      %3271 = dma.done [#allocation3], 32
    $region37: #{forward.5} parent=1 // pred_fallthru
      _
    %3272 = vsyncpa [#allocation3], 1

</llo_original>
